<compile_context>
chip_gen: v7x
topology: tpu7x:2x2x1
jax: 0.10.0
libtpu: 0.0.40
codegen_flags: <defaults>
</compile_context>

<pallas_src>
from functools import partial

import jax
import jax.numpy as jnp
from jax import lax
from jax.experimental import pallas as pl
from jax.experimental.pallas import tpu as pltpu
import numpy as np

KS = 3        # 3x3x3 kernel
EPS = 1e-5    # PyTorch BatchNorm default


def _lane_group_fold(v, group):
    """Cyclic roll-add tree over the lane axis of a (1, W*group) row.

    Sums the W lane-groups per channel (lane % group) and leaves the result
    broadcast to every group.  Requires W = lanes // group to be a power of 2.
    """
    lanes = v.shape[-1]
    s = lanes // 2
    while s >= group:
        v = v + pltpu.roll(v, shift=s, axis=1)
        s //= 2
    return v


def _bn_relu(acc, mask, gamma, beta, m, cout):
    """Training-mode BatchNorm (two-pass f32 stats over valid rows) + ReLU.

    acc  : (R, W*Cout) f32 lane-dense conv accumulator (valid + halo-junk rows)
    mask : (R, 1) f32, 1.0 on valid rows (junk rows excluded from the statistics)
    gamma/beta : (1, W*Cout) f32 per-channel params tiled across the W lane groups
    """
    inv_m = 1.0 / m
    mean = _lane_group_fold(jnp.sum(acc * mask, axis=0, keepdims=True), cout) * inv_m
    d = acc - mean
    var = _lane_group_fold(jnp.sum(d * d * mask, axis=0, keepdims=True), cout) * inv_m
    y = d * (gamma * lax.rsqrt(var + EPS)) + beta
    return jnp.maximum(y, 0.0)


def _fill_padded(dst_ref, get_band, N, D, H, Hp, Dp):
    """Fill a padded row-slab: interior (n, d) row-bands + halo/tail-only zeroing.

    Row r = n*Dp*Hp + d_pad*Hp + h_pad; band (n, d) lands at d_pad = d+1,
    h_pad in [1, H+1).  Every non-interior row is zeroed exactly once and the
    interior is never double-written (no full-buffer memset).
    """
    Rp = dst_ref.shape[0]
    L = dst_ref.shape[-1]
    dt = dst_ref.dtype
    prev = 0
    for n in range(N):
        for d in range(D):
            start = (n * Dp + d + 1) * Hp + 1
            if start > prev:                                   # leading / gap halo rows
                dst_ref[prev:start, :] = jnp.zeros((start - prev, L), dt)
            dst_ref[start:start + H, :] = get_band(n, d)       # interior band, full lanes
            prev = start + H
    if Rp > prev:                                              # trailing halo + shift tail
        dst_ref[prev:Rp, :] = jnp.zeros((Rp - prev, L), dt)


def _unet_conv3_x2_kernel(x_ref, b1_ref, g1_ref, bt1_ref,
                          b2_ref, g2_ref, bt2_ref, mask_ref,
                          o_ref, xpad_ref, ypad_ref,
                          *, N, D, H, W, Cout):
    """Fused UnetConv3: two (Conv3d 3x3x3 p=1 -> BN3d -> ReLU) stages, lane-dense.

    x_ref    : (N*D*H, W*C0)       bf16  concatenated input slab (rows = n,d,h)
    b1_ref   : (9, W*C0,  W*Cout)  bf16  stage-1 banded weights (t = kd*3+kh; kw folded)
    b2_ref   : (9, W*Cout, W*Cout) bf16  stage-2 banded weights
    g*/bt*   : (1, W*Cout)         f32   BN gamma/beta tiled across the W lane groups
    mask_ref : (Rv, 1)             f32   1.0 on valid rows of the halo-padded row space
    o_ref    : (N*D*H, W*Cout)     f32   lane-dense output slab
    xpad/ypad: (Rp, W*C)           bf16  padded slabs (rows = n, d_pad, h_pad, + tail)
    """
    Dp, Hp = D + 2, H + 2
    Rv = N * Dp * Hp                     # rows the conv is evaluated on (valid + junk)
    m = float(N * D * H * W)             # BN sample count per channel
    mask = mask_ref[...]

    def conv_stage(src_ref, w_ref):
        acc = None
        for t in range(KS * KS):
            off = (t // KS) * Hp + (t % KS)          # kd*Hp + kh row shift
            part = jnp.dot(src_ref[off:off + Rv, :], w_ref[t],
                           preferred_element_type=jnp.float32)
            acc = part if acc is None else acc + part
        return acc

    # ---- stage 1: interior bands + halo-only zeroing, 9 row-shifted matmuls, BN+ReLU ----
    _fill_padded(xpad_ref,
                 lambda n, d: x_ref[(n * D + d) * H:(n * D + d) * H + H, :],
                 N, D, H, Hp, Dp)
    y1 = _bn_relu(conv_stage(xpad_ref, b1_ref), mask,
                  g1_ref[...], bt1_ref[...], m, Cout)

    # ---- stage 2: stage-1 activation never leaves VMEM ----
    _fill_padded(ypad_ref,
                 lambda n, d: y1[(n * Dp + d) * Hp:(n * Dp + d) * Hp + H, :]
                 .astype(jnp.bfloat16),
                 N, D, H, Hp, Dp)
    y2 = _bn_relu(conv_stage(ypad_ref, b2_ref), mask,
                  g2_ref[...], bt2_ref[...], m, Cout)

    # ---- output: valid bands only; 8-row / 128-lane aligned unmasked stores ----
    for n in range(N):
        for d in range(D):
            o_ref[(n * D + d) * H:(n * D + d) * H + H, :] = (
                y2[(n * Dp + d) * Hp:(n * Dp + d) * Hp + H, :])


def _banded_weights(w_dhwio, W):
    """Fold the kw tap and the W zero-padding into 9 block-banded matrices.

    w_dhwio: (3, 3, 3, Cin, Cout)  ->  B: (9, W*Cin, W*Cout) with
    B[kd*3+kh, w_in*Cin+ci, w_out*Cout+co] = w[kd, kh, w_in-w_out+1, ci, co]
    (zero outside the band; the band truncation == zero padding along W).
    """
    kd_, kh_, kw_, cin, cout = w_dhwio.shape
    S = np.zeros((kw_, W, W), np.float32)
    for kw in range(kw_):
        for wo in range(W):
            wi = wo + kw - 1
            if 0 <= wi < W:
                S[kw, wi, wo] = 1.0
    w9 = w_dhwio.reshape(kd_ * kh_, kw_, cin, cout)
    B = jnp.einsum("tkio,kab->taibo", w9, S)
    return B.reshape(kd_ * kh_, W * cin, W * cout)


def _torch_style_pad(inputs1, off, off_z):
    # F.pad(inputs1, 2*[off//2, off//2, off_z//2]) on NCDHW, last-dim-first order:
    # W: (off//2, off//2), H: (off_z//2, off//2), D: (off//2, off_z//2).
    po, pz = off // 2, off_z // 2
    return jnp.pad(inputs1, ((0, 0), (0, 0), (po, pz), (pz, po), (po, po)))


def unet_up3_forward(inputs1, inputs2, params):
    """Pallas implementation of UnetUp3.forward (is_deconv=False, z_scale_factor=1).

    inputs1: (N, C_skip, D, H, W) NCDHW, inputs2: (N, C_deep, D, H, W) NCDHW.
    """
    # self.up = nn.Upsample(scale_factor=1, mode='trilinear') -> identity map.
    outputs2 = inputs2
    off = outputs2.shape[2] - inputs1.shape[2]
    off_z = outputs2.shape[4] - inputs1.shape[4]
    outputs1 = _torch_style_pad(inputs1, off, off_z)   # no-op when spatial shapes match

    # NCDHW -> NDHWC, channel concat (what UnetConv3 sees), then a lane-dense 2D bf16 slab.
    # TODO(synk): fuse the transpose into the kernel (manual DMA) for production sizes.
    x = jnp.concatenate(
        [jnp.transpose(outputs1, (0, 2, 3, 4, 1)),
         jnp.transpose(outputs2, (0, 2, 3, 4, 1))], axis=-1).astype(jnp.float32)

    N, D, H, W, C0 = x.shape
    Cout = params[0]["w"].shape[-1]
    assert W & (W - 1) == 0, "lane-fold BN reduction assumes W is a power of two"
    # TODO(synk): generic W via an in-kernel reshape fold (or a fold-matrix matmul).

    Dp, Hp = D + 2, H + 2
    Rv = N * Dp * Hp                                   # conv rows (valid + halo junk)
    Rp = ((Rv + 2 * Hp + 2 + 7) // 8) * 8              # slab rows incl. tap-shift tail

    x_slab = x.reshape(N * D * H, W * C0).astype(jnp.bfloat16)

    p1, p2 = params
    b1 = _banded_weights(p1["w"], W).astype(jnp.bfloat16)   # (9, W*C0,   W*Cout)
    b2 = _banded_weights(p2["w"], W).astype(jnp.bfloat16)   # (9, W*Cout, W*Cout)
    lane_vec = lambda v: jnp.tile(v.astype(jnp.float32), (W,)).reshape(1, W * Cout)
    # Conv bias is intentionally NOT passed: it cancels exactly under training-mode BN.

    # Valid-row mask over the halo-padded row space (r = n*Dp*Hp + d*Hp + h).
    r = np.arange(Rv)
    valid = (((r // Hp) % Dp) < D) & ((r % Hp) < H)
    mask = jnp.asarray(valid.astype(np.float32).reshape(Rv, 1))

    vmem = pl.BlockSpec(memory_space=pltpu.MemorySpace.VMEM)
    kernel = partial(_unet_conv3_x2_kernel, N=N, D=D, H=H, W=W, Cout=Cout)
    out2d = pl.pallas_call(
        kernel,
        out_shape=jax.ShapeDtypeStruct((N * D * H, W * Cout), jnp.float32),
        in_specs=[vmem] * 8,
        out_specs=vmem,
        scratch_shapes=[
            pltpu.VMEM((Rp, W * C0), jnp.bfloat16),     # stage-1 padded slab (~108 KB)
            pltpu.VMEM((Rp, W * Cout), jnp.bfloat16),   # stage-2 padded slab (~36 KB)
        ],
        compiler_params=pltpu.CompilerParams(vmem_limit_bytes=32 * 1024 * 1024),
    )(x_slab,
      b1, lane_vec(p1["gamma"]), lane_vec(p1["beta"]),
      b2, lane_vec(p2["gamma"]), lane_vec(p2["beta"]),
      mask)

    out = out2d.reshape(N, D, H, W, Cout)        # free reshape (row-major layouts match)
    return jnp.transpose(out, (0, 4, 1, 2, 3))   # NDHWC -> NCDHW


# ----------------------------- pure-JAX f32 reference -----------------------------
def _ref_stage(x_ndhwc, w_dhwio, b, gamma, beta):
    y = lax.conv_general_dilated(
        x_ndhwc, w_dhwio, window_strides=(1, 1, 1),
        padding=((1, 1), (1, 1), (1, 1)),
        dimension_numbers=("NDHWC", "DHWIO", "NDHWC"))
    y = y + b.reshape(1, 1, 1, 1, -1)
    mean = jnp.mean(y, axis=(0, 1, 2, 3), keepdims=True)
    var = jnp.mean(jnp.square(y - mean), axis=(0, 1, 2, 3), keepdims=True)
    y = (gamma.reshape(1, 1, 1, 1, -1) * (y - mean) * lax.rsqrt(var + EPS)
         + beta.reshape(1, 1, 1, 1, -1))
    return jnp.maximum(y, 0.0)


def unet_up3_reference(inputs1, inputs2, params):
    outputs2 = inputs2
    off = outputs2.shape[2] - inputs1.shape[2]
    off_z = outputs2.shape[4] - inputs1.shape[4]
    outputs1 = _torch_style_pad(inputs1, off, off_z)
    x = jnp.concatenate([outputs1, outputs2], axis=1)
    x = jnp.transpose(x, (0, 2, 3, 4, 1))
    for p in params:
        x = _ref_stage(x, p["w"], p["b"], p["gamma"], p["beta"])
    return jnp.transpose(x, (0, 4, 1, 2, 3))


# ------------------------------- parameter setup -----------------------------------
def init_params(key, in_size, out_size):
    """Two conv stages of UnetConv3(in_size+out_size, out_size), kaiming-style weights."""
    params = []
    cin = in_size + out_size          # is_deconv=False: conv1 sees the concat channels
    for _ in range(2):
        key, kw_, kb_, kg_, kbe_ = jax.random.split(key, 5)
        fan_in = cin * KS ** 3
        std = np.sqrt(2.0 / fan_in)
        w = std * jax.random.normal(kw_, (KS, KS, KS, cin, out_size), jnp.float32)  # DHWIO
        b = 0.1 * jax.random.normal(kb_, (out_size,), jnp.float32)
        gamma = 1.0 + 0.1 * jax.random.normal(kg_, (out_size,), jnp.float32)
        beta = 0.1 * jax.random.normal(kbe_, (out_size,), jnp.float32)
        params.append({"w": w, "b": b, "gamma": gamma, "beta": beta})
        cin = out_size
    return params


if __name__ == "__main__":
    key = jax.random.PRNGKey(0)
    k1, k2, kp = jax.random.split(key, 3)

    in_size, out_size = 16, 8                      # deep-path channels, module output channels
    N, Dz, Hy, Wx = 2, 4, 8, 16                    # small 3-D feature maps; Wx*out_size = 128
    inputs2 = jax.random.normal(k1, (N, in_size, Dz, Hy, Wx), jnp.float32)   # deep layer
    inputs1 = jax.random.normal(k2, (N, out_size, Dz, Hy, Wx), jnp.float32)  # skip connection
    params = init_params(kp, in_size, out_size)

    out = jax.block_until_ready(unet_up3_forward(inputs1, inputs2, params))
    assert out.shape == (N, out_size, Dz, Hy, Wx), out.shape

    ref = jax.block_until_ready(unet_up3_reference(inputs1, inputs2, params))
    err = float(np.max(np.abs(np.asarray(out) - np.asarray(ref))))
    assert np.allclose(np.asarray(out), np.asarray(ref), rtol=3e-2, atol=3e-2), err

    print("KERNEL_OK")
</pallas_src>

<mosaic_0001>
module attributes {stable_mosaic.version = 11 : i64} {
  func.func @_unet_conv3_x2_kernel(%arg0: memref<64x384xbf16, #tpu.memory_space<vmem>>, %arg1: memref<9x384x128xbf16, #tpu.memory_space<vmem>>, %arg2: memref<1x128xf32, #tpu.memory_space<vmem>>, %arg3: memref<1x128xf32, #tpu.memory_space<vmem>>, %arg4: memref<9x128x128xbf16, #tpu.memory_space<vmem>>, %arg5: memref<1x128xf32, #tpu.memory_space<vmem>>, %arg6: memref<1x128xf32, #tpu.memory_space<vmem>>, %arg7: memref<120x1xf32, #tpu.memory_space<vmem>>, %arg8: memref<64x128xf32, #tpu.memory_space<vmem>>, %arg9: memref<144x384xbf16, #tpu.memory_space<vmem>>, %arg10: memref<144x128xbf16, #tpu.memory_space<vmem>>) attributes {dimension_semantics = [], scalar_prefetch = 0 : i64, scratch_operands = 2 : i64, tpu.core_type = #tpu.core_type<tc>} {
    %c0 = arith.constant 0 : index
    %c0_0 = arith.constant 0 : index
    %0 = vector.load %arg7[%c0, %c0_0] : memref<120x1xf32, #tpu.memory_space<vmem>>, vector<120x1xf32>
    %cst = arith.constant 0.000000e+00 : bf16
    %1 = vector.broadcast %cst : bf16 to vector<11x384xbf16>
    %c0_1 = arith.constant 0 : index
    %c0_2 = arith.constant 0 : index
    %2 = vector.load %arg9[%c0_1, %c0_2] : memref<144x384xbf16, #tpu.memory_space<vmem>>, vector<11x384xbf16>
    tpu.vector_store %arg9[%c0_1, %c0_2], %1 {strides = array<i32>} : memref<144x384xbf16, #tpu.memory_space<vmem>>, vector<11x384xbf16>,
    %c0_3 = arith.constant 0 : index
    %c0_4 = arith.constant 0 : index
    %3 = vector.load %arg0[%c0_3, %c0_4] : memref<64x384xbf16, #tpu.memory_space<vmem>>, vector<8x384xbf16>
    %c11 = arith.constant 11 : index
    %c0_5 = arith.constant 0 : index
    %4 = vector.load %arg9[%c11, %c0_5] : memref<144x384xbf16, #tpu.memory_space<vmem>>, vector<8x384xbf16>
    tpu.vector_store %arg9[%c11, %c0_5], %3 {strides = array<i32>} : memref<144x384xbf16, #tpu.memory_space<vmem>>, vector<8x384xbf16>,
    %cst_6 = arith.constant 0.000000e+00 : bf16
    %5 = vector.broadcast %cst_6 : bf16 to vector<2x384xbf16>
    %c19 = arith.constant 19 : index
    %c0_7 = arith.constant 0 : index
    %6 = vector.load %arg9[%c19, %c0_7] : memref<144x384xbf16, #tpu.memory_space<vmem>>, vector<2x384xbf16>
    tpu.vector_store %arg9[%c19, %c0_7], %5 {strides = array<i32>} : memref<144x384xbf16, #tpu.memory_space<vmem>>, vector<2x384xbf16>,
    %c8 = arith.constant 8 : index
    %c0_8 = arith.constant 0 : index
    %7 = vector.load %arg0[%c8, %c0_8] : memref<64x384xbf16, #tpu.memory_space<vmem>>, vector<8x384xbf16>
    %c21 = arith.constant 21 : index
    %c0_9 = arith.constant 0 : index
    %8 = vector.load %arg9[%c21, %c0_9] : memref<144x384xbf16, #tpu.memory_space<vmem>>, vector<8x384xbf16>
    tpu.vector_store %arg9[%c21, %c0_9], %7 {strides = array<i32>} : memref<144x384xbf16, #tpu.memory_space<vmem>>, vector<8x384xbf16>,
    %cst_10 = arith.constant 0.000000e+00 : bf16
    %9 = vector.broadcast %cst_10 : bf16 to vector<2x384xbf16>
    %c29 = arith.constant 29 : index
    %c0_11 = arith.constant 0 : index
    %10 = vector.load %arg9[%c29, %c0_11] : memref<144x384xbf16, #tpu.memory_space<vmem>>, vector<2x384xbf16>
    tpu.vector_store %arg9[%c29, %c0_11], %9 {strides = array<i32>} : memref<144x384xbf16, #tpu.memory_space<vmem>>, vector<2x384xbf16>,
    %c16 = arith.constant 16 : index
    %c0_12 = arith.constant 0 : index
    %11 = vector.load %arg0[%c16, %c0_12] : memref<64x384xbf16, #tpu.memory_space<vmem>>, vector<8x384xbf16>
    %c31 = arith.constant 31 : index
    %c0_13 = arith.constant 0 : index
    %12 = vector.load %arg9[%c31, %c0_13] : memref<144x384xbf16, #tpu.memory_space<vmem>>, vector<8x384xbf16>
    tpu.vector_store %arg9[%c31, %c0_13], %11 {strides = array<i32>} : memref<144x384xbf16, #tpu.memory_space<vmem>>, vector<8x384xbf16>,
    %cst_14 = arith.constant 0.000000e+00 : bf16
    %13 = vector.broadcast %cst_14 : bf16 to vector<2x384xbf16>
    %c39 = arith.constant 39 : index
    %c0_15 = arith.constant 0 : index
    %14 = vector.load %arg9[%c39, %c0_15] : memref<144x384xbf16, #tpu.memory_space<vmem>>, vector<2x384xbf16>
    tpu.vector_store %arg9[%c39, %c0_15], %13 {strides = array<i32>} : memref<144x384xbf16, #tpu.memory_space<vmem>>, vector<2x384xbf16>,
    %c24 = arith.constant 24 : index
    %c0_16 = arith.constant 0 : index
    %15 = vector.load %arg0[%c24, %c0_16] : memref<64x384xbf16, #tpu.memory_space<vmem>>, vector<8x384xbf16>
    %c41 = arith.constant 41 : index
    %c0_17 = arith.constant 0 : index
    %16 = vector.load %arg9[%c41, %c0_17] : memref<144x384xbf16, #tpu.memory_space<vmem>>, vector<8x384xbf16>
    tpu.vector_store %arg9[%c41, %c0_17], %15 {strides = array<i32>} : memref<144x384xbf16, #tpu.memory_space<vmem>>, vector<8x384xbf16>,
    %cst_18 = arith.constant 0.000000e+00 : bf16
    %17 = vector.broadcast %cst_18 : bf16 to vector<22x384xbf16>
    %c49 = arith.constant 49 : index
    %c0_19 = arith.constant 0 : index
    %18 = vector.load %arg9[%c49, %c0_19] : memref<144x384xbf16, #tpu.memory_space<vmem>>, vector<22x384xbf16>
    tpu.vector_store %arg9[%c49, %c0_19], %17 {strides = array<i32>} : memref<144x384xbf16, #tpu.memory_space<vmem>>, vector<22x384xbf16>,
    %c32 = arith.constant 32 : index
    %c0_20 = arith.constant 0 : index
    %19 = vector.load %arg0[%c32, %c0_20] : memref<64x384xbf16, #tpu.memory_space<vmem>>, vector<8x384xbf16>
    %c71 = arith.constant 71 : index
    %c0_21 = arith.constant 0 : index
    %20 = vector.load %arg9[%c71, %c0_21] : memref<144x384xbf16, #tpu.memory_space<vmem>>, vector<8x384xbf16>
    tpu.vector_store %arg9[%c71, %c0_21], %19 {strides = array<i32>} : memref<144x384xbf16, #tpu.memory_space<vmem>>, vector<8x384xbf16>,
    %cst_22 = arith.constant 0.000000e+00 : bf16
    %21 = vector.broadcast %cst_22 : bf16 to vector<2x384xbf16>
    %c79 = arith.constant 79 : index
    %c0_23 = arith.constant 0 : index
    %22 = vector.load %arg9[%c79, %c0_23] : memref<144x384xbf16, #tpu.memory_space<vmem>>, vector<2x384xbf16>
    tpu.vector_store %arg9[%c79, %c0_23], %21 {strides = array<i32>} : memref<144x384xbf16, #tpu.memory_space<vmem>>, vector<2x384xbf16>,
    %c40 = arith.constant 40 : index
    %c0_24 = arith.constant 0 : index
    %23 = vector.load %arg0[%c40, %c0_24] : memref<64x384xbf16, #tpu.memory_space<vmem>>, vector<8x384xbf16>
    %c81 = arith.constant 81 : index
    %c0_25 = arith.constant 0 : index
    %24 = vector.load %arg9[%c81, %c0_25] : memref<144x384xbf16, #tpu.memory_space<vmem>>, vector<8x384xbf16>
    tpu.vector_store %arg9[%c81, %c0_25], %23 {strides = array<i32>} : memref<144x384xbf16, #tpu.memory_space<vmem>>, vector<8x384xbf16>,
    %cst_26 = arith.constant 0.000000e+00 : bf16
    %25 = vector.broadcast %cst_26 : bf16 to vector<2x384xbf16>
    %c89 = arith.constant 89 : index
    %c0_27 = arith.constant 0 : index
    %26 = vector.load %arg9[%c89, %c0_27] : memref<144x384xbf16, #tpu.memory_space<vmem>>, vector<2x384xbf16>
    tpu.vector_store %arg9[%c89, %c0_27], %25 {strides = array<i32>} : memref<144x384xbf16, #tpu.memory_space<vmem>>, vector<2x384xbf16>,
    %c48 = arith.constant 48 : index
    %c0_28 = arith.constant 0 : index
    %27 = vector.load %arg0[%c48, %c0_28] : memref<64x384xbf16, #tpu.memory_space<vmem>>, vector<8x384xbf16>
    %c91 = arith.constant 91 : index
    %c0_29 = arith.constant 0 : index
    %28 = vector.load %arg9[%c91, %c0_29] : memref<144x384xbf16, #tpu.memory_space<vmem>>, vector<8x384xbf16>
    tpu.vector_store %arg9[%c91, %c0_29], %27 {strides = array<i32>} : memref<144x384xbf16, #tpu.memory_space<vmem>>, vector<8x384xbf16>,
    %cst_30 = arith.constant 0.000000e+00 : bf16
    %29 = vector.broadcast %cst_30 : bf16 to vector<2x384xbf16>
    %c99 = arith.constant 99 : index
    %c0_31 = arith.constant 0 : index
    %30 = vector.load %arg9[%c99, %c0_31] : memref<144x384xbf16, #tpu.memory_space<vmem>>, vector<2x384xbf16>
    tpu.vector_store %arg9[%c99, %c0_31], %29 {strides = array<i32>} : memref<144x384xbf16, #tpu.memory_space<vmem>>, vector<2x384xbf16>,
    %c56 = arith.constant 56 : index
    %c0_32 = arith.constant 0 : index
    %31 = vector.load %arg0[%c56, %c0_32] : memref<64x384xbf16, #tpu.memory_space<vmem>>, vector<8x384xbf16>
    %c101 = arith.constant 101 : index
    %c0_33 = arith.constant 0 : index
    %32 = vector.load %arg9[%c101, %c0_33] : memref<144x384xbf16, #tpu.memory_space<vmem>>, vector<8x384xbf16>
    tpu.vector_store %arg9[%c101, %c0_33], %31 {strides = array<i32>} : memref<144x384xbf16, #tpu.memory_space<vmem>>, vector<8x384xbf16>,
    %cst_34 = arith.constant 0.000000e+00 : bf16
    %33 = vector.broadcast %cst_34 : bf16 to vector<35x384xbf16>
    %c109 = arith.constant 109 : index
    %c0_35 = arith.constant 0 : index
    %34 = vector.load %arg9[%c109, %c0_35] : memref<144x384xbf16, #tpu.memory_space<vmem>>, vector<35x384xbf16>
    tpu.vector_store %arg9[%c109, %c0_35], %33 {strides = array<i32>} : memref<144x384xbf16, #tpu.memory_space<vmem>>, vector<35x384xbf16>,
    %c0_36 = arith.constant 0 : index
    %c0_37 = arith.constant 0 : index
    %35 = vector.load %arg9[%c0_36, %c0_37] : memref<144x384xbf16, #tpu.memory_space<vmem>>, vector<120x384xbf16>
    %c0_38 = arith.constant 0 : index
    %c0_39 = arith.constant 0 : index
    %c0_40 = arith.constant 0 : index
    %36 = vector.load %arg1[%c0_38, %c0_39, %c0_40] : memref<9x384x128xbf16, #tpu.memory_space<vmem>>, vector<1x384x128xbf16>
    %37 = vector.shape_cast %36 : vector<1x384x128xbf16> to vector<384x128xbf16>
    %cst_41 = arith.constant dense<0.000000e+00> : vector<120x128xf32>
    %38 = tpu.matmul %35, %37, %cst_41 {dimension_numbers = #tpu.dot_dimension_numbers<[1], [0], [0], [1], [0, 0, 1, 1], [], []>} : vector<120x384xbf16>, vector<384x128xbf16>, vector<120x128xf32> -> vector<120x128xf32>
    %c1 = arith.constant 1 : index
    %c0_42 = arith.constant 0 : index
    %39 = vector.load %arg9[%c1, %c0_42] : memref<144x384xbf16, #tpu.memory_space<vmem>>, vector<120x384xbf16>
    %c1_43 = arith.constant 1 : index
    %c0_44 = arith.constant 0 : index
    %c0_45 = arith.constant 0 : index
    %40 = vector.load %arg1[%c1_43, %c0_44, %c0_45] : memref<9x384x128xbf16, #tpu.memory_space<vmem>>, vector<1x384x128xbf16>
    %41 = vector.shape_cast %40 : vector<1x384x128xbf16> to vector<384x128xbf16>
    %cst_46 = arith.constant dense<0.000000e+00> : vector<120x128xf32>
    %42 = tpu.matmul %39, %41, %cst_46 {dimension_numbers = #tpu.dot_dimension_numbers<[1], [0], [0], [1], [0, 0, 1, 1], [], []>} : vector<120x384xbf16>, vector<384x128xbf16>, vector<120x128xf32> -> vector<120x128xf32>
    %43 = arith.addf %38, %42 : vector<120x128xf32>
    %c2 = arith.constant 2 : index
    %c0_47 = arith.constant 0 : index
    %44 = vector.load %arg9[%c2, %c0_47] : memref<144x384xbf16, #tpu.memory_space<vmem>>, vector<120x384xbf16>
    %c2_48 = arith.constant 2 : index
    %c0_49 = arith.constant 0 : index
    %c0_50 = arith.constant 0 : index
    %45 = vector.load %arg1[%c2_48, %c0_49, %c0_50] : memref<9x384x128xbf16, #tpu.memory_space<vmem>>, vector<1x384x128xbf16>
    %46 = vector.shape_cast %45 : vector<1x384x128xbf16> to vector<384x128xbf16>
    %cst_51 = arith.constant dense<0.000000e+00> : vector<120x128xf32>
    %47 = tpu.matmul %44, %46, %cst_51 {dimension_numbers = #tpu.dot_dimension_numbers<[1], [0], [0], [1], [0, 0, 1, 1], [], []>} : vector<120x384xbf16>, vector<384x128xbf16>, vector<120x128xf32> -> vector<120x128xf32>
    %48 = arith.addf %43, %47 : vector<120x128xf32>
    %c10 = arith.constant 10 : index
    %c0_52 = arith.constant 0 : index
    %49 = vector.load %arg9[%c10, %c0_52] : memref<144x384xbf16, #tpu.memory_space<vmem>>, vector<120x384xbf16>
    %c3 = arith.constant 3 : index
    %c0_53 = arith.constant 0 : index
    %c0_54 = arith.constant 0 : index
    %50 = vector.load %arg1[%c3, %c0_53, %c0_54] : memref<9x384x128xbf16, #tpu.memory_space<vmem>>, vector<1x384x128xbf16>
    %51 = vector.shape_cast %50 : vector<1x384x128xbf16> to vector<384x128xbf16>
    %cst_55 = arith.constant dense<0.000000e+00> : vector<120x128xf32>
    %52 = tpu.matmul %49, %51, %cst_55 {dimension_numbers = #tpu.dot_dimension_numbers<[1], [0], [0], [1], [0, 0, 1, 1], [], []>} : vector<120x384xbf16>, vector<384x128xbf16>, vector<120x128xf32> -> vector<120x128xf32>
    %53 = arith.addf %48, %52 : vector<120x128xf32>
    %c11_56 = arith.constant 11 : index
    %c0_57 = arith.constant 0 : index
    %54 = vector.load %arg9[%c11_56, %c0_57] : memref<144x384xbf16, #tpu.memory_space<vmem>>, vector<120x384xbf16>
    %c4 = arith.constant 4 : index
    %c0_58 = arith.constant 0 : index
    %c0_59 = arith.constant 0 : index
    %55 = vector.load %arg1[%c4, %c0_58, %c0_59] : memref<9x384x128xbf16, #tpu.memory_space<vmem>>, vector<1x384x128xbf16>
    %56 = vector.shape_cast %55 : vector<1x384x128xbf16> to vector<384x128xbf16>
    %cst_60 = arith.constant dense<0.000000e+00> : vector<120x128xf32>
    %57 = tpu.matmul %54, %56, %cst_60 {dimension_numbers = #tpu.dot_dimension_numbers<[1], [0], [0], [1], [0, 0, 1, 1], [], []>} : vector<120x384xbf16>, vector<384x128xbf16>, vector<120x128xf32> -> vector<120x128xf32>
    %58 = arith.addf %53, %57 : vector<120x128xf32>
    %c12 = arith.constant 12 : index
    %c0_61 = arith.constant 0 : index
    %59 = vector.load %arg9[%c12, %c0_61] : memref<144x384xbf16, #tpu.memory_space<vmem>>, vector<120x384xbf16>
    %c5 = arith.constant 5 : index
    %c0_62 = arith.constant 0 : index
    %c0_63 = arith.constant 0 : index
    %60 = vector.load %arg1[%c5, %c0_62, %c0_63] : memref<9x384x128xbf16, #tpu.memory_space<vmem>>, vector<1x384x128xbf16>
    %61 = vector.shape_cast %60 : vector<1x384x128xbf16> to vector<384x128xbf16>
    %cst_64 = arith.constant dense<0.000000e+00> : vector<120x128xf32>
    %62 = tpu.matmul %59, %61, %cst_64 {dimension_numbers = #tpu.dot_dimension_numbers<[1], [0], [0], [1], [0, 0, 1, 1], [], []>} : vector<120x384xbf16>, vector<384x128xbf16>, vector<120x128xf32> -> vector<120x128xf32>
    %63 = arith.addf %58, %62 : vector<120x128xf32>
    %c20 = arith.constant 20 : index
    %c0_65 = arith.constant 0 : index
    %64 = vector.load %arg9[%c20, %c0_65] : memref<144x384xbf16, #tpu.memory_space<vmem>>, vector<120x384xbf16>
    %c6 = arith.constant 6 : index
    %c0_66 = arith.constant 0 : index
    %c0_67 = arith.constant 0 : index
    %65 = vector.load %arg1[%c6, %c0_66, %c0_67] : memref<9x384x128xbf16, #tpu.memory_space<vmem>>, vector<1x384x128xbf16>
    %66 = vector.shape_cast %65 : vector<1x384x128xbf16> to vector<384x128xbf16>
    %cst_68 = arith.constant dense<0.000000e+00> : vector<120x128xf32>
    %67 = tpu.matmul %64, %66, %cst_68 {dimension_numbers = #tpu.dot_dimension_numbers<[1], [0], [0], [1], [0, 0, 1, 1], [], []>} : vector<120x384xbf16>, vector<384x128xbf16>, vector<120x128xf32> -> vector<120x128xf32>
    %68 = arith.addf %63, %67 : vector<120x128xf32>
    %c21_69 = arith.constant 21 : index
    %c0_70 = arith.constant 0 : index
    %69 = vector.load %arg9[%c21_69, %c0_70] : memref<144x384xbf16, #tpu.memory_space<vmem>>, vector<120x384xbf16>
    %c7 = arith.constant 7 : index
    %c0_71 = arith.constant 0 : index
    %c0_72 = arith.constant 0 : index
    %70 = vector.load %arg1[%c7, %c0_71, %c0_72] : memref<9x384x128xbf16, #tpu.memory_space<vmem>>, vector<1x384x128xbf16>
    %71 = vector.shape_cast %70 : vector<1x384x128xbf16> to vector<384x128xbf16>
    %cst_73 = arith.constant dense<0.000000e+00> : vector<120x128xf32>
    %72 = tpu.matmul %69, %71, %cst_73 {dimension_numbers = #tpu.dot_dimension_numbers<[1], [0], [0], [1], [0, 0, 1, 1], [], []>} : vector<120x384xbf16>, vector<384x128xbf16>, vector<120x128xf32> -> vector<120x128xf32>
    %73 = arith.addf %68, %72 : vector<120x128xf32>
    %c22 = arith.constant 22 : index
    %c0_74 = arith.constant 0 : index
    %74 = vector.load %arg9[%c22, %c0_74] : memref<144x384xbf16, #tpu.memory_space<vmem>>, vector<120x384xbf16>
    %c8_75 = arith.constant 8 : index
    %c0_76 = arith.constant 0 : index
    %c0_77 = arith.constant 0 : index
    %75 = vector.load %arg1[%c8_75, %c0_76, %c0_77] : memref<9x384x128xbf16, #tpu.memory_space<vmem>>, vector<1x384x128xbf16>
    %76 = vector.shape_cast %75 : vector<1x384x128xbf16> to vector<384x128xbf16>
    %cst_78 = arith.constant dense<0.000000e+00> : vector<120x128xf32>
    %77 = tpu.matmul %74, %76, %cst_78 {dimension_numbers = #tpu.dot_dimension_numbers<[1], [0], [0], [1], [0, 0, 1, 1], [], []>} : vector<120x384xbf16>, vector<384x128xbf16>, vector<120x128xf32> -> vector<120x128xf32>
    %78 = arith.addf %73, %77 : vector<120x128xf32>
    %c0_79 = arith.constant 0 : index
    %c0_80 = arith.constant 0 : index
    %79 = vector.load %arg2[%c0_79, %c0_80] : memref<1x128xf32, #tpu.memory_space<vmem>>, vector<1x128xf32>
    %c0_81 = arith.constant 0 : index
    %c0_82 = arith.constant 0 : index
    %80 = vector.load %arg3[%c0_81, %c0_82] : memref<1x128xf32, #tpu.memory_space<vmem>>, vector<1x128xf32>
    %81 = vector.broadcast %0 : vector<120x1xf32> to vector<120x128xf32>
    %82 = arith.mulf %78, %81 : vector<120x128xf32>
    %cst_83 = arith.constant dense<0.000000e+00> : vector<128xf32>
    %83 = vector.multi_reduction <add>, %82, %cst_83 [0] : vector<120x128xf32> to vector<128xf32>
    %84 = vector.shape_cast %83 : vector<128xf32> to vector<1x128xf32>
    %c64_i32 = arith.constant 64 : i32
    %85 = tpu.dynamic_rotate %84 by %c64_i32 dim 1 : vector<1x128xf32>, i32 -> vector<1x128xf32>
    %86 = arith.addf %84, %85 : vector<1x128xf32>
    %c32_i32 = arith.constant 32 : i32
    %87 = tpu.dynamic_rotate %86 by %c32_i32 dim 1 : vector<1x128xf32>, i32 -> vector<1x128xf32>
    %88 = arith.addf %86, %87 : vector<1x128xf32>
    %c16_i32 = arith.constant 16 : i32
    %89 = tpu.dynamic_rotate %88 by %c16_i32 dim 1 : vector<1x128xf32>, i32 -> vector<1x128xf32>
    %90 = arith.addf %88, %89 : vector<1x128xf32>
    %c8_i32 = arith.constant 8 : i32
    %91 = tpu.dynamic_rotate %90 by %c8_i32 dim 1 : vector<1x128xf32>, i32 -> vector<1x128xf32>
    %92 = arith.addf %90, %91 : vector<1x128xf32>
    %cst_84 = arith.constant 9.765625E-4 : f32
    %93 = vector.broadcast %cst_84 : f32 to vector<1x128xf32>
    %94 = arith.mulf %92, %93 : vector<1x128xf32>
    %95 = vector.broadcast %94 : vector<1x128xf32> to vector<120x128xf32>
    %96 = arith.subf %78, %95 : vector<120x128xf32>
    %97 = arith.mulf %96, %96 : vector<120x128xf32>
    %98 = vector.broadcast %0 : vector<120x1xf32> to vector<120x128xf32>
    %99 = arith.mulf %97, %98 : vector<120x128xf32>
    %cst_85 = arith.constant dense<0.000000e+00> : vector<128xf32>
    %100 = vector.multi_reduction <add>, %99, %cst_85 [0] : vector<120x128xf32> to vector<128xf32>
    %101 = vector.shape_cast %100 : vector<128xf32> to vector<1x128xf32>
    %c64_i32_86 = arith.constant 64 : i32
    %102 = tpu.dynamic_rotate %101 by %c64_i32_86 dim 1 : vector<1x128xf32>, i32 -> vector<1x128xf32>
    %103 = arith.addf %101, %102 : vector<1x128xf32>
    %c32_i32_87 = arith.constant 32 : i32
    %104 = tpu.dynamic_rotate %103 by %c32_i32_87 dim 1 : vector<1x128xf32>, i32 -> vector<1x128xf32>
    %105 = arith.addf %103, %104 : vector<1x128xf32>
    %c16_i32_88 = arith.constant 16 : i32
    %106 = tpu.dynamic_rotate %105 by %c16_i32_88 dim 1 : vector<1x128xf32>, i32 -> vector<1x128xf32>
    %107 = arith.addf %105, %106 : vector<1x128xf32>
    %c8_i32_89 = arith.constant 8 : i32
    %108 = tpu.dynamic_rotate %107 by %c8_i32_89 dim 1 : vector<1x128xf32>, i32 -> vector<1x128xf32>
    %109 = arith.addf %107, %108 : vector<1x128xf32>
    %cst_90 = arith.constant 9.765625E-4 : f32
    %110 = vector.broadcast %cst_90 : f32 to vector<1x128xf32>
    %111 = arith.mulf %109, %110 : vector<1x128xf32>
    %cst_91 = arith.constant 9.99999974E-6 : f32
    %112 = vector.broadcast %cst_91 : f32 to vector<1x128xf32>
    %113 = arith.addf %111, %112 : vector<1x128xf32>
    %114 = math.rsqrt %113 : vector<1x128xf32>
    %115 = arith.mulf %79, %114 : vector<1x128xf32>
    %116 = vector.broadcast %115 : vector<1x128xf32> to vector<120x128xf32>
    %117 = arith.mulf %96, %116 : vector<120x128xf32>
    %118 = vector.broadcast %80 : vector<1x128xf32> to vector<120x128xf32>
    %119 = arith.addf %117, %118 : vector<120x128xf32>
    %cst_92 = arith.constant 0.000000e+00 : f32
    %120 = vector.broadcast %cst_92 : f32 to vector<120x128xf32>
    %121 = arith.maximumf %119, %120 : vector<120x128xf32>
    %cst_93 = arith.constant 0.000000e+00 : bf16
    %122 = vector.broadcast %cst_93 : bf16 to vector<11x128xbf16>
    %c0_94 = arith.constant 0 : index
    %c0_95 = arith.constant 0 : index
    %123 = vector.load %arg10[%c0_94, %c0_95] : memref<144x128xbf16, #tpu.memory_space<vmem>>, vector<11x128xbf16>
    tpu.vector_store %arg10[%c0_94, %c0_95], %122 {strides = array<i32>} : memref<144x128xbf16, #tpu.memory_space<vmem>>, vector<11x128xbf16>,
    %124 = vector.extract_strided_slice %121 {offsets = [0, 0], sizes = [8, 128], strides = [1, 1]} : vector<120x128xf32> to vector<8x128xf32>
    %125 = arith.truncf %124 : vector<8x128xf32> to vector<8x128xbf16>
    %c11_96 = arith.constant 11 : index
    %c0_97 = arith.constant 0 : index
    %126 = vector.load %arg10[%c11_96, %c0_97] : memref<144x128xbf16, #tpu.memory_space<vmem>>, vector<8x128xbf16>
    tpu.vector_store %arg10[%c11_96, %c0_97], %125 {strides = array<i32>} : memref<144x128xbf16, #tpu.memory_space<vmem>>, vector<8x128xbf16>,
    %cst_98 = arith.constant 0.000000e+00 : bf16
    %127 = vector.broadcast %cst_98 : bf16 to vector<2x128xbf16>
    %c19_99 = arith.constant 19 : index
    %c0_100 = arith.constant 0 : index
    %128 = vector.load %arg10[%c19_99, %c0_100] : memref<144x128xbf16, #tpu.memory_space<vmem>>, vector<2x128xbf16>
    tpu.vector_store %arg10[%c19_99, %c0_100], %127 {strides = array<i32>} : memref<144x128xbf16, #tpu.memory_space<vmem>>, vector<2x128xbf16>,
    %129 = vector.extract_strided_slice %121 {offsets = [10, 0], sizes = [8, 128], strides = [1, 1]} : vector<120x128xf32> to vector<8x128xf32>
    %130 = arith.truncf %129 : vector<8x128xf32> to vector<8x128xbf16>
    %c21_101 = arith.constant 21 : index
    %c0_102 = arith.constant 0 : index
    %131 = vector.load %arg10[%c21_101, %c0_102] : memref<144x128xbf16, #tpu.memory_space<vmem>>, vector<8x128xbf16>
    tpu.vector_store %arg10[%c21_101, %c0_102], %130 {strides = array<i32>} : memref<144x128xbf16, #tpu.memory_space<vmem>>, vector<8x128xbf16>,
    %cst_103 = arith.constant 0.000000e+00 : bf16
    %132 = vector.broadcast %cst_103 : bf16 to vector<2x128xbf16>
    %c29_104 = arith.constant 29 : index
    %c0_105 = arith.constant 0 : index
    %133 = vector.load %arg10[%c29_104, %c0_105] : memref<144x128xbf16, #tpu.memory_space<vmem>>, vector<2x128xbf16>
    tpu.vector_store %arg10[%c29_104, %c0_105], %132 {strides = array<i32>} : memref<144x128xbf16, #tpu.memory_space<vmem>>, vector<2x128xbf16>,
    %134 = vector.extract_strided_slice %121 {offsets = [20, 0], sizes = [8, 128], strides = [1, 1]} : vector<120x128xf32> to vector<8x128xf32>
    %135 = arith.truncf %134 : vector<8x128xf32> to vector<8x128xbf16>
    %c31_106 = arith.constant 31 : index
    %c0_107 = arith.constant 0 : index
    %136 = vector.load %arg10[%c31_106, %c0_107] : memref<144x128xbf16, #tpu.memory_space<vmem>>, vector<8x128xbf16>
    tpu.vector_store %arg10[%c31_106, %c0_107], %135 {strides = array<i32>} : memref<144x128xbf16, #tpu.memory_space<vmem>>, vector<8x128xbf16>,
    %cst_108 = arith.constant 0.000000e+00 : bf16
    %137 = vector.broadcast %cst_108 : bf16 to vector<2x128xbf16>
    %c39_109 = arith.constant 39 : index
    %c0_110 = arith.constant 0 : index
    %138 = vector.load %arg10[%c39_109, %c0_110] : memref<144x128xbf16, #tpu.memory_space<vmem>>, vector<2x128xbf16>
    tpu.vector_store %arg10[%c39_109, %c0_110], %137 {strides = array<i32>} : memref<144x128xbf16, #tpu.memory_space<vmem>>, vector<2x128xbf16>,
    %139 = vector.extract_strided_slice %121 {offsets = [30, 0], sizes = [8, 128], strides = [1, 1]} : vector<120x128xf32> to vector<8x128xf32>
    %140 = arith.truncf %139 : vector<8x128xf32> to vector<8x128xbf16>
    %c41_111 = arith.constant 41 : index
    %c0_112 = arith.constant 0 : index
    %141 = vector.load %arg10[%c41_111, %c0_112] : memref<144x128xbf16, #tpu.memory_space<vmem>>, vector<8x128xbf16>
    tpu.vector_store %arg10[%c41_111, %c0_112], %140 {strides = array<i32>} : memref<144x128xbf16, #tpu.memory_space<vmem>>, vector<8x128xbf16>,
    %cst_113 = arith.constant 0.000000e+00 : bf16
    %142 = vector.broadcast %cst_113 : bf16 to vector<22x128xbf16>
    %c49_114 = arith.constant 49 : index
    %c0_115 = arith.constant 0 : index
    %143 = vector.load %arg10[%c49_114, %c0_115] : memref<144x128xbf16, #tpu.memory_space<vmem>>, vector<22x128xbf16>
    tpu.vector_store %arg10[%c49_114, %c0_115], %142 {strides = array<i32>} : memref<144x128xbf16, #tpu.memory_space<vmem>>, vector<22x128xbf16>,
    %144 = vector.extract_strided_slice %121 {offsets = [60, 0], sizes = [8, 128], strides = [1, 1]} : vector<120x128xf32> to vector<8x128xf32>
    %145 = arith.truncf %144 : vector<8x128xf32> to vector<8x128xbf16>
    %c71_116 = arith.constant 71 : index
    %c0_117 = arith.constant 0 : index
    %146 = vector.load %arg10[%c71_116, %c0_117] : memref<144x128xbf16, #tpu.memory_space<vmem>>, vector<8x128xbf16>
    tpu.vector_store %arg10[%c71_116, %c0_117], %145 {strides = array<i32>} : memref<144x128xbf16, #tpu.memory_space<vmem>>, vector<8x128xbf16>,
    %cst_118 = arith.constant 0.000000e+00 : bf16
    %147 = vector.broadcast %cst_118 : bf16 to vector<2x128xbf16>
    %c79_119 = arith.constant 79 : index
    %c0_120 = arith.constant 0 : index
    %148 = vector.load %arg10[%c79_119, %c0_120] : memref<144x128xbf16, #tpu.memory_space<vmem>>, vector<2x128xbf16>
    tpu.vector_store %arg10[%c79_119, %c0_120], %147 {strides = array<i32>} : memref<144x128xbf16, #tpu.memory_space<vmem>>, vector<2x128xbf16>,
    %149 = vector.extract_strided_slice %121 {offsets = [70, 0], sizes = [8, 128], strides = [1, 1]} : vector<120x128xf32> to vector<8x128xf32>
    %150 = arith.truncf %149 : vector<8x128xf32> to vector<8x128xbf16>
    %c81_121 = arith.constant 81 : index
    %c0_122 = arith.constant 0 : index
    %151 = vector.load %arg10[%c81_121, %c0_122] : memref<144x128xbf16, #tpu.memory_space<vmem>>, vector<8x128xbf16>
    tpu.vector_store %arg10[%c81_121, %c0_122], %150 {strides = array<i32>} : memref<144x128xbf16, #tpu.memory_space<vmem>>, vector<8x128xbf16>,
    %cst_123 = arith.constant 0.000000e+00 : bf16
    %152 = vector.broadcast %cst_123 : bf16 to vector<2x128xbf16>
    %c89_124 = arith.constant 89 : index
    %c0_125 = arith.constant 0 : index
    %153 = vector.load %arg10[%c89_124, %c0_125] : memref<144x128xbf16, #tpu.memory_space<vmem>>, vector<2x128xbf16>
    tpu.vector_store %arg10[%c89_124, %c0_125], %152 {strides = array<i32>} : memref<144x128xbf16, #tpu.memory_space<vmem>>, vector<2x128xbf16>,
    %154 = vector.extract_strided_slice %121 {offsets = [80, 0], sizes = [8, 128], strides = [1, 1]} : vector<120x128xf32> to vector<8x128xf32>
    %155 = arith.truncf %154 : vector<8x128xf32> to vector<8x128xbf16>
    %c91_126 = arith.constant 91 : index
    %c0_127 = arith.constant 0 : index
    %156 = vector.load %arg10[%c91_126, %c0_127] : memref<144x128xbf16, #tpu.memory_space<vmem>>, vector<8x128xbf16>
    tpu.vector_store %arg10[%c91_126, %c0_127], %155 {strides = array<i32>} : memref<144x128xbf16, #tpu.memory_space<vmem>>, vector<8x128xbf16>,
    %cst_128 = arith.constant 0.000000e+00 : bf16
    %157 = vector.broadcast %cst_128 : bf16 to vector<2x128xbf16>
    %c99_129 = arith.constant 99 : index
    %c0_130 = arith.constant 0 : index
    %158 = vector.load %arg10[%c99_129, %c0_130] : memref<144x128xbf16, #tpu.memory_space<vmem>>, vector<2x128xbf16>
    tpu.vector_store %arg10[%c99_129, %c0_130], %157 {strides = array<i32>} : memref<144x128xbf16, #tpu.memory_space<vmem>>, vector<2x128xbf16>,
    %159 = vector.extract_strided_slice %121 {offsets = [90, 0], sizes = [8, 128], strides = [1, 1]} : vector<120x128xf32> to vector<8x128xf32>
    %160 = arith.truncf %159 : vector<8x128xf32> to vector<8x128xbf16>
    %c101_131 = arith.constant 101 : index
    %c0_132 = arith.constant 0 : index
    %161 = vector.load %arg10[%c101_131, %c0_132] : memref<144x128xbf16, #tpu.memory_space<vmem>>, vector<8x128xbf16>
    tpu.vector_store %arg10[%c101_131, %c0_132], %160 {strides = array<i32>} : memref<144x128xbf16, #tpu.memory_space<vmem>>, vector<8x128xbf16>,
    %cst_133 = arith.constant 0.000000e+00 : bf16
    %162 = vector.broadcast %cst_133 : bf16 to vector<35x128xbf16>
    %c109_134 = arith.constant 109 : index
    %c0_135 = arith.constant 0 : index
    %163 = vector.load %arg10[%c109_134, %c0_135] : memref<144x128xbf16, #tpu.memory_space<vmem>>, vector<35x128xbf16>
    tpu.vector_store %arg10[%c109_134, %c0_135], %162 {strides = array<i32>} : memref<144x128xbf16, #tpu.memory_space<vmem>>, vector<35x128xbf16>,
    %c0_136 = arith.constant 0 : index
    %c0_137 = arith.constant 0 : index
    %164 = vector.load %arg10[%c0_136, %c0_137] : memref<144x128xbf16, #tpu.memory_space<vmem>>, vector<120x128xbf16>
    %c0_138 = arith.constant 0 : index
    %c0_139 = arith.constant 0 : index
    %c0_140 = arith.constant 0 : index
    %165 = vector.load %arg4[%c0_138, %c0_139, %c0_140] : memref<9x128x128xbf16, #tpu.memory_space<vmem>>, vector<1x128x128xbf16>
    %166 = vector.shape_cast %165 : vector<1x128x128xbf16> to vector<128x128xbf16>
    %cst_141 = arith.constant dense<0.000000e+00> : vector<120x128xf32>
    %167 = tpu.matmul %164, %166, %cst_141 {dimension_numbers = #tpu.dot_dimension_numbers<[1], [0], [0], [1], [0, 0, 1, 1], [], []>} : vector<120x128xbf16>, vector<128x128xbf16>, vector<120x128xf32> -> vector<120x128xf32>
    %c1_142 = arith.constant 1 : index
    %c0_143 = arith.constant 0 : index
    %168 = vector.load %arg10[%c1_142, %c0_143] : memref<144x128xbf16, #tpu.memory_space<vmem>>, vector<120x128xbf16>
    %c1_144 = arith.constant 1 : index
    %c0_145 = arith.constant 0 : index
    %c0_146 = arith.constant 0 : index
    %169 = vector.load %arg4[%c1_144, %c0_145, %c0_146] : memref<9x128x128xbf16, #tpu.memory_space<vmem>>, vector<1x128x128xbf16>
    %170 = vector.shape_cast %169 : vector<1x128x128xbf16> to vector<128x128xbf16>
    %cst_147 = arith.constant dense<0.000000e+00> : vector<120x128xf32>
    %171 = tpu.matmul %168, %170, %cst_147 {dimension_numbers = #tpu.dot_dimension_numbers<[1], [0], [0], [1], [0, 0, 1, 1], [], []>} : vector<120x128xbf16>, vector<128x128xbf16>, vector<120x128xf32> -> vector<120x128xf32>
    %172 = arith.addf %167, %171 : vector<120x128xf32>
    %c2_148 = arith.constant 2 : index
    %c0_149 = arith.constant 0 : index
    %173 = vector.load %arg10[%c2_148, %c0_149] : memref<144x128xbf16, #tpu.memory_space<vmem>>, vector<120x128xbf16>
    %c2_150 = arith.constant 2 : index
    %c0_151 = arith.constant 0 : index
    %c0_152 = arith.constant 0 : index
    %174 = vector.load %arg4[%c2_150, %c0_151, %c0_152] : memref<9x128x128xbf16, #tpu.memory_space<vmem>>, vector<1x128x128xbf16>
    %175 = vector.shape_cast %174 : vector<1x128x128xbf16> to vector<128x128xbf16>
    %cst_153 = arith.constant dense<0.000000e+00> : vector<120x128xf32>
    %176 = tpu.matmul %173, %175, %cst_153 {dimension_numbers = #tpu.dot_dimension_numbers<[1], [0], [0], [1], [0, 0, 1, 1], [], []>} : vector<120x128xbf16>, vector<128x128xbf16>, vector<120x128xf32> -> vector<120x128xf32>
    %177 = arith.addf %172, %176 : vector<120x128xf32>
    %c10_154 = arith.constant 10 : index
    %c0_155 = arith.constant 0 : index
    %178 = vector.load %arg10[%c10_154, %c0_155] : memref<144x128xbf16, #tpu.memory_space<vmem>>, vector<120x128xbf16>
    %c3_156 = arith.constant 3 : index
    %c0_157 = arith.constant 0 : index
    %c0_158 = arith.constant 0 : index
    %179 = vector.load %arg4[%c3_156, %c0_157, %c0_158] : memref<9x128x128xbf16, #tpu.memory_space<vmem>>, vector<1x128x128xbf16>
    %180 = vector.shape_cast %179 : vector<1x128x128xbf16> to vector<128x128xbf16>
    %cst_159 = arith.constant dense<0.000000e+00> : vector<120x128xf32>
    %181 = tpu.matmul %178, %180, %cst_159 {dimension_numbers = #tpu.dot_dimension_numbers<[1], [0], [0], [1], [0, 0, 1, 1], [], []>} : vector<120x128xbf16>, vector<128x128xbf16>, vector<120x128xf32> -> vector<120x128xf32>
    %182 = arith.addf %177, %181 : vector<120x128xf32>
    %c11_160 = arith.constant 11 : index
    %c0_161 = arith.constant 0 : index
    %183 = vector.load %arg10[%c11_160, %c0_161] : memref<144x128xbf16, #tpu.memory_space<vmem>>, vector<120x128xbf16>
    %c4_162 = arith.constant 4 : index
    %c0_163 = arith.constant 0 : index
    %c0_164 = arith.constant 0 : index
    %184 = vector.load %arg4[%c4_162, %c0_163, %c0_164] : memref<9x128x128xbf16, #tpu.memory_space<vmem>>, vector<1x128x128xbf16>
    %185 = vector.shape_cast %184 : vector<1x128x128xbf16> to vector<128x128xbf16>
    %cst_165 = arith.constant dense<0.000000e+00> : vector<120x128xf32>
    %186 = tpu.matmul %183, %185, %cst_165 {dimension_numbers = #tpu.dot_dimension_numbers<[1], [0], [0], [1], [0, 0, 1, 1], [], []>} : vector<120x128xbf16>, vector<128x128xbf16>, vector<120x128xf32> -> vector<120x128xf32>
    %187 = arith.addf %182, %186 : vector<120x128xf32>
    %c12_166 = arith.constant 12 : index
    %c0_167 = arith.constant 0 : index
    %188 = vector.load %arg10[%c12_166, %c0_167] : memref<144x128xbf16, #tpu.memory_space<vmem>>, vector<120x128xbf16>
    %c5_168 = arith.constant 5 : index
    %c0_169 = arith.constant 0 : index
    %c0_170 = arith.constant 0 : index
    %189 = vector.load %arg4[%c5_168, %c0_169, %c0_170] : memref<9x128x128xbf16, #tpu.memory_space<vmem>>, vector<1x128x128xbf16>
    %190 = vector.shape_cast %189 : vector<1x128x128xbf16> to vector<128x128xbf16>
    %cst_171 = arith.constant dense<0.000000e+00> : vector<120x128xf32>
    %191 = tpu.matmul %188, %190, %cst_171 {dimension_numbers = #tpu.dot_dimension_numbers<[1], [0], [0], [1], [0, 0, 1, 1], [], []>} : vector<120x128xbf16>, vector<128x128xbf16>, vector<120x128xf32> -> vector<120x128xf32>
    %192 = arith.addf %187, %191 : vector<120x128xf32>
    %c20_172 = arith.constant 20 : index
    %c0_173 = arith.constant 0 : index
    %193 = vector.load %arg10[%c20_172, %c0_173] : memref<144x128xbf16, #tpu.memory_space<vmem>>, vector<120x128xbf16>
    %c6_174 = arith.constant 6 : index
    %c0_175 = arith.constant 0 : index
    %c0_176 = arith.constant 0 : index
    %194 = vector.load %arg4[%c6_174, %c0_175, %c0_176] : memref<9x128x128xbf16, #tpu.memory_space<vmem>>, vector<1x128x128xbf16>
    %195 = vector.shape_cast %194 : vector<1x128x128xbf16> to vector<128x128xbf16>
    %cst_177 = arith.constant dense<0.000000e+00> : vector<120x128xf32>
    %196 = tpu.matmul %193, %195, %cst_177 {dimension_numbers = #tpu.dot_dimension_numbers<[1], [0], [0], [1], [0, 0, 1, 1], [], []>} : vector<120x128xbf16>, vector<128x128xbf16>, vector<120x128xf32> -> vector<120x128xf32>
    %197 = arith.addf %192, %196 : vector<120x128xf32>
    %c21_178 = arith.constant 21 : index
    %c0_179 = arith.constant 0 : index
    %198 = vector.load %arg10[%c21_178, %c0_179] : memref<144x128xbf16, #tpu.memory_space<vmem>>, vector<120x128xbf16>
    %c7_180 = arith.constant 7 : index
    %c0_181 = arith.constant 0 : index
    %c0_182 = arith.constant 0 : index
    %199 = vector.load %arg4[%c7_180, %c0_181, %c0_182] : memref<9x128x128xbf16, #tpu.memory_space<vmem>>, vector<1x128x128xbf16>
    %200 = vector.shape_cast %199 : vector<1x128x128xbf16> to vector<128x128xbf16>
    %cst_183 = arith.constant dense<0.000000e+00> : vector<120x128xf32>
    %201 = tpu.matmul %198, %200, %cst_183 {dimension_numbers = #tpu.dot_dimension_numbers<[1], [0], [0], [1], [0, 0, 1, 1], [], []>} : vector<120x128xbf16>, vector<128x128xbf16>, vector<120x128xf32> -> vector<120x128xf32>
    %202 = arith.addf %197, %201 : vector<120x128xf32>
    %c22_184 = arith.constant 22 : index
    %c0_185 = arith.constant 0 : index
    %203 = vector.load %arg10[%c22_184, %c0_185] : memref<144x128xbf16, #tpu.memory_space<vmem>>, vector<120x128xbf16>
    %c8_186 = arith.constant 8 : index
    %c0_187 = arith.constant 0 : index
    %c0_188 = arith.constant 0 : index
    %204 = vector.load %arg4[%c8_186, %c0_187, %c0_188] : memref<9x128x128xbf16, #tpu.memory_space<vmem>>, vector<1x128x128xbf16>
    %205 = vector.shape_cast %204 : vector<1x128x128xbf16> to vector<128x128xbf16>
    %cst_189 = arith.constant dense<0.000000e+00> : vector<120x128xf32>
    %206 = tpu.matmul %203, %205, %cst_189 {dimension_numbers = #tpu.dot_dimension_numbers<[1], [0], [0], [1], [0, 0, 1, 1], [], []>} : vector<120x128xbf16>, vector<128x128xbf16>, vector<120x128xf32> -> vector<120x128xf32>
    %207 = arith.addf %202, %206 : vector<120x128xf32>
    %c0_190 = arith.constant 0 : index
    %c0_191 = arith.constant 0 : index
    %208 = vector.load %arg5[%c0_190, %c0_191] : memref<1x128xf32, #tpu.memory_space<vmem>>, vector<1x128xf32>
    %c0_192 = arith.constant 0 : index
    %c0_193 = arith.constant 0 : index
    %209 = vector.load %arg6[%c0_192, %c0_193] : memref<1x128xf32, #tpu.memory_space<vmem>>, vector<1x128xf32>
    %210 = vector.broadcast %0 : vector<120x1xf32> to vector<120x128xf32>
    %211 = arith.mulf %207, %210 : vector<120x128xf32>
    %cst_194 = arith.constant dense<0.000000e+00> : vector<128xf32>
    %212 = vector.multi_reduction <add>, %211, %cst_194 [0] : vector<120x128xf32> to vector<128xf32>
    %213 = vector.shape_cast %212 : vector<128xf32> to vector<1x128xf32>
    %c64_i32_195 = arith.constant 64 : i32
    %214 = tpu.dynamic_rotate %213 by %c64_i32_195 dim 1 : vector<1x128xf32>, i32 -> vector<1x128xf32>
    %215 = arith.addf %213, %214 : vector<1x128xf32>
    %c32_i32_196 = arith.constant 32 : i32
    %216 = tpu.dynamic_rotate %215 by %c32_i32_196 dim 1 : vector<1x128xf32>, i32 -> vector<1x128xf32>
    %217 = arith.addf %215, %216 : vector<1x128xf32>
    %c16_i32_197 = arith.constant 16 : i32
    %218 = tpu.dynamic_rotate %217 by %c16_i32_197 dim 1 : vector<1x128xf32>, i32 -> vector<1x128xf32>
    %219 = arith.addf %217, %218 : vector<1x128xf32>
    %c8_i32_198 = arith.constant 8 : i32
    %220 = tpu.dynamic_rotate %219 by %c8_i32_198 dim 1 : vector<1x128xf32>, i32 -> vector<1x128xf32>
    %221 = arith.addf %219, %220 : vector<1x128xf32>
    %cst_199 = arith.constant 9.765625E-4 : f32
    %222 = vector.broadcast %cst_199 : f32 to vector<1x128xf32>
    %223 = arith.mulf %221, %222 : vector<1x128xf32>
    %224 = vector.broadcast %223 : vector<1x128xf32> to vector<120x128xf32>
    %225 = arith.subf %207, %224 : vector<120x128xf32>
    %226 = arith.mulf %225, %225 : vector<120x128xf32>
    %227 = vector.broadcast %0 : vector<120x1xf32> to vector<120x128xf32>
    %228 = arith.mulf %226, %227 : vector<120x128xf32>
    %cst_200 = arith.constant dense<0.000000e+00> : vector<128xf32>
    %229 = vector.multi_reduction <add>, %228, %cst_200 [0] : vector<120x128xf32> to vector<128xf32>
    %230 = vector.shape_cast %229 : vector<128xf32> to vector<1x128xf32>
    %c64_i32_201 = arith.constant 64 : i32
    %231 = tpu.dynamic_rotate %230 by %c64_i32_201 dim 1 : vector<1x128xf32>, i32 -> vector<1x128xf32>
    %232 = arith.addf %230, %231 : vector<1x128xf32>
    %c32_i32_202 = arith.constant 32 : i32
    %233 = tpu.dynamic_rotate %232 by %c32_i32_202 dim 1 : vector<1x128xf32>, i32 -> vector<1x128xf32>
    %234 = arith.addf %232, %233 : vector<1x128xf32>
    %c16_i32_203 = arith.constant 16 : i32
    %235 = tpu.dynamic_rotate %234 by %c16_i32_203 dim 1 : vector<1x128xf32>, i32 -> vector<1x128xf32>
    %236 = arith.addf %234, %235 : vector<1x128xf32>
    %c8_i32_204 = arith.constant 8 : i32
    %237 = tpu.dynamic_rotate %236 by %c8_i32_204 dim 1 : vector<1x128xf32>, i32 -> vector<1x128xf32>
    %238 = arith.addf %236, %237 : vector<1x128xf32>
    %cst_205 = arith.constant 9.765625E-4 : f32
    %239 = vector.broadcast %cst_205 : f32 to vector<1x128xf32>
    %240 = arith.mulf %238, %239 : vector<1x128xf32>
    %cst_206 = arith.constant 9.99999974E-6 : f32
    %241 = vector.broadcast %cst_206 : f32 to vector<1x128xf32>
    %242 = arith.addf %240, %241 : vector<1x128xf32>
    %243 = math.rsqrt %242 : vector<1x128xf32>
    %244 = arith.mulf %208, %243 : vector<1x128xf32>
    %245 = vector.broadcast %244 : vector<1x128xf32> to vector<120x128xf32>
    %246 = arith.mulf %225, %245 : vector<120x128xf32>
    %247 = vector.broadcast %209 : vector<1x128xf32> to vector<120x128xf32>
    %248 = arith.addf %246, %247 : vector<120x128xf32>
    %cst_207 = arith.constant 0.000000e+00 : f32
    %249 = vector.broadcast %cst_207 : f32 to vector<120x128xf32>
    %250 = arith.maximumf %248, %249 : vector<120x128xf32>
    %251 = vector.extract_strided_slice %250 {offsets = [0, 0], sizes = [8, 128], strides = [1, 1]} : vector<120x128xf32> to vector<8x128xf32>
    %c0_208 = arith.constant 0 : index
    %c0_209 = arith.constant 0 : index
    %252 = vector.load %arg8[%c0_208, %c0_209] : memref<64x128xf32, #tpu.memory_space<vmem>>, vector<8x128xf32>
    tpu.vector_store %arg8[%c0_208, %c0_209], %251 {strides = array<i32>} : memref<64x128xf32, #tpu.memory_space<vmem>>, vector<8x128xf32>,
    %253 = vector.extract_strided_slice %250 {offsets = [10, 0], sizes = [8, 128], strides = [1, 1]} : vector<120x128xf32> to vector<8x128xf32>
    %c8_210 = arith.constant 8 : index
    %c0_211 = arith.constant 0 : index
    %254 = vector.load %arg8[%c8_210, %c0_211] : memref<64x128xf32, #tpu.memory_space<vmem>>, vector<8x128xf32>
    tpu.vector_store %arg8[%c8_210, %c0_211], %253 {strides = array<i32>} : memref<64x128xf32, #tpu.memory_space<vmem>>, vector<8x128xf32>,
    %255 = vector.extract_strided_slice %250 {offsets = [20, 0], sizes = [8, 128], strides = [1, 1]} : vector<120x128xf32> to vector<8x128xf32>
    %c16_212 = arith.constant 16 : index
    %c0_213 = arith.constant 0 : index
    %256 = vector.load %arg8[%c16_212, %c0_213] : memref<64x128xf32, #tpu.memory_space<vmem>>, vector<8x128xf32>
    tpu.vector_store %arg8[%c16_212, %c0_213], %255 {strides = array<i32>} : memref<64x128xf32, #tpu.memory_space<vmem>>, vector<8x128xf32>,
    %257 = vector.extract_strided_slice %250 {offsets = [30, 0], sizes = [8, 128], strides = [1, 1]} : vector<120x128xf32> to vector<8x128xf32>
    %c24_214 = arith.constant 24 : index
    %c0_215 = arith.constant 0 : index
    %258 = vector.load %arg8[%c24_214, %c0_215] : memref<64x128xf32, #tpu.memory_space<vmem>>, vector<8x128xf32>
    tpu.vector_store %arg8[%c24_214, %c0_215], %257 {strides = array<i32>} : memref<64x128xf32, #tpu.memory_space<vmem>>, vector<8x128xf32>,
    %259 = vector.extract_strided_slice %250 {offsets = [60, 0], sizes = [8, 128], strides = [1, 1]} : vector<120x128xf32> to vector<8x128xf32>
    %c32_216 = arith.constant 32 : index
    %c0_217 = arith.constant 0 : index
    %260 = vector.load %arg8[%c32_216, %c0_217] : memref<64x128xf32, #tpu.memory_space<vmem>>, vector<8x128xf32>
    tpu.vector_store %arg8[%c32_216, %c0_217], %259 {strides = array<i32>} : memref<64x128xf32, #tpu.memory_space<vmem>>, vector<8x128xf32>,
    %261 = vector.extract_strided_slice %250 {offsets = [70, 0], sizes = [8, 128], strides = [1, 1]} : vector<120x128xf32> to vector<8x128xf32>
    %c40_218 = arith.constant 40 : index
    %c0_219 = arith.constant 0 : index
    %262 = vector.load %arg8[%c40_218, %c0_219] : memref<64x128xf32, #tpu.memory_space<vmem>>, vector<8x128xf32>
    tpu.vector_store %arg8[%c40_218, %c0_219], %261 {strides = array<i32>} : memref<64x128xf32, #tpu.memory_space<vmem>>, vector<8x128xf32>,
    %263 = vector.extract_strided_slice %250 {offsets = [80, 0], sizes = [8, 128], strides = [1, 1]} : vector<120x128xf32> to vector<8x128xf32>
    %c48_220 = arith.constant 48 : index
    %c0_221 = arith.constant 0 : index
    %264 = vector.load %arg8[%c48_220, %c0_221] : memref<64x128xf32, #tpu.memory_space<vmem>>, vector<8x128xf32>
    tpu.vector_store %arg8[%c48_220, %c0_221], %263 {strides = array<i32>} : memref<64x128xf32, #tpu.memory_space<vmem>>, vector<8x128xf32>,
    %265 = vector.extract_strided_slice %250 {offsets = [90, 0], sizes = [8, 128], strides = [1, 1]} : vector<120x128xf32> to vector<8x128xf32>
    %c56_222 = arith.constant 56 : index
    %c0_223 = arith.constant 0 : index
    %266 = vector.load %arg8[%c56_222, %c0_223] : memref<64x128xf32, #tpu.memory_space<vmem>>, vector<8x128xf32>
    tpu.vector_store %arg8[%c56_222, %c0_223], %265 {strides = array<i32>} : memref<64x128xf32, #tpu.memory_space<vmem>>, vector<8x128xf32>,
    return
  }
}

</mosaic_0001>

<llo_original>
// kernel: tpu_custom_call.1
$region0: #{tpu_custom_call.1}
  #allocation0 [shape = 'u32[]', space=smem, size = 0x4, offset = 0x4, fixed_abs, tag = 'smem constant byte address 0x4 - core index']
  #allocation1 [shape = 'u32[144,128]{1,0:T(1,128)}', space=vmem, size = 0x12000, scoped, tag = 'internal scratch']
  #allocation2 [shape = 'bf16[144,384]{1,0:T(16,128)(2,1)}', space=vmem, size = 0x1b000, scoped, tag = 'scratch operand']
  #allocation3 [shape = 'bf16[144,128]{1,0:T(16,128)(2,1)}', space=vmem, size = 0x9000, scoped, tag = 'scratch operand']
  %s0 = inlined_call_operand.vmem [shape: bf16[64,384], index: 0, kind: input, shape index: {}]
  %s1 = inlined_call_operand.hbm [shape: bf16[9,384,128], index: 1, kind: input, shape index: {}]
  %s2 = inlined_call_operand.vmem [shape: f32[1,128], index: 2, kind: input, shape index: {}]
  %s3 = inlined_call_operand.vmem [shape: f32[1,128], index: 3, kind: input, shape index: {}]
  %s4 = inlined_call_operand.hbm [shape: bf16[9,128,128], index: 4, kind: input, shape index: {}]
  %s5 = inlined_call_operand.vmem [shape: f32[1,128], index: 5, kind: input, shape index: {}]
  %s6 = inlined_call_operand.vmem [shape: f32[1,128], index: 6, kind: input, shape index: {}]
  %s7 = inlined_call_operand.vmem [shape: f32[120,1], index: 7, kind: input, shape index: {}]
  %s8 = inlined_call_operand.hbm [shape: f32[64,128], index: 8, kind: output, shape index: {}]
  %s9 = sld [smem:[#allocation0]]
  $region50: #{tpu_custom_call.1} parent=0
    _
  %s11 = ssub.s32 1, %s9
  %s12 = scalar_select 0, %s11, %s9
  $region1: #{tpu_custom_call.1} parent=0
    #allocation4 [shape = 'u8[884736]{0}', space=vmem, size = 0xd8000, scoped, tag = 'input window, operand 1, single buffered']
    #allocation5 [shape = 's32[1]{0}', space=sflag, size = 0x4, scoped, tag = 'scoped memory for tpu_custom_call.1']
    #allocation6 [shape = 's32[1]{0}', space=sflag, size = 0x4, scoped, tag = 'scoped memory for tpu_custom_call.1']
    #allocation7 [shape = 'u8[294912]{0}', space=vmem, size = 0x48000, scoped, tag = 'input window, operand 4, single buffered']
    #allocation8 [shape = 's32[1]{0}', space=sflag, size = 0x4, scoped, tag = 'scoped memory for tpu_custom_call.1']
    #allocation9 [shape = 'u8[32768]{0}', space=vmem, size = 0x8000, scoped, tag = 'output window, operand 0, single buffered']
    %13 = vsyncpa [#allocation5], 0
    %14 = vsyncpa [#allocation8], 0
    %15 = vsyncpa [#allocation6], 0
    // Predicated region
    $region2: #{tpu_custom_call.1} parent=1 // pred_check
      _
    $region3: #{tpu_custom_call.1} parent=1 // pred_check_branch
      %17 = sbr.rel (0) target = $region5
    $region4: #{tpu_custom_call.1} parent=1 // pred_region
      _
    $region5: #{tpu_custom_call.1} parent=1 // pred_fallthru
      _
    // Predicated region
    $region6: #{tpu_custom_call.1} parent=1 // pred_check
      _
    $region7: #{tpu_custom_call.1} parent=1 // pred_check_branch
      %19 = sbr.rel (0) target = $region9
    $region8: #{tpu_custom_call.1} parent=1 // pred_region
      %s21 = ssub.s32 27648, 27648
      %22 = vsyncadd [#allocation5], %s21
      %s23 = sshll.u32 [#allocation4], 4
      %s24 = int_to_ptr.vmem [resolvable:$true] %s23
      %29 = dma.hbm_to_vmem [thread:$0]  %s1, 27648, %s24, [#allocation5], 64, 64, 4
    $region9: #{tpu_custom_call.1} parent=1 // pred_fallthru
      _
    // Predicated region
    $region10: #{tpu_custom_call.1} parent=1 // pred_check
      _
    $region11: #{tpu_custom_call.1} parent=1 // pred_check_branch
      %31 = sbr.rel (0) target = $region13
    $region12: #{tpu_custom_call.1} parent=1 // pred_region
      _
    $region13: #{tpu_custom_call.1} parent=1 // pred_fallthru
      _
    // Predicated region
    $region14: #{tpu_custom_call.1} parent=1 // pred_check
      _
    $region15: #{tpu_custom_call.1} parent=1 // pred_check_branch
      %33 = sbr.rel (0) target = $region17
    $region16: #{tpu_custom_call.1} parent=1 // pred_region
      _
    $region17: #{tpu_custom_call.1} parent=1 // pred_fallthru
      _
    // Predicated region
    $region18: #{tpu_custom_call.1} parent=1 // pred_check
      _
    $region19: #{tpu_custom_call.1} parent=1 // pred_check_branch
      %35 = sbr.rel (0) target = $region21
    $region20: #{tpu_custom_call.1} parent=1 // pred_region
      %s37 = ssub.s32 9216, 9216
      %38 = vsyncadd [#allocation8], %s37
      %s39 = sshll.u32 [#allocation7], 4
      %s40 = int_to_ptr.vmem [resolvable:$true] %s39
      %45 = dma.hbm_to_vmem [thread:$0]  %s4, 9216, %s40, [#allocation8], 64, 64, 4
    $region21: #{tpu_custom_call.1} parent=1 // pred_fallthru
      _
    // Predicated region
    $region22: #{tpu_custom_call.1} parent=1 // pred_check
      _
    $region23: #{tpu_custom_call.1} parent=1 // pred_check_branch
      %47 = sbr.rel (0) target = $region25
    $region24: #{tpu_custom_call.1} parent=1 // pred_region
      _
    $region25: #{tpu_custom_call.1} parent=1 // pred_fallthru
      _
    // Predicated region
    $region26: #{tpu_custom_call.1} parent=1 // pred_check
      _
    $region27: #{tpu_custom_call.1} parent=1 // pred_check_branch
      %49 = sbr.rel (0) target = $region29
    $region28: #{tpu_custom_call.1} parent=1 // pred_region
      _
    $region29: #{tpu_custom_call.1} parent=1 // pred_fallthru
      _
    // Predicated region
    $region30: #{tpu_custom_call.1} parent=1 // pred_check
      _
    $region31: #{tpu_custom_call.1} parent=1 // pred_check_branch
      %51 = sbr.rel (0) target = $region33
    $region32: #{tpu_custom_call.1} parent=1 // pred_region
      _
    $region33: #{tpu_custom_call.1} parent=1 // pred_fallthru
      _
    // Predicated region
    $region34: #{tpu_custom_call.1} parent=1 // pred_check
      _
    $region35: #{tpu_custom_call.1} parent=1 // pred_check_branch
      %53 = sbr.rel (0) target = $region37
    $region36: #{tpu_custom_call.1} parent=1 // pred_region
      %54 = dma.done [#allocation5], 27648
    $region37: #{tpu_custom_call.1} parent=1 // pred_fallthru
      _
    // Predicated region
    $region38: #{tpu_custom_call.1} parent=1 // pred_check
      _
    $region39: #{tpu_custom_call.1} parent=1 // pred_check_branch
      %56 = sbr.rel (0) target = $region41
    $region40: #{tpu_custom_call.1} parent=1 // pred_region
      %57 = dma.done [#allocation8], 9216
    $region41: #{tpu_custom_call.1} parent=1 // pred_fallthru
      _
    %v59 = vld [vmem:[%s7] sm:$0xff]
    %v60 = vld [vmem:[%s7 + $0x8] sm:$0xff]
    %v61 = vld [vmem:[%s7 + $0x10] sm:$0xff]
    %v62 = vld [vmem:[%s7 + $0x18] sm:$0xff]
    %v63 = vld [vmem:[%s7 + $0x20] sm:$0xff]
    %v64 = vld [vmem:[%s7 + $0x28] sm:$0xff]
    %v65 = vld [vmem:[%s7 + $0x30] sm:$0xff]
    %v66 = vld [vmem:[%s7 + $0x38] sm:$0xff]
    %v67 = vld [vmem:[%s7 + $0x40] sm:$0xff]
    %v68 = vld [vmem:[%s7 + $0x48] sm:$0xff]
    %v69 = vld [vmem:[%s7 + $0x50] sm:$0xff]
    %v70 = vld [vmem:[%s7 + $0x58] sm:$0xff]
    %v71 = vld [vmem:[%s7 + $0x60] sm:$0xff]
    %v72 = vld [vmem:[%s7 + $0x68] sm:$0xff]
    %v73 = vld [vmem:[%s7 + $0x70] sm:$0xff]
    %vm74 = vcmask 1045504
    %vm75 = vsmask.f32 5376
    %vm76 = vmand %vm74, %vm75
    %v77 = vld [vmem:[#allocation2] sm:$0x3f]
    %v78 = vsel %vm76, 0, %v77
    %79 = vst [vmem:[#allocation2] sm:$0x3f] %v78
    %v80 = vld [vmem:[#allocation2 + $0x8] sm:$0x3f]
    %v81 = vsel %vm76, 0, %v80
    %82 = vst [vmem:[#allocation2 + $0x8] sm:$0x3f] %v81
    %v83 = vld [vmem:[#allocation2 + $0x10] sm:$0x3f]
    %v84 = vsel %vm76, 0, %v83
    %85 = vst [vmem:[#allocation2 + $0x10] sm:$0x3f] %v84
    %v86 = vld [vmem:[%s0] sm:$0xff]
    %v87 = vld [vmem:[%s0 + $0x8] sm:$0xf]
    %v90 = vunpack.c.l.b16 %v86
    %v91 = vunpack.c.h.b16 %v86
    %v92 = vunpack.c.l.b16 %v87
    %v93 = vpack.c.b16 %v90, %v90
    %v94 = vpack.c.b16 %v91, %v91
    %v95 = vpack.c.b16 %v92, %v92
    %v97 = vshrl.u32 %v93, 16
    %v99 = vrot.slane %v97, 2
    %v100 = vshll.u32 %v93, 16
    %v102 = vrot.slane %v100, 3
    %v103 = vor.u32 %v99, %v102
    %v105 = vshrl.u32 %v94, 16
    %v107 = vrot.slane %v105, 2
    %v108 = vshll.u32 %v94, 16
    %v110 = vrot.slane %v108, 3
    %v111 = vor.u32 %v107, %v110
    %v113 = vshrl.u32 %v95, 16
    %v115 = vrot.slane %v113, 2
    %v116 = vshll.u32 %v95, 16
    %v118 = vrot.slane %v116, 3
    %v119 = vor.u32 %v115, %v118
    %vm123 = vcmask 1047557
    %vm124 = vsmask.f32 7958
    %vm125 = vmand %vm123, %vm124
    %v126 = vld [vmem:[#allocation2] sm:$0xe0]
    %v127 = vsel %vm125, %v103, %v126
    %128 = vst [vmem:[#allocation2] sm:$0xe0] %v127
    %v129 = vld [vmem:[#allocation2 + $0x8] sm:$0xe0]
    %v130 = vsel %vm125, %v111, %v129
    %131 = vst [vmem:[#allocation2 + $0x8] sm:$0xe0] %v130
    %v132 = vld [vmem:[#allocation2 + $0x10] sm:$0xe0]
    %v133 = vsel %vm125, %v119, %v132
    %134 = vst [vmem:[#allocation2 + $0x10] sm:$0xe0] %v133
    %vm135 = vcmask 1041408
    %vm136 = vsmask.f32 1280
    %vm137 = vmand %vm135, %vm136
    %v138 = vld [vmem:[#allocation2 + $0x18] sm:$0x3]
    %v139 = vsel %vm137, %v103, %v138
    %140 = vst [vmem:[#allocation2 + $0x18] sm:$0x3] %v139
    %v141 = vld [vmem:[#allocation2 + $0x20] sm:$0x3]
    %v142 = vsel %vm137, %v111, %v141
    %143 = vst [vmem:[#allocation2 + $0x20] sm:$0x3] %v142
    %v144 = vld [vmem:[#allocation2 + $0x28] sm:$0x3]
    %v145 = vsel %vm137, %v119, %v144
    %146 = vst [vmem:[#allocation2 + $0x28] sm:$0x3] %v145
    %vm147 = vcmask 1042433
    %vm148 = vsmask.f32 2310
    %vm149 = vmand %vm147, %vm148
    %v150 = vld [vmem:[#allocation2 + $0x18] sm:$0x6]
    %v151 = vsel %vm149, 0, %v150
    %152 = vst [vmem:[#allocation2 + $0x18] sm:$0x6] %v151
    %v153 = vld [vmem:[#allocation2 + $0x20] sm:$0x6]
    %v154 = vsel %vm149, 0, %v153
    %155 = vst [vmem:[#allocation2 + $0x20] sm:$0x6] %v154
    %v156 = vld [vmem:[#allocation2 + $0x28] sm:$0x6]
    %v157 = vsel %vm149, 0, %v156
    %158 = vst [vmem:[#allocation2 + $0x28] sm:$0x6] %v157
    %v159 = vld [vmem:[%s0 + $0xc] sm:$0xff]
    %v160 = vld [vmem:[%s0 + $0x14] sm:$0xf]
    %v163 = vunpack.c.l.b16 %v159
    %v164 = vunpack.c.h.b16 %v159
    %v165 = vunpack.c.l.b16 %v160
    %v166 = vpack.c.b16 %v163, %v163
    %v167 = vpack.c.b16 %v164, %v164
    %v168 = vpack.c.b16 %v165, %v165
    %v170 = vshrl.u32 %v166, 16
    %v172 = vrot.slane %v170, 5
    %v173 = vshll.u32 %v166, 16
    %v175 = vrot.slane %v173, 6
    %v176 = vor.u32 %v172, %v175
    %v178 = vshrl.u32 %v167, 16
    %v180 = vrot.slane %v178, 5
    %v181 = vshll.u32 %v167, 16
    %v183 = vrot.slane %v181, 6
    %v184 = vor.u32 %v180, %v183
    %v186 = vshrl.u32 %v168, 16
    %v188 = vrot.slane %v186, 5
    %v189 = vshll.u32 %v168, 16
    %v191 = vrot.slane %v189, 6
    %v192 = vor.u32 %v188, %v191
    %vm196 = vcmask 1046530
    %vm197 = vsmask.f32 6410
    %vm198 = vmand %vm196, %vm197
    %v199 = vld [vmem:[#allocation2 + $0x18] sm:$0x7c]
    %v200 = vsel %vm198, %v176, %v199
    %201 = vst [vmem:[#allocation2 + $0x18] sm:$0x7c] %v200
    %v202 = vld [vmem:[#allocation2 + $0x20] sm:$0x7c]
    %v203 = vsel %vm198, %v184, %v202
    %204 = vst [vmem:[#allocation2 + $0x20] sm:$0x7c] %v203
    %v205 = vld [vmem:[#allocation2 + $0x28] sm:$0x7c]
    %v206 = vsel %vm198, %v192, %v205
    %207 = vst [vmem:[#allocation2 + $0x28] sm:$0x7c] %v206
    %vm208 = vcmask 1047558
    %vm209 = vsmask.f32 7450
    %vm210 = vmand %vm208, %vm209
    %v211 = vld [vmem:[#allocation2 + $0x18] sm:$0xc0]
    %v212 = vsel %vm210, 0, %v211
    %213 = vst [vmem:[#allocation2 + $0x18] sm:$0xc0] %v212
    %v214 = vld [vmem:[#allocation2 + $0x20] sm:$0xc0]
    %v215 = vsel %vm210, 0, %v214
    %216 = vst [vmem:[#allocation2 + $0x20] sm:$0xc0] %v215
    %v217 = vld [vmem:[#allocation2 + $0x28] sm:$0xc0]
    %v218 = vsel %vm210, 0, %v217
    %219 = vst [vmem:[#allocation2 + $0x28] sm:$0xc0] %v218
    %v220 = vld [vmem:[%s0 + $0x18] sm:$0xff]
    %v221 = vld [vmem:[%s0 + $0x20] sm:$0xf]
    %v224 = vunpack.c.l.b16 %v220
    %v225 = vunpack.c.h.b16 %v220
    %v226 = vunpack.c.l.b16 %v221
    %v227 = vpack.c.b16 %v224, %v224
    %v228 = vpack.c.b16 %v225, %v225
    %v229 = vpack.c.b16 %v226, %v226
    %v231 = vshll.u32 %v227, 16
    %v233 = vrot.slane %v231, 1
    %v235 = vshll.u32 %v228, 16
    %v237 = vrot.slane %v235, 1
    %v239 = vshll.u32 %v229, 16
    %v241 = vrot.slane %v239, 1
    %v242 = vshrl.u32 %v227, 16
    %v244 = vor.u32 %v242, %v233
    %v245 = vshrl.u32 %v228, 16
    %v247 = vor.u32 %v245, %v237
    %v248 = vshrl.u32 %v229, 16
    %v250 = vor.u32 %v248, %v241
    %vm257 = vcmask 1047559
    %vm258 = vsmask.f32 7966
    %vm259 = vmand %vm257, %vm258
    %v260 = vld [vmem:[#allocation2 + $0x18] sm:$0x80]
    %v261 = vsel %vm259, %v233, %v260
    %262 = vst [vmem:[#allocation2 + $0x18] sm:$0x80] %v261
    %v263 = vld [vmem:[#allocation2 + $0x20] sm:$0x80]
    %v264 = vsel %vm259, %v237, %v263
    %265 = vst [vmem:[#allocation2 + $0x20] sm:$0x80] %v264
    %v266 = vld [vmem:[#allocation2 + $0x28] sm:$0x80]
    %v267 = vsel %vm259, %v241, %v266
    %268 = vst [vmem:[#allocation2 + $0x28] sm:$0x80] %v267
    %vm269 = vcmask 1043456
    %vm270 = vsmask.f32 3328
    %vm271 = vmand %vm269, %vm270
    %v272 = vld [vmem:[#allocation2 + $0x30] sm:$0xf]
    %v273 = vsel %vm271, %v244, %v272
    %274 = vst [vmem:[#allocation2 + $0x30] sm:$0xf] %v273
    %v275 = vld [vmem:[#allocation2 + $0x38] sm:$0xf]
    %v276 = vsel %vm271, %v247, %v275
    %277 = vst [vmem:[#allocation2 + $0x38] sm:$0xf] %v276
    %v278 = vld [vmem:[#allocation2 + $0x40] sm:$0xf]
    %v279 = vsel %vm271, %v250, %v278
    %280 = vst [vmem:[#allocation2 + $0x40] sm:$0xf] %v279
    %vm281 = vcmask 1044483
    %vm282 = vsmask.f32 4366
    %vm283 = vmand %vm281, %vm282
    %v284 = vld [vmem:[#allocation2 + $0x30] sm:$0x18]
    %v285 = vsel %vm283, 0, %v284
    %286 = vst [vmem:[#allocation2 + $0x30] sm:$0x18] %v285
    %v287 = vld [vmem:[#allocation2 + $0x38] sm:$0x18]
    %v288 = vsel %vm283, 0, %v287
    %289 = vst [vmem:[#allocation2 + $0x38] sm:$0x18] %v288
    %v290 = vld [vmem:[#allocation2 + $0x40] sm:$0x18]
    %v291 = vsel %vm283, 0, %v290
    %292 = vst [vmem:[#allocation2 + $0x40] sm:$0x18] %v291
    %v293 = vld [vmem:[%s0 + $0x24] sm:$0xff]
    %v294 = vld [vmem:[%s0 + $0x2c] sm:$0xf]
    %v297 = vunpack.c.l.b16 %v293
    %v298 = vunpack.c.h.b16 %v293
    %v299 = vunpack.c.l.b16 %v294
    %v300 = vpack.c.b16 %v297, %v297
    %v301 = vpack.c.b16 %v298, %v298
    %v302 = vpack.c.b16 %v299, %v299
    %v304 = vshrl.u32 %v300, 16
    %v306 = vrot.slane %v304, 3
    %v307 = vshll.u32 %v300, 16
    %v309 = vrot.slane %v307, 4
    %v310 = vor.u32 %v306, %v309
    %v312 = vshrl.u32 %v301, 16
    %v314 = vrot.slane %v312, 3
    %v315 = vshll.u32 %v301, 16
    %v317 = vrot.slane %v315, 4
    %v318 = vor.u32 %v314, %v317
    %v320 = vshrl.u32 %v302, 16
    %v322 = vrot.slane %v320, 3
    %v323 = vshll.u32 %v302, 16
    %v325 = vrot.slane %v323, 4
    %v326 = vor.u32 %v322, %v325
    %vm333 = vcmask 1047556
    %vm334 = vsmask.f32 7954
    %vm335 = vmand %vm333, %vm334
    %v336 = vld [vmem:[#allocation2 + $0x30] sm:$0xf0]
    %v337 = vsel %vm335, %v310, %v336
    %338 = vst [vmem:[#allocation2 + $0x30] sm:$0xf0] %v337
    %v339 = vld [vmem:[#allocation2 + $0x38] sm:$0xf0]
    %v340 = vsel %vm335, %v318, %v339
    %341 = vst [vmem:[#allocation2 + $0x38] sm:$0xf0] %v340
    %v342 = vld [vmem:[#allocation2 + $0x40] sm:$0xf0]
    %v343 = vsel %vm335, %v326, %v342
    %344 = vst [vmem:[#allocation2 + $0x40] sm:$0xf0] %v343
    %vm345 = vcmask 1040384
    %vm346 = vsmask.f32 256
    %vm347 = vmand %vm345, %vm346
    %v348 = vld [vmem:[#allocation2 + $0x48] sm:$0x1]
    %v349 = vsel %vm347, %v306, %v348
    %350 = vst [vmem:[#allocation2 + $0x48] sm:$0x1] %v349
    %v351 = vld [vmem:[#allocation2 + $0x50] sm:$0x1]
    %v352 = vsel %vm347, %v314, %v351
    %353 = vst [vmem:[#allocation2 + $0x50] sm:$0x1] %v352
    %v354 = vld [vmem:[#allocation2 + $0x58] sm:$0x1]
    %v355 = vsel %vm347, %v322, %v354
    %356 = vst [vmem:[#allocation2 + $0x58] sm:$0x1] %v355
    %vm357 = vcmask 1047552
    %vm358 = vsmask.f32 7938
    %vm359 = vmand %vm357, %vm358
    %v360 = vld [vmem:[#allocation2 + $0x48] sm:$0xff]
    %v361 = vsel %vm359, 0, %v360
    %362 = vst [vmem:[#allocation2 + $0x48] sm:$0xff] %v361
    %v363 = vld [vmem:[#allocation2 + $0x50] sm:$0xff]
    %v364 = vsel %vm359, 0, %v363
    %365 = vst [vmem:[#allocation2 + $0x50] sm:$0xff] %v364
    %v366 = vld [vmem:[#allocation2 + $0x58] sm:$0xff]
    %v367 = vsel %vm359, 0, %v366
    %368 = vst [vmem:[#allocation2 + $0x58] sm:$0xff] %v367
    %v369 = vld [vmem:[#allocation2 + $0x60] sm:$0xf]
    %v370 = vsel %vm271, 0, %v369
    %371 = vst [vmem:[#allocation2 + $0x60] sm:$0xf] %v370
    %v372 = vld [vmem:[#allocation2 + $0x68] sm:$0xf]
    %v373 = vsel %vm271, 0, %v372
    %374 = vst [vmem:[#allocation2 + $0x68] sm:$0xf] %v373
    %v375 = vld [vmem:[#allocation2 + $0x70] sm:$0xf]
    %v376 = vsel %vm271, 0, %v375
    %377 = vst [vmem:[#allocation2 + $0x70] sm:$0xf] %v376
    %v378 = vld [vmem:[%s0 + $0x30] sm:$0xff]
    %v379 = vld [vmem:[%s0 + $0x38] sm:$0xf]
    %v382 = vunpack.c.l.b16 %v378
    %v383 = vunpack.c.h.b16 %v378
    %v384 = vunpack.c.l.b16 %v379
    %v385 = vpack.c.b16 %v382, %v382
    %v386 = vpack.c.b16 %v383, %v383
    %v387 = vpack.c.b16 %v384, %v384
    %v389 = vshrl.u32 %v385, 16
    %v391 = vrot.slane %v389, 4
    %v392 = vshll.u32 %v385, 16
    %v394 = vrot.slane %v392, 5
    %v395 = vor.u32 %v391, %v394
    %v397 = vshrl.u32 %v386, 16
    %v399 = vrot.slane %v397, 4
    %v400 = vshll.u32 %v386, 16
    %v402 = vrot.slane %v400, 5
    %v403 = vor.u32 %v399, %v402
    %v405 = vshrl.u32 %v387, 16
    %v407 = vrot.slane %v405, 4
    %v408 = vshll.u32 %v387, 16
    %v410 = vrot.slane %v408, 5
    %v411 = vor.u32 %v407, %v410
    %vm415 = vcmask 1047555
    %vm416 = vsmask.f32 7438
    %vm417 = vmand %vm415, %vm416
    %v418 = vld [vmem:[#allocation2 + $0x60] sm:$0xf8]
    %v419 = vsel %vm417, %v395, %v418
    %420 = vst [vmem:[#allocation2 + $0x60] sm:$0xf8] %v419
    %v421 = vld [vmem:[#allocation2 + $0x68] sm:$0xf8]
    %v422 = vsel %vm417, %v403, %v421
    %423 = vst [vmem:[#allocation2 + $0x68] sm:$0xf8] %v422
    %v424 = vld [vmem:[#allocation2 + $0x70] sm:$0xf8]
    %v425 = vsel %vm417, %v411, %v424
    %426 = vst [vmem:[#allocation2 + $0x70] sm:$0xf8] %v425
    %v427 = vld [vmem:[#allocation2 + $0x60] sm:$0x80]
    %v428 = vsel %vm259, 0, %v427
    %429 = vst [vmem:[#allocation2 + $0x60] sm:$0x80] %v428
    %v430 = vld [vmem:[#allocation2 + $0x68] sm:$0x80]
    %v431 = vsel %vm259, 0, %v430
    %432 = vst [vmem:[#allocation2 + $0x68] sm:$0x80] %v431
    %v433 = vld [vmem:[#allocation2 + $0x70] sm:$0x80]
    %v434 = vsel %vm259, 0, %v433
    %435 = vst [vmem:[#allocation2 + $0x70] sm:$0x80] %v434
    %v436 = vld [vmem:[#allocation2 + $0x78] sm:$0x1]
    %v437 = vsel %vm347, 0, %v436
    %438 = vst [vmem:[#allocation2 + $0x78] sm:$0x1] %v437
    %v439 = vld [vmem:[#allocation2 + $0x80] sm:$0x1]
    %v440 = vsel %vm347, 0, %v439
    %441 = vst [vmem:[#allocation2 + $0x80] sm:$0x1] %v440
    %v442 = vld [vmem:[#allocation2 + $0x88] sm:$0x1]
    %v443 = vsel %vm347, 0, %v442
    %444 = vst [vmem:[#allocation2 + $0x88] sm:$0x1] %v443
    %v445 = vld [vmem:[%s0 + $0x3c] sm:$0xff]
    %v446 = vld [vmem:[%s0 + $0x44] sm:$0xf]
    %v449 = vunpack.c.l.b16 %v445
    %v450 = vunpack.c.h.b16 %v445
    %v451 = vunpack.c.l.b16 %v446
    %v452 = vpack.c.b16 %v449, %v449
    %v453 = vpack.c.b16 %v450, %v450
    %v454 = vpack.c.b16 %v451, %v451
    %v456 = vshrl.u32 %v452, 16
    %v458 = vrot.slane %v456, 7
    %v459 = vshll.u32 %v452, 16
    %v461 = vor.u32 %v458, %v459
    %v463 = vshrl.u32 %v453, 16
    %v465 = vrot.slane %v463, 7
    %v466 = vshll.u32 %v453, 16
    %v468 = vor.u32 %v465, %v466
    %v470 = vshrl.u32 %v454, 16
    %v472 = vrot.slane %v470, 7
    %v473 = vshll.u32 %v454, 16
    %v475 = vor.u32 %v472, %v473
    %vm479 = vcmask 1044480
    %vm480 = vsmask.f32 4354
    %vm481 = vmand %vm479, %vm480
    %v482 = vld [vmem:[#allocation2 + $0x78] sm:$0x1f]
    %v483 = vsel %vm481, %v461, %v482
    %484 = vst [vmem:[#allocation2 + $0x78] sm:$0x1f] %v483
    %v485 = vld [vmem:[#allocation2 + $0x80] sm:$0x1f]
    %v486 = vsel %vm481, %v468, %v485
    %487 = vst [vmem:[#allocation2 + $0x80] sm:$0x1f] %v486
    %v488 = vld [vmem:[#allocation2 + $0x88] sm:$0x1f]
    %v489 = vsel %vm481, %v475, %v488
    %490 = vst [vmem:[#allocation2 + $0x88] sm:$0x1f] %v489
    %vm491 = vcmask 1045508
    %vm492 = vsmask.f32 5394
    %vm493 = vmand %vm491, %vm492
    %v494 = vld [vmem:[#allocation2 + $0x78] sm:$0x30]
    %v495 = vsel %vm493, 0, %v494
    %496 = vst [vmem:[#allocation2 + $0x78] sm:$0x30] %v495
    %v497 = vld [vmem:[#allocation2 + $0x80] sm:$0x30]
    %v498 = vsel %vm493, 0, %v497
    %499 = vst [vmem:[#allocation2 + $0x80] sm:$0x30] %v498
    %v500 = vld [vmem:[#allocation2 + $0x88] sm:$0x30]
    %v501 = vsel %vm493, 0, %v500
    %502 = vst [vmem:[#allocation2 + $0x88] sm:$0x30] %v501
    %v503 = vld [vmem:[%s0 + $0x48] sm:$0xff]
    %v504 = vld [vmem:[%s0 + $0x50] sm:$0xf]
    %v507 = vunpack.c.l.b16 %v503
    %v508 = vunpack.c.h.b16 %v503
    %v509 = vunpack.c.l.b16 %v504
    %v510 = vpack.c.b16 %v507, %v507
    %v511 = vpack.c.b16 %v508, %v508
    %v512 = vpack.c.b16 %v509, %v509
    %v514 = vshrl.u32 %v510, 16
    %v516 = vrot.slane %v514, 2
    %v517 = vshll.u32 %v510, 16
    %v519 = vrot.slane %v517, 3
    %v520 = vor.u32 %v516, %v519
    %v522 = vshrl.u32 %v511, 16
    %v524 = vrot.slane %v522, 2
    %v525 = vshll.u32 %v511, 16
    %v527 = vrot.slane %v525, 3
    %v528 = vor.u32 %v524, %v527
    %v530 = vshrl.u32 %v512, 16
    %v532 = vrot.slane %v530, 2
    %v533 = vshll.u32 %v512, 16
    %v535 = vrot.slane %v533, 3
    %v536 = vor.u32 %v532, %v535
    %v540 = vld [vmem:[#allocation2 + $0x78] sm:$0xe0]
    %v541 = vsel %vm125, %v520, %v540
    %542 = vst [vmem:[#allocation2 + $0x78] sm:$0xe0] %v541
    %v543 = vld [vmem:[#allocation2 + $0x80] sm:$0xe0]
    %v544 = vsel %vm125, %v528, %v543
    %545 = vst [vmem:[#allocation2 + $0x80] sm:$0xe0] %v544
    %v546 = vld [vmem:[#allocation2 + $0x88] sm:$0xe0]
    %v547 = vsel %vm125, %v536, %v546
    %548 = vst [vmem:[#allocation2 + $0x88] sm:$0xe0] %v547
    %v549 = vld [vmem:[#allocation2 + $0x90] sm:$0x3]
    %v550 = vsel %vm137, %v520, %v549
    %551 = vst [vmem:[#allocation2 + $0x90] sm:$0x3] %v550
    %v552 = vld [vmem:[#allocation2 + $0x98] sm:$0x3]
    %v553 = vsel %vm137, %v528, %v552
    %554 = vst [vmem:[#allocation2 + $0x98] sm:$0x3] %v553
    %v555 = vld [vmem:[#allocation2 + $0xa0] sm:$0x3]
    %v556 = vsel %vm137, %v536, %v555
    %557 = vst [vmem:[#allocation2 + $0xa0] sm:$0x3] %v556
    %v558 = vld [vmem:[#allocation2 + $0x90] sm:$0x6]
    %v559 = vsel %vm149, 0, %v558
    %560 = vst [vmem:[#allocation2 + $0x90] sm:$0x6] %v559
    %v561 = vld [vmem:[#allocation2 + $0x98] sm:$0x6]
    %v562 = vsel %vm149, 0, %v561
    %563 = vst [vmem:[#allocation2 + $0x98] sm:$0x6] %v562
    %v564 = vld [vmem:[#allocation2 + $0xa0] sm:$0x6]
    %v565 = vsel %vm149, 0, %v564
    %566 = vst [vmem:[#allocation2 + $0xa0] sm:$0x6] %v565
    %v567 = vld [vmem:[%s0 + $0x54] sm:$0xff]
    %v568 = vld [vmem:[%s0 + $0x5c] sm:$0xf]
    %v571 = vunpack.c.l.b16 %v567
    %v572 = vunpack.c.h.b16 %v567
    %v573 = vunpack.c.l.b16 %v568
    %v574 = vpack.c.b16 %v571, %v571
    %v575 = vpack.c.b16 %v572, %v572
    %v576 = vpack.c.b16 %v573, %v573
    %v578 = vshrl.u32 %v574, 16
    %v580 = vrot.slane %v578, 5
    %v581 = vshll.u32 %v574, 16
    %v583 = vrot.slane %v581, 6
    %v584 = vor.u32 %v580, %v583
    %v586 = vshrl.u32 %v575, 16
    %v588 = vrot.slane %v586, 5
    %v589 = vshll.u32 %v575, 16
    %v591 = vrot.slane %v589, 6
    %v592 = vor.u32 %v588, %v591
    %v594 = vshrl.u32 %v576, 16
    %v596 = vrot.slane %v594, 5
    %v597 = vshll.u32 %v576, 16
    %v599 = vrot.slane %v597, 6
    %v600 = vor.u32 %v596, %v599
    %v604 = vld [vmem:[#allocation2 + $0x90] sm:$0x7c]
    %v605 = vsel %vm198, %v584, %v604
    %606 = vst [vmem:[#allocation2 + $0x90] sm:$0x7c] %v605
    %v607 = vld [vmem:[#allocation2 + $0x98] sm:$0x7c]
    %v608 = vsel %vm198, %v592, %v607
    %609 = vst [vmem:[#allocation2 + $0x98] sm:$0x7c] %v608
    %v610 = vld [vmem:[#allocation2 + $0xa0] sm:$0x7c]
    %v611 = vsel %vm198, %v600, %v610
    %612 = vst [vmem:[#allocation2 + $0xa0] sm:$0x7c] %v611
    %vm613 = vsmask.f32 7962
    %vm614 = vmand %vm208, %vm613
    %v615 = vld [vmem:[#allocation2 + $0x90] sm:$0xc0]
    %v616 = vsel %vm614, 0, %v615
    %617 = vst [vmem:[#allocation2 + $0x90] sm:$0xc0] %v616
    %v618 = vld [vmem:[#allocation2 + $0x98] sm:$0xc0]
    %v619 = vsel %vm614, 0, %v618
    %620 = vst [vmem:[#allocation2 + $0x98] sm:$0xc0] %v619
    %v621 = vld [vmem:[#allocation2 + $0xa0] sm:$0xc0]
    %v622 = vsel %vm614, 0, %v621
    %623 = vst [vmem:[#allocation2 + $0xa0] sm:$0xc0] %v622
    %624 = vst [vmem:[#allocation2 + $0xa8] sm:$0xff] 0
    %625 = vst [vmem:[#allocation2 + $0xb0] sm:$0xff] 0
    %626 = vst [vmem:[#allocation2 + $0xb8] sm:$0xff] 0
    %627 = vst [vmem:[#allocation2 + $0xc0] sm:$0xff] 0
    %628 = vst [vmem:[#allocation2 + $0xc8] sm:$0xff] 0
    %629 = vst [vmem:[#allocation2 + $0xd0] sm:$0xff] 0
    %v630 = vld [vmem:[#allocation2] sm:$0xff]
    %v631 = vld [vmem:[#allocation2 + $0x8] sm:$0xff]
    %v632 = vld [vmem:[#allocation2 + $0x10] sm:$0xff]
    %v633 = vld [vmem:[#allocation2 + $0x18] sm:$0xff]
    %v634 = vld [vmem:[#allocation2 + $0x20] sm:$0xff]
    %v635 = vld [vmem:[#allocation2 + $0x28] sm:$0xff]
    %v636 = vld [vmem:[#allocation2 + $0x30] sm:$0xff]
    %v637 = vld [vmem:[#allocation2 + $0x38] sm:$0xff]
    %v638 = vld [vmem:[#allocation2 + $0x40] sm:$0xff]
    %v639 = vld [vmem:[#allocation2 + $0x48] sm:$0xff]
    %v640 = vld [vmem:[#allocation2 + $0x50] sm:$0xff]
    %v641 = vld [vmem:[#allocation2 + $0x58] sm:$0xff]
    %v642 = vld [vmem:[#allocation2 + $0x60] sm:$0xff]
    %v643 = vld [vmem:[#allocation2 + $0x68] sm:$0xff]
    %v644 = vld [vmem:[#allocation2 + $0x70] sm:$0xff]
    %v645 = vld [vmem:[#allocation2 + $0x78] sm:$0xff]
    %v646 = vld [vmem:[#allocation2 + $0x80] sm:$0xff]
    %v647 = vld [vmem:[#allocation2 + $0x88] sm:$0xff]
    %v648 = vld [vmem:[#allocation2 + $0x90] sm:$0xff]
    %v649 = vld [vmem:[#allocation2 + $0x98] sm:$0xff]
    %v650 = vld [vmem:[#allocation2 + $0xa0] sm:$0xff]
    %v651 = vld [vmem:[#allocation2 + $0xa8] sm:$0xf]
    %v652 = vld [vmem:[#allocation2 + $0xb0] sm:$0xf]
    %v653 = vld [vmem:[#allocation2 + $0xb8] sm:$0xf]
    %v654 = vld [vmem:[#allocation4] sm:$0xf]
    %v655 = vld [vmem:[#allocation4 + $0x4] sm:$0xf]
    %v656 = vld [vmem:[#allocation4 + $0x8] sm:$0xf]
    %v657 = vld [vmem:[#allocation4 + $0xc] sm:$0xf]
    %v658 = vld [vmem:[#allocation4 + $0x10] sm:$0xf]
    %v659 = vld [vmem:[#allocation4 + $0x14] sm:$0xf]
    %v660 = vld [vmem:[#allocation4 + $0x18] sm:$0xf]
    %v661 = vld [vmem:[#allocation4 + $0x1c] sm:$0xf]
    %v662 = vld [vmem:[#allocation4 + $0x20] sm:$0xf]
    %v663 = vld [vmem:[#allocation4 + $0x24] sm:$0xf]
    %v664 = vld [vmem:[#allocation4 + $0x28] sm:$0xf]
    %v665 = vld [vmem:[#allocation4 + $0x2c] sm:$0xf]
    %v666 = vld [vmem:[#allocation4 + $0x30] sm:$0xf]
    %v667 = vld [vmem:[#allocation4 + $0x34] sm:$0xf]
    %v668 = vld [vmem:[#allocation4 + $0x38] sm:$0xf]
    %v669 = vld [vmem:[#allocation4 + $0x3c] sm:$0xf]
    %v670 = vld [vmem:[#allocation4 + $0x40] sm:$0xf]
    %v671 = vld [vmem:[#allocation4 + $0x44] sm:$0xf]
    %v672 = vld [vmem:[#allocation4 + $0x48] sm:$0xf]
    %v673 = vld [vmem:[#allocation4 + $0x4c] sm:$0xf]
    %v674 = vld [vmem:[#allocation4 + $0x50] sm:$0xf]
    %v675 = vld [vmem:[#allocation4 + $0x54] sm:$0xf]
    %v676 = vld [vmem:[#allocation4 + $0x58] sm:$0xf]
    %v677 = vld [vmem:[#allocation4 + $0x5c] sm:$0xf]
    %v678 = vld [vmem:[#allocation4 + $0x60] sm:$0xf]
    %v679 = vld [vmem:[#allocation4 + $0x64] sm:$0xf]
    %v680 = vld [vmem:[#allocation4 + $0x68] sm:$0xf]
    %v681 = vld [vmem:[#allocation4 + $0x6c] sm:$0xf]
    %v682 = vld [vmem:[#allocation4 + $0x70] sm:$0xf]
    %v683 = vld [vmem:[#allocation4 + $0x74] sm:$0xf]
    %v684 = vld [vmem:[#allocation4 + $0x78] sm:$0xf]
    %v685 = vld [vmem:[#allocation4 + $0x7c] sm:$0xf]
    %v686 = vld [vmem:[#allocation4 + $0x80] sm:$0xf]
    %v687 = vld [vmem:[#allocation4 + $0x84] sm:$0xf]
    %v688 = vld [vmem:[#allocation4 + $0x88] sm:$0xf]
    %v689 = vld [vmem:[#allocation4 + $0x8c] sm:$0xf]
    %v690 = vld [vmem:[#allocation4 + $0x90] sm:$0xf]
    %v691 = vld [vmem:[#allocation4 + $0x94] sm:$0xf]
    %v692 = vld [vmem:[#allocation4 + $0x98] sm:$0xf]
    %v693 = vld [vmem:[#allocation4 + $0x9c] sm:$0xf]
    %v694 = vld [vmem:[#allocation4 + $0xa0] sm:$0xf]
    %v695 = vld [vmem:[#allocation4 + $0xa4] sm:$0xf]
    %v696 = vld [vmem:[#allocation4 + $0xa8] sm:$0xf]
    %v697 = vld [vmem:[#allocation4 + $0xac] sm:$0xf]
    %v698 = vld [vmem:[#allocation4 + $0xb0] sm:$0xf]
    %v699 = vld [vmem:[#allocation4 + $0xb4] sm:$0xf]
    %v700 = vld [vmem:[#allocation4 + $0xb8] sm:$0xf]
    %v701 = vld [vmem:[#allocation4 + $0xbc] sm:$0xf]
    %v702 = vld [vmem:[#allocation2 + $0xa8] sm:$0x1f]
    %v703 = vld [vmem:[#allocation2 + $0xb0] sm:$0x1f]
    %v704 = vld [vmem:[#allocation2 + $0xb8] sm:$0x1f]
    %s705 = scalar_lea.vmem [#allocation4], 192
    %v706 = vld [vmem:[%s705] sm:$0xf]
    %v707 = vld [vmem:[%s705 + $0x4] sm:$0xf]
    %v708 = vld [vmem:[%s705 + $0x8] sm:$0xf]
    %v709 = vld [vmem:[%s705 + $0xc] sm:$0xf]
    %v710 = vld [vmem:[%s705 + $0x10] sm:$0xf]
    %v711 = vld [vmem:[%s705 + $0x14] sm:$0xf]
    %v712 = vld [vmem:[%s705 + $0x18] sm:$0xf]
    %v713 = vld [vmem:[%s705 + $0x1c] sm:$0xf]
    %v714 = vld [vmem:[%s705 + $0x20] sm:$0xf]
    %v715 = vld [vmem:[%s705 + $0x24] sm:$0xf]
    %v716 = vld [vmem:[%s705 + $0x28] sm:$0xf]
    %v717 = vld [vmem:[%s705 + $0x2c] sm:$0xf]
    %v718 = vld [vmem:[%s705 + $0x30] sm:$0xf]
    %v719 = vld [vmem:[%s705 + $0x34] sm:$0xf]
    %v720 = vld [vmem:[%s705 + $0x38] sm:$0xf]
    %v721 = vld [vmem:[%s705 + $0x3c] sm:$0xf]
    %v722 = vld [vmem:[%s705 + $0x40] sm:$0xf]
    %v723 = vld [vmem:[%s705 + $0x44] sm:$0xf]
    %v724 = vld [vmem:[%s705 + $0x48] sm:$0xf]
    %v725 = vld [vmem:[%s705 + $0x4c] sm:$0xf]
    %v726 = vld [vmem:[%s705 + $0x50] sm:$0xf]
    %v727 = vld [vmem:[%s705 + $0x54] sm:$0xf]
    %v728 = vld [vmem:[%s705 + $0x58] sm:$0xf]
    %v729 = vld [vmem:[%s705 + $0x5c] sm:$0xf]
    %v730 = vld [vmem:[%s705 + $0x60] sm:$0xf]
    %v731 = vld [vmem:[%s705 + $0x64] sm:$0xf]
    %v732 = vld [vmem:[%s705 + $0x68] sm:$0xf]
    %v733 = vld [vmem:[%s705 + $0x6c] sm:$0xf]
    %v734 = vld [vmem:[%s705 + $0x70] sm:$0xf]
    %v735 = vld [vmem:[%s705 + $0x74] sm:$0xf]
    %v736 = vld [vmem:[%s705 + $0x78] sm:$0xf]
    %v737 = vld [vmem:[%s705 + $0x7c] sm:$0xf]
    %v738 = vld [vmem:[%s705 + $0x80] sm:$0xf]
    %v739 = vld [vmem:[%s705 + $0x84] sm:$0xf]
    %v740 = vld [vmem:[%s705 + $0x88] sm:$0xf]
    %v741 = vld [vmem:[%s705 + $0x8c] sm:$0xf]
    %v742 = vld [vmem:[%s705 + $0x90] sm:$0xf]
    %v743 = vld [vmem:[%s705 + $0x94] sm:$0xf]
    %v744 = vld [vmem:[%s705 + $0x98] sm:$0xf]
    %v745 = vld [vmem:[%s705 + $0x9c] sm:$0xf]
    %v746 = vld [vmem:[%s705 + $0xa0] sm:$0xf]
    %v747 = vld [vmem:[%s705 + $0xa4] sm:$0xf]
    %v748 = vld [vmem:[%s705 + $0xa8] sm:$0xf]
    %v749 = vld [vmem:[%s705 + $0xac] sm:$0xf]
    %v750 = vld [vmem:[%s705 + $0xb0] sm:$0xf]
    %v751 = vld [vmem:[%s705 + $0xb4] sm:$0xf]
    %v752 = vld [vmem:[%s705 + $0xb8] sm:$0xf]
    %v753 = vld [vmem:[%s705 + $0xbc] sm:$0xf]
    %vm754 = vsmask.f32 7424
    %v756 = vshrl.u32 %v630, 16
    %v758 = vshll.u32 %v630, 16
    %v760 = vrot.slane %v758, 1
    %v761 = vor.u32 %v756, %v760
    %v763 = vshll.u32 %v633, 16
    %v765 = vrot.slane %v763, 1
    %v766 = vsel %vm754, %v761, %v765
    %v768 = vshrl.u32 %v631, 16
    %v770 = vshll.u32 %v631, 16
    %v772 = vrot.slane %v770, 1
    %v773 = vor.u32 %v768, %v772
    %v775 = vshll.u32 %v634, 16
    %v777 = vrot.slane %v775, 1
    %v778 = vsel %vm754, %v773, %v777
    %v780 = vshrl.u32 %v632, 16
    %v782 = vshll.u32 %v632, 16
    %v784 = vrot.slane %v782, 1
    %v785 = vor.u32 %v780, %v784
    %v787 = vshll.u32 %v635, 16
    %v789 = vrot.slane %v787, 1
    %v790 = vsel %vm754, %v785, %v789
    %v791 = vshrl.u32 %v633, 16
    %v793 = vor.u32 %v791, %v765
    %v795 = vshll.u32 %v636, 16
    %v797 = vrot.slane %v795, 1
    %v798 = vsel %vm754, %v793, %v797
    %v799 = vshrl.u32 %v634, 16
    %v801 = vor.u32 %v799, %v777
    %v803 = vshll.u32 %v637, 16
    %v805 = vrot.slane %v803, 1
    %v806 = vsel %vm754, %v801, %v805
    %v807 = vshrl.u32 %v635, 16
    %v809 = vor.u32 %v807, %v789
    %v811 = vshll.u32 %v638, 16
    %v813 = vrot.slane %v811, 1
    %v814 = vsel %vm754, %v809, %v813
    %v815 = vshrl.u32 %v636, 16
    %v817 = vor.u32 %v815, %v797
    %v819 = vshll.u32 %v639, 16
    %v821 = vrot.slane %v819, 1
    %v822 = vsel %vm754, %v817, %v821
    %v823 = vshrl.u32 %v637, 16
    %v825 = vor.u32 %v823, %v805
    %v827 = vshll.u32 %v640, 16
    %v829 = vrot.slane %v827, 1
    %v830 = vsel %vm754, %v825, %v829
    %v831 = vshrl.u32 %v638, 16
    %v833 = vor.u32 %v831, %v813
    %v835 = vshll.u32 %v641, 16
    %v837 = vrot.slane %v835, 1
    %v838 = vsel %vm754, %v833, %v837
    %v839 = vshrl.u32 %v639, 16
    %v841 = vor.u32 %v839, %v821
    %v843 = vshll.u32 %v642, 16
    %v845 = vrot.slane %v843, 1
    %v846 = vsel %vm754, %v841, %v845
    %v847 = vshrl.u32 %v640, 16
    %v849 = vor.u32 %v847, %v829
    %v851 = vshll.u32 %v643, 16
    %v853 = vrot.slane %v851, 1
    %v854 = vsel %vm754, %v849, %v853
    %v855 = vshrl.u32 %v641, 16
    %v857 = vor.u32 %v855, %v837
    %v859 = vshll.u32 %v644, 16
    %v861 = vrot.slane %v859, 1
    %v862 = vsel %vm754, %v857, %v861
    %v863 = vshrl.u32 %v642, 16
    %v865 = vor.u32 %v863, %v845
    %v867 = vshll.u32 %v645, 16
    %v869 = vrot.slane %v867, 1
    %v870 = vsel %vm754, %v865, %v869
    %v871 = vshrl.u32 %v643, 16
    %v873 = vor.u32 %v871, %v853
    %v875 = vshll.u32 %v646, 16
    %v877 = vrot.slane %v875, 1
    %v878 = vsel %vm754, %v873, %v877
    %v879 = vshrl.u32 %v644, 16
    %v881 = vor.u32 %v879, %v861
    %v883 = vshll.u32 %v647, 16
    %v885 = vrot.slane %v883, 1
    %v886 = vsel %vm754, %v881, %v885
    %v887 = vshrl.u32 %v645, 16
    %v889 = vor.u32 %v887, %v869
    %v891 = vshll.u32 %v648, 16
    %v893 = vrot.slane %v891, 1
    %v894 = vsel %vm754, %v889, %v893
    %v895 = vshrl.u32 %v646, 16
    %v897 = vor.u32 %v895, %v877
    %v899 = vshll.u32 %v649, 16
    %v901 = vrot.slane %v899, 1
    %v902 = vsel %vm754, %v897, %v901
    %v903 = vshrl.u32 %v647, 16
    %v905 = vor.u32 %v903, %v885
    %v907 = vshll.u32 %v650, 16
    %v909 = vrot.slane %v907, 1
    %v910 = vsel %vm754, %v905, %v909
    %v911 = vshrl.u32 %v648, 16
    %v913 = vor.u32 %v911, %v893
    %v915 = vshll.u32 %v702, 16
    %v917 = vrot.slane %v915, 1
    %v918 = vsel %vm754, %v913, %v917
    %v919 = vshrl.u32 %v649, 16
    %v921 = vor.u32 %v919, %v901
    %v923 = vshll.u32 %v703, 16
    %v925 = vrot.slane %v923, 1
    %v926 = vsel %vm754, %v921, %v925
    %v927 = vshrl.u32 %v650, 16
    %v929 = vor.u32 %v927, %v909
    %v931 = vshll.u32 %v704, 16
    %v933 = vrot.slane %v931, 1
    %v934 = vsel %vm754, %v929, %v933
    %v935 = vshrl.u32 %v702, 16
    %v937 = vor.u32 %v935, %v917
    %v938 = vshrl.u32 %v703, 16
    %v940 = vor.u32 %v938, %v925
    %v941 = vshrl.u32 %v704, 16
    %v943 = vor.u32 %v941, %v933
    %v1016 = vunpack.c.l.b16 %v706
    %v1017 = vunpack.c.l.b16 %v707
    %v1018 = vunpack.c.l.b16 %v708
    %v1019 = vunpack.c.l.b16 %v709
    %v1020 = vunpack.c.l.b16 %v710
    %v1021 = vunpack.c.l.b16 %v711
    %v1022 = vunpack.c.l.b16 %v712
    %v1023 = vunpack.c.l.b16 %v713
    %v1024 = vunpack.c.l.b16 %v714
    %v1025 = vunpack.c.l.b16 %v715
    %v1026 = vunpack.c.l.b16 %v716
    %v1027 = vunpack.c.l.b16 %v717
    %v1028 = vunpack.c.l.b16 %v718
    %v1029 = vunpack.c.l.b16 %v719
    %v1030 = vunpack.c.l.b16 %v720
    %v1031 = vunpack.c.l.b16 %v721
    %v1032 = vunpack.c.l.b16 %v722
    %v1033 = vunpack.c.l.b16 %v723
    %v1034 = vunpack.c.l.b16 %v724
    %v1035 = vunpack.c.l.b16 %v725
    %v1036 = vunpack.c.l.b16 %v726
    %v1037 = vunpack.c.l.b16 %v727
    %v1038 = vunpack.c.l.b16 %v728
    %v1039 = vunpack.c.l.b16 %v729
    %v1040 = vunpack.c.l.b16 %v730
    %v1041 = vunpack.c.l.b16 %v731
    %v1042 = vunpack.c.l.b16 %v732
    %v1043 = vunpack.c.l.b16 %v733
    %v1044 = vunpack.c.l.b16 %v734
    %v1045 = vunpack.c.l.b16 %v735
    %v1046 = vunpack.c.l.b16 %v736
    %v1047 = vunpack.c.l.b16 %v737
    %v1048 = vunpack.c.l.b16 %v738
    %v1049 = vunpack.c.l.b16 %v739
    %v1050 = vunpack.c.l.b16 %v740
    %v1051 = vunpack.c.l.b16 %v741
    %v1052 = vunpack.c.l.b16 %v742
    %v1053 = vunpack.c.l.b16 %v743
    %v1054 = vunpack.c.l.b16 %v744
    %v1055 = vunpack.c.l.b16 %v745
    %v1056 = vunpack.c.l.b16 %v746
    %v1057 = vunpack.c.l.b16 %v747
    %v1058 = vunpack.c.l.b16 %v748
    %v1059 = vunpack.c.l.b16 %v749
    %v1060 = vunpack.c.l.b16 %v750
    %v1061 = vunpack.c.l.b16 %v751
    %v1062 = vunpack.c.l.b16 %v752
    %v1063 = vunpack.c.l.b16 %v753
    %v1064 = vpack.c.b16 %v1017, %v1016
    %v1065 = vpack.c.b16 %v1019, %v1018
    %v1066 = vpack.c.b16 %v1021, %v1020
    %v1067 = vpack.c.b16 %v1023, %v1022
    %v1068 = vpack.c.b16 %v1025, %v1024
    %v1069 = vpack.c.b16 %v1027, %v1026
    %v1070 = vpack.c.b16 %v1029, %v1028
    %v1071 = vpack.c.b16 %v1031, %v1030
    %v1072 = vpack.c.b16 %v1033, %v1032
    %v1073 = vpack.c.b16 %v1035, %v1034
    %v1074 = vpack.c.b16 %v1037, %v1036
    %v1075 = vpack.c.b16 %v1039, %v1038
    %v1076 = vpack.c.b16 %v1041, %v1040
    %v1077 = vpack.c.b16 %v1043, %v1042
    %v1078 = vpack.c.b16 %v1045, %v1044
    %v1079 = vpack.c.b16 %v1047, %v1046
    %v1080 = vpack.c.b16 %v1049, %v1048
    %v1081 = vpack.c.b16 %v1051, %v1050
    %v1082 = vpack.c.b16 %v1053, %v1052
    %v1083 = vpack.c.b16 %v1055, %v1054
    %v1084 = vpack.c.b16 %v1057, %v1056
    %v1085 = vpack.c.b16 %v1059, %v1058
    %v1086 = vpack.c.b16 %v1061, %v1060
    %v1087 = vpack.c.b16 %v1063, %v1062
    %1112 = vmatprep.subr.bf16.mxu0 0
    %1113 = vmatpush1.bf16.msra.mxu0 %v1064
    %1114 = vmatprep.subr.bf16.mxu0 0
    %1115 = vmatpush1.bf16.msra.mxu0 %v1065
    %1116 = vmatprep.subr.bf16.mxu0 0
    %1117 = vmatpush1.bf16.msra.mxu0 %v1066
    %1118 = vmatprep.subr.bf16.mxu0 0
    %1119 = vmatpush1.bf16.msra.mxu0 %v1067
    %1120 = vmatprep.subr.bf16.mxu0 0
    %1121 = vmatpush1.bf16.msra.mxu0 %v1068
    %1122 = vmatprep.subr.bf16.mxu0 0
    %1123 = vmatpush1.bf16.msra.mxu0 %v1069
    %1124 = vmatprep.subr.bf16.mxu0 0
    %1125 = vmatpush1.bf16.msra.mxu0 %v1070
    %1126 = vmatprep.subr.bf16.mxu0 0
    %1127 = vmatpush1.bf16.msra.mxu0 %v1071
    %1128 = vmatprep.subr.bf16.mxu0 0
    %1129 = vmatpush1.bf16.msra.mxu0 %v1072
    %1130 = vmatprep.subr.bf16.mxu0 0
    %1131 = vmatpush1.bf16.msra.mxu0 %v1073
    %1132 = vmatprep.subr.bf16.mxu0 0
    %1133 = vmatpush1.bf16.msra.mxu0 %v1074
    %1134 = vmatprep.subr.bf16.mxu0 0
    %1135 = vmatpush1.bf16.msra.mxu0 %v1075
    %1136 = vmatprep.subr.bf16.mxu0 0
    %1137 = vmatpush1.bf16.msra.mxu0 %v1076
    %1138 = vmatprep.subr.bf16.mxu0 0
    %1139 = vmatpush1.bf16.msra.mxu0 %v1077
    %1140 = vmatprep.subr.bf16.mxu0 0
    %1141 = vmatpush1.bf16.msra.mxu0 %v1078
    %1142 = vmatprep.subr.bf16.mxu0 0
    %1143 = vmatpush1.bf16.msra.mxu0 %v1079
    %1144 = vmatprep.mubr.bf16.mxu0 %v778
    %1145 = vmatmul.mubr.bf16.gmra.mrb[0].mxu0 %v766
    %v1146 = vpop.f32.mrb[0].mxu0
    %v1147 = vadd.f32 0.0, %v1146
    %v1148 = vpop.f32.mrb[0].mxu0
    %v1149 = vpop.f32.mrb[0].mxu0
    %v1150 = vadd.f32 0.0, %v1149
    %v1151 = vpop.f32.mrb[0].mxu0
    %1152 = vmatprep.mubr.bf16.mxu0 %v806
    %1153 = vmatmul.mubr.bf16.gmra.mrb[0].mxu0 %v798
    %v1154 = vpop.f32.mrb[0].mxu0
    %v1155 = vadd.f32 0.0, %v1154
    %v1156 = vpop.f32.mrb[0].mxu0
    %v1157 = vpop.f32.mrb[0].mxu0
    %v1158 = vadd.f32 0.0, %v1157
    %v1159 = vpop.f32.mrb[0].mxu0
    %1160 = vmatprep.mubr.bf16.mxu0 %v830
    %1161 = vmatmul.mubr.bf16.gmra.mrb[0].mxu0 %v822
    %v1162 = vpop.f32.mrb[0].mxu0
    %v1163 = vadd.f32 0.0, %v1162
    %v1164 = vpop.f32.mrb[0].mxu0
    %v1165 = vpop.f32.mrb[0].mxu0
    %v1166 = vadd.f32 0.0, %v1165
    %v1167 = vpop.f32.mrb[0].mxu0
    %1168 = vmatprep.mubr.bf16.mxu0 %v854
    %1169 = vmatmul.mubr.bf16.gmra.mrb[0].mxu0 %v846
    %v1170 = vpop.f32.mrb[0].mxu0
    %v1171 = vadd.f32 0.0, %v1170
    %v1172 = vpop.f32.mrb[0].mxu0
    %v1173 = vpop.f32.mrb[0].mxu0
    %v1174 = vadd.f32 0.0, %v1173
    %v1175 = vpop.f32.mrb[0].mxu0
    %1176 = vmatprep.mubr.bf16.mxu0 %v878
    %1177 = vmatmul.mubr.bf16.gmra.mrb[0].mxu0 %v870
    %v1178 = vpop.f32.mrb[0].mxu0
    %v1179 = vadd.f32 0.0, %v1178
    %v1180 = vpop.f32.mrb[0].mxu0
    %v1181 = vpop.f32.mrb[0].mxu0
    %v1182 = vadd.f32 0.0, %v1181
    %v1183 = vpop.f32.mrb[0].mxu0
    %1184 = vmatprep.mubr.bf16.mxu0 %v902
    %1185 = vmatmul.mubr.bf16.gmra.mrb[0].mxu0 %v894
    %v1186 = vpop.f32.mrb[0].mxu0
    %v1187 = vadd.f32 0.0, %v1186
    %v1188 = vpop.f32.mrb[0].mxu0
    %v1189 = vpop.f32.mrb[0].mxu0
    %v1190 = vadd.f32 0.0, %v1189
    %v1191 = vpop.f32.mrb[0].mxu0
    %1192 = vmatprep.mubr.bf16.mxu0 %v926
    %1193 = vmatmul.mubr.bf16.gmra.mrb[0].mxu0 %v918
    %v1194 = vpop.f32.mrb[0].mxu0
    %v1195 = vadd.f32 0.0, %v1194
    %v1196 = vpop.f32.mrb[0].mxu0
    %v1197 = vpop.f32.mrb[0].mxu0
    %v1198 = vadd.f32 0.0, %v1197
    %v1199 = vpop.f32.mrb[0].mxu0
    %1200 = vmatprep.mubr.bf16.mxu0 %v940
    %1201 = vmatmul.mubr.bf16.gmra.mrb[0].mxu0 %v937
    %v1202 = vpop.f32.mrb[0].mxu0
    %v1203 = vadd.f32 0.0, %v1202
    %v1204 = vpop.f32.mrb[0].mxu0
    %v1205 = vpop.f32.mrb[0].mxu0
    %v1206 = vpop.f32.mrb[0].mxu0
    %1207 = vdwg.mxu0
    %1208 = vmatprep.subr.bf16.mxu0 0
    %1209 = vmatpush1.bf16.msra.mxu0 %v1080
    %1210 = vmatprep.subr.bf16.mxu0 0
    %1211 = vmatpush1.bf16.msra.mxu0 %v1081
    %1212 = vmatprep.subr.bf16.mxu0 0
    %1213 = vmatpush1.bf16.msra.mxu0 %v1082
    %1214 = vmatprep.subr.bf16.mxu0 0
    %1215 = vmatpush1.bf16.msra.mxu0 %v1083
    %1216 = vmatprep.subr.bf16.mxu0 0
    %1217 = vmatpush1.bf16.msra.mxu0 %v1084
    %1218 = vmatprep.subr.bf16.mxu0 0
    %1219 = vmatpush1.bf16.msra.mxu0 %v1085
    %1220 = vmatprep.subr.bf16.mxu0 0
    %1221 = vmatpush1.bf16.msra.mxu0 %v1086
    %1222 = vmatprep.subr.bf16.mxu0 0
    %1223 = vmatpush1.bf16.msra.mxu0 %v1087
    %1224 = vmatprep.subr.bf16.mxu0 0
    %1225 = vmatpush1.bf16.msra.mxu0 0
    %1226 = vmatprep.subr.bf16.mxu0 0
    %1227 = vmatpush1.bf16.msra.mxu0 0
    %1228 = vmatprep.subr.bf16.mxu0 0
    %1229 = vmatpush1.bf16.msra.mxu0 0
    %1230 = vmatprep.subr.bf16.mxu0 0
    %1231 = vmatpush1.bf16.msra.mxu0 0
    %1232 = vmatprep.subr.bf16.mxu0 0
    %1233 = vmatpush1.bf16.msra.mxu0 0
    %1234 = vmatprep.subr.bf16.mxu0 0
    %1235 = vmatpush1.bf16.msra.mxu0 0
    %1236 = vmatprep.subr.bf16.mxu0 0
    %1237 = vmatpush1.bf16.msra.mxu0 0
    %1238 = vmatprep.subr.bf16.mxu0 0
    %1239 = vmatpush1.bf16.msra.mxu0 0
    %1240 = vmatprep.mubr.bf16.mxu0 0
    %1241 = vmatmul.mubr.bf16.gmra.mrb[0].mxu0 %v790
    %v1242 = vpop.f32.mrb[0].mxu0
    %v1243 = vadd.f32 %v1147, %v1242
    %v1244 = vpop.f32.mrb[0].mxu0
    %v1245 = vpop.f32.mrb[0].mxu0
    %v1246 = vadd.f32 %v1150, %v1245
    %v1247 = vpop.f32.mrb[0].mxu0
    %1248 = vmatprep.mubr.bf16.mxu0 0
    %1249 = vmatmul.mubr.bf16.gmra.mrb[0].mxu0 %v814
    %v1250 = vpop.f32.mrb[0].mxu0
    %v1251 = vadd.f32 %v1155, %v1250
    %v1252 = vpop.f32.mrb[0].mxu0
    %v1253 = vpop.f32.mrb[0].mxu0
    %v1254 = vadd.f32 %v1158, %v1253
    %v1255 = vpop.f32.mrb[0].mxu0
    %1256 = vmatprep.mubr.bf16.mxu0 0
    %1257 = vmatmul.mubr.bf16.gmra.mrb[0].mxu0 %v838
    %v1258 = vpop.f32.mrb[0].mxu0
    %v1259 = vadd.f32 %v1163, %v1258
    %v1260 = vpop.f32.mrb[0].mxu0
    %v1261 = vpop.f32.mrb[0].mxu0
    %v1262 = vadd.f32 %v1166, %v1261
    %v1263 = vpop.f32.mrb[0].mxu0
    %1264 = vmatprep.mubr.bf16.mxu0 0
    %1265 = vmatmul.mubr.bf16.gmra.mrb[0].mxu0 %v862
    %v1266 = vpop.f32.mrb[0].mxu0
    %v1267 = vadd.f32 %v1171, %v1266
    %v1268 = vpop.f32.mrb[0].mxu0
    %v1269 = vpop.f32.mrb[0].mxu0
    %v1270 = vadd.f32 %v1174, %v1269
    %v1271 = vpop.f32.mrb[0].mxu0
    %1272 = vmatprep.mubr.bf16.mxu0 0
    %1273 = vmatmul.mubr.bf16.gmra.mrb[0].mxu0 %v886
    %v1274 = vpop.f32.mrb[0].mxu0
    %v1275 = vadd.f32 %v1179, %v1274
    %v1276 = vpop.f32.mrb[0].mxu0
    %v1277 = vpop.f32.mrb[0].mxu0
    %v1278 = vadd.f32 %v1182, %v1277
    %v1279 = vpop.f32.mrb[0].mxu0
    %1280 = vmatprep.mubr.bf16.mxu0 0
    %1281 = vmatmul.mubr.bf16.gmra.mrb[0].mxu0 %v910
    %v1282 = vpop.f32.mrb[0].mxu0
    %v1283 = vadd.f32 %v1187, %v1282
    %v1284 = vpop.f32.mrb[0].mxu0
    %v1285 = vpop.f32.mrb[0].mxu0
    %v1286 = vadd.f32 %v1190, %v1285
    %v1287 = vpop.f32.mrb[0].mxu0
    %1288 = vmatprep.mubr.bf16.mxu0 0
    %1289 = vmatmul.mubr.bf16.gmra.mrb[0].mxu0 %v934
    %v1290 = vpop.f32.mrb[0].mxu0
    %v1291 = vadd.f32 %v1195, %v1290
    %v1292 = vpop.f32.mrb[0].mxu0
    %v1293 = vpop.f32.mrb[0].mxu0
    %v1294 = vadd.f32 %v1198, %v1293
    %v1295 = vpop.f32.mrb[0].mxu0
    %1296 = vmatprep.mubr.bf16.mxu0 0
    %1297 = vmatmul.mubr.bf16.gmra.mrb[0].mxu0 %v943
    %v1298 = vpop.f32.mrb[0].mxu0
    %v1299 = vadd.f32 %v1203, %v1298
    %v1300 = vpop.f32.mrb[0].mxu0
    %v1301 = vpop.f32.mrb[0].mxu0
    %v1302 = vpop.f32.mrb[0].mxu0
    %1303 = vdwg.mxu0
    %v1352 = vunpack.c.l.b16 %v654
    %v1353 = vunpack.c.l.b16 %v655
    %v1354 = vunpack.c.l.b16 %v656
    %v1355 = vunpack.c.l.b16 %v657
    %v1356 = vunpack.c.l.b16 %v658
    %v1357 = vunpack.c.l.b16 %v659
    %v1358 = vunpack.c.l.b16 %v660
    %v1359 = vunpack.c.l.b16 %v661
    %v1360 = vunpack.c.l.b16 %v662
    %v1361 = vunpack.c.l.b16 %v663
    %v1362 = vunpack.c.l.b16 %v664
    %v1363 = vunpack.c.l.b16 %v665
    %v1364 = vunpack.c.l.b16 %v666
    %v1365 = vunpack.c.l.b16 %v667
    %v1366 = vunpack.c.l.b16 %v668
    %v1367 = vunpack.c.l.b16 %v669
    %v1368 = vunpack.c.l.b16 %v670
    %v1369 = vunpack.c.l.b16 %v671
    %v1370 = vunpack.c.l.b16 %v672
    %v1371 = vunpack.c.l.b16 %v673
    %v1372 = vunpack.c.l.b16 %v674
    %v1373 = vunpack.c.l.b16 %v675
    %v1374 = vunpack.c.l.b16 %v676
    %v1375 = vunpack.c.l.b16 %v677
    %v1376 = vunpack.c.l.b16 %v678
    %v1377 = vunpack.c.l.b16 %v679
    %v1378 = vunpack.c.l.b16 %v680
    %v1379 = vunpack.c.l.b16 %v681
    %v1380 = vunpack.c.l.b16 %v682
    %v1381 = vunpack.c.l.b16 %v683
    %v1382 = vunpack.c.l.b16 %v684
    %v1383 = vunpack.c.l.b16 %v685
    %v1384 = vunpack.c.l.b16 %v686
    %v1385 = vunpack.c.l.b16 %v687
    %v1386 = vunpack.c.l.b16 %v688
    %v1387 = vunpack.c.l.b16 %v689
    %v1388 = vunpack.c.l.b16 %v690
    %v1389 = vunpack.c.l.b16 %v691
    %v1390 = vunpack.c.l.b16 %v692
    %v1391 = vunpack.c.l.b16 %v693
    %v1392 = vunpack.c.l.b16 %v694
    %v1393 = vunpack.c.l.b16 %v695
    %v1394 = vunpack.c.l.b16 %v696
    %v1395 = vunpack.c.l.b16 %v697
    %v1396 = vunpack.c.l.b16 %v698
    %v1397 = vunpack.c.l.b16 %v699
    %v1398 = vunpack.c.l.b16 %v700
    %v1399 = vunpack.c.l.b16 %v701
    %v1400 = vpack.c.b16 %v1353, %v1352
    %v1401 = vpack.c.b16 %v1355, %v1354
    %v1402 = vpack.c.b16 %v1357, %v1356
    %v1403 = vpack.c.b16 %v1359, %v1358
    %v1404 = vpack.c.b16 %v1361, %v1360
    %v1405 = vpack.c.b16 %v1363, %v1362
    %v1406 = vpack.c.b16 %v1365, %v1364
    %v1407 = vpack.c.b16 %v1367, %v1366
    %v1408 = vpack.c.b16 %v1369, %v1368
    %v1409 = vpack.c.b16 %v1371, %v1370
    %v1410 = vpack.c.b16 %v1373, %v1372
    %v1411 = vpack.c.b16 %v1375, %v1374
    %v1412 = vpack.c.b16 %v1377, %v1376
    %v1413 = vpack.c.b16 %v1379, %v1378
    %v1414 = vpack.c.b16 %v1381, %v1380
    %v1415 = vpack.c.b16 %v1383, %v1382
    %v1416 = vpack.c.b16 %v1385, %v1384
    %v1417 = vpack.c.b16 %v1387, %v1386
    %v1418 = vpack.c.b16 %v1389, %v1388
    %v1419 = vpack.c.b16 %v1391, %v1390
    %v1420 = vpack.c.b16 %v1393, %v1392
    %v1421 = vpack.c.b16 %v1395, %v1394
    %v1422 = vpack.c.b16 %v1397, %v1396
    %v1423 = vpack.c.b16 %v1399, %v1398
    %1448 = vmatprep.subr.bf16.mxu0 0
    %1449 = vmatpush1.bf16.msra.mxu0 %v1400
    %1450 = vmatprep.subr.bf16.mxu0 0
    %1451 = vmatpush1.bf16.msra.mxu0 %v1401
    %1452 = vmatprep.subr.bf16.mxu0 0
    %1453 = vmatpush1.bf16.msra.mxu0 %v1402
    %1454 = vmatprep.subr.bf16.mxu0 0
    %1455 = vmatpush1.bf16.msra.mxu0 %v1403
    %1456 = vmatprep.subr.bf16.mxu0 0
    %1457 = vmatpush1.bf16.msra.mxu0 %v1404
    %1458 = vmatprep.subr.bf16.mxu0 0
    %1459 = vmatpush1.bf16.msra.mxu0 %v1405
    %1460 = vmatprep.subr.bf16.mxu0 0
    %1461 = vmatpush1.bf16.msra.mxu0 %v1406
    %1462 = vmatprep.subr.bf16.mxu0 0
    %1463 = vmatpush1.bf16.msra.mxu0 %v1407
    %1464 = vmatprep.subr.bf16.mxu0 0
    %1465 = vmatpush1.bf16.msra.mxu0 %v1408
    %1466 = vmatprep.subr.bf16.mxu0 0
    %1467 = vmatpush1.bf16.msra.mxu0 %v1409
    %1468 = vmatprep.subr.bf16.mxu0 0
    %1469 = vmatpush1.bf16.msra.mxu0 %v1410
    %1470 = vmatprep.subr.bf16.mxu0 0
    %1471 = vmatpush1.bf16.msra.mxu0 %v1411
    %1472 = vmatprep.subr.bf16.mxu0 0
    %1473 = vmatpush1.bf16.msra.mxu0 %v1412
    %1474 = vmatprep.subr.bf16.mxu0 0
    %1475 = vmatpush1.bf16.msra.mxu0 %v1413
    %1476 = vmatprep.subr.bf16.mxu0 0
    %1477 = vmatpush1.bf16.msra.mxu0 %v1414
    %1478 = vmatprep.subr.bf16.mxu0 0
    %1479 = vmatpush1.bf16.msra.mxu0 %v1415
    %1480 = vmatprep.mubr.bf16.mxu0 %v631
    %1481 = vmatmul.mubr.bf16.gmra.mrb[0].mxu0 %v630
    %v1482 = vpop.f32.mrb[0].mxu0
    %v1483 = vadd.f32 %v1243, %v1482
    %v1484 = vpop.f32.mrb[0].mxu0
    %v1485 = vpop.f32.mrb[0].mxu0
    %v1486 = vadd.f32 %v1246, %v1485
    %v1487 = vpop.f32.mrb[0].mxu0
    %1488 = vmatprep.mubr.bf16.mxu0 %v634
    %1489 = vmatmul.mubr.bf16.gmra.mrb[0].mxu0 %v633
    %v1490 = vpop.f32.mrb[0].mxu0
    %v1491 = vadd.f32 %v1251, %v1490
    %v1492 = vpop.f32.mrb[0].mxu0
    %v1493 = vpop.f32.mrb[0].mxu0
    %v1494 = vadd.f32 %v1254, %v1493
    %v1495 = vpop.f32.mrb[0].mxu0
    %1496 = vmatprep.mubr.bf16.mxu0 %v637
    %1497 = vmatmul.mubr.bf16.gmra.mrb[0].mxu0 %v636
    %v1498 = vpop.f32.mrb[0].mxu0
    %v1499 = vadd.f32 %v1259, %v1498
    %v1500 = vpop.f32.mrb[0].mxu0
    %v1501 = vpop.f32.mrb[0].mxu0
    %v1502 = vadd.f32 %v1262, %v1501
    %v1503 = vpop.f32.mrb[0].mxu0
    %1504 = vmatprep.mubr.bf16.mxu0 %v640
    %1505 = vmatmul.mubr.bf16.gmra.mrb[0].mxu0 %v639
    %v1506 = vpop.f32.mrb[0].mxu0
    %v1507 = vadd.f32 %v1267, %v1506
    %v1508 = vpop.f32.mrb[0].mxu0
    %v1509 = vpop.f32.mrb[0].mxu0
    %v1510 = vadd.f32 %v1270, %v1509
    %v1511 = vpop.f32.mrb[0].mxu0
    %1512 = vmatprep.mubr.bf16.mxu0 %v643
    %1513 = vmatmul.mubr.bf16.gmra.mrb[0].mxu0 %v642
    %v1514 = vpop.f32.mrb[0].mxu0
    %v1515 = vadd.f32 %v1275, %v1514
    %v1516 = vpop.f32.mrb[0].mxu0
    %v1517 = vpop.f32.mrb[0].mxu0
    %v1518 = vadd.f32 %v1278, %v1517
    %v1519 = vpop.f32.mrb[0].mxu0
    %1520 = vmatprep.mubr.bf16.mxu0 %v646
    %1521 = vmatmul.mubr.bf16.gmra.mrb[0].mxu0 %v645
    %v1522 = vpop.f32.mrb[0].mxu0
    %v1523 = vadd.f32 %v1283, %v1522
    %v1524 = vpop.f32.mrb[0].mxu0
    %v1525 = vpop.f32.mrb[0].mxu0
    %v1526 = vadd.f32 %v1286, %v1525
    %v1527 = vpop.f32.mrb[0].mxu0
    %1528 = vmatprep.mubr.bf16.mxu0 %v649
    %1529 = vmatmul.mubr.bf16.gmra.mrb[0].mxu0 %v648
    %v1530 = vpop.f32.mrb[0].mxu0
    %v1531 = vadd.f32 %v1291, %v1530
    %v1532 = vpop.f32.mrb[0].mxu0
    %v1533 = vpop.f32.mrb[0].mxu0
    %v1534 = vadd.f32 %v1294, %v1533
    %v1535 = vpop.f32.mrb[0].mxu0
    %1536 = vmatprep.mubr.bf16.mxu0 %v652
    %1537 = vmatmul.mubr.bf16.gmra.mrb[0].mxu0 %v651
    %v1538 = vpop.f32.mrb[0].mxu0
    %v1539 = vadd.f32 %v1299, %v1538
    %v1540 = vpop.f32.mrb[0].mxu0
    %v1541 = vpop.f32.mrb[0].mxu0
    %v1542 = vpop.f32.mrb[0].mxu0
    %1543 = vdwg.mxu0
    %1544 = vmatprep.subr.bf16.mxu0 0
    %1545 = vmatpush1.bf16.msra.mxu0 %v1416
    %1546 = vmatprep.subr.bf16.mxu0 0
    %1547 = vmatpush1.bf16.msra.mxu0 %v1417
    %1548 = vmatprep.subr.bf16.mxu0 0
    %1549 = vmatpush1.bf16.msra.mxu0 %v1418
    %1550 = vmatprep.subr.bf16.mxu0 0
    %1551 = vmatpush1.bf16.msra.mxu0 %v1419
    %1552 = vmatprep.subr.bf16.mxu0 0
    %1553 = vmatpush1.bf16.msra.mxu0 %v1420
    %1554 = vmatprep.subr.bf16.mxu0 0
    %1555 = vmatpush1.bf16.msra.mxu0 %v1421
    %1556 = vmatprep.subr.bf16.mxu0 0
    %1557 = vmatpush1.bf16.msra.mxu0 %v1422
    %1558 = vmatprep.subr.bf16.mxu0 0
    %1559 = vmatpush1.bf16.msra.mxu0 %v1423
    %1560 = vmatprep.subr.bf16.mxu0 0
    %1561 = vmatpush1.bf16.msra.mxu0 0
    %1562 = vmatprep.subr.bf16.mxu0 0
    %1563 = vmatpush1.bf16.msra.mxu0 0
    %1564 = vmatprep.subr.bf16.mxu0 0
    %1565 = vmatpush1.bf16.msra.mxu0 0
    %1566 = vmatprep.subr.bf16.mxu0 0
    %1567 = vmatpush1.bf16.msra.mxu0 0
    %1568 = vmatprep.subr.bf16.mxu0 0
    %1569 = vmatpush1.bf16.msra.mxu0 0
    %1570 = vmatprep.subr.bf16.mxu0 0
    %1571 = vmatpush1.bf16.msra.mxu0 0
    %1572 = vmatprep.subr.bf16.mxu0 0
    %1573 = vmatpush1.bf16.msra.mxu0 0
    %1574 = vmatprep.subr.bf16.mxu0 0
    %1575 = vmatpush1.bf16.msra.mxu0 0
    %1576 = vmatprep.mubr.bf16.mxu0 0
    %1577 = vmatmul.mubr.bf16.gmra.mrb[0].mxu0 %v632
    %v1578 = vpop.f32.mrb[0].mxu0
    %v1579 = vadd.f32 %v1483, %v1578
    %v1580 = vpop.f32.mrb[0].mxu0
    %v1581 = vpop.f32.mrb[0].mxu0
    %v1582 = vadd.f32 %v1486, %v1581
    %v1583 = vpop.f32.mrb[0].mxu0
    %1584 = vmatprep.mubr.bf16.mxu0 0
    %1585 = vmatmul.mubr.bf16.gmra.mrb[0].mxu0 %v635
    %v1586 = vpop.f32.mrb[0].mxu0
    %v1587 = vadd.f32 %v1491, %v1586
    %v1588 = vpop.f32.mrb[0].mxu0
    %v1589 = vpop.f32.mrb[0].mxu0
    %v1590 = vadd.f32 %v1494, %v1589
    %v1591 = vpop.f32.mrb[0].mxu0
    %1592 = vmatprep.mubr.bf16.mxu0 0
    %1593 = vmatmul.mubr.bf16.gmra.mrb[0].mxu0 %v638
    %v1594 = vpop.f32.mrb[0].mxu0
    %v1595 = vadd.f32 %v1499, %v1594
    %v1596 = vpop.f32.mrb[0].mxu0
    %v1597 = vpop.f32.mrb[0].mxu0
    %v1598 = vadd.f32 %v1502, %v1597
    %v1599 = vpop.f32.mrb[0].mxu0
    %1600 = vmatprep.mubr.bf16.mxu0 0
    %1601 = vmatmul.mubr.bf16.gmra.mrb[0].mxu0 %v641
    %v1602 = vpop.f32.mrb[0].mxu0
    %v1603 = vadd.f32 %v1507, %v1602
    %v1604 = vpop.f32.mrb[0].mxu0
    %v1605 = vpop.f32.mrb[0].mxu0
    %v1606 = vadd.f32 %v1510, %v1605
    %v1607 = vpop.f32.mrb[0].mxu0
    %1608 = vmatprep.mubr.bf16.mxu0 0
    %1609 = vmatmul.mubr.bf16.gmra.mrb[0].mxu0 %v644
    %v1610 = vpop.f32.mrb[0].mxu0
    %v1611 = vadd.f32 %v1515, %v1610
    %v1612 = vpop.f32.mrb[0].mxu0
    %v1613 = vpop.f32.mrb[0].mxu0
    %v1614 = vadd.f32 %v1518, %v1613
    %v1615 = vpop.f32.mrb[0].mxu0
    %1616 = vmatprep.mubr.bf16.mxu0 0
    %1617 = vmatmul.mubr.bf16.gmra.mrb[0].mxu0 %v647
    %v1618 = vpop.f32.mrb[0].mxu0
    %v1619 = vadd.f32 %v1523, %v1618
    %v1620 = vpop.f32.mrb[0].mxu0
    %v1621 = vpop.f32.mrb[0].mxu0
    %v1622 = vadd.f32 %v1526, %v1621
    %v1623 = vpop.f32.mrb[0].mxu0
    %1624 = vmatprep.mubr.bf16.mxu0 0
    %1625 = vmatmul.mubr.bf16.gmra.mrb[0].mxu0 %v650
    %v1626 = vpop.f32.mrb[0].mxu0
    %v1627 = vadd.f32 %v1531, %v1626
    %v1628 = vpop.f32.mrb[0].mxu0
    %v1629 = vpop.f32.mrb[0].mxu0
    %v1630 = vadd.f32 %v1534, %v1629
    %v1631 = vpop.f32.mrb[0].mxu0
    %1632 = vmatprep.mubr.bf16.mxu0 0
    %1633 = vmatmul.mubr.bf16.gmra.mrb[0].mxu0 %v653
    %v1634 = vpop.f32.mrb[0].mxu0
    %v1635 = vadd.f32 %v1539, %v1634
    %v1636 = vpop.f32.mrb[0].mxu0
    %v1637 = vpop.f32.mrb[0].mxu0
    %v1638 = vpop.f32.mrb[0].mxu0
    %1639 = vdwg.mxu0
    %v1640 = vld [vmem:[#allocation2] sm:$0xfe]
    %v1641 = vld [vmem:[#allocation2 + $0x8] sm:$0xfe]
    %v1642 = vld [vmem:[#allocation2 + $0x10] sm:$0xfe]
    %s1643 = scalar_lea.vmem [#allocation4], 384
    %v1644 = vld [vmem:[%s1643] sm:$0xf]
    %v1645 = vld [vmem:[%s1643 + $0x4] sm:$0xf]
    %v1646 = vld [vmem:[%s1643 + $0x8] sm:$0xf]
    %v1647 = vld [vmem:[%s1643 + $0xc] sm:$0xf]
    %v1648 = vld [vmem:[%s1643 + $0x10] sm:$0xf]
    %v1649 = vld [vmem:[%s1643 + $0x14] sm:$0xf]
    %v1650 = vld [vmem:[%s1643 + $0x18] sm:$0xf]
    %v1651 = vld [vmem:[%s1643 + $0x1c] sm:$0xf]
    %v1652 = vld [vmem:[%s1643 + $0x20] sm:$0xf]
    %v1653 = vld [vmem:[%s1643 + $0x24] sm:$0xf]
    %v1654 = vld [vmem:[%s1643 + $0x28] sm:$0xf]
    %v1655 = vld [vmem:[%s1643 + $0x2c] sm:$0xf]
    %v1656 = vld [vmem:[%s1643 + $0x30] sm:$0xf]
    %v1657 = vld [vmem:[%s1643 + $0x34] sm:$0xf]
    %v1658 = vld [vmem:[%s1643 + $0x38] sm:$0xf]
    %v1659 = vld [vmem:[%s1643 + $0x3c] sm:$0xf]
    %v1660 = vld [vmem:[%s1643 + $0x40] sm:$0xf]
    %v1661 = vld [vmem:[%s1643 + $0x44] sm:$0xf]
    %v1662 = vld [vmem:[%s1643 + $0x48] sm:$0xf]
    %v1663 = vld [vmem:[%s1643 + $0x4c] sm:$0xf]
    %v1664 = vld [vmem:[%s1643 + $0x50] sm:$0xf]
    %v1665 = vld [vmem:[%s1643 + $0x54] sm:$0xf]
    %v1666 = vld [vmem:[%s1643 + $0x58] sm:$0xf]
    %v1667 = vld [vmem:[%s1643 + $0x5c] sm:$0xf]
    %v1668 = vld [vmem:[%s1643 + $0x60] sm:$0xf]
    %v1669 = vld [vmem:[%s1643 + $0x64] sm:$0xf]
    %v1670 = vld [vmem:[%s1643 + $0x68] sm:$0xf]
    %v1671 = vld [vmem:[%s1643 + $0x6c] sm:$0xf]
    %v1672 = vld [vmem:[%s1643 + $0x70] sm:$0xf]
    %v1673 = vld [vmem:[%s1643 + $0x74] sm:$0xf]
    %v1674 = vld [vmem:[%s1643 + $0x78] sm:$0xf]
    %v1675 = vld [vmem:[%s1643 + $0x7c] sm:$0xf]
    %v1676 = vld [vmem:[%s1643 + $0x80] sm:$0xf]
    %v1677 = vld [vmem:[%s1643 + $0x84] sm:$0xf]
    %v1678 = vld [vmem:[%s1643 + $0x88] sm:$0xf]
    %v1679 = vld [vmem:[%s1643 + $0x8c] sm:$0xf]
    %v1680 = vld [vmem:[%s1643 + $0x90] sm:$0xf]
    %v1681 = vld [vmem:[%s1643 + $0x94] sm:$0xf]
    %v1682 = vld [vmem:[%s1643 + $0x98] sm:$0xf]
    %v1683 = vld [vmem:[%s1643 + $0x9c] sm:$0xf]
    %v1684 = vld [vmem:[%s1643 + $0xa0] sm:$0xf]
    %v1685 = vld [vmem:[%s1643 + $0xa4] sm:$0xf]
    %v1686 = vld [vmem:[%s1643 + $0xa8] sm:$0xf]
    %v1687 = vld [vmem:[%s1643 + $0xac] sm:$0xf]
    %v1688 = vld [vmem:[%s1643 + $0xb0] sm:$0xf]
    %v1689 = vld [vmem:[%s1643 + $0xb4] sm:$0xf]
    %v1690 = vld [vmem:[%s1643 + $0xb8] sm:$0xf]
    %v1691 = vld [vmem:[%s1643 + $0xbc] sm:$0xf]
    %vm1716 = vcmask 1046528
    %v1717 = vrot.slane %v1640, 1
    %v1718 = vrot.slane %v633, 1
    %v1719 = vsel %vm1716, %v1717, %v1718
    %v1720 = vrot.slane %v1641, 1
    %v1721 = vrot.slane %v634, 1
    %v1722 = vsel %vm1716, %v1720, %v1721
    %v1723 = vrot.slane %v1642, 1
    %v1724 = vrot.slane %v635, 1
    %v1725 = vsel %vm1716, %v1723, %v1724
    %v1726 = vrot.slane %v636, 1
    %v1727 = vsel %vm1716, %v1718, %v1726
    %v1728 = vrot.slane %v637, 1
    %v1729 = vsel %vm1716, %v1721, %v1728
    %v1730 = vrot.slane %v638, 1
    %v1731 = vsel %vm1716, %v1724, %v1730
    %v1732 = vrot.slane %v639, 1
    %v1733 = vsel %vm1716, %v1726, %v1732
    %v1734 = vrot.slane %v640, 1
    %v1735 = vsel %vm1716, %v1728, %v1734
    %v1736 = vrot.slane %v641, 1
    %v1737 = vsel %vm1716, %v1730, %v1736
    %v1738 = vrot.slane %v642, 1
    %v1739 = vsel %vm1716, %v1732, %v1738
    %v1740 = vrot.slane %v643, 1
    %v1741 = vsel %vm1716, %v1734, %v1740
    %v1742 = vrot.slane %v644, 1
    %v1743 = vsel %vm1716, %v1736, %v1742
    %v1744 = vrot.slane %v645, 1
    %v1745 = vsel %vm1716, %v1738, %v1744
    %v1746 = vrot.slane %v646, 1
    %v1747 = vsel %vm1716, %v1740, %v1746
    %v1748 = vrot.slane %v647, 1
    %v1749 = vsel %vm1716, %v1742, %v1748
    %v1750 = vrot.slane %v648, 1
    %v1751 = vsel %vm1716, %v1744, %v1750
    %v1752 = vrot.slane %v649, 1
    %v1753 = vsel %vm1716, %v1746, %v1752
    %v1754 = vrot.slane %v650, 1
    %v1755 = vsel %vm1716, %v1748, %v1754
    %v1756 = vrot.slane %v702, 1
    %v1757 = vsel %vm1716, %v1750, %v1756
    %v1758 = vrot.slane %v703, 1
    %v1759 = vsel %vm1716, %v1752, %v1758
    %v1760 = vrot.slane %v704, 1
    %v1761 = vsel %vm1716, %v1754, %v1760
    %v1834 = vunpack.c.l.b16 %v1644
    %v1835 = vunpack.c.l.b16 %v1645
    %v1836 = vunpack.c.l.b16 %v1646
    %v1837 = vunpack.c.l.b16 %v1647
    %v1838 = vunpack.c.l.b16 %v1648
    %v1839 = vunpack.c.l.b16 %v1649
    %v1840 = vunpack.c.l.b16 %v1650
    %v1841 = vunpack.c.l.b16 %v1651
    %v1842 = vunpack.c.l.b16 %v1652
    %v1843 = vunpack.c.l.b16 %v1653
    %v1844 = vunpack.c.l.b16 %v1654
    %v1845 = vunpack.c.l.b16 %v1655
    %v1846 = vunpack.c.l.b16 %v1656
    %v1847 = vunpack.c.l.b16 %v1657
    %v1848 = vunpack.c.l.b16 %v1658
    %v1849 = vunpack.c.l.b16 %v1659
    %v1850 = vunpack.c.l.b16 %v1660
    %v1851 = vunpack.c.l.b16 %v1661
    %v1852 = vunpack.c.l.b16 %v1662
    %v1853 = vunpack.c.l.b16 %v1663
    %v1854 = vunpack.c.l.b16 %v1664
    %v1855 = vunpack.c.l.b16 %v1665
    %v1856 = vunpack.c.l.b16 %v1666
    %v1857 = vunpack.c.l.b16 %v1667
    %v1858 = vunpack.c.l.b16 %v1668
    %v1859 = vunpack.c.l.b16 %v1669
    %v1860 = vunpack.c.l.b16 %v1670
    %v1861 = vunpack.c.l.b16 %v1671
    %v1862 = vunpack.c.l.b16 %v1672
    %v1863 = vunpack.c.l.b16 %v1673
    %v1864 = vunpack.c.l.b16 %v1674
    %v1865 = vunpack.c.l.b16 %v1675
    %v1866 = vunpack.c.l.b16 %v1676
    %v1867 = vunpack.c.l.b16 %v1677
    %v1868 = vunpack.c.l.b16 %v1678
    %v1869 = vunpack.c.l.b16 %v1679
    %v1870 = vunpack.c.l.b16 %v1680
    %v1871 = vunpack.c.l.b16 %v1681
    %v1872 = vunpack.c.l.b16 %v1682
    %v1873 = vunpack.c.l.b16 %v1683
    %v1874 = vunpack.c.l.b16 %v1684
    %v1875 = vunpack.c.l.b16 %v1685
    %v1876 = vunpack.c.l.b16 %v1686
    %v1877 = vunpack.c.l.b16 %v1687
    %v1878 = vunpack.c.l.b16 %v1688
    %v1879 = vunpack.c.l.b16 %v1689
    %v1880 = vunpack.c.l.b16 %v1690
    %v1881 = vunpack.c.l.b16 %v1691
    %v1882 = vpack.c.b16 %v1835, %v1834
    %v1883 = vpack.c.b16 %v1837, %v1836
    %v1884 = vpack.c.b16 %v1839, %v1838
    %v1885 = vpack.c.b16 %v1841, %v1840
    %v1886 = vpack.c.b16 %v1843, %v1842
    %v1887 = vpack.c.b16 %v1845, %v1844
    %v1888 = vpack.c.b16 %v1847, %v1846
    %v1889 = vpack.c.b16 %v1849, %v1848
    %v1890 = vpack.c.b16 %v1851, %v1850
    %v1891 = vpack.c.b16 %v1853, %v1852
    %v1892 = vpack.c.b16 %v1855, %v1854
    %v1893 = vpack.c.b16 %v1857, %v1856
    %v1894 = vpack.c.b16 %v1859, %v1858
    %v1895 = vpack.c.b16 %v1861, %v1860
    %v1896 = vpack.c.b16 %v1863, %v1862
    %v1897 = vpack.c.b16 %v1865, %v1864
    %v1898 = vpack.c.b16 %v1867, %v1866
    %v1899 = vpack.c.b16 %v1869, %v1868
    %v1900 = vpack.c.b16 %v1871, %v1870
    %v1901 = vpack.c.b16 %v1873, %v1872
    %v1902 = vpack.c.b16 %v1875, %v1874
    %v1903 = vpack.c.b16 %v1877, %v1876
    %v1904 = vpack.c.b16 %v1879, %v1878
    %v1905 = vpack.c.b16 %v1881, %v1880
    %1930 = vmatprep.subr.bf16.mxu0 0
    %1931 = vmatpush1.bf16.msra.mxu0 %v1882
    %1932 = vmatprep.subr.bf16.mxu0 0
    %1933 = vmatpush1.bf16.msra.mxu0 %v1883
    %1934 = vmatprep.subr.bf16.mxu0 0
    %1935 = vmatpush1.bf16.msra.mxu0 %v1884
    %1936 = vmatprep.subr.bf16.mxu0 0
    %1937 = vmatpush1.bf16.msra.mxu0 %v1885
    %1938 = vmatprep.subr.bf16.mxu0 0
    %1939 = vmatpush1.bf16.msra.mxu0 %v1886
    %1940 = vmatprep.subr.bf16.mxu0 0
    %1941 = vmatpush1.bf16.msra.mxu0 %v1887
    %1942 = vmatprep.subr.bf16.mxu0 0
    %1943 = vmatpush1.bf16.msra.mxu0 %v1888
    %1944 = vmatprep.subr.bf16.mxu0 0
    %1945 = vmatpush1.bf16.msra.mxu0 %v1889
    %1946 = vmatprep.subr.bf16.mxu0 0
    %1947 = vmatpush1.bf16.msra.mxu0 %v1890
    %1948 = vmatprep.subr.bf16.mxu0 0
    %1949 = vmatpush1.bf16.msra.mxu0 %v1891
    %1950 = vmatprep.subr.bf16.mxu0 0
    %1951 = vmatpush1.bf16.msra.mxu0 %v1892
    %1952 = vmatprep.subr.bf16.mxu0 0
    %1953 = vmatpush1.bf16.msra.mxu0 %v1893
    %1954 = vmatprep.subr.bf16.mxu0 0
    %1955 = vmatpush1.bf16.msra.mxu0 %v1894
    %1956 = vmatprep.subr.bf16.mxu0 0
    %1957 = vmatpush1.bf16.msra.mxu0 %v1895
    %1958 = vmatprep.subr.bf16.mxu0 0
    %1959 = vmatpush1.bf16.msra.mxu0 %v1896
    %1960 = vmatprep.subr.bf16.mxu0 0
    %1961 = vmatpush1.bf16.msra.mxu0 %v1897
    %1962 = vmatprep.mubr.bf16.mxu0 %v1722
    %1963 = vmatmul.mubr.bf16.gmra.mrb[0].mxu0 %v1719
    %v1964 = vpop.f32.mrb[0].mxu0
    %v1965 = vadd.f32 0.0, %v1964
    %v1966 = vpop.f32.mrb[0].mxu0
    %v1967 = vpop.f32.mrb[0].mxu0
    %v1968 = vadd.f32 0.0, %v1967
    %v1969 = vpop.f32.mrb[0].mxu0
    %1970 = vmatprep.mubr.bf16.mxu0 %v1729
    %1971 = vmatmul.mubr.bf16.gmra.mrb[0].mxu0 %v1727
    %v1972 = vpop.f32.mrb[0].mxu0
    %v1973 = vadd.f32 0.0, %v1972
    %v1974 = vpop.f32.mrb[0].mxu0
    %v1975 = vpop.f32.mrb[0].mxu0
    %v1976 = vadd.f32 0.0, %v1975
    %v1977 = vpop.f32.mrb[0].mxu0
    %1978 = vmatprep.mubr.bf16.mxu0 %v1735
    %1979 = vmatmul.mubr.bf16.gmra.mrb[0].mxu0 %v1733
    %v1980 = vpop.f32.mrb[0].mxu0
    %v1981 = vadd.f32 0.0, %v1980
    %v1982 = vpop.f32.mrb[0].mxu0
    %v1983 = vpop.f32.mrb[0].mxu0
    %v1984 = vadd.f32 0.0, %v1983
    %v1985 = vpop.f32.mrb[0].mxu0
    %1986 = vmatprep.mubr.bf16.mxu0 %v1741
    %1987 = vmatmul.mubr.bf16.gmra.mrb[0].mxu0 %v1739
    %v1988 = vpop.f32.mrb[0].mxu0
    %v1989 = vadd.f32 0.0, %v1988
    %v1990 = vpop.f32.mrb[0].mxu0
    %v1991 = vpop.f32.mrb[0].mxu0
    %v1992 = vadd.f32 0.0, %v1991
    %v1993 = vpop.f32.mrb[0].mxu0
    %1994 = vmatprep.mubr.bf16.mxu0 %v1747
    %1995 = vmatmul.mubr.bf16.gmra.mrb[0].mxu0 %v1745
    %v1996 = vpop.f32.mrb[0].mxu0
    %v1997 = vadd.f32 0.0, %v1996
    %v1998 = vpop.f32.mrb[0].mxu0
    %v1999 = vpop.f32.mrb[0].mxu0
    %v2000 = vadd.f32 0.0, %v1999
    %v2001 = vpop.f32.mrb[0].mxu0
    %2002 = vmatprep.mubr.bf16.mxu0 %v1753
    %2003 = vmatmul.mubr.bf16.gmra.mrb[0].mxu0 %v1751
    %v2004 = vpop.f32.mrb[0].mxu0
    %v2005 = vadd.f32 0.0, %v2004
    %v2006 = vpop.f32.mrb[0].mxu0
    %v2007 = vpop.f32.mrb[0].mxu0
    %v2008 = vadd.f32 0.0, %v2007
    %v2009 = vpop.f32.mrb[0].mxu0
    %2010 = vmatprep.mubr.bf16.mxu0 %v1759
    %2011 = vmatmul.mubr.bf16.gmra.mrb[0].mxu0 %v1757
    %v2012 = vpop.f32.mrb[0].mxu0
    %v2013 = vadd.f32 0.0, %v2012
    %v2014 = vpop.f32.mrb[0].mxu0
    %v2015 = vpop.f32.mrb[0].mxu0
    %v2016 = vadd.f32 0.0, %v2015
    %v2017 = vpop.f32.mrb[0].mxu0
    %2018 = vmatprep.mubr.bf16.mxu0 %v1758
    %2019 = vmatmul.mubr.bf16.gmra.mrb[0].mxu0 %v1756
    %v2020 = vpop.f32.mrb[0].mxu0
    %v2021 = vadd.f32 0.0, %v2020
    %v2022 = vpop.f32.mrb[0].mxu0
    %v2023 = vpop.f32.mrb[0].mxu0
    %v2024 = vpop.f32.mrb[0].mxu0
    %2025 = vdwg.mxu0
    %2026 = vmatprep.subr.bf16.mxu0 0
    %2027 = vmatpush1.bf16.msra.mxu0 %v1898
    %2028 = vmatprep.subr.bf16.mxu0 0
    %2029 = vmatpush1.bf16.msra.mxu0 %v1899
    %2030 = vmatprep.subr.bf16.mxu0 0
    %2031 = vmatpush1.bf16.msra.mxu0 %v1900
    %2032 = vmatprep.subr.bf16.mxu0 0
    %2033 = vmatpush1.bf16.msra.mxu0 %v1901
    %2034 = vmatprep.subr.bf16.mxu0 0
    %2035 = vmatpush1.bf16.msra.mxu0 %v1902
    %2036 = vmatprep.subr.bf16.mxu0 0
    %2037 = vmatpush1.bf16.msra.mxu0 %v1903
    %2038 = vmatprep.subr.bf16.mxu0 0
    %2039 = vmatpush1.bf16.msra.mxu0 %v1904
    %2040 = vmatprep.subr.bf16.mxu0 0
    %2041 = vmatpush1.bf16.msra.mxu0 %v1905
    %2042 = vmatprep.subr.bf16.mxu0 0
    %2043 = vmatpush1.bf16.msra.mxu0 0
    %2044 = vmatprep.subr.bf16.mxu0 0
    %2045 = vmatpush1.bf16.msra.mxu0 0
    %2046 = vmatprep.subr.bf16.mxu0 0
    %2047 = vmatpush1.bf16.msra.mxu0 0
    %2048 = vmatprep.subr.bf16.mxu0 0
    %2049 = vmatpush1.bf16.msra.mxu0 0
    %2050 = vmatprep.subr.bf16.mxu0 0
    %2051 = vmatpush1.bf16.msra.mxu0 0
    %2052 = vmatprep.subr.bf16.mxu0 0
    %2053 = vmatpush1.bf16.msra.mxu0 0
    %2054 = vmatprep.subr.bf16.mxu0 0
    %2055 = vmatpush1.bf16.msra.mxu0 0
    %2056 = vmatprep.subr.bf16.mxu0 0
    %2057 = vmatpush1.bf16.msra.mxu0 0
    %2058 = vmatprep.mubr.bf16.mxu0 0
    %2059 = vmatmul.mubr.bf16.gmra.mrb[0].mxu0 %v1725
    %v2060 = vpop.f32.mrb[0].mxu0
    %v2061 = vadd.f32 %v1965, %v2060
    %v2062 = vpop.f32.mrb[0].mxu0
    %v2063 = vpop.f32.mrb[0].mxu0
    %v2064 = vadd.f32 %v1968, %v2063
    %v2065 = vpop.f32.mrb[0].mxu0
    %2066 = vmatprep.mubr.bf16.mxu0 0
    %2067 = vmatmul.mubr.bf16.gmra.mrb[0].mxu0 %v1731
    %v2068 = vpop.f32.mrb[0].mxu0
    %v2069 = vadd.f32 %v1973, %v2068
    %v2070 = vpop.f32.mrb[0].mxu0
    %v2071 = vpop.f32.mrb[0].mxu0
    %v2072 = vadd.f32 %v1976, %v2071
    %v2073 = vpop.f32.mrb[0].mxu0
    %2074 = vmatprep.mubr.bf16.mxu0 0
    %2075 = vmatmul.mubr.bf16.gmra.mrb[0].mxu0 %v1737
    %v2076 = vpop.f32.mrb[0].mxu0
    %v2077 = vadd.f32 %v1981, %v2076
    %v2078 = vpop.f32.mrb[0].mxu0
    %v2079 = vpop.f32.mrb[0].mxu0
    %v2080 = vadd.f32 %v1984, %v2079
    %v2081 = vpop.f32.mrb[0].mxu0
    %2082 = vmatprep.mubr.bf16.mxu0 0
    %2083 = vmatmul.mubr.bf16.gmra.mrb[0].mxu0 %v1743
    %v2084 = vpop.f32.mrb[0].mxu0
    %v2085 = vadd.f32 %v1989, %v2084
    %v2086 = vpop.f32.mrb[0].mxu0
    %v2087 = vpop.f32.mrb[0].mxu0
    %v2088 = vadd.f32 %v1992, %v2087
    %v2089 = vpop.f32.mrb[0].mxu0
    %2090 = vmatprep.mubr.bf16.mxu0 0
    %2091 = vmatmul.mubr.bf16.gmra.mrb[0].mxu0 %v1749
    %v2092 = vpop.f32.mrb[0].mxu0
    %v2093 = vadd.f32 %v1997, %v2092
    %v2094 = vpop.f32.mrb[0].mxu0
    %v2095 = vpop.f32.mrb[0].mxu0
    %v2096 = vadd.f32 %v2000, %v2095
    %v2097 = vpop.f32.mrb[0].mxu0
    %2098 = vmatprep.mubr.bf16.mxu0 0
    %2099 = vmatmul.mubr.bf16.gmra.mrb[0].mxu0 %v1755
    %v2100 = vpop.f32.mrb[0].mxu0
    %v2101 = vadd.f32 %v2005, %v2100
    %v2102 = vpop.f32.mrb[0].mxu0
    %v2103 = vpop.f32.mrb[0].mxu0
    %v2104 = vadd.f32 %v2008, %v2103
    %v2105 = vpop.f32.mrb[0].mxu0
    %2106 = vmatprep.mubr.bf16.mxu0 0
    %2107 = vmatmul.mubr.bf16.gmra.mrb[0].mxu0 %v1761
    %v2108 = vpop.f32.mrb[0].mxu0
    %v2109 = vadd.f32 %v2013, %v2108
    %v2110 = vpop.f32.mrb[0].mxu0
    %v2111 = vpop.f32.mrb[0].mxu0
    %v2112 = vadd.f32 %v2016, %v2111
    %v2113 = vpop.f32.mrb[0].mxu0
    %2114 = vmatprep.mubr.bf16.mxu0 0
    %2115 = vmatmul.mubr.bf16.gmra.mrb[0].mxu0 %v1760
    %v2116 = vpop.f32.mrb[0].mxu0
    %v2117 = vadd.f32 %v2021, %v2116
    %v2118 = vpop.f32.mrb[0].mxu0
    %v2119 = vpop.f32.mrb[0].mxu0
    %v2120 = vpop.f32.mrb[0].mxu0
    %2121 = vdwg.mxu0
    %v2122 = vadd.f32 %v1579, %v2061
    %v2123 = vadd.f32 %v1582, %v2064
    %v2124 = vadd.f32 %v1587, %v2069
    %v2125 = vadd.f32 %v1590, %v2072
    %v2126 = vadd.f32 %v1595, %v2077
    %v2127 = vadd.f32 %v1598, %v2080
    %v2128 = vadd.f32 %v1603, %v2085
    %v2129 = vadd.f32 %v1606, %v2088
    %v2130 = vadd.f32 %v1611, %v2093
    %v2131 = vadd.f32 %v1614, %v2096
    %v2132 = vadd.f32 %v1619, %v2101
    %v2133 = vadd.f32 %v1622, %v2104
    %v2134 = vadd.f32 %v1627, %v2109
    %v2135 = vadd.f32 %v1630, %v2112
    %v2136 = vadd.f32 %v1635, %v2117
    %v2137 = vld [vmem:[#allocation2] sm:$0xe0]
    %v2138 = vld [vmem:[#allocation2 + $0x8] sm:$0xe0]
    %v2139 = vld [vmem:[#allocation2 + $0x10] sm:$0xe0]
    %v2140 = vld [vmem:[#allocation2 + $0x18] sm:$0xff]
    %v2141 = vld [vmem:[#allocation2 + $0x20] sm:$0xff]
    %v2142 = vld [vmem:[#allocation2 + $0x28] sm:$0xff]
    %v2143 = vld [vmem:[#allocation2 + $0x30] sm:$0xff]
    %v2144 = vld [vmem:[#allocation2 + $0x38] sm:$0xff]
    %v2145 = vld [vmem:[#allocation2 + $0x40] sm:$0xff]
    %v2146 = vld [vmem:[#allocation2 + $0x48] sm:$0xff]
    %v2147 = vld [vmem:[#allocation2 + $0x50] sm:$0xff]
    %v2148 = vld [vmem:[#allocation2 + $0x58] sm:$0xff]
    %v2149 = vld [vmem:[#allocation2 + $0x60] sm:$0xff]
    %v2150 = vld [vmem:[#allocation2 + $0x68] sm:$0xff]
    %v2151 = vld [vmem:[#allocation2 + $0x70] sm:$0xff]
    %v2152 = vld [vmem:[#allocation2 + $0x78] sm:$0xff]
    %v2153 = vld [vmem:[#allocation2 + $0x80] sm:$0xff]
    %v2154 = vld [vmem:[#allocation2 + $0x88] sm:$0xff]
    %v2155 = vld [vmem:[#allocation2 + $0x90] sm:$0xff]
    %v2156 = vld [vmem:[#allocation2 + $0x98] sm:$0xff]
    %v2157 = vld [vmem:[#allocation2 + $0xa0] sm:$0xff]
    %v2158 = vld [vmem:[#allocation2 + $0xa8] sm:$0xff]
    %v2159 = vld [vmem:[#allocation2 + $0xb0] sm:$0xff]
    %v2160 = vld [vmem:[#allocation2 + $0xb8] sm:$0xff]
    %v2161 = vld [vmem:[#allocation2 + $0xc0] sm:$0x1]
    %v2162 = vld [vmem:[#allocation2 + $0xc8] sm:$0x1]
    %v2163 = vld [vmem:[#allocation2 + $0xd0] sm:$0x1]
    %s2164 = scalar_lea.vmem [#allocation4], 576
    %v2165 = vld [vmem:[%s2164] sm:$0xf]
    %v2166 = vld [vmem:[%s2164 + $0x4] sm:$0xf]
    %v2167 = vld [vmem:[%s2164 + $0x8] sm:$0xf]
    %v2168 = vld [vmem:[%s2164 + $0xc] sm:$0xf]
    %v2169 = vld [vmem:[%s2164 + $0x10] sm:$0xf]
    %v2170 = vld [vmem:[%s2164 + $0x14] sm:$0xf]
    %v2171 = vld [vmem:[%s2164 + $0x18] sm:$0xf]
    %v2172 = vld [vmem:[%s2164 + $0x1c] sm:$0xf]
    %v2173 = vld [vmem:[%s2164 + $0x20] sm:$0xf]
    %v2174 = vld [vmem:[%s2164 + $0x24] sm:$0xf]
    %v2175 = vld [vmem:[%s2164 + $0x28] sm:$0xf]
    %v2176 = vld [vmem:[%s2164 + $0x2c] sm:$0xf]
    %v2177 = vld [vmem:[%s2164 + $0x30] sm:$0xf]
    %v2178 = vld [vmem:[%s2164 + $0x34] sm:$0xf]
    %v2179 = vld [vmem:[%s2164 + $0x38] sm:$0xf]
    %v2180 = vld [vmem:[%s2164 + $0x3c] sm:$0xf]
    %v2181 = vld [vmem:[%s2164 + $0x40] sm:$0xf]
    %v2182 = vld [vmem:[%s2164 + $0x44] sm:$0xf]
    %v2183 = vld [vmem:[%s2164 + $0x48] sm:$0xf]
    %v2184 = vld [vmem:[%s2164 + $0x4c] sm:$0xf]
    %v2185 = vld [vmem:[%s2164 + $0x50] sm:$0xf]
    %v2186 = vld [vmem:[%s2164 + $0x54] sm:$0xf]
    %v2187 = vld [vmem:[%s2164 + $0x58] sm:$0xf]
    %v2188 = vld [vmem:[%s2164 + $0x5c] sm:$0xf]
    %v2189 = vld [vmem:[%s2164 + $0x60] sm:$0xf]
    %v2190 = vld [vmem:[%s2164 + $0x64] sm:$0xf]
    %v2191 = vld [vmem:[%s2164 + $0x68] sm:$0xf]
    %v2192 = vld [vmem:[%s2164 + $0x6c] sm:$0xf]
    %v2193 = vld [vmem:[%s2164 + $0x70] sm:$0xf]
    %v2194 = vld [vmem:[%s2164 + $0x74] sm:$0xf]
    %v2195 = vld [vmem:[%s2164 + $0x78] sm:$0xf]
    %v2196 = vld [vmem:[%s2164 + $0x7c] sm:$0xf]
    %v2197 = vld [vmem:[%s2164 + $0x80] sm:$0xf]
    %v2198 = vld [vmem:[%s2164 + $0x84] sm:$0xf]
    %v2199 = vld [vmem:[%s2164 + $0x88] sm:$0xf]
    %v2200 = vld [vmem:[%s2164 + $0x8c] sm:$0xf]
    %v2201 = vld [vmem:[%s2164 + $0x90] sm:$0xf]
    %v2202 = vld [vmem:[%s2164 + $0x94] sm:$0xf]
    %v2203 = vld [vmem:[%s2164 + $0x98] sm:$0xf]
    %v2204 = vld [vmem:[%s2164 + $0x9c] sm:$0xf]
    %v2205 = vld [vmem:[%s2164 + $0xa0] sm:$0xf]
    %v2206 = vld [vmem:[%s2164 + $0xa4] sm:$0xf]
    %v2207 = vld [vmem:[%s2164 + $0xa8] sm:$0xf]
    %v2208 = vld [vmem:[%s2164 + $0xac] sm:$0xf]
    %v2209 = vld [vmem:[%s2164 + $0xb0] sm:$0xf]
    %v2210 = vld [vmem:[%s2164 + $0xb4] sm:$0xf]
    %v2211 = vld [vmem:[%s2164 + $0xb8] sm:$0xf]
    %v2212 = vld [vmem:[%s2164 + $0xbc] sm:$0xf]
    %vm2240 = vcmask 1042432
    %v2241 = vrot.slane %v2137, 5
    %v2242 = vrot.slane %v2140, 5
    %v2243 = vsel %vm2240, %v2241, %v2242
    %v2244 = vrot.slane %v2138, 5
    %v2245 = vrot.slane %v2141, 5
    %v2246 = vsel %vm2240, %v2244, %v2245
    %v2247 = vrot.slane %v2139, 5
    %v2248 = vrot.slane %v2142, 5
    %v2249 = vsel %vm2240, %v2247, %v2248
    %v2250 = vrot.slane %v2143, 5
    %v2251 = vsel %vm2240, %v2242, %v2250
    %v2252 = vrot.slane %v2144, 5
    %v2253 = vsel %vm2240, %v2245, %v2252
    %v2254 = vrot.slane %v2145, 5
    %v2255 = vsel %vm2240, %v2248, %v2254
    %v2256 = vrot.slane %v2146, 5
    %v2257 = vsel %vm2240, %v2250, %v2256
    %v2258 = vrot.slane %v2147, 5
    %v2259 = vsel %vm2240, %v2252, %v2258
    %v2260 = vrot.slane %v2148, 5
    %v2261 = vsel %vm2240, %v2254, %v2260
    %v2262 = vrot.slane %v2149, 5
    %v2263 = vsel %vm2240, %v2256, %v2262
    %v2264 = vrot.slane %v2150, 5
    %v2265 = vsel %vm2240, %v2258, %v2264
    %v2266 = vrot.slane %v2151, 5
    %v2267 = vsel %vm2240, %v2260, %v2266
    %v2268 = vrot.slane %v2152, 5
    %v2269 = vsel %vm2240, %v2262, %v2268
    %v2270 = vrot.slane %v2153, 5
    %v2271 = vsel %vm2240, %v2264, %v2270
    %v2272 = vrot.slane %v2154, 5
    %v2273 = vsel %vm2240, %v2266, %v2272
    %v2274 = vrot.slane %v2155, 5
    %v2275 = vsel %vm2240, %v2268, %v2274
    %v2276 = vrot.slane %v2156, 5
    %v2277 = vsel %vm2240, %v2270, %v2276
    %v2278 = vrot.slane %v2157, 5
    %v2279 = vsel %vm2240, %v2272, %v2278
    %v2280 = vrot.slane %v2158, 5
    %v2281 = vsel %vm2240, %v2274, %v2280
    %v2282 = vrot.slane %v2159, 5
    %v2283 = vsel %vm2240, %v2276, %v2282
    %v2284 = vrot.slane %v2160, 5
    %v2285 = vsel %vm2240, %v2278, %v2284
    %v2286 = vrot.slane %v2161, 5
    %v2287 = vsel %vm2240, %v2280, %v2286
    %v2288 = vrot.slane %v2162, 5
    %v2289 = vsel %vm2240, %v2282, %v2288
    %v2290 = vrot.slane %v2163, 5
    %v2291 = vsel %vm2240, %v2284, %v2290
    %v2364 = vunpack.c.l.b16 %v2165
    %v2365 = vunpack.c.l.b16 %v2166
    %v2366 = vunpack.c.l.b16 %v2167
    %v2367 = vunpack.c.l.b16 %v2168
    %v2368 = vunpack.c.l.b16 %v2169
    %v2369 = vunpack.c.l.b16 %v2170
    %v2370 = vunpack.c.l.b16 %v2171
    %v2371 = vunpack.c.l.b16 %v2172
    %v2372 = vunpack.c.l.b16 %v2173
    %v2373 = vunpack.c.l.b16 %v2174
    %v2374 = vunpack.c.l.b16 %v2175
    %v2375 = vunpack.c.l.b16 %v2176
    %v2376 = vunpack.c.l.b16 %v2177
    %v2377 = vunpack.c.l.b16 %v2178
    %v2378 = vunpack.c.l.b16 %v2179
    %v2379 = vunpack.c.l.b16 %v2180
    %v2380 = vunpack.c.l.b16 %v2181
    %v2381 = vunpack.c.l.b16 %v2182
    %v2382 = vunpack.c.l.b16 %v2183
    %v2383 = vunpack.c.l.b16 %v2184
    %v2384 = vunpack.c.l.b16 %v2185
    %v2385 = vunpack.c.l.b16 %v2186
    %v2386 = vunpack.c.l.b16 %v2187
    %v2387 = vunpack.c.l.b16 %v2188
    %v2388 = vunpack.c.l.b16 %v2189
    %v2389 = vunpack.c.l.b16 %v2190
    %v2390 = vunpack.c.l.b16 %v2191
    %v2391 = vunpack.c.l.b16 %v2192
    %v2392 = vunpack.c.l.b16 %v2193
    %v2393 = vunpack.c.l.b16 %v2194
    %v2394 = vunpack.c.l.b16 %v2195
    %v2395 = vunpack.c.l.b16 %v2196
    %v2396 = vunpack.c.l.b16 %v2197
    %v2397 = vunpack.c.l.b16 %v2198
    %v2398 = vunpack.c.l.b16 %v2199
    %v2399 = vunpack.c.l.b16 %v2200
    %v2400 = vunpack.c.l.b16 %v2201
    %v2401 = vunpack.c.l.b16 %v2202
    %v2402 = vunpack.c.l.b16 %v2203
    %v2403 = vunpack.c.l.b16 %v2204
    %v2404 = vunpack.c.l.b16 %v2205
    %v2405 = vunpack.c.l.b16 %v2206
    %v2406 = vunpack.c.l.b16 %v2207
    %v2407 = vunpack.c.l.b16 %v2208
    %v2408 = vunpack.c.l.b16 %v2209
    %v2409 = vunpack.c.l.b16 %v2210
    %v2410 = vunpack.c.l.b16 %v2211
    %v2411 = vunpack.c.l.b16 %v2212
    %v2412 = vpack.c.b16 %v2365, %v2364
    %v2413 = vpack.c.b16 %v2367, %v2366
    %v2414 = vpack.c.b16 %v2369, %v2368
    %v2415 = vpack.c.b16 %v2371, %v2370
    %v2416 = vpack.c.b16 %v2373, %v2372
    %v2417 = vpack.c.b16 %v2375, %v2374
    %v2418 = vpack.c.b16 %v2377, %v2376
    %v2419 = vpack.c.b16 %v2379, %v2378
    %v2420 = vpack.c.b16 %v2381, %v2380
    %v2421 = vpack.c.b16 %v2383, %v2382
    %v2422 = vpack.c.b16 %v2385, %v2384
    %v2423 = vpack.c.b16 %v2387, %v2386
    %v2424 = vpack.c.b16 %v2389, %v2388
    %v2425 = vpack.c.b16 %v2391, %v2390
    %v2426 = vpack.c.b16 %v2393, %v2392
    %v2427 = vpack.c.b16 %v2395, %v2394
    %v2428 = vpack.c.b16 %v2397, %v2396
    %v2429 = vpack.c.b16 %v2399, %v2398
    %v2430 = vpack.c.b16 %v2401, %v2400
    %v2431 = vpack.c.b16 %v2403, %v2402
    %v2432 = vpack.c.b16 %v2405, %v2404
    %v2433 = vpack.c.b16 %v2407, %v2406
    %v2434 = vpack.c.b16 %v2409, %v2408
    %v2435 = vpack.c.b16 %v2411, %v2410
    %2460 = vmatprep.subr.bf16.mxu0 0
    %2461 = vmatpush1.bf16.msra.mxu0 %v2412
    %2462 = vmatprep.subr.bf16.mxu0 0
    %2463 = vmatpush1.bf16.msra.mxu0 %v2413
    %2464 = vmatprep.subr.bf16.mxu0 0
    %2465 = vmatpush1.bf16.msra.mxu0 %v2414
    %2466 = vmatprep.subr.bf16.mxu0 0
    %2467 = vmatpush1.bf16.msra.mxu0 %v2415
    %2468 = vmatprep.subr.bf16.mxu0 0
    %2469 = vmatpush1.bf16.msra.mxu0 %v2416
    %2470 = vmatprep.subr.bf16.mxu0 0
    %2471 = vmatpush1.bf16.msra.mxu0 %v2417
    %2472 = vmatprep.subr.bf16.mxu0 0
    %2473 = vmatpush1.bf16.msra.mxu0 %v2418
    %2474 = vmatprep.subr.bf16.mxu0 0
    %2475 = vmatpush1.bf16.msra.mxu0 %v2419
    %2476 = vmatprep.subr.bf16.mxu0 0
    %2477 = vmatpush1.bf16.msra.mxu0 %v2420
    %2478 = vmatprep.subr.bf16.mxu0 0
    %2479 = vmatpush1.bf16.msra.mxu0 %v2421
    %2480 = vmatprep.subr.bf16.mxu0 0
    %2481 = vmatpush1.bf16.msra.mxu0 %v2422
    %2482 = vmatprep.subr.bf16.mxu0 0
    %2483 = vmatpush1.bf16.msra.mxu0 %v2423
    %2484 = vmatprep.subr.bf16.mxu0 0
    %2485 = vmatpush1.bf16.msra.mxu0 %v2424
    %2486 = vmatprep.subr.bf16.mxu0 0
    %2487 = vmatpush1.bf16.msra.mxu0 %v2425
    %2488 = vmatprep.subr.bf16.mxu0 0
    %2489 = vmatpush1.bf16.msra.mxu0 %v2426
    %2490 = vmatprep.subr.bf16.mxu0 0
    %2491 = vmatpush1.bf16.msra.mxu0 %v2427
    %2492 = vmatprep.mubr.bf16.mxu0 %v2246
    %2493 = vmatmul.mubr.bf16.gmra.mrb[0].mxu0 %v2243
    %v2494 = vpop.f32.mrb[0].mxu0
    %v2495 = vadd.f32 0.0, %v2494
    %v2496 = vpop.f32.mrb[0].mxu0
    %v2497 = vpop.f32.mrb[0].mxu0
    %v2498 = vadd.f32 0.0, %v2497
    %v2499 = vpop.f32.mrb[0].mxu0
    %2500 = vmatprep.mubr.bf16.mxu0 %v2253
    %2501 = vmatmul.mubr.bf16.gmra.mrb[0].mxu0 %v2251
    %v2502 = vpop.f32.mrb[0].mxu0
    %v2503 = vadd.f32 0.0, %v2502
    %v2504 = vpop.f32.mrb[0].mxu0
    %v2505 = vpop.f32.mrb[0].mxu0
    %v2506 = vadd.f32 0.0, %v2505
    %v2507 = vpop.f32.mrb[0].mxu0
    %2508 = vmatprep.mubr.bf16.mxu0 %v2259
    %2509 = vmatmul.mubr.bf16.gmra.mrb[0].mxu0 %v2257
    %v2510 = vpop.f32.mrb[0].mxu0
    %v2511 = vadd.f32 0.0, %v2510
    %v2512 = vpop.f32.mrb[0].mxu0
    %v2513 = vpop.f32.mrb[0].mxu0
    %v2514 = vadd.f32 0.0, %v2513
    %v2515 = vpop.f32.mrb[0].mxu0
    %2516 = vmatprep.mubr.bf16.mxu0 %v2265
    %2517 = vmatmul.mubr.bf16.gmra.mrb[0].mxu0 %v2263
    %v2518 = vpop.f32.mrb[0].mxu0
    %v2519 = vadd.f32 0.0, %v2518
    %v2520 = vpop.f32.mrb[0].mxu0
    %v2521 = vpop.f32.mrb[0].mxu0
    %v2522 = vadd.f32 0.0, %v2521
    %v2523 = vpop.f32.mrb[0].mxu0
    %2524 = vmatprep.mubr.bf16.mxu0 %v2271
    %2525 = vmatmul.mubr.bf16.gmra.mrb[0].mxu0 %v2269
    %v2526 = vpop.f32.mrb[0].mxu0
    %v2527 = vadd.f32 0.0, %v2526
    %v2528 = vpop.f32.mrb[0].mxu0
    %v2529 = vpop.f32.mrb[0].mxu0
    %v2530 = vadd.f32 0.0, %v2529
    %v2531 = vpop.f32.mrb[0].mxu0
    %2532 = vmatprep.mubr.bf16.mxu0 %v2277
    %2533 = vmatmul.mubr.bf16.gmra.mrb[0].mxu0 %v2275
    %v2534 = vpop.f32.mrb[0].mxu0
    %v2535 = vadd.f32 0.0, %v2534
    %v2536 = vpop.f32.mrb[0].mxu0
    %v2537 = vpop.f32.mrb[0].mxu0
    %v2538 = vadd.f32 0.0, %v2537
    %v2539 = vpop.f32.mrb[0].mxu0
    %2540 = vmatprep.mubr.bf16.mxu0 %v2283
    %2541 = vmatmul.mubr.bf16.gmra.mrb[0].mxu0 %v2281
    %v2542 = vpop.f32.mrb[0].mxu0
    %v2543 = vadd.f32 0.0, %v2542
    %v2544 = vpop.f32.mrb[0].mxu0
    %v2545 = vpop.f32.mrb[0].mxu0
    %v2546 = vadd.f32 0.0, %v2545
    %v2547 = vpop.f32.mrb[0].mxu0
    %2548 = vmatprep.mubr.bf16.mxu0 %v2289
    %2549 = vmatmul.mubr.bf16.gmra.mrb[0].mxu0 %v2287
    %v2550 = vpop.f32.mrb[0].mxu0
    %v2551 = vadd.f32 0.0, %v2550
    %v2552 = vpop.f32.mrb[0].mxu0
    %v2553 = vpop.f32.mrb[0].mxu0
    %v2554 = vpop.f32.mrb[0].mxu0
    %2555 = vdwg.mxu0
    %2556 = vmatprep.subr.bf16.mxu0 0
    %2557 = vmatpush1.bf16.msra.mxu0 %v2428
    %2558 = vmatprep.subr.bf16.mxu0 0
    %2559 = vmatpush1.bf16.msra.mxu0 %v2429
    %2560 = vmatprep.subr.bf16.mxu0 0
    %2561 = vmatpush1.bf16.msra.mxu0 %v2430
    %2562 = vmatprep.subr.bf16.mxu0 0
    %2563 = vmatpush1.bf16.msra.mxu0 %v2431
    %2564 = vmatprep.subr.bf16.mxu0 0
    %2565 = vmatpush1.bf16.msra.mxu0 %v2432
    %2566 = vmatprep.subr.bf16.mxu0 0
    %2567 = vmatpush1.bf16.msra.mxu0 %v2433
    %2568 = vmatprep.subr.bf16.mxu0 0
    %2569 = vmatpush1.bf16.msra.mxu0 %v2434
    %2570 = vmatprep.subr.bf16.mxu0 0
    %2571 = vmatpush1.bf16.msra.mxu0 %v2435
    %2572 = vmatprep.subr.bf16.mxu0 0
    %2573 = vmatpush1.bf16.msra.mxu0 0
    %2574 = vmatprep.subr.bf16.mxu0 0
    %2575 = vmatpush1.bf16.msra.mxu0 0
    %2576 = vmatprep.subr.bf16.mxu0 0
    %2577 = vmatpush1.bf16.msra.mxu0 0
    %2578 = vmatprep.subr.bf16.mxu0 0
    %2579 = vmatpush1.bf16.msra.mxu0 0
    %2580 = vmatprep.subr.bf16.mxu0 0
    %2581 = vmatpush1.bf16.msra.mxu0 0
    %2582 = vmatprep.subr.bf16.mxu0 0
    %2583 = vmatpush1.bf16.msra.mxu0 0
    %2584 = vmatprep.subr.bf16.mxu0 0
    %2585 = vmatpush1.bf16.msra.mxu0 0
    %2586 = vmatprep.subr.bf16.mxu0 0
    %2587 = vmatpush1.bf16.msra.mxu0 0
    %2588 = vmatprep.mubr.bf16.mxu0 0
    %2589 = vmatmul.mubr.bf16.gmra.mrb[0].mxu0 %v2249
    %v2590 = vpop.f32.mrb[0].mxu0
    %v2591 = vadd.f32 %v2495, %v2590
    %v2592 = vpop.f32.mrb[0].mxu0
    %v2593 = vpop.f32.mrb[0].mxu0
    %v2594 = vadd.f32 %v2498, %v2593
    %v2595 = vpop.f32.mrb[0].mxu0
    %2596 = vmatprep.mubr.bf16.mxu0 0
    %2597 = vmatmul.mubr.bf16.gmra.mrb[0].mxu0 %v2255
    %v2598 = vpop.f32.mrb[0].mxu0
    %v2599 = vadd.f32 %v2503, %v2598
    %v2600 = vpop.f32.mrb[0].mxu0
    %v2601 = vpop.f32.mrb[0].mxu0
    %v2602 = vadd.f32 %v2506, %v2601
    %v2603 = vpop.f32.mrb[0].mxu0
    %2604 = vmatprep.mubr.bf16.mxu0 0
    %2605 = vmatmul.mubr.bf16.gmra.mrb[0].mxu0 %v2261
    %v2606 = vpop.f32.mrb[0].mxu0
    %v2607 = vadd.f32 %v2511, %v2606
    %v2608 = vpop.f32.mrb[0].mxu0
    %v2609 = vpop.f32.mrb[0].mxu0
    %v2610 = vadd.f32 %v2514, %v2609
    %v2611 = vpop.f32.mrb[0].mxu0
    %2612 = vmatprep.mubr.bf16.mxu0 0
    %2613 = vmatmul.mubr.bf16.gmra.mrb[0].mxu0 %v2267
    %v2614 = vpop.f32.mrb[0].mxu0
    %v2615 = vadd.f32 %v2519, %v2614
    %v2616 = vpop.f32.mrb[0].mxu0
    %v2617 = vpop.f32.mrb[0].mxu0
    %v2618 = vadd.f32 %v2522, %v2617
    %v2619 = vpop.f32.mrb[0].mxu0
    %2620 = vmatprep.mubr.bf16.mxu0 0
    %2621 = vmatmul.mubr.bf16.gmra.mrb[0].mxu0 %v2273
    %v2622 = vpop.f32.mrb[0].mxu0
    %v2623 = vadd.f32 %v2527, %v2622
    %v2624 = vpop.f32.mrb[0].mxu0
    %v2625 = vpop.f32.mrb[0].mxu0
    %v2626 = vadd.f32 %v2530, %v2625
    %v2627 = vpop.f32.mrb[0].mxu0
    %2628 = vmatprep.mubr.bf16.mxu0 0
    %2629 = vmatmul.mubr.bf16.gmra.mrb[0].mxu0 %v2279
    %v2630 = vpop.f32.mrb[0].mxu0
    %v2631 = vadd.f32 %v2535, %v2630
    %v2632 = vpop.f32.mrb[0].mxu0
    %v2633 = vpop.f32.mrb[0].mxu0
    %v2634 = vadd.f32 %v2538, %v2633
    %v2635 = vpop.f32.mrb[0].mxu0
    %2636 = vmatprep.mubr.bf16.mxu0 0
    %2637 = vmatmul.mubr.bf16.gmra.mrb[0].mxu0 %v2285
    %v2638 = vpop.f32.mrb[0].mxu0
    %v2639 = vadd.f32 %v2543, %v2638
    %v2640 = vpop.f32.mrb[0].mxu0
    %v2641 = vpop.f32.mrb[0].mxu0
    %v2642 = vadd.f32 %v2546, %v2641
    %v2643 = vpop.f32.mrb[0].mxu0
    %2644 = vmatprep.mubr.bf16.mxu0 0
    %2645 = vmatmul.mubr.bf16.gmra.mrb[0].mxu0 %v2291
    %v2646 = vpop.f32.mrb[0].mxu0
    %v2647 = vadd.f32 %v2551, %v2646
    %v2648 = vpop.f32.mrb[0].mxu0
    %v2649 = vpop.f32.mrb[0].mxu0
    %v2650 = vpop.f32.mrb[0].mxu0
    %2651 = vdwg.mxu0
    %v2652 = vadd.f32 %v2122, %v2591
    %v2653 = vadd.f32 %v2123, %v2594
    %v2654 = vadd.f32 %v2124, %v2599
    %v2655 = vadd.f32 %v2125, %v2602
    %v2656 = vadd.f32 %v2126, %v2607
    %v2657 = vadd.f32 %v2127, %v2610
    %v2658 = vadd.f32 %v2128, %v2615
    %v2659 = vadd.f32 %v2129, %v2618
    %v2660 = vadd.f32 %v2130, %v2623
    %v2661 = vadd.f32 %v2131, %v2626
    %v2662 = vadd.f32 %v2132, %v2631
    %v2663 = vadd.f32 %v2133, %v2634
    %v2664 = vadd.f32 %v2134, %v2639
    %v2665 = vadd.f32 %v2135, %v2642
    %v2666 = vadd.f32 %v2136, %v2647
    %v2667 = vld [vmem:[#allocation2 + $0xc0] sm:$0x3]
    %v2668 = vld [vmem:[#allocation2 + $0xc8] sm:$0x3]
    %v2669 = vld [vmem:[#allocation2 + $0xd0] sm:$0x3]
    %s2670 = scalar_lea.vmem [#allocation4], 768
    %v2671 = vld [vmem:[%s2670] sm:$0xf]
    %v2672 = vld [vmem:[%s2670 + $0x4] sm:$0xf]
    %v2673 = vld [vmem:[%s2670 + $0x8] sm:$0xf]
    %v2674 = vld [vmem:[%s2670 + $0xc] sm:$0xf]
    %v2675 = vld [vmem:[%s2670 + $0x10] sm:$0xf]
    %v2676 = vld [vmem:[%s2670 + $0x14] sm:$0xf]
    %v2677 = vld [vmem:[%s2670 + $0x18] sm:$0xf]
    %v2678 = vld [vmem:[%s2670 + $0x1c] sm:$0xf]
    %v2679 = vld [vmem:[%s2670 + $0x20] sm:$0xf]
    %v2680 = vld [vmem:[%s2670 + $0x24] sm:$0xf]
    %v2681 = vld [vmem:[%s2670 + $0x28] sm:$0xf]
    %v2682 = vld [vmem:[%s2670 + $0x2c] sm:$0xf]
    %v2683 = vld [vmem:[%s2670 + $0x30] sm:$0xf]
    %v2684 = vld [vmem:[%s2670 + $0x34] sm:$0xf]
    %v2685 = vld [vmem:[%s2670 + $0x38] sm:$0xf]
    %v2686 = vld [vmem:[%s2670 + $0x3c] sm:$0xf]
    %v2687 = vld [vmem:[%s2670 + $0x40] sm:$0xf]
    %v2688 = vld [vmem:[%s2670 + $0x44] sm:$0xf]
    %v2689 = vld [vmem:[%s2670 + $0x48] sm:$0xf]
    %v2690 = vld [vmem:[%s2670 + $0x4c] sm:$0xf]
    %v2691 = vld [vmem:[%s2670 + $0x50] sm:$0xf]
    %v2692 = vld [vmem:[%s2670 + $0x54] sm:$0xf]
    %v2693 = vld [vmem:[%s2670 + $0x58] sm:$0xf]
    %v2694 = vld [vmem:[%s2670 + $0x5c] sm:$0xf]
    %v2695 = vld [vmem:[%s2670 + $0x60] sm:$0xf]
    %v2696 = vld [vmem:[%s2670 + $0x64] sm:$0xf]
    %v2697 = vld [vmem:[%s2670 + $0x68] sm:$0xf]
    %v2698 = vld [vmem:[%s2670 + $0x6c] sm:$0xf]
    %v2699 = vld [vmem:[%s2670 + $0x70] sm:$0xf]
    %v2700 = vld [vmem:[%s2670 + $0x74] sm:$0xf]
    %v2701 = vld [vmem:[%s2670 + $0x78] sm:$0xf]
    %v2702 = vld [vmem:[%s2670 + $0x7c] sm:$0xf]
    %v2703 = vld [vmem:[%s2670 + $0x80] sm:$0xf]
    %v2704 = vld [vmem:[%s2670 + $0x84] sm:$0xf]
    %v2705 = vld [vmem:[%s2670 + $0x88] sm:$0xf]
    %v2706 = vld [vmem:[%s2670 + $0x8c] sm:$0xf]
    %v2707 = vld [vmem:[%s2670 + $0x90] sm:$0xf]
    %v2708 = vld [vmem:[%s2670 + $0x94] sm:$0xf]
    %v2709 = vld [vmem:[%s2670 + $0x98] sm:$0xf]
    %v2710 = vld [vmem:[%s2670 + $0x9c] sm:$0xf]
    %v2711 = vld [vmem:[%s2670 + $0xa0] sm:$0xf]
    %v2712 = vld [vmem:[%s2670 + $0xa4] sm:$0xf]
    %v2713 = vld [vmem:[%s2670 + $0xa8] sm:$0xf]
    %v2714 = vld [vmem:[%s2670 + $0xac] sm:$0xf]
    %v2715 = vld [vmem:[%s2670 + $0xb0] sm:$0xf]
    %v2716 = vld [vmem:[%s2670 + $0xb4] sm:$0xf]
    %v2717 = vld [vmem:[%s2670 + $0xb8] sm:$0xf]
    %v2718 = vld [vmem:[%s2670 + $0xbc] sm:$0xf]
    %vm2719 = vsmask.f32 2304
    %v2721 = vshrl.u32 %v2137, 16
    %v2723 = vrot.slane %v2721, 5
    %v2724 = vshll.u32 %v2137, 16
    %v2726 = vrot.slane %v2724, 6
    %v2727 = vor.u32 %v2723, %v2726
    %v2729 = vshrl.u32 %v2140, 16
    %v2731 = vrot.slane %v2729, 5
    %v2732 = vshll.u32 %v2140, 16
    %v2734 = vrot.slane %v2732, 6
    %v2735 = vor.u32 %v2731, %v2734
    %v2736 = vsel %vm2719, %v2727, %v2735
    %v2738 = vshrl.u32 %v2138, 16
    %v2740 = vrot.slane %v2738, 5
    %v2741 = vshll.u32 %v2138, 16
    %v2743 = vrot.slane %v2741, 6
    %v2744 = vor.u32 %v2740, %v2743
    %v2746 = vshrl.u32 %v2141, 16
    %v2748 = vrot.slane %v2746, 5
    %v2749 = vshll.u32 %v2141, 16
    %v2751 = vrot.slane %v2749, 6
    %v2752 = vor.u32 %v2748, %v2751
    %v2753 = vsel %vm2719, %v2744, %v2752
    %v2755 = vshrl.u32 %v2139, 16
    %v2757 = vrot.slane %v2755, 5
    %v2758 = vshll.u32 %v2139, 16
    %v2760 = vrot.slane %v2758, 6
    %v2761 = vor.u32 %v2757, %v2760
    %v2763 = vshrl.u32 %v2142, 16
    %v2765 = vrot.slane %v2763, 5
    %v2766 = vshll.u32 %v2142, 16
    %v2768 = vrot.slane %v2766, 6
    %v2769 = vor.u32 %v2765, %v2768
    %v2770 = vsel %vm2719, %v2761, %v2769
    %v2772 = vshrl.u32 %v2143, 16
    %v2774 = vrot.slane %v2772, 5
    %v2775 = vshll.u32 %v2143, 16
    %v2777 = vrot.slane %v2775, 6
    %v2778 = vor.u32 %v2774, %v2777
    %v2779 = vsel %vm2719, %v2735, %v2778
    %v2781 = vshrl.u32 %v2144, 16
    %v2783 = vrot.slane %v2781, 5
    %v2784 = vshll.u32 %v2144, 16
    %v2786 = vrot.slane %v2784, 6
    %v2787 = vor.u32 %v2783, %v2786
    %v2788 = vsel %vm2719, %v2752, %v2787
    %v2790 = vshrl.u32 %v2145, 16
    %v2792 = vrot.slane %v2790, 5
    %v2793 = vshll.u32 %v2145, 16
    %v2795 = vrot.slane %v2793, 6
    %v2796 = vor.u32 %v2792, %v2795
    %v2797 = vsel %vm2719, %v2769, %v2796
    %v2799 = vshrl.u32 %v2146, 16
    %v2801 = vrot.slane %v2799, 5
    %v2802 = vshll.u32 %v2146, 16
    %v2804 = vrot.slane %v2802, 6
    %v2805 = vor.u32 %v2801, %v2804
    %v2806 = vsel %vm2719, %v2778, %v2805
    %v2808 = vshrl.u32 %v2147, 16
    %v2810 = vrot.slane %v2808, 5
    %v2811 = vshll.u32 %v2147, 16
    %v2813 = vrot.slane %v2811, 6
    %v2814 = vor.u32 %v2810, %v2813
    %v2815 = vsel %vm2719, %v2787, %v2814
    %v2817 = vshrl.u32 %v2148, 16
    %v2819 = vrot.slane %v2817, 5
    %v2820 = vshll.u32 %v2148, 16
    %v2822 = vrot.slane %v2820, 6
    %v2823 = vor.u32 %v2819, %v2822
    %v2824 = vsel %vm2719, %v2796, %v2823
    %v2826 = vshrl.u32 %v2149, 16
    %v2828 = vrot.slane %v2826, 5
    %v2829 = vshll.u32 %v2149, 16
    %v2831 = vrot.slane %v2829, 6
    %v2832 = vor.u32 %v2828, %v2831
    %v2833 = vsel %vm2719, %v2805, %v2832
    %v2835 = vshrl.u32 %v2150, 16
    %v2837 = vrot.slane %v2835, 5
    %v2838 = vshll.u32 %v2150, 16
    %v2840 = vrot.slane %v2838, 6
    %v2841 = vor.u32 %v2837, %v2840
    %v2842 = vsel %vm2719, %v2814, %v2841
    %v2844 = vshrl.u32 %v2151, 16
    %v2846 = vrot.slane %v2844, 5
    %v2847 = vshll.u32 %v2151, 16
    %v2849 = vrot.slane %v2847, 6
    %v2850 = vor.u32 %v2846, %v2849
    %v2851 = vsel %vm2719, %v2823, %v2850
    %v2853 = vshrl.u32 %v2152, 16
    %v2855 = vrot.slane %v2853, 5
    %v2856 = vshll.u32 %v2152, 16
    %v2858 = vrot.slane %v2856, 6
    %v2859 = vor.u32 %v2855, %v2858
    %v2860 = vsel %vm2719, %v2832, %v2859
    %v2862 = vshrl.u32 %v2153, 16
    %v2864 = vrot.slane %v2862, 5
    %v2865 = vshll.u32 %v2153, 16
    %v2867 = vrot.slane %v2865, 6
    %v2868 = vor.u32 %v2864, %v2867
    %v2869 = vsel %vm2719, %v2841, %v2868
    %v2871 = vshrl.u32 %v2154, 16
    %v2873 = vrot.slane %v2871, 5
    %v2874 = vshll.u32 %v2154, 16
    %v2876 = vrot.slane %v2874, 6
    %v2877 = vor.u32 %v2873, %v2876
    %v2878 = vsel %vm2719, %v2850, %v2877
    %v2880 = vshrl.u32 %v2155, 16
    %v2882 = vrot.slane %v2880, 5
    %v2883 = vshll.u32 %v2155, 16
    %v2885 = vrot.slane %v2883, 6
    %v2886 = vor.u32 %v2882, %v2885
    %v2887 = vsel %vm2719, %v2859, %v2886
    %v2889 = vshrl.u32 %v2156, 16
    %v2891 = vrot.slane %v2889, 5
    %v2892 = vshll.u32 %v2156, 16
    %v2894 = vrot.slane %v2892, 6
    %v2895 = vor.u32 %v2891, %v2894
    %v2896 = vsel %vm2719, %v2868, %v2895
    %v2898 = vshrl.u32 %v2157, 16
    %v2900 = vrot.slane %v2898, 5
    %v2901 = vshll.u32 %v2157, 16
    %v2903 = vrot.slane %v2901, 6
    %v2904 = vor.u32 %v2900, %v2903
    %v2905 = vsel %vm2719, %v2877, %v2904
    %v2907 = vshrl.u32 %v2158, 16
    %v2909 = vrot.slane %v2907, 5
    %v2910 = vshll.u32 %v2158, 16
    %v2912 = vrot.slane %v2910, 6
    %v2913 = vor.u32 %v2909, %v2912
    %v2914 = vsel %vm2719, %v2886, %v2913
    %v2916 = vshrl.u32 %v2159, 16
    %v2918 = vrot.slane %v2916, 5
    %v2919 = vshll.u32 %v2159, 16
    %v2921 = vrot.slane %v2919, 6
    %v2922 = vor.u32 %v2918, %v2921
    %v2923 = vsel %vm2719, %v2895, %v2922
    %v2925 = vshrl.u32 %v2160, 16
    %v2927 = vrot.slane %v2925, 5
    %v2928 = vshll.u32 %v2160, 16
    %v2930 = vrot.slane %v2928, 6
    %v2931 = vor.u32 %v2927, %v2930
    %v2932 = vsel %vm2719, %v2904, %v2931
    %v2934 = vshrl.u32 %v2667, 16
    %v2936 = vrot.slane %v2934, 5
    %v2937 = vshll.u32 %v2667, 16
    %v2939 = vrot.slane %v2937, 6
    %v2940 = vor.u32 %v2936, %v2939
    %v2941 = vsel %vm2719, %v2913, %v2940
    %v2943 = vshrl.u32 %v2668, 16
    %v2945 = vrot.slane %v2943, 5
    %v2946 = vshll.u32 %v2668, 16
    %v2948 = vrot.slane %v2946, 6
    %v2949 = vor.u32 %v2945, %v2948
    %v2950 = vsel %vm2719, %v2922, %v2949
    %v2952 = vshrl.u32 %v2669, 16
    %v2954 = vrot.slane %v2952, 5
    %v2955 = vshll.u32 %v2669, 16
    %v2957 = vrot.slane %v2955, 6
    %v2958 = vor.u32 %v2954, %v2957
    %v2959 = vsel %vm2719, %v2931, %v2958
    %v3032 = vunpack.c.l.b16 %v2671
    %v3033 = vunpack.c.l.b16 %v2672
    %v3034 = vunpack.c.l.b16 %v2673
    %v3035 = vunpack.c.l.b16 %v2674
    %v3036 = vunpack.c.l.b16 %v2675
    %v3037 = vunpack.c.l.b16 %v2676
    %v3038 = vunpack.c.l.b16 %v2677
    %v3039 = vunpack.c.l.b16 %v2678
    %v3040 = vunpack.c.l.b16 %v2679
    %v3041 = vunpack.c.l.b16 %v2680
    %v3042 = vunpack.c.l.b16 %v2681
    %v3043 = vunpack.c.l.b16 %v2682
    %v3044 = vunpack.c.l.b16 %v2683
    %v3045 = vunpack.c.l.b16 %v2684
    %v3046 = vunpack.c.l.b16 %v2685
    %v3047 = vunpack.c.l.b16 %v2686
    %v3048 = vunpack.c.l.b16 %v2687
    %v3049 = vunpack.c.l.b16 %v2688
    %v3050 = vunpack.c.l.b16 %v2689
    %v3051 = vunpack.c.l.b16 %v2690
    %v3052 = vunpack.c.l.b16 %v2691
    %v3053 = vunpack.c.l.b16 %v2692
    %v3054 = vunpack.c.l.b16 %v2693
    %v3055 = vunpack.c.l.b16 %v2694
    %v3056 = vunpack.c.l.b16 %v2695
    %v3057 = vunpack.c.l.b16 %v2696
    %v3058 = vunpack.c.l.b16 %v2697
    %v3059 = vunpack.c.l.b16 %v2698
    %v3060 = vunpack.c.l.b16 %v2699
    %v3061 = vunpack.c.l.b16 %v2700
    %v3062 = vunpack.c.l.b16 %v2701
    %v3063 = vunpack.c.l.b16 %v2702
    %v3064 = vunpack.c.l.b16 %v2703
    %v3065 = vunpack.c.l.b16 %v2704
    %v3066 = vunpack.c.l.b16 %v2705
    %v3067 = vunpack.c.l.b16 %v2706
    %v3068 = vunpack.c.l.b16 %v2707
    %v3069 = vunpack.c.l.b16 %v2708
    %v3070 = vunpack.c.l.b16 %v2709
    %v3071 = vunpack.c.l.b16 %v2710
    %v3072 = vunpack.c.l.b16 %v2711
    %v3073 = vunpack.c.l.b16 %v2712
    %v3074 = vunpack.c.l.b16 %v2713
    %v3075 = vunpack.c.l.b16 %v2714
    %v3076 = vunpack.c.l.b16 %v2715
    %v3077 = vunpack.c.l.b16 %v2716
    %v3078 = vunpack.c.l.b16 %v2717
    %v3079 = vunpack.c.l.b16 %v2718
    %v3080 = vpack.c.b16 %v3033, %v3032
    %v3081 = vpack.c.b16 %v3035, %v3034
    %v3082 = vpack.c.b16 %v3037, %v3036
    %v3083 = vpack.c.b16 %v3039, %v3038
    %v3084 = vpack.c.b16 %v3041, %v3040
    %v3085 = vpack.c.b16 %v3043, %v3042
    %v3086 = vpack.c.b16 %v3045, %v3044
    %v3087 = vpack.c.b16 %v3047, %v3046
    %v3088 = vpack.c.b16 %v3049, %v3048
    %v3089 = vpack.c.b16 %v3051, %v3050
    %v3090 = vpack.c.b16 %v3053, %v3052
    %v3091 = vpack.c.b16 %v3055, %v3054
    %v3092 = vpack.c.b16 %v3057, %v3056
    %v3093 = vpack.c.b16 %v3059, %v3058
    %v3094 = vpack.c.b16 %v3061, %v3060
    %v3095 = vpack.c.b16 %v3063, %v3062
    %v3096 = vpack.c.b16 %v3065, %v3064
    %v3097 = vpack.c.b16 %v3067, %v3066
    %v3098 = vpack.c.b16 %v3069, %v3068
    %v3099 = vpack.c.b16 %v3071, %v3070
    %v3100 = vpack.c.b16 %v3073, %v3072
    %v3101 = vpack.c.b16 %v3075, %v3074
    %v3102 = vpack.c.b16 %v3077, %v3076
    %v3103 = vpack.c.b16 %v3079, %v3078
    %3128 = vmatprep.subr.bf16.mxu0 0
    %3129 = vmatpush1.bf16.msra.mxu0 %v3080
    %3130 = vmatprep.subr.bf16.mxu0 0
    %3131 = vmatpush1.bf16.msra.mxu0 %v3081
    %3132 = vmatprep.subr.bf16.mxu0 0
    %3133 = vmatpush1.bf16.msra.mxu0 %v3082
    %3134 = vmatprep.subr.bf16.mxu0 0
    %3135 = vmatpush1.bf16.msra.mxu0 %v3083
    %3136 = vmatprep.subr.bf16.mxu0 0
    %3137 = vmatpush1.bf16.msra.mxu0 %v3084
    %3138 = vmatprep.subr.bf16.mxu0 0
    %3139 = vmatpush1.bf16.msra.mxu0 %v3085
    %3140 = vmatprep.subr.bf16.mxu0 0
    %3141 = vmatpush1.bf16.msra.mxu0 %v3086
    %3142 = vmatprep.subr.bf16.mxu0 0
    %3143 = vmatpush1.bf16.msra.mxu0 %v3087
    %3144 = vmatprep.subr.bf16.mxu0 0
    %3145 = vmatpush1.bf16.msra.mxu0 %v3088
    %3146 = vmatprep.subr.bf16.mxu0 0
    %3147 = vmatpush1.bf16.msra.mxu0 %v3089
    %3148 = vmatprep.subr.bf16.mxu0 0
    %3149 = vmatpush1.bf16.msra.mxu0 %v3090
    %3150 = vmatprep.subr.bf16.mxu0 0
    %3151 = vmatpush1.bf16.msra.mxu0 %v3091
    %3152 = vmatprep.subr.bf16.mxu0 0
    %3153 = vmatpush1.bf16.msra.mxu0 %v3092
    %3154 = vmatprep.subr.bf16.mxu0 0
    %3155 = vmatpush1.bf16.msra.mxu0 %v3093
    %3156 = vmatprep.subr.bf16.mxu0 0
    %3157 = vmatpush1.bf16.msra.mxu0 %v3094
    %3158 = vmatprep.subr.bf16.mxu0 0
    %3159 = vmatpush1.bf16.msra.mxu0 %v3095
    %3160 = vmatprep.mubr.bf16.mxu0 %v2753
    %3161 = vmatmul.mubr.bf16.gmra.mrb[0].mxu0 %v2736
    %v3162 = vpop.f32.mrb[0].mxu0
    %v3163 = vadd.f32 0.0, %v3162
    %v3164 = vpop.f32.mrb[0].mxu0
    %v3165 = vpop.f32.mrb[0].mxu0
    %v3166 = vadd.f32 0.0, %v3165
    %v3167 = vpop.f32.mrb[0].mxu0
    %3168 = vmatprep.mubr.bf16.mxu0 %v2788
    %3169 = vmatmul.mubr.bf16.gmra.mrb[0].mxu0 %v2779
    %v3170 = vpop.f32.mrb[0].mxu0
    %v3171 = vadd.f32 0.0, %v3170
    %v3172 = vpop.f32.mrb[0].mxu0
    %v3173 = vpop.f32.mrb[0].mxu0
    %v3174 = vadd.f32 0.0, %v3173
    %v3175 = vpop.f32.mrb[0].mxu0
    %3176 = vmatprep.mubr.bf16.mxu0 %v2815
    %3177 = vmatmul.mubr.bf16.gmra.mrb[0].mxu0 %v2806
    %v3178 = vpop.f32.mrb[0].mxu0
    %v3179 = vadd.f32 0.0, %v3178
    %v3180 = vpop.f32.mrb[0].mxu0
    %v3181 = vpop.f32.mrb[0].mxu0
    %v3182 = vadd.f32 0.0, %v3181
    %v3183 = vpop.f32.mrb[0].mxu0
    %3184 = vmatprep.mubr.bf16.mxu0 %v2842
    %3185 = vmatmul.mubr.bf16.gmra.mrb[0].mxu0 %v2833
    %v3186 = vpop.f32.mrb[0].mxu0
    %v3187 = vadd.f32 0.0, %v3186
    %v3188 = vpop.f32.mrb[0].mxu0
    %v3189 = vpop.f32.mrb[0].mxu0
    %v3190 = vadd.f32 0.0, %v3189
    %v3191 = vpop.f32.mrb[0].mxu0
    %3192 = vmatprep.mubr.bf16.mxu0 %v2869
    %3193 = vmatmul.mubr.bf16.gmra.mrb[0].mxu0 %v2860
    %v3194 = vpop.f32.mrb[0].mxu0
    %v3195 = vadd.f32 0.0, %v3194
    %v3196 = vpop.f32.mrb[0].mxu0
    %v3197 = vpop.f32.mrb[0].mxu0
    %v3198 = vadd.f32 0.0, %v3197
    %v3199 = vpop.f32.mrb[0].mxu0
    %3200 = vmatprep.mubr.bf16.mxu0 %v2896
    %3201 = vmatmul.mubr.bf16.gmra.mrb[0].mxu0 %v2887
    %v3202 = vpop.f32.mrb[0].mxu0
    %v3203 = vadd.f32 0.0, %v3202
    %v3204 = vpop.f32.mrb[0].mxu0
    %v3205 = vpop.f32.mrb[0].mxu0
    %v3206 = vadd.f32 0.0, %v3205
    %v3207 = vpop.f32.mrb[0].mxu0
    %3208 = vmatprep.mubr.bf16.mxu0 %v2923
    %3209 = vmatmul.mubr.bf16.gmra.mrb[0].mxu0 %v2914
    %v3210 = vpop.f32.mrb[0].mxu0
    %v3211 = vadd.f32 0.0, %v3210
    %v3212 = vpop.f32.mrb[0].mxu0
    %v3213 = vpop.f32.mrb[0].mxu0
    %v3214 = vadd.f32 0.0, %v3213
    %v3215 = vpop.f32.mrb[0].mxu0
    %3216 = vmatprep.mubr.bf16.mxu0 %v2950
    %3217 = vmatmul.mubr.bf16.gmra.mrb[0].mxu0 %v2941
    %v3218 = vpop.f32.mrb[0].mxu0
    %v3219 = vadd.f32 0.0, %v3218
    %v3220 = vpop.f32.mrb[0].mxu0
    %v3221 = vpop.f32.mrb[0].mxu0
    %v3222 = vpop.f32.mrb[0].mxu0
    %3223 = vdwg.mxu0
    %3224 = vmatprep.subr.bf16.mxu0 0
    %3225 = vmatpush1.bf16.msra.mxu0 %v3096
    %3226 = vmatprep.subr.bf16.mxu0 0
    %3227 = vmatpush1.bf16.msra.mxu0 %v3097
    %3228 = vmatprep.subr.bf16.mxu0 0
    %3229 = vmatpush1.bf16.msra.mxu0 %v3098
    %3230 = vmatprep.subr.bf16.mxu0 0
    %3231 = vmatpush1.bf16.msra.mxu0 %v3099
    %3232 = vmatprep.subr.bf16.mxu0 0
    %3233 = vmatpush1.bf16.msra.mxu0 %v3100
    %3234 = vmatprep.subr.bf16.mxu0 0
    %3235 = vmatpush1.bf16.msra.mxu0 %v3101
    %3236 = vmatprep.subr.bf16.mxu0 0
    %3237 = vmatpush1.bf16.msra.mxu0 %v3102
    %3238 = vmatprep.subr.bf16.mxu0 0
    %3239 = vmatpush1.bf16.msra.mxu0 %v3103
    %3240 = vmatprep.subr.bf16.mxu0 0
    %3241 = vmatpush1.bf16.msra.mxu0 0
    %3242 = vmatprep.subr.bf16.mxu0 0
    %3243 = vmatpush1.bf16.msra.mxu0 0
    %3244 = vmatprep.subr.bf16.mxu0 0
    %3245 = vmatpush1.bf16.msra.mxu0 0
    %3246 = vmatprep.subr.bf16.mxu0 0
    %3247 = vmatpush1.bf16.msra.mxu0 0
    %3248 = vmatprep.subr.bf16.mxu0 0
    %3249 = vmatpush1.bf16.msra.mxu0 0
    %3250 = vmatprep.subr.bf16.mxu0 0
    %3251 = vmatpush1.bf16.msra.mxu0 0
    %3252 = vmatprep.subr.bf16.mxu0 0
    %3253 = vmatpush1.bf16.msra.mxu0 0
    %3254 = vmatprep.subr.bf16.mxu0 0
    %3255 = vmatpush1.bf16.msra.mxu0 0
    %3256 = vmatprep.mubr.bf16.mxu0 0
    %3257 = vmatmul.mubr.bf16.gmra.mrb[0].mxu0 %v2770
    %v3258 = vpop.f32.mrb[0].mxu0
    %v3259 = vadd.f32 %v3163, %v3258
    %v3260 = vpop.f32.mrb[0].mxu0
    %v3261 = vpop.f32.mrb[0].mxu0
    %v3262 = vadd.f32 %v3166, %v3261
    %v3263 = vpop.f32.mrb[0].mxu0
    %3264 = vmatprep.mubr.bf16.mxu0 0
    %3265 = vmatmul.mubr.bf16.gmra.mrb[0].mxu0 %v2797
    %v3266 = vpop.f32.mrb[0].mxu0
    %v3267 = vadd.f32 %v3171, %v3266
    %v3268 = vpop.f32.mrb[0].mxu0
    %v3269 = vpop.f32.mrb[0].mxu0
    %v3270 = vadd.f32 %v3174, %v3269
    %v3271 = vpop.f32.mrb[0].mxu0
    %3272 = vmatprep.mubr.bf16.mxu0 0
    %3273 = vmatmul.mubr.bf16.gmra.mrb[0].mxu0 %v2824
    %v3274 = vpop.f32.mrb[0].mxu0
    %v3275 = vadd.f32 %v3179, %v3274
    %v3276 = vpop.f32.mrb[0].mxu0
    %v3277 = vpop.f32.mrb[0].mxu0
    %v3278 = vadd.f32 %v3182, %v3277
    %v3279 = vpop.f32.mrb[0].mxu0
    %3280 = vmatprep.mubr.bf16.mxu0 0
    %3281 = vmatmul.mubr.bf16.gmra.mrb[0].mxu0 %v2851
    %v3282 = vpop.f32.mrb[0].mxu0
    %v3283 = vadd.f32 %v3187, %v3282
    %v3284 = vpop.f32.mrb[0].mxu0
    %v3285 = vpop.f32.mrb[0].mxu0
    %v3286 = vadd.f32 %v3190, %v3285
    %v3287 = vpop.f32.mrb[0].mxu0
    %3288 = vmatprep.mubr.bf16.mxu0 0
    %3289 = vmatmul.mubr.bf16.gmra.mrb[0].mxu0 %v2878
    %v3290 = vpop.f32.mrb[0].mxu0
    %v3291 = vadd.f32 %v3195, %v3290
    %v3292 = vpop.f32.mrb[0].mxu0
    %v3293 = vpop.f32.mrb[0].mxu0
    %v3294 = vadd.f32 %v3198, %v3293
    %v3295 = vpop.f32.mrb[0].mxu0
    %3296 = vmatprep.mubr.bf16.mxu0 0
    %3297 = vmatmul.mubr.bf16.gmra.mrb[0].mxu0 %v2905
    %v3298 = vpop.f32.mrb[0].mxu0
    %v3299 = vadd.f32 %v3203, %v3298
    %v3300 = vpop.f32.mrb[0].mxu0
    %v3301 = vpop.f32.mrb[0].mxu0
    %v3302 = vadd.f32 %v3206, %v3301
    %v3303 = vpop.f32.mrb[0].mxu0
    %3304 = vmatprep.mubr.bf16.mxu0 0
    %3305 = vmatmul.mubr.bf16.gmra.mrb[0].mxu0 %v2932
    %v3306 = vpop.f32.mrb[0].mxu0
    %v3307 = vadd.f32 %v3211, %v3306
    %v3308 = vpop.f32.mrb[0].mxu0
    %v3309 = vpop.f32.mrb[0].mxu0
    %v3310 = vadd.f32 %v3214, %v3309
    %v3311 = vpop.f32.mrb[0].mxu0
    %3312 = vmatprep.mubr.bf16.mxu0 0
    %3313 = vmatmul.mubr.bf16.gmra.mrb[0].mxu0 %v2959
    %v3314 = vpop.f32.mrb[0].mxu0
    %v3315 = vadd.f32 %v3219, %v3314
    %v3316 = vpop.f32.mrb[0].mxu0
    %v3317 = vpop.f32.mrb[0].mxu0
    %v3318 = vpop.f32.mrb[0].mxu0
    %3319 = vdwg.mxu0
    %v3320 = vadd.f32 %v2652, %v3259
    %v3321 = vadd.f32 %v2653, %v3262
    %v3322 = vadd.f32 %v2654, %v3267
    %v3323 = vadd.f32 %v2655, %v3270
    %v3324 = vadd.f32 %v2656, %v3275
    %v3325 = vadd.f32 %v2657, %v3278
    %v3326 = vadd.f32 %v2658, %v3283
    %v3327 = vadd.f32 %v2659, %v3286
    %v3328 = vadd.f32 %v2660, %v3291
    %v3329 = vadd.f32 %v2661, %v3294
    %v3330 = vadd.f32 %v2662, %v3299
    %v3331 = vadd.f32 %v2663, %v3302
    %v3332 = vadd.f32 %v2664, %v3307
    %v3333 = vadd.f32 %v2665, %v3310
    %v3334 = vadd.f32 %v2666, %v3315
    %v3335 = vld [vmem:[#allocation2] sm:$0xc0]
    %v3336 = vld [vmem:[#allocation2 + $0x8] sm:$0xc0]
    %v3337 = vld [vmem:[#allocation2 + $0x10] sm:$0xc0]
    %s3338 = scalar_lea.vmem [#allocation4], 960
    %v3339 = vld [vmem:[%s3338] sm:$0xf]
    %v3340 = vld [vmem:[%s3338 + $0x4] sm:$0xf]
    %v3341 = vld [vmem:[%s3338 + $0x8] sm:$0xf]
    %v3342 = vld [vmem:[%s3338 + $0xc] sm:$0xf]
    %v3343 = vld [vmem:[%s3338 + $0x10] sm:$0xf]
    %v3344 = vld [vmem:[%s3338 + $0x14] sm:$0xf]
    %v3345 = vld [vmem:[%s3338 + $0x18] sm:$0xf]
    %v3346 = vld [vmem:[%s3338 + $0x1c] sm:$0xf]
    %v3347 = vld [vmem:[%s3338 + $0x20] sm:$0xf]
    %v3348 = vld [vmem:[%s3338 + $0x24] sm:$0xf]
    %v3349 = vld [vmem:[%s3338 + $0x28] sm:$0xf]
    %v3350 = vld [vmem:[%s3338 + $0x2c] sm:$0xf]
    %v3351 = vld [vmem:[%s3338 + $0x30] sm:$0xf]
    %v3352 = vld [vmem:[%s3338 + $0x34] sm:$0xf]
    %v3353 = vld [vmem:[%s3338 + $0x38] sm:$0xf]
    %v3354 = vld [vmem:[%s3338 + $0x3c] sm:$0xf]
    %v3355 = vld [vmem:[%s3338 + $0x40] sm:$0xf]
    %v3356 = vld [vmem:[%s3338 + $0x44] sm:$0xf]
    %v3357 = vld [vmem:[%s3338 + $0x48] sm:$0xf]
    %v3358 = vld [vmem:[%s3338 + $0x4c] sm:$0xf]
    %v3359 = vld [vmem:[%s3338 + $0x50] sm:$0xf]
    %v3360 = vld [vmem:[%s3338 + $0x54] sm:$0xf]
    %v3361 = vld [vmem:[%s3338 + $0x58] sm:$0xf]
    %v3362 = vld [vmem:[%s3338 + $0x5c] sm:$0xf]
    %v3363 = vld [vmem:[%s3338 + $0x60] sm:$0xf]
    %v3364 = vld [vmem:[%s3338 + $0x64] sm:$0xf]
    %v3365 = vld [vmem:[%s3338 + $0x68] sm:$0xf]
    %v3366 = vld [vmem:[%s3338 + $0x6c] sm:$0xf]
    %v3367 = vld [vmem:[%s3338 + $0x70] sm:$0xf]
    %v3368 = vld [vmem:[%s3338 + $0x74] sm:$0xf]
    %v3369 = vld [vmem:[%s3338 + $0x78] sm:$0xf]
    %v3370 = vld [vmem:[%s3338 + $0x7c] sm:$0xf]
    %v3371 = vld [vmem:[%s3338 + $0x80] sm:$0xf]
    %v3372 = vld [vmem:[%s3338 + $0x84] sm:$0xf]
    %v3373 = vld [vmem:[%s3338 + $0x88] sm:$0xf]
    %v3374 = vld [vmem:[%s3338 + $0x8c] sm:$0xf]
    %v3375 = vld [vmem:[%s3338 + $0x90] sm:$0xf]
    %v3376 = vld [vmem:[%s3338 + $0x94] sm:$0xf]
    %v3377 = vld [vmem:[%s3338 + $0x98] sm:$0xf]
    %v3378 = vld [vmem:[%s3338 + $0x9c] sm:$0xf]
    %v3379 = vld [vmem:[%s3338 + $0xa0] sm:$0xf]
    %v3380 = vld [vmem:[%s3338 + $0xa4] sm:$0xf]
    %v3381 = vld [vmem:[%s3338 + $0xa8] sm:$0xf]
    %v3382 = vld [vmem:[%s3338 + $0xac] sm:$0xf]
    %v3383 = vld [vmem:[%s3338 + $0xb0] sm:$0xf]
    %v3384 = vld [vmem:[%s3338 + $0xb4] sm:$0xf]
    %v3385 = vld [vmem:[%s3338 + $0xb8] sm:$0xf]
    %v3386 = vld [vmem:[%s3338 + $0xbc] sm:$0xf]
    %v3393 = vrot.slane %v3335, 6
    %v3394 = vrot.slane %v2140, 6
    %v3395 = vsel %vm135, %v3393, %v3394
    %v3396 = vrot.slane %v3336, 6
    %v3397 = vrot.slane %v2141, 6
    %v3398 = vsel %vm135, %v3396, %v3397
    %v3399 = vrot.slane %v3337, 6
    %v3400 = vrot.slane %v2142, 6
    %v3401 = vsel %vm135, %v3399, %v3400
    %v3402 = vrot.slane %v2143, 6
    %v3403 = vsel %vm135, %v3394, %v3402
    %v3404 = vrot.slane %v2144, 6
    %v3405 = vsel %vm135, %v3397, %v3404
    %v3406 = vrot.slane %v2145, 6
    %v3407 = vsel %vm135, %v3400, %v3406
    %v3408 = vrot.slane %v2146, 6
    %v3409 = vsel %vm135, %v3402, %v3408
    %v3410 = vrot.slane %v2147, 6
    %v3411 = vsel %vm135, %v3404, %v3410
    %v3412 = vrot.slane %v2148, 6
    %v3413 = vsel %vm135, %v3406, %v3412
    %v3414 = vrot.slane %v2149, 6
    %v3415 = vsel %vm135, %v3408, %v3414
    %v3416 = vrot.slane %v2150, 6
    %v3417 = vsel %vm135, %v3410, %v3416
    %v3418 = vrot.slane %v2151, 6
    %v3419 = vsel %vm135, %v3412, %v3418
    %v3420 = vrot.slane %v2152, 6
    %v3421 = vsel %vm135, %v3414, %v3420
    %v3422 = vrot.slane %v2153, 6
    %v3423 = vsel %vm135, %v3416, %v3422
    %v3424 = vrot.slane %v2154, 6
    %v3425 = vsel %vm135, %v3418, %v3424
    %v3426 = vrot.slane %v2155, 6
    %v3427 = vsel %vm135, %v3420, %v3426
    %v3428 = vrot.slane %v2156, 6
    %v3429 = vsel %vm135, %v3422, %v3428
    %v3430 = vrot.slane %v2157, 6
    %v3431 = vsel %vm135, %v3424, %v3430
    %v3432 = vrot.slane %v2158, 6
    %v3433 = vsel %vm135, %v3426, %v3432
    %v3434 = vrot.slane %v2159, 6
    %v3435 = vsel %vm135, %v3428, %v3434
    %v3436 = vrot.slane %v2160, 6
    %v3437 = vsel %vm135, %v3430, %v3436
    %v3438 = vrot.slane %v2667, 6
    %v3439 = vsel %vm135, %v3432, %v3438
    %v3440 = vrot.slane %v2668, 6
    %v3441 = vsel %vm135, %v3434, %v3440
    %v3442 = vrot.slane %v2669, 6
    %v3443 = vsel %vm135, %v3436, %v3442
    %v3516 = vunpack.c.l.b16 %v3339
    %v3517 = vunpack.c.l.b16 %v3340
    %v3518 = vunpack.c.l.b16 %v3341
    %v3519 = vunpack.c.l.b16 %v3342
    %v3520 = vunpack.c.l.b16 %v3343
    %v3521 = vunpack.c.l.b16 %v3344
    %v3522 = vunpack.c.l.b16 %v3345
    %v3523 = vunpack.c.l.b16 %v3346
    %v3524 = vunpack.c.l.b16 %v3347
    %v3525 = vunpack.c.l.b16 %v3348
    %v3526 = vunpack.c.l.b16 %v3349
    %v3527 = vunpack.c.l.b16 %v3350
    %v3528 = vunpack.c.l.b16 %v3351
    %v3529 = vunpack.c.l.b16 %v3352
    %v3530 = vunpack.c.l.b16 %v3353
    %v3531 = vunpack.c.l.b16 %v3354
    %v3532 = vunpack.c.l.b16 %v3355
    %v3533 = vunpack.c.l.b16 %v3356
    %v3534 = vunpack.c.l.b16 %v3357
    %v3535 = vunpack.c.l.b16 %v3358
    %v3536 = vunpack.c.l.b16 %v3359
    %v3537 = vunpack.c.l.b16 %v3360
    %v3538 = vunpack.c.l.b16 %v3361
    %v3539 = vunpack.c.l.b16 %v3362
    %v3540 = vunpack.c.l.b16 %v3363
    %v3541 = vunpack.c.l.b16 %v3364
    %v3542 = vunpack.c.l.b16 %v3365
    %v3543 = vunpack.c.l.b16 %v3366
    %v3544 = vunpack.c.l.b16 %v3367
    %v3545 = vunpack.c.l.b16 %v3368
    %v3546 = vunpack.c.l.b16 %v3369
    %v3547 = vunpack.c.l.b16 %v3370
    %v3548 = vunpack.c.l.b16 %v3371
    %v3549 = vunpack.c.l.b16 %v3372
    %v3550 = vunpack.c.l.b16 %v3373
    %v3551 = vunpack.c.l.b16 %v3374
    %v3552 = vunpack.c.l.b16 %v3375
    %v3553 = vunpack.c.l.b16 %v3376
    %v3554 = vunpack.c.l.b16 %v3377
    %v3555 = vunpack.c.l.b16 %v3378
    %v3556 = vunpack.c.l.b16 %v3379
    %v3557 = vunpack.c.l.b16 %v3380
    %v3558 = vunpack.c.l.b16 %v3381
    %v3559 = vunpack.c.l.b16 %v3382
    %v3560 = vunpack.c.l.b16 %v3383
    %v3561 = vunpack.c.l.b16 %v3384
    %v3562 = vunpack.c.l.b16 %v3385
    %v3563 = vunpack.c.l.b16 %v3386
    %v3564 = vpack.c.b16 %v3517, %v3516
    %v3565 = vpack.c.b16 %v3519, %v3518
    %v3566 = vpack.c.b16 %v3521, %v3520
    %v3567 = vpack.c.b16 %v3523, %v3522
    %v3568 = vpack.c.b16 %v3525, %v3524
    %v3569 = vpack.c.b16 %v3527, %v3526
    %v3570 = vpack.c.b16 %v3529, %v3528
    %v3571 = vpack.c.b16 %v3531, %v3530
    %v3572 = vpack.c.b16 %v3533, %v3532
    %v3573 = vpack.c.b16 %v3535, %v3534
    %v3574 = vpack.c.b16 %v3537, %v3536
    %v3575 = vpack.c.b16 %v3539, %v3538
    %v3576 = vpack.c.b16 %v3541, %v3540
    %v3577 = vpack.c.b16 %v3543, %v3542
    %v3578 = vpack.c.b16 %v3545, %v3544
    %v3579 = vpack.c.b16 %v3547, %v3546
    %v3580 = vpack.c.b16 %v3549, %v3548
    %v3581 = vpack.c.b16 %v3551, %v3550
    %v3582 = vpack.c.b16 %v3553, %v3552
    %v3583 = vpack.c.b16 %v3555, %v3554
    %v3584 = vpack.c.b16 %v3557, %v3556
    %v3585 = vpack.c.b16 %v3559, %v3558
    %v3586 = vpack.c.b16 %v3561, %v3560
    %v3587 = vpack.c.b16 %v3563, %v3562
    %3612 = vmatprep.subr.bf16.mxu0 0
    %3613 = vmatpush1.bf16.msra.mxu0 %v3564
    %3614 = vmatprep.subr.bf16.mxu0 0
    %3615 = vmatpush1.bf16.msra.mxu0 %v3565
    %3616 = vmatprep.subr.bf16.mxu0 0
    %3617 = vmatpush1.bf16.msra.mxu0 %v3566
    %3618 = vmatprep.subr.bf16.mxu0 0
    %3619 = vmatpush1.bf16.msra.mxu0 %v3567
    %3620 = vmatprep.subr.bf16.mxu0 0
    %3621 = vmatpush1.bf16.msra.mxu0 %v3568
    %3622 = vmatprep.subr.bf16.mxu0 0
    %3623 = vmatpush1.bf16.msra.mxu0 %v3569
    %3624 = vmatprep.subr.bf16.mxu0 0
    %3625 = vmatpush1.bf16.msra.mxu0 %v3570
    %3626 = vmatprep.subr.bf16.mxu0 0
    %3627 = vmatpush1.bf16.msra.mxu0 %v3571
    %3628 = vmatprep.subr.bf16.mxu0 0
    %3629 = vmatpush1.bf16.msra.mxu0 %v3572
    %3630 = vmatprep.subr.bf16.mxu0 0
    %3631 = vmatpush1.bf16.msra.mxu0 %v3573
    %3632 = vmatprep.subr.bf16.mxu0 0
    %3633 = vmatpush1.bf16.msra.mxu0 %v3574
    %3634 = vmatprep.subr.bf16.mxu0 0
    %3635 = vmatpush1.bf16.msra.mxu0 %v3575
    %3636 = vmatprep.subr.bf16.mxu0 0
    %3637 = vmatpush1.bf16.msra.mxu0 %v3576
    %3638 = vmatprep.subr.bf16.mxu0 0
    %3639 = vmatpush1.bf16.msra.mxu0 %v3577
    %3640 = vmatprep.subr.bf16.mxu0 0
    %3641 = vmatpush1.bf16.msra.mxu0 %v3578
    %3642 = vmatprep.subr.bf16.mxu0 0
    %3643 = vmatpush1.bf16.msra.mxu0 %v3579
    %3644 = vmatprep.mubr.bf16.mxu0 %v3398
    %3645 = vmatmul.mubr.bf16.gmra.mrb[0].mxu0 %v3395
    %v3646 = vpop.f32.mrb[0].mxu0
    %v3647 = vadd.f32 0.0, %v3646
    %v3648 = vpop.f32.mrb[0].mxu0
    %v3649 = vpop.f32.mrb[0].mxu0
    %v3650 = vadd.f32 0.0, %v3649
    %v3651 = vpop.f32.mrb[0].mxu0
    %3652 = vmatprep.mubr.bf16.mxu0 %v3405
    %3653 = vmatmul.mubr.bf16.gmra.mrb[0].mxu0 %v3403
    %v3654 = vpop.f32.mrb[0].mxu0
    %v3655 = vadd.f32 0.0, %v3654
    %v3656 = vpop.f32.mrb[0].mxu0
    %v3657 = vpop.f32.mrb[0].mxu0
    %v3658 = vadd.f32 0.0, %v3657
    %v3659 = vpop.f32.mrb[0].mxu0
    %3660 = vmatprep.mubr.bf16.mxu0 %v3411
    %3661 = vmatmul.mubr.bf16.gmra.mrb[0].mxu0 %v3409
    %v3662 = vpop.f32.mrb[0].mxu0
    %v3663 = vadd.f32 0.0, %v3662
    %v3664 = vpop.f32.mrb[0].mxu0
    %v3665 = vpop.f32.mrb[0].mxu0
    %v3666 = vadd.f32 0.0, %v3665
    %v3667 = vpop.f32.mrb[0].mxu0
    %3668 = vmatprep.mubr.bf16.mxu0 %v3417
    %3669 = vmatmul.mubr.bf16.gmra.mrb[0].mxu0 %v3415
    %v3670 = vpop.f32.mrb[0].mxu0
    %v3671 = vadd.f32 0.0, %v3670
    %v3672 = vpop.f32.mrb[0].mxu0
    %v3673 = vpop.f32.mrb[0].mxu0
    %v3674 = vadd.f32 0.0, %v3673
    %v3675 = vpop.f32.mrb[0].mxu0
    %3676 = vmatprep.mubr.bf16.mxu0 %v3423
    %3677 = vmatmul.mubr.bf16.gmra.mrb[0].mxu0 %v3421
    %v3678 = vpop.f32.mrb[0].mxu0
    %v3679 = vadd.f32 0.0, %v3678
    %v3680 = vpop.f32.mrb[0].mxu0
    %v3681 = vpop.f32.mrb[0].mxu0
    %v3682 = vadd.f32 0.0, %v3681
    %v3683 = vpop.f32.mrb[0].mxu0
    %3684 = vmatprep.mubr.bf16.mxu0 %v3429
    %3685 = vmatmul.mubr.bf16.gmra.mrb[0].mxu0 %v3427
    %v3686 = vpop.f32.mrb[0].mxu0
    %v3687 = vadd.f32 0.0, %v3686
    %v3688 = vpop.f32.mrb[0].mxu0
    %v3689 = vpop.f32.mrb[0].mxu0
    %v3690 = vadd.f32 0.0, %v3689
    %v3691 = vpop.f32.mrb[0].mxu0
    %3692 = vmatprep.mubr.bf16.mxu0 %v3435
    %3693 = vmatmul.mubr.bf16.gmra.mrb[0].mxu0 %v3433
    %v3694 = vpop.f32.mrb[0].mxu0
    %v3695 = vadd.f32 0.0, %v3694
    %v3696 = vpop.f32.mrb[0].mxu0
    %v3697 = vpop.f32.mrb[0].mxu0
    %v3698 = vadd.f32 0.0, %v3697
    %v3699 = vpop.f32.mrb[0].mxu0
    %3700 = vmatprep.mubr.bf16.mxu0 %v3441
    %3701 = vmatmul.mubr.bf16.gmra.mrb[0].mxu0 %v3439
    %v3702 = vpop.f32.mrb[0].mxu0
    %v3703 = vadd.f32 0.0, %v3702
    %v3704 = vpop.f32.mrb[0].mxu0
    %v3705 = vpop.f32.mrb[0].mxu0
    %v3706 = vpop.f32.mrb[0].mxu0
    %3707 = vdwg.mxu0
    %3708 = vmatprep.subr.bf16.mxu0 0
    %3709 = vmatpush1.bf16.msra.mxu0 %v3580
    %3710 = vmatprep.subr.bf16.mxu0 0
    %3711 = vmatpush1.bf16.msra.mxu0 %v3581
    %3712 = vmatprep.subr.bf16.mxu0 0
    %3713 = vmatpush1.bf16.msra.mxu0 %v3582
    %3714 = vmatprep.subr.bf16.mxu0 0
    %3715 = vmatpush1.bf16.msra.mxu0 %v3583
    %3716 = vmatprep.subr.bf16.mxu0 0
    %3717 = vmatpush1.bf16.msra.mxu0 %v3584
    %3718 = vmatprep.subr.bf16.mxu0 0
    %3719 = vmatpush1.bf16.msra.mxu0 %v3585
    %3720 = vmatprep.subr.bf16.mxu0 0
    %3721 = vmatpush1.bf16.msra.mxu0 %v3586
    %3722 = vmatprep.subr.bf16.mxu0 0
    %3723 = vmatpush1.bf16.msra.mxu0 %v3587
    %3724 = vmatprep.subr.bf16.mxu0 0
    %3725 = vmatpush1.bf16.msra.mxu0 0
    %3726 = vmatprep.subr.bf16.mxu0 0
    %3727 = vmatpush1.bf16.msra.mxu0 0
    %3728 = vmatprep.subr.bf16.mxu0 0
    %3729 = vmatpush1.bf16.msra.mxu0 0
    %3730 = vmatprep.subr.bf16.mxu0 0
    %3731 = vmatpush1.bf16.msra.mxu0 0
    %3732 = vmatprep.subr.bf16.mxu0 0
    %3733 = vmatpush1.bf16.msra.mxu0 0
    %3734 = vmatprep.subr.bf16.mxu0 0
    %3735 = vmatpush1.bf16.msra.mxu0 0
    %3736 = vmatprep.subr.bf16.mxu0 0
    %3737 = vmatpush1.bf16.msra.mxu0 0
    %3738 = vmatprep.subr.bf16.mxu0 0
    %3739 = vmatpush1.bf16.msra.mxu0 0
    %3740 = vmatprep.mubr.bf16.mxu0 0
    %3741 = vmatmul.mubr.bf16.gmra.mrb[0].mxu0 %v3401
    %v3742 = vpop.f32.mrb[0].mxu0
    %v3743 = vadd.f32 %v3647, %v3742
    %v3744 = vpop.f32.mrb[0].mxu0
    %v3745 = vpop.f32.mrb[0].mxu0
    %v3746 = vadd.f32 %v3650, %v3745
    %v3747 = vpop.f32.mrb[0].mxu0
    %3748 = vmatprep.mubr.bf16.mxu0 0
    %3749 = vmatmul.mubr.bf16.gmra.mrb[0].mxu0 %v3407
    %v3750 = vpop.f32.mrb[0].mxu0
    %v3751 = vadd.f32 %v3655, %v3750
    %v3752 = vpop.f32.mrb[0].mxu0
    %v3753 = vpop.f32.mrb[0].mxu0
    %v3754 = vadd.f32 %v3658, %v3753
    %v3755 = vpop.f32.mrb[0].mxu0
    %3756 = vmatprep.mubr.bf16.mxu0 0
    %3757 = vmatmul.mubr.bf16.gmra.mrb[0].mxu0 %v3413
    %v3758 = vpop.f32.mrb[0].mxu0
    %v3759 = vadd.f32 %v3663, %v3758
    %v3760 = vpop.f32.mrb[0].mxu0
    %v3761 = vpop.f32.mrb[0].mxu0
    %v3762 = vadd.f32 %v3666, %v3761
    %v3763 = vpop.f32.mrb[0].mxu0
    %3764 = vmatprep.mubr.bf16.mxu0 0
    %3765 = vmatmul.mubr.bf16.gmra.mrb[0].mxu0 %v3419
    %v3766 = vpop.f32.mrb[0].mxu0
    %v3767 = vadd.f32 %v3671, %v3766
    %v3768 = vpop.f32.mrb[0].mxu0
    %v3769 = vpop.f32.mrb[0].mxu0
    %v3770 = vadd.f32 %v3674, %v3769
    %v3771 = vpop.f32.mrb[0].mxu0
    %3772 = vmatprep.mubr.bf16.mxu0 0
    %3773 = vmatmul.mubr.bf16.gmra.mrb[0].mxu0 %v3425
    %v3774 = vpop.f32.mrb[0].mxu0
    %v3775 = vadd.f32 %v3679, %v3774
    %v3776 = vpop.f32.mrb[0].mxu0
    %v3777 = vpop.f32.mrb[0].mxu0
    %v3778 = vadd.f32 %v3682, %v3777
    %v3779 = vpop.f32.mrb[0].mxu0
    %3780 = vmatprep.mubr.bf16.mxu0 0
    %3781 = vmatmul.mubr.bf16.gmra.mrb[0].mxu0 %v3431
    %v3782 = vpop.f32.mrb[0].mxu0
    %v3783 = vadd.f32 %v3687, %v3782
    %v3784 = vpop.f32.mrb[0].mxu0
    %v3785 = vpop.f32.mrb[0].mxu0
    %v3786 = vadd.f32 %v3690, %v3785
    %v3787 = vpop.f32.mrb[0].mxu0
    %3788 = vmatprep.mubr.bf16.mxu0 0
    %3789 = vmatmul.mubr.bf16.gmra.mrb[0].mxu0 %v3437
    %v3790 = vpop.f32.mrb[0].mxu0
    %v3791 = vadd.f32 %v3695, %v3790
    %v3792 = vpop.f32.mrb[0].mxu0
    %v3793 = vpop.f32.mrb[0].mxu0
    %v3794 = vadd.f32 %v3698, %v3793
    %v3795 = vpop.f32.mrb[0].mxu0
    %3796 = vmatprep.mubr.bf16.mxu0 0
    %3797 = vmatmul.mubr.bf16.gmra.mrb[0].mxu0 %v3443
    %v3798 = vpop.f32.mrb[0].mxu0
    %v3799 = vadd.f32 %v3703, %v3798
    %v3800 = vpop.f32.mrb[0].mxu0
    %v3801 = vpop.f32.mrb[0].mxu0
    %v3802 = vpop.f32.mrb[0].mxu0
    %3803 = vdwg.mxu0
    %v3804 = vadd.f32 %v3320, %v3743
    %v3805 = vadd.f32 %v3321, %v3746
    %v3806 = vadd.f32 %v3322, %v3751
    %v3807 = vadd.f32 %v3323, %v3754
    %v3808 = vadd.f32 %v3324, %v3759
    %v3809 = vadd.f32 %v3325, %v3762
    %v3810 = vadd.f32 %v3326, %v3767
    %v3811 = vadd.f32 %v3327, %v3770
    %v3812 = vadd.f32 %v3328, %v3775
    %v3813 = vadd.f32 %v3329, %v3778
    %v3814 = vadd.f32 %v3330, %v3783
    %v3815 = vadd.f32 %v3331, %v3786
    %v3816 = vadd.f32 %v3332, %v3791
    %v3817 = vadd.f32 %v3333, %v3794
    %v3818 = vadd.f32 %v3334, %v3799
    %v3819 = vld [vmem:[#allocation2 + $0x18] sm:$0xfc]
    %v3820 = vld [vmem:[#allocation2 + $0x20] sm:$0xfc]
    %v3821 = vld [vmem:[#allocation2 + $0x28] sm:$0xfc]
    %v3822 = vld [vmem:[#allocation2 + $0xc0] sm:$0x3f]
    %v3823 = vld [vmem:[#allocation2 + $0xc8] sm:$0x3f]
    %v3824 = vld [vmem:[#allocation2 + $0xd0] sm:$0x3f]
    %s3825 = scalar_lea.vmem [#allocation4], 1152
    %v3826 = vld [vmem:[%s3825] sm:$0xf]
    %v3827 = vld [vmem:[%s3825 + $0x4] sm:$0xf]
    %v3828 = vld [vmem:[%s3825 + $0x8] sm:$0xf]
    %v3829 = vld [vmem:[%s3825 + $0xc] sm:$0xf]
    %v3830 = vld [vmem:[%s3825 + $0x10] sm:$0xf]
    %v3831 = vld [vmem:[%s3825 + $0x14] sm:$0xf]
    %v3832 = vld [vmem:[%s3825 + $0x18] sm:$0xf]
    %v3833 = vld [vmem:[%s3825 + $0x1c] sm:$0xf]
    %v3834 = vld [vmem:[%s3825 + $0x20] sm:$0xf]
    %v3835 = vld [vmem:[%s3825 + $0x24] sm:$0xf]
    %v3836 = vld [vmem:[%s3825 + $0x28] sm:$0xf]
    %v3837 = vld [vmem:[%s3825 + $0x2c] sm:$0xf]
    %v3838 = vld [vmem:[%s3825 + $0x30] sm:$0xf]
    %v3839 = vld [vmem:[%s3825 + $0x34] sm:$0xf]
    %v3840 = vld [vmem:[%s3825 + $0x38] sm:$0xf]
    %v3841 = vld [vmem:[%s3825 + $0x3c] sm:$0xf]
    %v3842 = vld [vmem:[%s3825 + $0x40] sm:$0xf]
    %v3843 = vld [vmem:[%s3825 + $0x44] sm:$0xf]
    %v3844 = vld [vmem:[%s3825 + $0x48] sm:$0xf]
    %v3845 = vld [vmem:[%s3825 + $0x4c] sm:$0xf]
    %v3846 = vld [vmem:[%s3825 + $0x50] sm:$0xf]
    %v3847 = vld [vmem:[%s3825 + $0x54] sm:$0xf]
    %v3848 = vld [vmem:[%s3825 + $0x58] sm:$0xf]
    %v3849 = vld [vmem:[%s3825 + $0x5c] sm:$0xf]
    %v3850 = vld [vmem:[%s3825 + $0x60] sm:$0xf]
    %v3851 = vld [vmem:[%s3825 + $0x64] sm:$0xf]
    %v3852 = vld [vmem:[%s3825 + $0x68] sm:$0xf]
    %v3853 = vld [vmem:[%s3825 + $0x6c] sm:$0xf]
    %v3854 = vld [vmem:[%s3825 + $0x70] sm:$0xf]
    %v3855 = vld [vmem:[%s3825 + $0x74] sm:$0xf]
    %v3856 = vld [vmem:[%s3825 + $0x78] sm:$0xf]
    %v3857 = vld [vmem:[%s3825 + $0x7c] sm:$0xf]
    %v3858 = vld [vmem:[%s3825 + $0x80] sm:$0xf]
    %v3859 = vld [vmem:[%s3825 + $0x84] sm:$0xf]
    %v3860 = vld [vmem:[%s3825 + $0x88] sm:$0xf]
    %v3861 = vld [vmem:[%s3825 + $0x8c] sm:$0xf]
    %v3862 = vld [vmem:[%s3825 + $0x90] sm:$0xf]
    %v3863 = vld [vmem:[%s3825 + $0x94] sm:$0xf]
    %v3864 = vld [vmem:[%s3825 + $0x98] sm:$0xf]
    %v3865 = vld [vmem:[%s3825 + $0x9c] sm:$0xf]
    %v3866 = vld [vmem:[%s3825 + $0xa0] sm:$0xf]
    %v3867 = vld [vmem:[%s3825 + $0xa4] sm:$0xf]
    %v3868 = vld [vmem:[%s3825 + $0xa8] sm:$0xf]
    %v3869 = vld [vmem:[%s3825 + $0xac] sm:$0xf]
    %v3870 = vld [vmem:[%s3825 + $0xb0] sm:$0xf]
    %v3871 = vld [vmem:[%s3825 + $0xb4] sm:$0xf]
    %v3872 = vld [vmem:[%s3825 + $0xb8] sm:$0xf]
    %v3873 = vld [vmem:[%s3825 + $0xbc] sm:$0xf]
    %v3880 = vrot.slane %v3819, 2
    %v3881 = vrot.slane %v2143, 2
    %v3882 = vsel %vm74, %v3880, %v3881
    %v3883 = vrot.slane %v3820, 2
    %v3884 = vrot.slane %v2144, 2
    %v3885 = vsel %vm74, %v3883, %v3884
    %v3886 = vrot.slane %v3821, 2
    %v3887 = vrot.slane %v2145, 2
    %v3888 = vsel %vm74, %v3886, %v3887
    %v3889 = vrot.slane %v2146, 2
    %v3890 = vsel %vm74, %v3881, %v3889
    %v3891 = vrot.slane %v2147, 2
    %v3892 = vsel %vm74, %v3884, %v3891
    %v3893 = vrot.slane %v2148, 2
    %v3894 = vsel %vm74, %v3887, %v3893
    %v3895 = vrot.slane %v2149, 2
    %v3896 = vsel %vm74, %v3889, %v3895
    %v3897 = vrot.slane %v2150, 2
    %v3898 = vsel %vm74, %v3891, %v3897
    %v3899 = vrot.slane %v2151, 2
    %v3900 = vsel %vm74, %v3893, %v3899
    %v3901 = vrot.slane %v2152, 2
    %v3902 = vsel %vm74, %v3895, %v3901
    %v3903 = vrot.slane %v2153, 2
    %v3904 = vsel %vm74, %v3897, %v3903
    %v3905 = vrot.slane %v2154, 2
    %v3906 = vsel %vm74, %v3899, %v3905
    %v3907 = vrot.slane %v2155, 2
    %v3908 = vsel %vm74, %v3901, %v3907
    %v3909 = vrot.slane %v2156, 2
    %v3910 = vsel %vm74, %v3903, %v3909
    %v3911 = vrot.slane %v2157, 2
    %v3912 = vsel %vm74, %v3905, %v3911
    %v3913 = vrot.slane %v2158, 2
    %v3914 = vsel %vm74, %v3907, %v3913
    %v3915 = vrot.slane %v2159, 2
    %v3916 = vsel %vm74, %v3909, %v3915
    %v3917 = vrot.slane %v2160, 2
    %v3918 = vsel %vm74, %v3911, %v3917
    %v3919 = vrot.slane %v3822, 2
    %v3920 = vsel %vm74, %v3913, %v3919
    %v3921 = vrot.slane %v3823, 2
    %v3922 = vsel %vm74, %v3915, %v3921
    %v3923 = vrot.slane %v3824, 2
    %v3924 = vsel %vm74, %v3917, %v3923
    %v3997 = vunpack.c.l.b16 %v3826
    %v3998 = vunpack.c.l.b16 %v3827
    %v3999 = vunpack.c.l.b16 %v3828
    %v4000 = vunpack.c.l.b16 %v3829
    %v4001 = vunpack.c.l.b16 %v3830
    %v4002 = vunpack.c.l.b16 %v3831
    %v4003 = vunpack.c.l.b16 %v3832
    %v4004 = vunpack.c.l.b16 %v3833
    %v4005 = vunpack.c.l.b16 %v3834
    %v4006 = vunpack.c.l.b16 %v3835
    %v4007 = vunpack.c.l.b16 %v3836
    %v4008 = vunpack.c.l.b16 %v3837
    %v4009 = vunpack.c.l.b16 %v3838
    %v4010 = vunpack.c.l.b16 %v3839
    %v4011 = vunpack.c.l.b16 %v3840
    %v4012 = vunpack.c.l.b16 %v3841
    %v4013 = vunpack.c.l.b16 %v3842
    %v4014 = vunpack.c.l.b16 %v3843
    %v4015 = vunpack.c.l.b16 %v3844
    %v4016 = vunpack.c.l.b16 %v3845
    %v4017 = vunpack.c.l.b16 %v3846
    %v4018 = vunpack.c.l.b16 %v3847
    %v4019 = vunpack.c.l.b16 %v3848
    %v4020 = vunpack.c.l.b16 %v3849
    %v4021 = vunpack.c.l.b16 %v3850
    %v4022 = vunpack.c.l.b16 %v3851
    %v4023 = vunpack.c.l.b16 %v3852
    %v4024 = vunpack.c.l.b16 %v3853
    %v4025 = vunpack.c.l.b16 %v3854
    %v4026 = vunpack.c.l.b16 %v3855
    %v4027 = vunpack.c.l.b16 %v3856
    %v4028 = vunpack.c.l.b16 %v3857
    %v4029 = vunpack.c.l.b16 %v3858
    %v4030 = vunpack.c.l.b16 %v3859
    %v4031 = vunpack.c.l.b16 %v3860
    %v4032 = vunpack.c.l.b16 %v3861
    %v4033 = vunpack.c.l.b16 %v3862
    %v4034 = vunpack.c.l.b16 %v3863
    %v4035 = vunpack.c.l.b16 %v3864
    %v4036 = vunpack.c.l.b16 %v3865
    %v4037 = vunpack.c.l.b16 %v3866
    %v4038 = vunpack.c.l.b16 %v3867
    %v4039 = vunpack.c.l.b16 %v3868
    %v4040 = vunpack.c.l.b16 %v3869
    %v4041 = vunpack.c.l.b16 %v3870
    %v4042 = vunpack.c.l.b16 %v3871
    %v4043 = vunpack.c.l.b16 %v3872
    %v4044 = vunpack.c.l.b16 %v3873
    %v4045 = vpack.c.b16 %v3998, %v3997
    %v4046 = vpack.c.b16 %v4000, %v3999
    %v4047 = vpack.c.b16 %v4002, %v4001
    %v4048 = vpack.c.b16 %v4004, %v4003
    %v4049 = vpack.c.b16 %v4006, %v4005
    %v4050 = vpack.c.b16 %v4008, %v4007
    %v4051 = vpack.c.b16 %v4010, %v4009
    %v4052 = vpack.c.b16 %v4012, %v4011
    %v4053 = vpack.c.b16 %v4014, %v4013
    %v4054 = vpack.c.b16 %v4016, %v4015
    %v4055 = vpack.c.b16 %v4018, %v4017
    %v4056 = vpack.c.b16 %v4020, %v4019
    %v4057 = vpack.c.b16 %v4022, %v4021
    %v4058 = vpack.c.b16 %v4024, %v4023
    %v4059 = vpack.c.b16 %v4026, %v4025
    %v4060 = vpack.c.b16 %v4028, %v4027
    %v4061 = vpack.c.b16 %v4030, %v4029
    %v4062 = vpack.c.b16 %v4032, %v4031
    %v4063 = vpack.c.b16 %v4034, %v4033
    %v4064 = vpack.c.b16 %v4036, %v4035
    %v4065 = vpack.c.b16 %v4038, %v4037
    %v4066 = vpack.c.b16 %v4040, %v4039
    %v4067 = vpack.c.b16 %v4042, %v4041
    %v4068 = vpack.c.b16 %v4044, %v4043
    %4093 = vmatprep.subr.bf16.mxu0 0
    %4094 = vmatpush1.bf16.msra.mxu0 %v4045
    %4095 = vmatprep.subr.bf16.mxu0 0
    %4096 = vmatpush1.bf16.msra.mxu0 %v4046
    %4097 = vmatprep.subr.bf16.mxu0 0
    %4098 = vmatpush1.bf16.msra.mxu0 %v4047
    %4099 = vmatprep.subr.bf16.mxu0 0
    %4100 = vmatpush1.bf16.msra.mxu0 %v4048
    %4101 = vmatprep.subr.bf16.mxu0 0
    %4102 = vmatpush1.bf16.msra.mxu0 %v4049
    %4103 = vmatprep.subr.bf16.mxu0 0
    %4104 = vmatpush1.bf16.msra.mxu0 %v4050
    %4105 = vmatprep.subr.bf16.mxu0 0
    %4106 = vmatpush1.bf16.msra.mxu0 %v4051
    %4107 = vmatprep.subr.bf16.mxu0 0
    %4108 = vmatpush1.bf16.msra.mxu0 %v4052
    %4109 = vmatprep.subr.bf16.mxu0 0
    %4110 = vmatpush1.bf16.msra.mxu0 %v4053
    %4111 = vmatprep.subr.bf16.mxu0 0
    %4112 = vmatpush1.bf16.msra.mxu0 %v4054
    %4113 = vmatprep.subr.bf16.mxu0 0
    %4114 = vmatpush1.bf16.msra.mxu0 %v4055
    %4115 = vmatprep.subr.bf16.mxu0 0
    %4116 = vmatpush1.bf16.msra.mxu0 %v4056
    %4117 = vmatprep.subr.bf16.mxu0 0
    %4118 = vmatpush1.bf16.msra.mxu0 %v4057
    %4119 = vmatprep.subr.bf16.mxu0 0
    %4120 = vmatpush1.bf16.msra.mxu0 %v4058
    %4121 = vmatprep.subr.bf16.mxu0 0
    %4122 = vmatpush1.bf16.msra.mxu0 %v4059
    %4123 = vmatprep.subr.bf16.mxu0 0
    %4124 = vmatpush1.bf16.msra.mxu0 %v4060
    %4125 = vmatprep.mubr.bf16.mxu0 %v3885
    %4126 = vmatmul.mubr.bf16.gmra.mrb[0].mxu0 %v3882
    %v4127 = vpop.f32.mrb[0].mxu0
    %v4128 = vadd.f32 0.0, %v4127
    %v4129 = vpop.f32.mrb[0].mxu0
    %v4130 = vpop.f32.mrb[0].mxu0
    %v4131 = vadd.f32 0.0, %v4130
    %v4132 = vpop.f32.mrb[0].mxu0
    %4133 = vmatprep.mubr.bf16.mxu0 %v3892
    %4134 = vmatmul.mubr.bf16.gmra.mrb[0].mxu0 %v3890
    %v4135 = vpop.f32.mrb[0].mxu0
    %v4136 = vadd.f32 0.0, %v4135
    %v4137 = vpop.f32.mrb[0].mxu0
    %v4138 = vpop.f32.mrb[0].mxu0
    %v4139 = vadd.f32 0.0, %v4138
    %v4140 = vpop.f32.mrb[0].mxu0
    %4141 = vmatprep.mubr.bf16.mxu0 %v3898
    %4142 = vmatmul.mubr.bf16.gmra.mrb[0].mxu0 %v3896
    %v4143 = vpop.f32.mrb[0].mxu0
    %v4144 = vadd.f32 0.0, %v4143
    %v4145 = vpop.f32.mrb[0].mxu0
    %v4146 = vpop.f32.mrb[0].mxu0
    %v4147 = vadd.f32 0.0, %v4146
    %v4148 = vpop.f32.mrb[0].mxu0
    %4149 = vmatprep.mubr.bf16.mxu0 %v3904
    %4150 = vmatmul.mubr.bf16.gmra.mrb[0].mxu0 %v3902
    %v4151 = vpop.f32.mrb[0].mxu0
    %v4152 = vadd.f32 0.0, %v4151
    %v4153 = vpop.f32.mrb[0].mxu0
    %v4154 = vpop.f32.mrb[0].mxu0
    %v4155 = vadd.f32 0.0, %v4154
    %v4156 = vpop.f32.mrb[0].mxu0
    %4157 = vmatprep.mubr.bf16.mxu0 %v3910
    %4158 = vmatmul.mubr.bf16.gmra.mrb[0].mxu0 %v3908
    %v4159 = vpop.f32.mrb[0].mxu0
    %v4160 = vadd.f32 0.0, %v4159
    %v4161 = vpop.f32.mrb[0].mxu0
    %v4162 = vpop.f32.mrb[0].mxu0
    %v4163 = vadd.f32 0.0, %v4162
    %v4164 = vpop.f32.mrb[0].mxu0
    %4165 = vmatprep.mubr.bf16.mxu0 %v3916
    %4166 = vmatmul.mubr.bf16.gmra.mrb[0].mxu0 %v3914
    %v4167 = vpop.f32.mrb[0].mxu0
    %v4168 = vadd.f32 0.0, %v4167
    %v4169 = vpop.f32.mrb[0].mxu0
    %v4170 = vpop.f32.mrb[0].mxu0
    %v4171 = vadd.f32 0.0, %v4170
    %v4172 = vpop.f32.mrb[0].mxu0
    %4173 = vmatprep.mubr.bf16.mxu0 %v3922
    %4174 = vmatmul.mubr.bf16.gmra.mrb[0].mxu0 %v3920
    %v4175 = vpop.f32.mrb[0].mxu0
    %v4176 = vadd.f32 0.0, %v4175
    %v4177 = vpop.f32.mrb[0].mxu0
    %v4178 = vpop.f32.mrb[0].mxu0
    %v4179 = vadd.f32 0.0, %v4178
    %v4180 = vpop.f32.mrb[0].mxu0
    %4181 = vmatprep.mubr.bf16.mxu0 %v3921
    %4182 = vmatmul.mubr.bf16.gmra.mrb[0].mxu0 %v3919
    %v4183 = vpop.f32.mrb[0].mxu0
    %v4184 = vadd.f32 0.0, %v4183
    %v4185 = vpop.f32.mrb[0].mxu0
    %v4186 = vpop.f32.mrb[0].mxu0
    %v4187 = vpop.f32.mrb[0].mxu0
    %4188 = vdwg.mxu0
    %4189 = vmatprep.subr.bf16.mxu0 0
    %4190 = vmatpush1.bf16.msra.mxu0 %v4061
    %4191 = vmatprep.subr.bf16.mxu0 0
    %4192 = vmatpush1.bf16.msra.mxu0 %v4062
    %4193 = vmatprep.subr.bf16.mxu0 0
    %4194 = vmatpush1.bf16.msra.mxu0 %v4063
    %4195 = vmatprep.subr.bf16.mxu0 0
    %4196 = vmatpush1.bf16.msra.mxu0 %v4064
    %4197 = vmatprep.subr.bf16.mxu0 0
    %4198 = vmatpush1.bf16.msra.mxu0 %v4065
    %4199 = vmatprep.subr.bf16.mxu0 0
    %4200 = vmatpush1.bf16.msra.mxu0 %v4066
    %4201 = vmatprep.subr.bf16.mxu0 0
    %4202 = vmatpush1.bf16.msra.mxu0 %v4067
    %4203 = vmatprep.subr.bf16.mxu0 0
    %4204 = vmatpush1.bf16.msra.mxu0 %v4068
    %4205 = vmatprep.subr.bf16.mxu0 0
    %4206 = vmatpush1.bf16.msra.mxu0 0
    %4207 = vmatprep.subr.bf16.mxu0 0
    %4208 = vmatpush1.bf16.msra.mxu0 0
    %4209 = vmatprep.subr.bf16.mxu0 0
    %4210 = vmatpush1.bf16.msra.mxu0 0
    %4211 = vmatprep.subr.bf16.mxu0 0
    %4212 = vmatpush1.bf16.msra.mxu0 0
    %4213 = vmatprep.subr.bf16.mxu0 0
    %4214 = vmatpush1.bf16.msra.mxu0 0
    %4215 = vmatprep.subr.bf16.mxu0 0
    %4216 = vmatpush1.bf16.msra.mxu0 0
    %4217 = vmatprep.subr.bf16.mxu0 0
    %4218 = vmatpush1.bf16.msra.mxu0 0
    %4219 = vmatprep.subr.bf16.mxu0 0
    %4220 = vmatpush1.bf16.msra.mxu0 0
    %4221 = vmatprep.mubr.bf16.mxu0 0
    %4222 = vmatmul.mubr.bf16.gmra.mrb[0].mxu0 %v3888
    %v4223 = vpop.f32.mrb[0].mxu0
    %v4224 = vadd.f32 %v4128, %v4223
    %v4225 = vpop.f32.mrb[0].mxu0
    %v4226 = vpop.f32.mrb[0].mxu0
    %v4227 = vadd.f32 %v4131, %v4226
    %v4228 = vpop.f32.mrb[0].mxu0
    %4229 = vmatprep.mubr.bf16.mxu0 0
    %4230 = vmatmul.mubr.bf16.gmra.mrb[0].mxu0 %v3894
    %v4231 = vpop.f32.mrb[0].mxu0
    %v4232 = vadd.f32 %v4136, %v4231
    %v4233 = vpop.f32.mrb[0].mxu0
    %v4234 = vpop.f32.mrb[0].mxu0
    %v4235 = vadd.f32 %v4139, %v4234
    %v4236 = vpop.f32.mrb[0].mxu0
    %4237 = vmatprep.mubr.bf16.mxu0 0
    %4238 = vmatmul.mubr.bf16.gmra.mrb[0].mxu0 %v3900
    %v4239 = vpop.f32.mrb[0].mxu0
    %v4240 = vadd.f32 %v4144, %v4239
    %v4241 = vpop.f32.mrb[0].mxu0
    %v4242 = vpop.f32.mrb[0].mxu0
    %v4243 = vadd.f32 %v4147, %v4242
    %v4244 = vpop.f32.mrb[0].mxu0
    %4245 = vmatprep.mubr.bf16.mxu0 0
    %4246 = vmatmul.mubr.bf16.gmra.mrb[0].mxu0 %v3906
    %v4247 = vpop.f32.mrb[0].mxu0
    %v4248 = vadd.f32 %v4152, %v4247
    %v4249 = vpop.f32.mrb[0].mxu0
    %v4250 = vpop.f32.mrb[0].mxu0
    %v4251 = vadd.f32 %v4155, %v4250
    %v4252 = vpop.f32.mrb[0].mxu0
    %4253 = vmatprep.mubr.bf16.mxu0 0
    %4254 = vmatmul.mubr.bf16.gmra.mrb[0].mxu0 %v3912
    %v4255 = vpop.f32.mrb[0].mxu0
    %v4256 = vadd.f32 %v4160, %v4255
    %v4257 = vpop.f32.mrb[0].mxu0
    %v4258 = vpop.f32.mrb[0].mxu0
    %v4259 = vadd.f32 %v4163, %v4258
    %v4260 = vpop.f32.mrb[0].mxu0
    %4261 = vmatprep.mubr.bf16.mxu0 0
    %4262 = vmatmul.mubr.bf16.gmra.mrb[0].mxu0 %v3918
    %v4263 = vpop.f32.mrb[0].mxu0
    %v4264 = vadd.f32 %v4168, %v4263
    %v4265 = vpop.f32.mrb[0].mxu0
    %v4266 = vpop.f32.mrb[0].mxu0
    %v4267 = vadd.f32 %v4171, %v4266
    %v4268 = vpop.f32.mrb[0].mxu0
    %4269 = vmatprep.mubr.bf16.mxu0 0
    %4270 = vmatmul.mubr.bf16.gmra.mrb[0].mxu0 %v3924
    %v4271 = vpop.f32.mrb[0].mxu0
    %v4272 = vadd.f32 %v4176, %v4271
    %v4273 = vpop.f32.mrb[0].mxu0
    %v4274 = vpop.f32.mrb[0].mxu0
    %v4275 = vadd.f32 %v4179, %v4274
    %v4276 = vpop.f32.mrb[0].mxu0
    %4277 = vmatprep.mubr.bf16.mxu0 0
    %4278 = vmatmul.mubr.bf16.gmra.mrb[0].mxu0 %v3923
    %v4279 = vpop.f32.mrb[0].mxu0
    %v4280 = vadd.f32 %v4184, %v4279
    %v4281 = vpop.f32.mrb[0].mxu0
    %v4282 = vpop.f32.mrb[0].mxu0
    %v4283 = vpop.f32.mrb[0].mxu0
    %4284 = vdwg.mxu0
    %v4285 = vadd.f32 %v3804, %v4224
    %v4286 = vadd.f32 %v3805, %v4227
    %v4287 = vadd.f32 %v3806, %v4232
    %v4288 = vadd.f32 %v3807, %v4235
    %v4289 = vadd.f32 %v3808, %v4240
    %v4290 = vadd.f32 %v3809, %v4243
    %v4291 = vadd.f32 %v3810, %v4248
    %v4292 = vadd.f32 %v3811, %v4251
    %v4293 = vadd.f32 %v3812, %v4256
    %v4294 = vadd.f32 %v3813, %v4259
    %v4295 = vadd.f32 %v3814, %v4264
    %v4296 = vadd.f32 %v3815, %v4267
    %v4297 = vadd.f32 %v3816, %v4272
    %v4298 = vadd.f32 %v3817, %v4275
    %v4299 = vadd.f32 %v3818, %v4280
    %v4300 = vld [vmem:[#allocation2 + $0xc0] sm:$0x7f]
    %v4301 = vld [vmem:[#allocation2 + $0xc8] sm:$0x7f]
    %v4302 = vld [vmem:[#allocation2 + $0xd0] sm:$0x7f]
    %s4303 = scalar_lea.vmem [#allocation4], 1344
    %v4304 = vld [vmem:[%s4303] sm:$0xf]
    %v4305 = vld [vmem:[%s4303 + $0x4] sm:$0xf]
    %v4306 = vld [vmem:[%s4303 + $0x8] sm:$0xf]
    %v4307 = vld [vmem:[%s4303 + $0xc] sm:$0xf]
    %v4308 = vld [vmem:[%s4303 + $0x10] sm:$0xf]
    %v4309 = vld [vmem:[%s4303 + $0x14] sm:$0xf]
    %v4310 = vld [vmem:[%s4303 + $0x18] sm:$0xf]
    %v4311 = vld [vmem:[%s4303 + $0x1c] sm:$0xf]
    %v4312 = vld [vmem:[%s4303 + $0x20] sm:$0xf]
    %v4313 = vld [vmem:[%s4303 + $0x24] sm:$0xf]
    %v4314 = vld [vmem:[%s4303 + $0x28] sm:$0xf]
    %v4315 = vld [vmem:[%s4303 + $0x2c] sm:$0xf]
    %v4316 = vld [vmem:[%s4303 + $0x30] sm:$0xf]
    %v4317 = vld [vmem:[%s4303 + $0x34] sm:$0xf]
    %v4318 = vld [vmem:[%s4303 + $0x38] sm:$0xf]
    %v4319 = vld [vmem:[%s4303 + $0x3c] sm:$0xf]
    %v4320 = vld [vmem:[%s4303 + $0x40] sm:$0xf]
    %v4321 = vld [vmem:[%s4303 + $0x44] sm:$0xf]
    %v4322 = vld [vmem:[%s4303 + $0x48] sm:$0xf]
    %v4323 = vld [vmem:[%s4303 + $0x4c] sm:$0xf]
    %v4324 = vld [vmem:[%s4303 + $0x50] sm:$0xf]
    %v4325 = vld [vmem:[%s4303 + $0x54] sm:$0xf]
    %v4326 = vld [vmem:[%s4303 + $0x58] sm:$0xf]
    %v4327 = vld [vmem:[%s4303 + $0x5c] sm:$0xf]
    %v4328 = vld [vmem:[%s4303 + $0x60] sm:$0xf]
    %v4329 = vld [vmem:[%s4303 + $0x64] sm:$0xf]
    %v4330 = vld [vmem:[%s4303 + $0x68] sm:$0xf]
    %v4331 = vld [vmem:[%s4303 + $0x6c] sm:$0xf]
    %v4332 = vld [vmem:[%s4303 + $0x70] sm:$0xf]
    %v4333 = vld [vmem:[%s4303 + $0x74] sm:$0xf]
    %v4334 = vld [vmem:[%s4303 + $0x78] sm:$0xf]
    %v4335 = vld [vmem:[%s4303 + $0x7c] sm:$0xf]
    %v4336 = vld [vmem:[%s4303 + $0x80] sm:$0xf]
    %v4337 = vld [vmem:[%s4303 + $0x84] sm:$0xf]
    %v4338 = vld [vmem:[%s4303 + $0x88] sm:$0xf]
    %v4339 = vld [vmem:[%s4303 + $0x8c] sm:$0xf]
    %v4340 = vld [vmem:[%s4303 + $0x90] sm:$0xf]
    %v4341 = vld [vmem:[%s4303 + $0x94] sm:$0xf]
    %v4342 = vld [vmem:[%s4303 + $0x98] sm:$0xf]
    %v4343 = vld [vmem:[%s4303 + $0x9c] sm:$0xf]
    %v4344 = vld [vmem:[%s4303 + $0xa0] sm:$0xf]
    %v4345 = vld [vmem:[%s4303 + $0xa4] sm:$0xf]
    %v4346 = vld [vmem:[%s4303 + $0xa8] sm:$0xf]
    %v4347 = vld [vmem:[%s4303 + $0xac] sm:$0xf]
    %v4348 = vld [vmem:[%s4303 + $0xb0] sm:$0xf]
    %v4349 = vld [vmem:[%s4303 + $0xb4] sm:$0xf]
    %v4350 = vld [vmem:[%s4303 + $0xb8] sm:$0xf]
    %v4351 = vld [vmem:[%s4303 + $0xbc] sm:$0xf]
    %v4353 = vshrl.u32 %v3819, 16
    %v4355 = vrot.slane %v4353, 2
    %v4356 = vshll.u32 %v3819, 16
    %v4358 = vrot.slane %v4356, 3
    %v4359 = vor.u32 %v4355, %v4358
    %v4360 = vrot.slane %v2772, 2
    %v4361 = vrot.slane %v2775, 3
    %v4362 = vor.u32 %v4360, %v4361
    %v4363 = vsel %vm75, %v4359, %v4362
    %v4365 = vshrl.u32 %v3820, 16
    %v4367 = vrot.slane %v4365, 2
    %v4368 = vshll.u32 %v3820, 16
    %v4370 = vrot.slane %v4368, 3
    %v4371 = vor.u32 %v4367, %v4370
    %v4372 = vrot.slane %v2781, 2
    %v4373 = vrot.slane %v2784, 3
    %v4374 = vor.u32 %v4372, %v4373
    %v4375 = vsel %vm75, %v4371, %v4374
    %v4377 = vshrl.u32 %v3821, 16
    %v4379 = vrot.slane %v4377, 2
    %v4380 = vshll.u32 %v3821, 16
    %v4382 = vrot.slane %v4380, 3
    %v4383 = vor.u32 %v4379, %v4382
    %v4384 = vrot.slane %v2790, 2
    %v4385 = vrot.slane %v2793, 3
    %v4386 = vor.u32 %v4384, %v4385
    %v4387 = vsel %vm75, %v4383, %v4386
    %v4388 = vrot.slane %v2799, 2
    %v4389 = vrot.slane %v2802, 3
    %v4390 = vor.u32 %v4388, %v4389
    %v4391 = vsel %vm75, %v4362, %v4390
    %v4392 = vrot.slane %v2808, 2
    %v4393 = vrot.slane %v2811, 3
    %v4394 = vor.u32 %v4392, %v4393
    %v4395 = vsel %vm75, %v4374, %v4394
    %v4396 = vrot.slane %v2817, 2
    %v4397 = vrot.slane %v2820, 3
    %v4398 = vor.u32 %v4396, %v4397
    %v4399 = vsel %vm75, %v4386, %v4398
    %v4400 = vrot.slane %v2826, 2
    %v4401 = vrot.slane %v2829, 3
    %v4402 = vor.u32 %v4400, %v4401
    %v4403 = vsel %vm75, %v4390, %v4402
    %v4404 = vrot.slane %v2835, 2
    %v4405 = vrot.slane %v2838, 3
    %v4406 = vor.u32 %v4404, %v4405
    %v4407 = vsel %vm75, %v4394, %v4406
    %v4408 = vrot.slane %v2844, 2
    %v4409 = vrot.slane %v2847, 3
    %v4410 = vor.u32 %v4408, %v4409
    %v4411 = vsel %vm75, %v4398, %v4410
    %v4412 = vrot.slane %v2853, 2
    %v4413 = vrot.slane %v2856, 3
    %v4414 = vor.u32 %v4412, %v4413
    %v4415 = vsel %vm75, %v4402, %v4414
    %v4416 = vrot.slane %v2862, 2
    %v4417 = vrot.slane %v2865, 3
    %v4418 = vor.u32 %v4416, %v4417
    %v4419 = vsel %vm75, %v4406, %v4418
    %v4420 = vrot.slane %v2871, 2
    %v4421 = vrot.slane %v2874, 3
    %v4422 = vor.u32 %v4420, %v4421
    %v4423 = vsel %vm75, %v4410, %v4422
    %v4424 = vrot.slane %v2880, 2
    %v4425 = vrot.slane %v2883, 3
    %v4426 = vor.u32 %v4424, %v4425
    %v4427 = vsel %vm75, %v4414, %v4426
    %v4428 = vrot.slane %v2889, 2
    %v4429 = vrot.slane %v2892, 3
    %v4430 = vor.u32 %v4428, %v4429
    %v4431 = vsel %vm75, %v4418, %v4430
    %v4432 = vrot.slane %v2898, 2
    %v4433 = vrot.slane %v2901, 3
    %v4434 = vor.u32 %v4432, %v4433
    %v4435 = vsel %vm75, %v4422, %v4434
    %v4436 = vrot.slane %v2907, 2
    %v4437 = vrot.slane %v2910, 3
    %v4438 = vor.u32 %v4436, %v4437
    %v4439 = vsel %vm75, %v4426, %v4438
    %v4440 = vrot.slane %v2916, 2
    %v4441 = vrot.slane %v2919, 3
    %v4442 = vor.u32 %v4440, %v4441
    %v4443 = vsel %vm75, %v4430, %v4442
    %v4444 = vrot.slane %v2925, 2
    %v4445 = vrot.slane %v2928, 3
    %v4446 = vor.u32 %v4444, %v4445
    %v4447 = vsel %vm75, %v4434, %v4446
    %v4449 = vshrl.u32 %v4300, 16
    %v4451 = vrot.slane %v4449, 2
    %v4452 = vshll.u32 %v4300, 16
    %v4454 = vrot.slane %v4452, 3
    %v4455 = vor.u32 %v4451, %v4454
    %v4456 = vsel %vm75, %v4438, %v4455
    %v4458 = vshrl.u32 %v4301, 16
    %v4460 = vrot.slane %v4458, 2
    %v4461 = vshll.u32 %v4301, 16
    %v4463 = vrot.slane %v4461, 3
    %v4464 = vor.u32 %v4460, %v4463
    %v4465 = vsel %vm75, %v4442, %v4464
    %v4467 = vshrl.u32 %v4302, 16
    %v4469 = vrot.slane %v4467, 2
    %v4470 = vshll.u32 %v4302, 16
    %v4472 = vrot.slane %v4470, 3
    %v4473 = vor.u32 %v4469, %v4472
    %v4474 = vsel %vm75, %v4446, %v4473
    %v4547 = vunpack.c.l.b16 %v4304
    %v4548 = vunpack.c.l.b16 %v4305
    %v4549 = vunpack.c.l.b16 %v4306
    %v4550 = vunpack.c.l.b16 %v4307
    %v4551 = vunpack.c.l.b16 %v4308
    %v4552 = vunpack.c.l.b16 %v4309
    %v4553 = vunpack.c.l.b16 %v4310
    %v4554 = vunpack.c.l.b16 %v4311
    %v4555 = vunpack.c.l.b16 %v4312
    %v4556 = vunpack.c.l.b16 %v4313
    %v4557 = vunpack.c.l.b16 %v4314
    %v4558 = vunpack.c.l.b16 %v4315
    %v4559 = vunpack.c.l.b16 %v4316
    %v4560 = vunpack.c.l.b16 %v4317
    %v4561 = vunpack.c.l.b16 %v4318
    %v4562 = vunpack.c.l.b16 %v4319
    %v4563 = vunpack.c.l.b16 %v4320
    %v4564 = vunpack.c.l.b16 %v4321
    %v4565 = vunpack.c.l.b16 %v4322
    %v4566 = vunpack.c.l.b16 %v4323
    %v4567 = vunpack.c.l.b16 %v4324
    %v4568 = vunpack.c.l.b16 %v4325
    %v4569 = vunpack.c.l.b16 %v4326
    %v4570 = vunpack.c.l.b16 %v4327
    %v4571 = vunpack.c.l.b16 %v4328
    %v4572 = vunpack.c.l.b16 %v4329
    %v4573 = vunpack.c.l.b16 %v4330
    %v4574 = vunpack.c.l.b16 %v4331
    %v4575 = vunpack.c.l.b16 %v4332
    %v4576 = vunpack.c.l.b16 %v4333
    %v4577 = vunpack.c.l.b16 %v4334
    %v4578 = vunpack.c.l.b16 %v4335
    %v4579 = vunpack.c.l.b16 %v4336
    %v4580 = vunpack.c.l.b16 %v4337
    %v4581 = vunpack.c.l.b16 %v4338
    %v4582 = vunpack.c.l.b16 %v4339
    %v4583 = vunpack.c.l.b16 %v4340
    %v4584 = vunpack.c.l.b16 %v4341
    %v4585 = vunpack.c.l.b16 %v4342
    %v4586 = vunpack.c.l.b16 %v4343
    %v4587 = vunpack.c.l.b16 %v4344
    %v4588 = vunpack.c.l.b16 %v4345
    %v4589 = vunpack.c.l.b16 %v4346
    %v4590 = vunpack.c.l.b16 %v4347
    %v4591 = vunpack.c.l.b16 %v4348
    %v4592 = vunpack.c.l.b16 %v4349
    %v4593 = vunpack.c.l.b16 %v4350
    %v4594 = vunpack.c.l.b16 %v4351
    %v4595 = vpack.c.b16 %v4548, %v4547
    %v4596 = vpack.c.b16 %v4550, %v4549
    %v4597 = vpack.c.b16 %v4552, %v4551
    %v4598 = vpack.c.b16 %v4554, %v4553
    %v4599 = vpack.c.b16 %v4556, %v4555
    %v4600 = vpack.c.b16 %v4558, %v4557
    %v4601 = vpack.c.b16 %v4560, %v4559
    %v4602 = vpack.c.b16 %v4562, %v4561
    %v4603 = vpack.c.b16 %v4564, %v4563
    %v4604 = vpack.c.b16 %v4566, %v4565
    %v4605 = vpack.c.b16 %v4568, %v4567
    %v4606 = vpack.c.b16 %v4570, %v4569
    %v4607 = vpack.c.b16 %v4572, %v4571
    %v4608 = vpack.c.b16 %v4574, %v4573
    %v4609 = vpack.c.b16 %v4576, %v4575
    %v4610 = vpack.c.b16 %v4578, %v4577
    %v4611 = vpack.c.b16 %v4580, %v4579
    %v4612 = vpack.c.b16 %v4582, %v4581
    %v4613 = vpack.c.b16 %v4584, %v4583
    %v4614 = vpack.c.b16 %v4586, %v4585
    %v4615 = vpack.c.b16 %v4588, %v4587
    %v4616 = vpack.c.b16 %v4590, %v4589
    %v4617 = vpack.c.b16 %v4592, %v4591
    %v4618 = vpack.c.b16 %v4594, %v4593
    %4643 = vmatprep.subr.bf16.mxu0 0
    %4644 = vmatpush1.bf16.msra.mxu0 %v4595
    %4645 = vmatprep.subr.bf16.mxu0 0
    %4646 = vmatpush1.bf16.msra.mxu0 %v4596
    %4647 = vmatprep.subr.bf16.mxu0 0
    %4648 = vmatpush1.bf16.msra.mxu0 %v4597
    %4649 = vmatprep.subr.bf16.mxu0 0
    %4650 = vmatpush1.bf16.msra.mxu0 %v4598
    %4651 = vmatprep.subr.bf16.mxu0 0
    %4652 = vmatpush1.bf16.msra.mxu0 %v4599
    %4653 = vmatprep.subr.bf16.mxu0 0
    %4654 = vmatpush1.bf16.msra.mxu0 %v4600
    %4655 = vmatprep.subr.bf16.mxu0 0
    %4656 = vmatpush1.bf16.msra.mxu0 %v4601
    %4657 = vmatprep.subr.bf16.mxu0 0
    %4658 = vmatpush1.bf16.msra.mxu0 %v4602
    %4659 = vmatprep.subr.bf16.mxu0 0
    %4660 = vmatpush1.bf16.msra.mxu0 %v4603
    %4661 = vmatprep.subr.bf16.mxu0 0
    %4662 = vmatpush1.bf16.msra.mxu0 %v4604
    %4663 = vmatprep.subr.bf16.mxu0 0
    %4664 = vmatpush1.bf16.msra.mxu0 %v4605
    %4665 = vmatprep.subr.bf16.mxu0 0
    %4666 = vmatpush1.bf16.msra.mxu0 %v4606
    %4667 = vmatprep.subr.bf16.mxu0 0
    %4668 = vmatpush1.bf16.msra.mxu0 %v4607
    %4669 = vmatprep.subr.bf16.mxu0 0
    %4670 = vmatpush1.bf16.msra.mxu0 %v4608
    %4671 = vmatprep.subr.bf16.mxu0 0
    %4672 = vmatpush1.bf16.msra.mxu0 %v4609
    %4673 = vmatprep.subr.bf16.mxu0 0
    %4674 = vmatpush1.bf16.msra.mxu0 %v4610
    %4675 = vmatprep.mubr.bf16.mxu0 %v4375
    %4676 = vmatmul.mubr.bf16.gmra.mrb[0].mxu0 %v4363
    %v4677 = vpop.f32.mrb[0].mxu0
    %v4678 = vadd.f32 0.0, %v4677
    %v4679 = vpop.f32.mrb[0].mxu0
    %v4680 = vpop.f32.mrb[0].mxu0
    %v4681 = vadd.f32 0.0, %v4680
    %v4682 = vpop.f32.mrb[0].mxu0
    %4683 = vmatprep.mubr.bf16.mxu0 %v4395
    %4684 = vmatmul.mubr.bf16.gmra.mrb[0].mxu0 %v4391
    %v4685 = vpop.f32.mrb[0].mxu0
    %v4686 = vadd.f32 0.0, %v4685
    %v4687 = vpop.f32.mrb[0].mxu0
    %v4688 = vpop.f32.mrb[0].mxu0
    %v4689 = vadd.f32 0.0, %v4688
    %v4690 = vpop.f32.mrb[0].mxu0
    %4691 = vmatprep.mubr.bf16.mxu0 %v4407
    %4692 = vmatmul.mubr.bf16.gmra.mrb[0].mxu0 %v4403
    %v4693 = vpop.f32.mrb[0].mxu0
    %v4694 = vadd.f32 0.0, %v4693
    %v4695 = vpop.f32.mrb[0].mxu0
    %v4696 = vpop.f32.mrb[0].mxu0
    %v4697 = vadd.f32 0.0, %v4696
    %v4698 = vpop.f32.mrb[0].mxu0
    %4699 = vmatprep.mubr.bf16.mxu0 %v4419
    %4700 = vmatmul.mubr.bf16.gmra.mrb[0].mxu0 %v4415
    %v4701 = vpop.f32.mrb[0].mxu0
    %v4702 = vadd.f32 0.0, %v4701
    %v4703 = vpop.f32.mrb[0].mxu0
    %v4704 = vpop.f32.mrb[0].mxu0
    %v4705 = vadd.f32 0.0, %v4704
    %v4706 = vpop.f32.mrb[0].mxu0
    %4707 = vmatprep.mubr.bf16.mxu0 %v4431
    %4708 = vmatmul.mubr.bf16.gmra.mrb[0].mxu0 %v4427
    %v4709 = vpop.f32.mrb[0].mxu0
    %v4710 = vadd.f32 0.0, %v4709
    %v4711 = vpop.f32.mrb[0].mxu0
    %v4712 = vpop.f32.mrb[0].mxu0
    %v4713 = vadd.f32 0.0, %v4712
    %v4714 = vpop.f32.mrb[0].mxu0
    %4715 = vmatprep.mubr.bf16.mxu0 %v4443
    %4716 = vmatmul.mubr.bf16.gmra.mrb[0].mxu0 %v4439
    %v4717 = vpop.f32.mrb[0].mxu0
    %v4718 = vadd.f32 0.0, %v4717
    %v4719 = vpop.f32.mrb[0].mxu0
    %v4720 = vpop.f32.mrb[0].mxu0
    %v4721 = vadd.f32 0.0, %v4720
    %v4722 = vpop.f32.mrb[0].mxu0
    %4723 = vmatprep.mubr.bf16.mxu0 %v4465
    %4724 = vmatmul.mubr.bf16.gmra.mrb[0].mxu0 %v4456
    %v4725 = vpop.f32.mrb[0].mxu0
    %v4726 = vadd.f32 0.0, %v4725
    %v4727 = vpop.f32.mrb[0].mxu0
    %v4728 = vpop.f32.mrb[0].mxu0
    %v4729 = vadd.f32 0.0, %v4728
    %v4730 = vpop.f32.mrb[0].mxu0
    %4731 = vmatprep.mubr.bf16.mxu0 %v4464
    %4732 = vmatmul.mubr.bf16.gmra.mrb[0].mxu0 %v4455
    %v4733 = vpop.f32.mrb[0].mxu0
    %v4734 = vadd.f32 0.0, %v4733
    %v4735 = vpop.f32.mrb[0].mxu0
    %v4736 = vpop.f32.mrb[0].mxu0
    %v4737 = vpop.f32.mrb[0].mxu0
    %4738 = vdwg.mxu0
    %4739 = vmatprep.subr.bf16.mxu0 0
    %4740 = vmatpush1.bf16.msra.mxu0 %v4611
    %4741 = vmatprep.subr.bf16.mxu0 0
    %4742 = vmatpush1.bf16.msra.mxu0 %v4612
    %4743 = vmatprep.subr.bf16.mxu0 0
    %4744 = vmatpush1.bf16.msra.mxu0 %v4613
    %4745 = vmatprep.subr.bf16.mxu0 0
    %4746 = vmatpush1.bf16.msra.mxu0 %v4614
    %4747 = vmatprep.subr.bf16.mxu0 0
    %4748 = vmatpush1.bf16.msra.mxu0 %v4615
    %4749 = vmatprep.subr.bf16.mxu0 0
    %4750 = vmatpush1.bf16.msra.mxu0 %v4616
    %4751 = vmatprep.subr.bf16.mxu0 0
    %4752 = vmatpush1.bf16.msra.mxu0 %v4617
    %4753 = vmatprep.subr.bf16.mxu0 0
    %4754 = vmatpush1.bf16.msra.mxu0 %v4618
    %4755 = vmatprep.subr.bf16.mxu0 0
    %4756 = vmatpush1.bf16.msra.mxu0 0
    %4757 = vmatprep.subr.bf16.mxu0 0
    %4758 = vmatpush1.bf16.msra.mxu0 0
    %4759 = vmatprep.subr.bf16.mxu0 0
    %4760 = vmatpush1.bf16.msra.mxu0 0
    %4761 = vmatprep.subr.bf16.mxu0 0
    %4762 = vmatpush1.bf16.msra.mxu0 0
    %4763 = vmatprep.subr.bf16.mxu0 0
    %4764 = vmatpush1.bf16.msra.mxu0 0
    %4765 = vmatprep.subr.bf16.mxu0 0
    %4766 = vmatpush1.bf16.msra.mxu0 0
    %4767 = vmatprep.subr.bf16.mxu0 0
    %4768 = vmatpush1.bf16.msra.mxu0 0
    %4769 = vmatprep.subr.bf16.mxu0 0
    %4770 = vmatpush1.bf16.msra.mxu0 0
    %4771 = vmatprep.mubr.bf16.mxu0 0
    %4772 = vmatmul.mubr.bf16.gmra.mrb[0].mxu0 %v4387
    %v4773 = vpop.f32.mrb[0].mxu0
    %v4774 = vadd.f32 %v4678, %v4773
    %v4775 = vpop.f32.mrb[0].mxu0
    %v4776 = vpop.f32.mrb[0].mxu0
    %v4777 = vadd.f32 %v4681, %v4776
    %v4778 = vpop.f32.mrb[0].mxu0
    %4779 = vmatprep.mubr.bf16.mxu0 0
    %4780 = vmatmul.mubr.bf16.gmra.mrb[0].mxu0 %v4399
    %v4781 = vpop.f32.mrb[0].mxu0
    %v4782 = vadd.f32 %v4686, %v4781
    %v4783 = vpop.f32.mrb[0].mxu0
    %v4784 = vpop.f32.mrb[0].mxu0
    %v4785 = vadd.f32 %v4689, %v4784
    %v4786 = vpop.f32.mrb[0].mxu0
    %4787 = vmatprep.mubr.bf16.mxu0 0
    %4788 = vmatmul.mubr.bf16.gmra.mrb[0].mxu0 %v4411
    %v4789 = vpop.f32.mrb[0].mxu0
    %v4790 = vadd.f32 %v4694, %v4789
    %v4791 = vpop.f32.mrb[0].mxu0
    %v4792 = vpop.f32.mrb[0].mxu0
    %v4793 = vadd.f32 %v4697, %v4792
    %v4794 = vpop.f32.mrb[0].mxu0
    %4795 = vmatprep.mubr.bf16.mxu0 0
    %4796 = vmatmul.mubr.bf16.gmra.mrb[0].mxu0 %v4423
    %v4797 = vpop.f32.mrb[0].mxu0
    %v4798 = vadd.f32 %v4702, %v4797
    %v4799 = vpop.f32.mrb[0].mxu0
    %v4800 = vpop.f32.mrb[0].mxu0
    %v4801 = vadd.f32 %v4705, %v4800
    %v4802 = vpop.f32.mrb[0].mxu0
    %4803 = vmatprep.mubr.bf16.mxu0 0
    %4804 = vmatmul.mubr.bf16.gmra.mrb[0].mxu0 %v4435
    %v4805 = vpop.f32.mrb[0].mxu0
    %v4806 = vadd.f32 %v4710, %v4805
    %v4807 = vpop.f32.mrb[0].mxu0
    %v4808 = vpop.f32.mrb[0].mxu0
    %v4809 = vadd.f32 %v4713, %v4808
    %v4810 = vpop.f32.mrb[0].mxu0
    %4811 = vmatprep.mubr.bf16.mxu0 0
    %4812 = vmatmul.mubr.bf16.gmra.mrb[0].mxu0 %v4447
    %v4813 = vpop.f32.mrb[0].mxu0
    %v4814 = vadd.f32 %v4718, %v4813
    %v4815 = vpop.f32.mrb[0].mxu0
    %v4816 = vpop.f32.mrb[0].mxu0
    %v4817 = vadd.f32 %v4721, %v4816
    %v4818 = vpop.f32.mrb[0].mxu0
    %4819 = vmatprep.mubr.bf16.mxu0 0
    %4820 = vmatmul.mubr.bf16.gmra.mrb[0].mxu0 %v4474
    %v4821 = vpop.f32.mrb[0].mxu0
    %v4822 = vadd.f32 %v4726, %v4821
    %v4823 = vpop.f32.mrb[0].mxu0
    %v4824 = vpop.f32.mrb[0].mxu0
    %v4825 = vadd.f32 %v4729, %v4824
    %v4826 = vpop.f32.mrb[0].mxu0
    %4827 = vmatprep.mubr.bf16.mxu0 0
    %4828 = vmatmul.mubr.bf16.gmra.mrb[0].mxu0 %v4473
    %v4829 = vpop.f32.mrb[0].mxu0
    %v4830 = vadd.f32 %v4734, %v4829
    %v4831 = vpop.f32.mrb[0].mxu0
    %v4832 = vpop.f32.mrb[0].mxu0
    %v4833 = vpop.f32.mrb[0].mxu0
    %4834 = vdwg.mxu0
    %v4835 = vadd.f32 %v4285, %v4774
    %v4836 = vadd.f32 %v4286, %v4777
    %v4837 = vadd.f32 %v4287, %v4782
    %v4838 = vadd.f32 %v4288, %v4785
    %v4839 = vadd.f32 %v4289, %v4790
    %v4840 = vadd.f32 %v4290, %v4793
    %v4841 = vadd.f32 %v4291, %v4798
    %v4842 = vadd.f32 %v4292, %v4801
    %v4843 = vadd.f32 %v4293, %v4806
    %v4844 = vadd.f32 %v4294, %v4809
    %v4845 = vadd.f32 %v4295, %v4814
    %v4846 = vadd.f32 %v4296, %v4817
    %v4847 = vadd.f32 %v4297, %v4822
    %v4848 = vadd.f32 %v4298, %v4825
    %v4849 = vadd.f32 %v4299, %v4830
    %v4850 = vld [vmem:[#allocation2 + $0x18] sm:$0xf8]
    %v4851 = vld [vmem:[#allocation2 + $0x20] sm:$0xf8]
    %v4852 = vld [vmem:[#allocation2 + $0x28] sm:$0xf8]
    %s4853 = scalar_lea.vmem [#allocation4], 1536
    %v4854 = vld [vmem:[%s4853] sm:$0xf]
    %v4855 = vld [vmem:[%s4853 + $0x4] sm:$0xf]
    %v4856 = vld [vmem:[%s4853 + $0x8] sm:$0xf]
    %v4857 = vld [vmem:[%s4853 + $0xc] sm:$0xf]
    %v4858 = vld [vmem:[%s4853 + $0x10] sm:$0xf]
    %v4859 = vld [vmem:[%s4853 + $0x14] sm:$0xf]
    %v4860 = vld [vmem:[%s4853 + $0x18] sm:$0xf]
    %v4861 = vld [vmem:[%s4853 + $0x1c] sm:$0xf]
    %v4862 = vld [vmem:[%s4853 + $0x20] sm:$0xf]
    %v4863 = vld [vmem:[%s4853 + $0x24] sm:$0xf]
    %v4864 = vld [vmem:[%s4853 + $0x28] sm:$0xf]
    %v4865 = vld [vmem:[%s4853 + $0x2c] sm:$0xf]
    %v4866 = vld [vmem:[%s4853 + $0x30] sm:$0xf]
    %v4867 = vld [vmem:[%s4853 + $0x34] sm:$0xf]
    %v4868 = vld [vmem:[%s4853 + $0x38] sm:$0xf]
    %v4869 = vld [vmem:[%s4853 + $0x3c] sm:$0xf]
    %v4870 = vld [vmem:[%s4853 + $0x40] sm:$0xf]
    %v4871 = vld [vmem:[%s4853 + $0x44] sm:$0xf]
    %v4872 = vld [vmem:[%s4853 + $0x48] sm:$0xf]
    %v4873 = vld [vmem:[%s4853 + $0x4c] sm:$0xf]
    %v4874 = vld [vmem:[%s4853 + $0x50] sm:$0xf]
    %v4875 = vld [vmem:[%s4853 + $0x54] sm:$0xf]
    %v4876 = vld [vmem:[%s4853 + $0x58] sm:$0xf]
    %v4877 = vld [vmem:[%s4853 + $0x5c] sm:$0xf]
    %v4878 = vld [vmem:[%s4853 + $0x60] sm:$0xf]
    %v4879 = vld [vmem:[%s4853 + $0x64] sm:$0xf]
    %v4880 = vld [vmem:[%s4853 + $0x68] sm:$0xf]
    %v4881 = vld [vmem:[%s4853 + $0x6c] sm:$0xf]
    %v4882 = vld [vmem:[%s4853 + $0x70] sm:$0xf]
    %v4883 = vld [vmem:[%s4853 + $0x74] sm:$0xf]
    %v4884 = vld [vmem:[%s4853 + $0x78] sm:$0xf]
    %v4885 = vld [vmem:[%s4853 + $0x7c] sm:$0xf]
    %v4886 = vld [vmem:[%s4853 + $0x80] sm:$0xf]
    %v4887 = vld [vmem:[%s4853 + $0x84] sm:$0xf]
    %v4888 = vld [vmem:[%s4853 + $0x88] sm:$0xf]
    %v4889 = vld [vmem:[%s4853 + $0x8c] sm:$0xf]
    %v4890 = vld [vmem:[%s4853 + $0x90] sm:$0xf]
    %v4891 = vld [vmem:[%s4853 + $0x94] sm:$0xf]
    %v4892 = vld [vmem:[%s4853 + $0x98] sm:$0xf]
    %v4893 = vld [vmem:[%s4853 + $0x9c] sm:$0xf]
    %v4894 = vld [vmem:[%s4853 + $0xa0] sm:$0xf]
    %v4895 = vld [vmem:[%s4853 + $0xa4] sm:$0xf]
    %v4896 = vld [vmem:[%s4853 + $0xa8] sm:$0xf]
    %v4897 = vld [vmem:[%s4853 + $0xac] sm:$0xf]
    %v4898 = vld [vmem:[%s4853 + $0xb0] sm:$0xf]
    %v4899 = vld [vmem:[%s4853 + $0xb4] sm:$0xf]
    %v4900 = vld [vmem:[%s4853 + $0xb8] sm:$0xf]
    %v4901 = vld [vmem:[%s4853 + $0xbc] sm:$0xf]
    %v4908 = vrot.slane %v4850, 3
    %v4909 = vrot.slane %v2143, 3
    %v4910 = vsel %vm479, %v4908, %v4909
    %v4911 = vrot.slane %v4851, 3
    %v4912 = vrot.slane %v2144, 3
    %v4913 = vsel %vm479, %v4911, %v4912
    %v4914 = vrot.slane %v4852, 3
    %v4915 = vrot.slane %v2145, 3
    %v4916 = vsel %vm479, %v4914, %v4915
    %v4917 = vrot.slane %v2146, 3
    %v4918 = vsel %vm479, %v4909, %v4917
    %v4919 = vrot.slane %v2147, 3
    %v4920 = vsel %vm479, %v4912, %v4919
    %v4921 = vrot.slane %v2148, 3
    %v4922 = vsel %vm479, %v4915, %v4921
    %v4923 = vrot.slane %v2149, 3
    %v4924 = vsel %vm479, %v4917, %v4923
    %v4925 = vrot.slane %v2150, 3
    %v4926 = vsel %vm479, %v4919, %v4925
    %v4927 = vrot.slane %v2151, 3
    %v4928 = vsel %vm479, %v4921, %v4927
    %v4929 = vrot.slane %v2152, 3
    %v4930 = vsel %vm479, %v4923, %v4929
    %v4931 = vrot.slane %v2153, 3
    %v4932 = vsel %vm479, %v4925, %v4931
    %v4933 = vrot.slane %v2154, 3
    %v4934 = vsel %vm479, %v4927, %v4933
    %v4935 = vrot.slane %v2155, 3
    %v4936 = vsel %vm479, %v4929, %v4935
    %v4937 = vrot.slane %v2156, 3
    %v4938 = vsel %vm479, %v4931, %v4937
    %v4939 = vrot.slane %v2157, 3
    %v4940 = vsel %vm479, %v4933, %v4939
    %v4941 = vrot.slane %v2158, 3
    %v4942 = vsel %vm479, %v4935, %v4941
    %v4943 = vrot.slane %v2159, 3
    %v4944 = vsel %vm479, %v4937, %v4943
    %v4945 = vrot.slane %v2160, 3
    %v4946 = vsel %vm479, %v4939, %v4945
    %v4947 = vrot.slane %v4300, 3
    %v4948 = vsel %vm479, %v4941, %v4947
    %v4949 = vrot.slane %v4301, 3
    %v4950 = vsel %vm479, %v4943, %v4949
    %v4951 = vrot.slane %v4302, 3
    %v4952 = vsel %vm479, %v4945, %v4951
    %v5025 = vunpack.c.l.b16 %v4854
    %v5026 = vunpack.c.l.b16 %v4855
    %v5027 = vunpack.c.l.b16 %v4856
    %v5028 = vunpack.c.l.b16 %v4857
    %v5029 = vunpack.c.l.b16 %v4858
    %v5030 = vunpack.c.l.b16 %v4859
    %v5031 = vunpack.c.l.b16 %v4860
    %v5032 = vunpack.c.l.b16 %v4861
    %v5033 = vunpack.c.l.b16 %v4862
    %v5034 = vunpack.c.l.b16 %v4863
    %v5035 = vunpack.c.l.b16 %v4864
    %v5036 = vunpack.c.l.b16 %v4865
    %v5037 = vunpack.c.l.b16 %v4866
    %v5038 = vunpack.c.l.b16 %v4867
    %v5039 = vunpack.c.l.b16 %v4868
    %v5040 = vunpack.c.l.b16 %v4869
    %v5041 = vunpack.c.l.b16 %v4870
    %v5042 = vunpack.c.l.b16 %v4871
    %v5043 = vunpack.c.l.b16 %v4872
    %v5044 = vunpack.c.l.b16 %v4873
    %v5045 = vunpack.c.l.b16 %v4874
    %v5046 = vunpack.c.l.b16 %v4875
    %v5047 = vunpack.c.l.b16 %v4876
    %v5048 = vunpack.c.l.b16 %v4877
    %v5049 = vunpack.c.l.b16 %v4878
    %v5050 = vunpack.c.l.b16 %v4879
    %v5051 = vunpack.c.l.b16 %v4880
    %v5052 = vunpack.c.l.b16 %v4881
    %v5053 = vunpack.c.l.b16 %v4882
    %v5054 = vunpack.c.l.b16 %v4883
    %v5055 = vunpack.c.l.b16 %v4884
    %v5056 = vunpack.c.l.b16 %v4885
    %v5057 = vunpack.c.l.b16 %v4886
    %v5058 = vunpack.c.l.b16 %v4887
    %v5059 = vunpack.c.l.b16 %v4888
    %v5060 = vunpack.c.l.b16 %v4889
    %v5061 = vunpack.c.l.b16 %v4890
    %v5062 = vunpack.c.l.b16 %v4891
    %v5063 = vunpack.c.l.b16 %v4892
    %v5064 = vunpack.c.l.b16 %v4893
    %v5065 = vunpack.c.l.b16 %v4894
    %v5066 = vunpack.c.l.b16 %v4895
    %v5067 = vunpack.c.l.b16 %v4896
    %v5068 = vunpack.c.l.b16 %v4897
    %v5069 = vunpack.c.l.b16 %v4898
    %v5070 = vunpack.c.l.b16 %v4899
    %v5071 = vunpack.c.l.b16 %v4900
    %v5072 = vunpack.c.l.b16 %v4901
    %v5073 = vpack.c.b16 %v5026, %v5025
    %v5074 = vpack.c.b16 %v5028, %v5027
    %v5075 = vpack.c.b16 %v5030, %v5029
    %v5076 = vpack.c.b16 %v5032, %v5031
    %v5077 = vpack.c.b16 %v5034, %v5033
    %v5078 = vpack.c.b16 %v5036, %v5035
    %v5079 = vpack.c.b16 %v5038, %v5037
    %v5080 = vpack.c.b16 %v5040, %v5039
    %v5081 = vpack.c.b16 %v5042, %v5041
    %v5082 = vpack.c.b16 %v5044, %v5043
    %v5083 = vpack.c.b16 %v5046, %v5045
    %v5084 = vpack.c.b16 %v5048, %v5047
    %v5085 = vpack.c.b16 %v5050, %v5049
    %v5086 = vpack.c.b16 %v5052, %v5051
    %v5087 = vpack.c.b16 %v5054, %v5053
    %v5088 = vpack.c.b16 %v5056, %v5055
    %v5089 = vpack.c.b16 %v5058, %v5057
    %v5090 = vpack.c.b16 %v5060, %v5059
    %v5091 = vpack.c.b16 %v5062, %v5061
    %v5092 = vpack.c.b16 %v5064, %v5063
    %v5093 = vpack.c.b16 %v5066, %v5065
    %v5094 = vpack.c.b16 %v5068, %v5067
    %v5095 = vpack.c.b16 %v5070, %v5069
    %v5096 = vpack.c.b16 %v5072, %v5071
    %5121 = vmatprep.subr.bf16.mxu0 0
    %5122 = vmatpush1.bf16.msra.mxu0 %v5073
    %5123 = vmatprep.subr.bf16.mxu0 0
    %5124 = vmatpush1.bf16.msra.mxu0 %v5074
    %5125 = vmatprep.subr.bf16.mxu0 0
    %5126 = vmatpush1.bf16.msra.mxu0 %v5075
    %5127 = vmatprep.subr.bf16.mxu0 0
    %5128 = vmatpush1.bf16.msra.mxu0 %v5076
    %5129 = vmatprep.subr.bf16.mxu0 0
    %5130 = vmatpush1.bf16.msra.mxu0 %v5077
    %5131 = vmatprep.subr.bf16.mxu0 0
    %5132 = vmatpush1.bf16.msra.mxu0 %v5078
    %5133 = vmatprep.subr.bf16.mxu0 0
    %5134 = vmatpush1.bf16.msra.mxu0 %v5079
    %5135 = vmatprep.subr.bf16.mxu0 0
    %5136 = vmatpush1.bf16.msra.mxu0 %v5080
    %5137 = vmatprep.subr.bf16.mxu0 0
    %5138 = vmatpush1.bf16.msra.mxu0 %v5081
    %5139 = vmatprep.subr.bf16.mxu0 0
    %5140 = vmatpush1.bf16.msra.mxu0 %v5082
    %5141 = vmatprep.subr.bf16.mxu0 0
    %5142 = vmatpush1.bf16.msra.mxu0 %v5083
    %5143 = vmatprep.subr.bf16.mxu0 0
    %5144 = vmatpush1.bf16.msra.mxu0 %v5084
    %5145 = vmatprep.subr.bf16.mxu0 0
    %5146 = vmatpush1.bf16.msra.mxu0 %v5085
    %5147 = vmatprep.subr.bf16.mxu0 0
    %5148 = vmatpush1.bf16.msra.mxu0 %v5086
    %5149 = vmatprep.subr.bf16.mxu0 0
    %5150 = vmatpush1.bf16.msra.mxu0 %v5087
    %5151 = vmatprep.subr.bf16.mxu0 0
    %5152 = vmatpush1.bf16.msra.mxu0 %v5088
    %5153 = vmatprep.mubr.bf16.mxu0 %v4913
    %5154 = vmatmul.mubr.bf16.gmra.mrb[0].mxu0 %v4910
    %v5155 = vpop.f32.mrb[0].mxu0
    %v5156 = vadd.f32 0.0, %v5155
    %v5157 = vpop.f32.mrb[0].mxu0
    %v5158 = vpop.f32.mrb[0].mxu0
    %v5159 = vadd.f32 0.0, %v5158
    %v5160 = vpop.f32.mrb[0].mxu0
    %5161 = vmatprep.mubr.bf16.mxu0 %v4920
    %5162 = vmatmul.mubr.bf16.gmra.mrb[0].mxu0 %v4918
    %v5163 = vpop.f32.mrb[0].mxu0
    %v5164 = vadd.f32 0.0, %v5163
    %v5165 = vpop.f32.mrb[0].mxu0
    %v5166 = vpop.f32.mrb[0].mxu0
    %v5167 = vadd.f32 0.0, %v5166
    %v5168 = vpop.f32.mrb[0].mxu0
    %5169 = vmatprep.mubr.bf16.mxu0 %v4926
    %5170 = vmatmul.mubr.bf16.gmra.mrb[0].mxu0 %v4924
    %v5171 = vpop.f32.mrb[0].mxu0
    %v5172 = vadd.f32 0.0, %v5171
    %v5173 = vpop.f32.mrb[0].mxu0
    %v5174 = vpop.f32.mrb[0].mxu0
    %v5175 = vadd.f32 0.0, %v5174
    %v5176 = vpop.f32.mrb[0].mxu0
    %5177 = vmatprep.mubr.bf16.mxu0 %v4932
    %5178 = vmatmul.mubr.bf16.gmra.mrb[0].mxu0 %v4930
    %v5179 = vpop.f32.mrb[0].mxu0
    %v5180 = vadd.f32 0.0, %v5179
    %v5181 = vpop.f32.mrb[0].mxu0
    %v5182 = vpop.f32.mrb[0].mxu0
    %v5183 = vadd.f32 0.0, %v5182
    %v5184 = vpop.f32.mrb[0].mxu0
    %5185 = vmatprep.mubr.bf16.mxu0 %v4938
    %5186 = vmatmul.mubr.bf16.gmra.mrb[0].mxu0 %v4936
    %v5187 = vpop.f32.mrb[0].mxu0
    %v5188 = vadd.f32 0.0, %v5187
    %v5189 = vpop.f32.mrb[0].mxu0
    %v5190 = vpop.f32.mrb[0].mxu0
    %v5191 = vadd.f32 0.0, %v5190
    %v5192 = vpop.f32.mrb[0].mxu0
    %5193 = vmatprep.mubr.bf16.mxu0 %v4944
    %5194 = vmatmul.mubr.bf16.gmra.mrb[0].mxu0 %v4942
    %v5195 = vpop.f32.mrb[0].mxu0
    %v5196 = vadd.f32 0.0, %v5195
    %v5197 = vpop.f32.mrb[0].mxu0
    %v5198 = vpop.f32.mrb[0].mxu0
    %v5199 = vadd.f32 0.0, %v5198
    %v5200 = vpop.f32.mrb[0].mxu0
    %5201 = vmatprep.mubr.bf16.mxu0 %v4950
    %5202 = vmatmul.mubr.bf16.gmra.mrb[0].mxu0 %v4948
    %v5203 = vpop.f32.mrb[0].mxu0
    %v5204 = vadd.f32 0.0, %v5203
    %v5205 = vpop.f32.mrb[0].mxu0
    %v5206 = vpop.f32.mrb[0].mxu0
    %v5207 = vadd.f32 0.0, %v5206
    %v5208 = vpop.f32.mrb[0].mxu0
    %5209 = vmatprep.mubr.bf16.mxu0 %v4949
    %5210 = vmatmul.mubr.bf16.gmra.mrb[0].mxu0 %v4947
    %v5211 = vpop.f32.mrb[0].mxu0
    %v5212 = vadd.f32 0.0, %v5211
    %v5213 = vpop.f32.mrb[0].mxu0
    %v5214 = vpop.f32.mrb[0].mxu0
    %v5215 = vpop.f32.mrb[0].mxu0
    %5216 = vdwg.mxu0
    %5217 = vmatprep.subr.bf16.mxu0 0
    %5218 = vmatpush1.bf16.msra.mxu0 %v5089
    %5219 = vmatprep.subr.bf16.mxu0 0
    %5220 = vmatpush1.bf16.msra.mxu0 %v5090
    %5221 = vmatprep.subr.bf16.mxu0 0
    %5222 = vmatpush1.bf16.msra.mxu0 %v5091
    %5223 = vmatprep.subr.bf16.mxu0 0
    %5224 = vmatpush1.bf16.msra.mxu0 %v5092
    %5225 = vmatprep.subr.bf16.mxu0 0
    %5226 = vmatpush1.bf16.msra.mxu0 %v5093
    %5227 = vmatprep.subr.bf16.mxu0 0
    %5228 = vmatpush1.bf16.msra.mxu0 %v5094
    %5229 = vmatprep.subr.bf16.mxu0 0
    %5230 = vmatpush1.bf16.msra.mxu0 %v5095
    %5231 = vmatprep.subr.bf16.mxu0 0
    %5232 = vmatpush1.bf16.msra.mxu0 %v5096
    %5233 = vmatprep.subr.bf16.mxu0 0
    %5234 = vmatpush1.bf16.msra.mxu0 0
    %5235 = vmatprep.subr.bf16.mxu0 0
    %5236 = vmatpush1.bf16.msra.mxu0 0
    %5237 = vmatprep.subr.bf16.mxu0 0
    %5238 = vmatpush1.bf16.msra.mxu0 0
    %5239 = vmatprep.subr.bf16.mxu0 0
    %5240 = vmatpush1.bf16.msra.mxu0 0
    %5241 = vmatprep.subr.bf16.mxu0 0
    %5242 = vmatpush1.bf16.msra.mxu0 0
    %5243 = vmatprep.subr.bf16.mxu0 0
    %5244 = vmatpush1.bf16.msra.mxu0 0
    %5245 = vmatprep.subr.bf16.mxu0 0
    %5246 = vmatpush1.bf16.msra.mxu0 0
    %5247 = vmatprep.subr.bf16.mxu0 0
    %5248 = vmatpush1.bf16.msra.mxu0 0
    %5249 = vmatprep.mubr.bf16.mxu0 0
    %5250 = vmatmul.mubr.bf16.gmra.mrb[0].mxu0 %v4916
    %v5251 = vpop.f32.mrb[0].mxu0
    %v5252 = vadd.f32 %v5156, %v5251
    %v5253 = vpop.f32.mrb[0].mxu0
    %v5254 = vpop.f32.mrb[0].mxu0
    %v5255 = vadd.f32 %v5159, %v5254
    %v5256 = vpop.f32.mrb[0].mxu0
    %5257 = vmatprep.mubr.bf16.mxu0 0
    %5258 = vmatmul.mubr.bf16.gmra.mrb[0].mxu0 %v4922
    %v5259 = vpop.f32.mrb[0].mxu0
    %v5260 = vadd.f32 %v5164, %v5259
    %v5261 = vpop.f32.mrb[0].mxu0
    %v5262 = vpop.f32.mrb[0].mxu0
    %v5263 = vadd.f32 %v5167, %v5262
    %v5264 = vpop.f32.mrb[0].mxu0
    %5265 = vmatprep.mubr.bf16.mxu0 0
    %5266 = vmatmul.mubr.bf16.gmra.mrb[0].mxu0 %v4928
    %v5267 = vpop.f32.mrb[0].mxu0
    %v5268 = vadd.f32 %v5172, %v5267
    %v5269 = vpop.f32.mrb[0].mxu0
    %v5270 = vpop.f32.mrb[0].mxu0
    %v5271 = vadd.f32 %v5175, %v5270
    %v5272 = vpop.f32.mrb[0].mxu0
    %5273 = vmatprep.mubr.bf16.mxu0 0
    %5274 = vmatmul.mubr.bf16.gmra.mrb[0].mxu0 %v4934
    %v5275 = vpop.f32.mrb[0].mxu0
    %v5276 = vadd.f32 %v5180, %v5275
    %v5277 = vpop.f32.mrb[0].mxu0
    %v5278 = vpop.f32.mrb[0].mxu0
    %v5279 = vadd.f32 %v5183, %v5278
    %v5280 = vpop.f32.mrb[0].mxu0
    %5281 = vmatprep.mubr.bf16.mxu0 0
    %5282 = vmatmul.mubr.bf16.gmra.mrb[0].mxu0 %v4940
    %v5283 = vpop.f32.mrb[0].mxu0
    %v5284 = vadd.f32 %v5188, %v5283
    %v5285 = vpop.f32.mrb[0].mxu0
    %v5286 = vpop.f32.mrb[0].mxu0
    %v5287 = vadd.f32 %v5191, %v5286
    %v5288 = vpop.f32.mrb[0].mxu0
    %5289 = vmatprep.mubr.bf16.mxu0 0
    %5290 = vmatmul.mubr.bf16.gmra.mrb[0].mxu0 %v4946
    %v5291 = vpop.f32.mrb[0].mxu0
    %v5292 = vadd.f32 %v5196, %v5291
    %v5293 = vpop.f32.mrb[0].mxu0
    %v5294 = vpop.f32.mrb[0].mxu0
    %v5295 = vadd.f32 %v5199, %v5294
    %v5296 = vpop.f32.mrb[0].mxu0
    %5297 = vmatprep.mubr.bf16.mxu0 0
    %5298 = vmatmul.mubr.bf16.gmra.mrb[0].mxu0 %v4952
    %v5299 = vpop.f32.mrb[0].mxu0
    %v5300 = vadd.f32 %v5204, %v5299
    %v5301 = vpop.f32.mrb[0].mxu0
    %v5302 = vpop.f32.mrb[0].mxu0
    %v5303 = vadd.f32 %v5207, %v5302
    %v5304 = vpop.f32.mrb[0].mxu0
    %5305 = vmatprep.mubr.bf16.mxu0 0
    %5306 = vmatmul.mubr.bf16.gmra.mrb[0].mxu0 %v4951
    %v5307 = vpop.f32.mrb[0].mxu0
    %v5308 = vadd.f32 %v5212, %v5307
    %v5309 = vpop.f32.mrb[0].mxu0
    %v5310 = vpop.f32.mrb[0].mxu0
    %v5311 = vpop.f32.mrb[0].mxu0
    %5312 = vdwg.mxu0
    %v5313 = vadd.f32 %v4835, %v5252
    %v5314 = vadd.f32 %v4836, %v5255
    %v5315 = vadd.f32 %v4837, %v5260
    %v5316 = vadd.f32 %v4838, %v5263
    %v5317 = vadd.f32 %v4839, %v5268
    %v5318 = vadd.f32 %v4840, %v5271
    %v5319 = vadd.f32 %v4841, %v5276
    %v5320 = vadd.f32 %v4842, %v5279
    %v5321 = vadd.f32 %v4843, %v5284
    %v5322 = vadd.f32 %v4844, %v5287
    %v5323 = vadd.f32 %v4845, %v5292
    %v5324 = vadd.f32 %v4846, %v5295
    %v5325 = vadd.f32 %v4847, %v5300
    %v5326 = vadd.f32 %v4848, %v5303
    %v5327 = vadd.f32 %v4849, %v5308
    %v5328 = vld [vmem:[%s2] sm:$0x1]
    %v5329 = vld [vmem:[%s3] sm:$0x1]
    %5331 = vset.pattern.permute.xlu0 0
    %5332 = vperm.xlu0 %5331, %v59
    %v5333 = vpop.permute.xlu0 %5332
    %5336 = vset.pattern.permute.xlu0 0
    %5337 = vperm.xlu0 %5336, %v60
    %v5338 = vpop.permute.xlu0 %5337
    %5341 = vset.pattern.permute.xlu0 0
    %5342 = vperm.xlu0 %5341, %v61
    %v5343 = vpop.permute.xlu0 %5342
    %5346 = vset.pattern.permute.xlu0 0
    %5347 = vperm.xlu0 %5346, %v62
    %v5348 = vpop.permute.xlu0 %5347
    %5351 = vset.pattern.permute.xlu0 0
    %5352 = vperm.xlu0 %5351, %v63
    %v5353 = vpop.permute.xlu0 %5352
    %5356 = vset.pattern.permute.xlu0 0
    %5357 = vperm.xlu0 %5356, %v64
    %v5358 = vpop.permute.xlu0 %5357
    %5361 = vset.pattern.permute.xlu0 0
    %5362 = vperm.xlu0 %5361, %v65
    %v5363 = vpop.permute.xlu0 %5362
    %5366 = vset.pattern.permute.xlu0 0
    %5367 = vperm.xlu0 %5366, %v66
    %v5368 = vpop.permute.xlu0 %5367
    %5371 = vset.pattern.permute.xlu0 0
    %5372 = vperm.xlu0 %5371, %v67
    %v5373 = vpop.permute.xlu0 %5372
    %5376 = vset.pattern.permute.xlu0 0
    %5377 = vperm.xlu0 %5376, %v68
    %v5378 = vpop.permute.xlu0 %5377
    %5381 = vset.pattern.permute.xlu0 0
    %5382 = vperm.xlu0 %5381, %v69
    %v5383 = vpop.permute.xlu0 %5382
    %5386 = vset.pattern.permute.xlu0 0
    %5387 = vperm.xlu0 %5386, %v70
    %v5388 = vpop.permute.xlu0 %5387
    %5391 = vset.pattern.permute.xlu0 0
    %5392 = vperm.xlu0 %5391, %v71
    %v5393 = vpop.permute.xlu0 %5392
    %5396 = vset.pattern.permute.xlu0 0
    %5397 = vperm.xlu0 %5396, %v72
    %v5398 = vpop.permute.xlu0 %5397
    %5401 = vset.pattern.permute.xlu0 0
    %5402 = vperm.xlu0 %5401, %v73
    %v5403 = vpop.permute.xlu0 %5402
    %v5405 = vmul.f32 %v5313, %v5333
    %v5406 = vmul.f32 %v5314, %v5338
    %v5407 = vmul.f32 %v5315, %v5343
    %v5408 = vmul.f32 %v5316, %v5348
    %v5409 = vmul.f32 %v5317, %v5353
    %v5410 = vmul.f32 %v5318, %v5358
    %v5411 = vmul.f32 %v5319, %v5363
    %v5412 = vmul.f32 %v5320, %v5368
    %v5413 = vmul.f32 %v5321, %v5373
    %v5414 = vmul.f32 %v5322, %v5378
    %v5415 = vmul.f32 %v5323, %v5383
    %v5416 = vmul.f32 %v5324, %v5388
    %v5417 = vmul.f32 %v5325, %v5393
    %v5418 = vmul.f32 %v5326, %v5398
    %v5419 = vmul.f32 %v5327, %v5403
    %v5420 = vadd.f32 %v5405, %v5406
    %v5421 = vadd.f32 %v5420, %v5407
    %v5422 = vadd.f32 %v5421, %v5408
    %v5423 = vadd.f32 %v5422, %v5409
    %v5424 = vadd.f32 %v5423, %v5410
    %v5425 = vadd.f32 %v5424, %v5411
    %v5426 = vadd.f32 %v5425, %v5412
    %v5427 = vadd.f32 %v5426, %v5413
    %v5428 = vadd.f32 %v5427, %v5414
    %v5429 = vadd.f32 %v5428, %v5415
    %v5430 = vadd.f32 %v5429, %v5416
    %v5431 = vadd.f32 %v5430, %v5417
    %v5432 = vadd.f32 %v5431, %v5418
    %v5433 = vadd.f32 %v5432, %v5419
    %v5434 = vrot.slane %v5433, 4
    %v5435 = vadd.f32 %v5433, %v5434
    %v5436 = vrot.slane %v5435, 2
    %v5437 = vadd.f32 %v5435, %v5436
    %v5438 = vrot.slane %v5437, 1
    %v5439 = vadd.f32 %v5437, %v5438
    %5440 = vrot.lane.b32.xlu0 %v5439, 64
    %v5441 = vpop.permute.xlu0 %5440
    %v5442 = vadd.f32 %v5439, %v5441
    %5443 = vrot.lane.b32.xlu0 %v5442, 32
    %v5444 = vpop.permute.xlu0 %5443
    %v5445 = vadd.f32 %v5442, %v5444
    %5446 = vrot.lane.b32.xlu0 %v5445, 16
    %v5447 = vpop.permute.xlu0 %5446
    %v5448 = vadd.f32 %v5445, %v5447
    %5449 = vrot.lane.b32.xlu0 %v5448, 8
    %v5450 = vpop.permute.xlu0 %5449
    %v5451 = vadd.f32 %v5448, %v5450
    %v5452 = vmul.f32 %v5451, 0.0009765625
    %v5453 = vlaneseq
    %v5454 = vshrl.u32 %v5453, 7
    %v5455 = vsub.s32 0, %v5454
    %v5456 = vrot.slane %v5452, %v5455
    %v5457 = vsub.f32 %v5313, %v5456
    %v5458 = vsub.f32 %v5314, %v5456
    %v5459 = vsub.f32 %v5315, %v5456
    %v5460 = vsub.f32 %v5316, %v5456
    %v5461 = vsub.f32 %v5317, %v5456
    %v5462 = vsub.f32 %v5318, %v5456
    %v5463 = vsub.f32 %v5319, %v5456
    %v5464 = vsub.f32 %v5320, %v5456
    %v5465 = vsub.f32 %v5321, %v5456
    %v5466 = vsub.f32 %v5322, %v5456
    %v5467 = vsub.f32 %v5323, %v5456
    %v5468 = vsub.f32 %v5324, %v5456
    %v5469 = vsub.f32 %v5325, %v5456
    %v5470 = vsub.f32 %v5326, %v5456
    %v5471 = vsub.f32 %v5327, %v5456
    %v5472 = vmul.f32 %v5457, %v5457
    %v5473 = vmul.f32 %v5458, %v5458
    %v5474 = vmul.f32 %v5459, %v5459
    %v5475 = vmul.f32 %v5460, %v5460
    %v5476 = vmul.f32 %v5461, %v5461
    %v5477 = vmul.f32 %v5462, %v5462
    %v5478 = vmul.f32 %v5463, %v5463
    %v5479 = vmul.f32 %v5464, %v5464
    %v5480 = vmul.f32 %v5465, %v5465
    %v5481 = vmul.f32 %v5466, %v5466
    %v5482 = vmul.f32 %v5467, %v5467
    %v5483 = vmul.f32 %v5468, %v5468
    %v5484 = vmul.f32 %v5469, %v5469
    %v5485 = vmul.f32 %v5470, %v5470
    %v5486 = vmul.f32 %v5471, %v5471
    %v5487 = vmul.f32 %v5472, %v5333
    %v5488 = vmul.f32 %v5473, %v5338
    %v5489 = vmul.f32 %v5474, %v5343
    %v5490 = vmul.f32 %v5475, %v5348
    %v5491 = vmul.f32 %v5476, %v5353
    %v5492 = vmul.f32 %v5477, %v5358
    %v5493 = vmul.f32 %v5478, %v5363
    %v5494 = vmul.f32 %v5479, %v5368
    %v5495 = vmul.f32 %v5480, %v5373
    %v5496 = vmul.f32 %v5481, %v5378
    %v5497 = vmul.f32 %v5482, %v5383
    %v5498 = vmul.f32 %v5483, %v5388
    %v5499 = vmul.f32 %v5484, %v5393
    %v5500 = vmul.f32 %v5485, %v5398
    %v5501 = vmul.f32 %v5486, %v5403
    %v5502 = vadd.f32 %v5487, %v5488
    %v5503 = vadd.f32 %v5502, %v5489
    %v5504 = vadd.f32 %v5503, %v5490
    %v5505 = vadd.f32 %v5504, %v5491
    %v5506 = vadd.f32 %v5505, %v5492
    %v5507 = vadd.f32 %v5506, %v5493
    %v5508 = vadd.f32 %v5507, %v5494
    %v5509 = vadd.f32 %v5508, %v5495
    %v5510 = vadd.f32 %v5509, %v5496
    %v5511 = vadd.f32 %v5510, %v5497
    %v5512 = vadd.f32 %v5511, %v5498
    %v5513 = vadd.f32 %v5512, %v5499
    %v5514 = vadd.f32 %v5513, %v5500
    %v5515 = vadd.f32 %v5514, %v5501
    %v5516 = vrot.slane %v5515, 4
    %v5517 = vadd.f32 %v5515, %v5516
    %v5518 = vrot.slane %v5517, 2
    %v5519 = vadd.f32 %v5517, %v5518
    %v5520 = vrot.slane %v5519, 1
    %v5521 = vadd.f32 %v5519, %v5520
    %5522 = vrot.lane.b32.xlu0 %v5521, 64
    %v5523 = vpop.permute.xlu0 %5522
    %v5524 = vadd.f32 %v5521, %v5523
    %5525 = vrot.lane.b32.xlu0 %v5524, 32
    %v5526 = vpop.permute.xlu0 %5525
    %v5527 = vadd.f32 %v5524, %v5526
    %5528 = vrot.lane.b32.xlu0 %v5527, 16
    %v5529 = vpop.permute.xlu0 %5528
    %v5530 = vadd.f32 %v5527, %v5529
    %5531 = vrot.lane.b32.xlu0 %v5530, 8
    %v5532 = vpop.permute.xlu0 %5531
    %v5533 = vadd.f32 %v5530, %v5532
    %v5534 = vmul.f32 %v5533, 0.0009765625
    %v5535 = vadd.f32 %v5534, 1e-05
    %v5536 = vrsqrt.pop %v5535
    %v5537 = vmul.f32 %v5328, %v5536
    %v5539 = vlaneseq
    %v5540 = vshrl.u32 %v5539, 7
    %v5541 = vsub.s32 0, %v5540
    %v5542 = vrot.slane %v5537, %v5541
    %v5544 = vmul.f32 %v5457, %v5542
    %v5545 = vmul.f32 %v5458, %v5542
    %v5546 = vmul.f32 %v5459, %v5542
    %v5547 = vmul.f32 %v5460, %v5542
    %v5548 = vmul.f32 %v5461, %v5542
    %v5549 = vmul.f32 %v5464, %v5542
    %v5550 = vmul.f32 %v5465, %v5542
    %v5551 = vmul.f32 %v5466, %v5542
    %v5552 = vmul.f32 %v5467, %v5542
    %v5553 = vmul.f32 %v5468, %v5542
    %v5554 = vmul.f32 %v5469, %v5542
    %v5556 = vlaneseq
    %v5557 = vshrl.u32 %v5556, 7
    %v5558 = vsub.s32 0, %v5557
    %v5559 = vrot.slane %v5329, %v5558
    %v5561 = vadd.f32 %v5544, %v5559
    %v5562 = vadd.f32 %v5545, %v5559
    %v5563 = vadd.f32 %v5546, %v5559
    %v5564 = vadd.f32 %v5547, %v5559
    %v5565 = vadd.f32 %v5548, %v5559
    %v5566 = vadd.f32 %v5549, %v5559
    %v5567 = vadd.f32 %v5550, %v5559
    %v5568 = vadd.f32 %v5551, %v5559
    %v5569 = vadd.f32 %v5552, %v5559
    %v5570 = vadd.f32 %v5553, %v5559
    %v5571 = vadd.f32 %v5554, %v5559
    %v5572 = vmax.f32 %v5561, 0.0
    %v5573 = vmax.f32 %v5562, 0.0
    %v5574 = vmax.f32 %v5563, 0.0
    %v5575 = vmax.f32 %v5564, 0.0
    %v5576 = vmax.f32 %v5565, 0.0
    %v5577 = vmax.f32 %v5566, 0.0
    %v5578 = vmax.f32 %v5567, 0.0
    %v5579 = vmax.f32 %v5568, 0.0
    %v5580 = vmax.f32 %v5569, 0.0
    %v5581 = vmax.f32 %v5570, 0.0
    %v5582 = vmax.f32 %v5571, 0.0
    %v5583 = vld [vmem:[#allocation3] sm:$0x3f]
    %v5584 = vsel %vm76, 0, %v5583
    %5585 = vst [vmem:[#allocation3] sm:$0x3f] %v5584
    %v5586 = vpack.c.bf16 %v5572, %v5572
    %v5588 = vshrl.u32 %v5586, 16
    %v5590 = vrot.slane %v5588, 2
    %v5591 = vshll.u32 %v5586, 16
    %v5593 = vrot.slane %v5591, 3
    %v5594 = vor.u32 %v5590, %v5593
    %v5596 = vld [vmem:[#allocation3] sm:$0xe0]
    %v5597 = vsel %vm125, %v5594, %v5596
    %5598 = vst [vmem:[#allocation3] sm:$0xe0] %v5597
    %v5599 = vld [vmem:[#allocation3 + $0x8] sm:$0x3]
    %v5600 = vsel %vm137, %v5594, %v5599
    %5601 = vst [vmem:[#allocation3 + $0x8] sm:$0x3] %v5600
    %v5602 = vld [vmem:[#allocation3 + $0x8] sm:$0x6]
    %v5603 = vsel %vm149, 0, %v5602
    %5604 = vst [vmem:[#allocation3 + $0x8] sm:$0x6] %v5603
    %v5605 = vpack.c.bf16 %v5574, %v5573
    %v5607 = vshrl.u32 %v5605, 16
    %v5609 = vrot.slane %v5607, 6
    %v5610 = vshll.u32 %v5605, 16
    %v5612 = vrot.slane %v5610, 7
    %v5613 = vor.u32 %v5609, %v5612
    %v5615 = vld [vmem:[#allocation3 + $0x8] sm:$0x7c]
    %v5616 = vsel %vm198, %v5613, %v5615
    %5617 = vst [vmem:[#allocation3 + $0x8] sm:$0x7c] %v5616
    %v5618 = vld [vmem:[#allocation3 + $0x8] sm:$0xc0]
    %v5619 = vsel %vm210, 0, %v5618
    %5620 = vst [vmem:[#allocation3 + $0x8] sm:$0xc0] %v5619
    %v5621 = vpack.c.bf16 %v5575, %v5574
    %v5623 = vshll.u32 %v5621, 16
    %v5625 = vrot.slane %v5623, 3
    %v5626 = vshrl.u32 %v5621, 16
    %v5628 = vrot.slane %v5626, 2
    %v5629 = vor.u32 %v5628, %v5625
    %v5632 = vld [vmem:[#allocation3 + $0x8] sm:$0x80]
    %v5633 = vsel %vm259, %v5625, %v5632
    %5634 = vst [vmem:[#allocation3 + $0x8] sm:$0x80] %v5633
    %v5635 = vld [vmem:[#allocation3 + $0x10] sm:$0xf]
    %v5636 = vsel %vm271, %v5629, %v5635
    %5637 = vst [vmem:[#allocation3 + $0x10] sm:$0xf] %v5636
    %v5638 = vld [vmem:[#allocation3 + $0x10] sm:$0x18]
    %v5639 = vsel %vm283, 0, %v5638
    %5640 = vst [vmem:[#allocation3 + $0x10] sm:$0x18] %v5639
    %v5641 = vpack.c.bf16 %v5576, %v5575
    %v5643 = vshrl.u32 %v5641, 16
    %v5645 = vrot.slane %v5643, 6
    %v5646 = vshll.u32 %v5641, 16
    %v5648 = vrot.slane %v5646, 7
    %v5649 = vor.u32 %v5645, %v5648
    %v5652 = vld [vmem:[#allocation3 + $0x10] sm:$0xf0]
    %v5653 = vsel %vm335, %v5649, %v5652
    %5654 = vst [vmem:[#allocation3 + $0x10] sm:$0xf0] %v5653
    %v5655 = vld [vmem:[#allocation3 + $0x18] sm:$0x1]
    %v5656 = vsel %vm347, %v5645, %v5655
    %5657 = vst [vmem:[#allocation3 + $0x18] sm:$0x1] %v5656
    %v5658 = vld [vmem:[#allocation3 + $0x18] sm:$0xff]
    %v5659 = vsel %vm359, 0, %v5658
    %5660 = vst [vmem:[#allocation3 + $0x18] sm:$0xff] %v5659
    %v5661 = vld [vmem:[#allocation3 + $0x20] sm:$0xf]
    %v5662 = vsel %vm271, 0, %v5661
    %5663 = vst [vmem:[#allocation3 + $0x20] sm:$0xf] %v5662
    %v5664 = vpack.c.bf16 %v5578, %v5577
    %v5666 = vshrl.u32 %v5664, 16
    %v5668 = vrot.slane %v5666, 6
    %v5669 = vshll.u32 %v5664, 16
    %v5671 = vrot.slane %v5669, 7
    %v5672 = vor.u32 %v5668, %v5671
    %v5674 = vld [vmem:[#allocation3 + $0x20] sm:$0xf8]
    %v5675 = vsel %vm417, %v5672, %v5674
    %5676 = vst [vmem:[#allocation3 + $0x20] sm:$0xf8] %v5675
    %v5677 = vld [vmem:[#allocation3 + $0x20] sm:$0x80]
    %v5678 = vsel %vm259, 0, %v5677
    %5679 = vst [vmem:[#allocation3 + $0x20] sm:$0x80] %v5678
    %v5680 = vld [vmem:[#allocation3 + $0x28] sm:$0x1]
    %v5681 = vsel %vm347, 0, %v5680
    %5682 = vst [vmem:[#allocation3 + $0x28] sm:$0x1] %v5681
    %v5683 = vpack.c.bf16 %v5579, %v5578
    %v5685 = vshrl.u32 %v5683, 16
    %v5687 = vrot.slane %v5685, 2
    %v5688 = vshll.u32 %v5683, 16
    %v5690 = vrot.slane %v5688, 3
    %v5691 = vor.u32 %v5687, %v5690
    %v5693 = vld [vmem:[#allocation3 + $0x28] sm:$0x1f]
    %v5694 = vsel %vm481, %v5691, %v5693
    %5695 = vst [vmem:[#allocation3 + $0x28] sm:$0x1f] %v5694
    %v5696 = vld [vmem:[#allocation3 + $0x28] sm:$0x30]
    %v5697 = vsel %vm493, 0, %v5696
    %5698 = vst [vmem:[#allocation3 + $0x28] sm:$0x30] %v5697
    %v5699 = vpack.c.bf16 %v5580, %v5580
    %v5701 = vshrl.u32 %v5699, 16
    %v5703 = vrot.slane %v5701, 2
    %v5704 = vshll.u32 %v5699, 16
    %v5706 = vrot.slane %v5704, 3
    %v5707 = vor.u32 %v5703, %v5706
    %v5709 = vld [vmem:[#allocation3 + $0x28] sm:$0xe0]
    %v5710 = vsel %vm125, %v5707, %v5709
    %5711 = vst [vmem:[#allocation3 + $0x28] sm:$0xe0] %v5710
    %v5712 = vld [vmem:[#allocation3 + $0x30] sm:$0x3]
    %v5713 = vsel %vm137, %v5707, %v5712
    %5714 = vst [vmem:[#allocation3 + $0x30] sm:$0x3] %v5713
    %v5715 = vld [vmem:[#allocation3 + $0x30] sm:$0x6]
    %v5716 = vsel %vm149, 0, %v5715
    %5717 = vst [vmem:[#allocation3 + $0x30] sm:$0x6] %v5716
    %v5718 = vpack.c.bf16 %v5582, %v5581
    %v5720 = vshrl.u32 %v5718, 16
    %v5722 = vrot.slane %v5720, 6
    %v5723 = vshll.u32 %v5718, 16
    %v5725 = vrot.slane %v5723, 7
    %v5726 = vor.u32 %v5722, %v5725
    %v5728 = vld [vmem:[#allocation3 + $0x30] sm:$0x7c]
    %v5729 = vsel %vm198, %v5726, %v5728
    %5730 = vst [vmem:[#allocation3 + $0x30] sm:$0x7c] %v5729
    %v5731 = vld [vmem:[#allocation3 + $0x30] sm:$0xc0]
    %v5732 = vsel %vm614, 0, %v5731
    %5733 = vst [vmem:[#allocation3 + $0x30] sm:$0xc0] %v5732
    %5734 = vst [vmem:[#allocation3 + $0x38] sm:$0xff] 0
    %5735 = vst [vmem:[#allocation3 + $0x40] sm:$0xff] 0
    %v5736 = vld [vmem:[#allocation3] sm:$0xff]
    %v5737 = vld [vmem:[#allocation3 + $0x8] sm:$0xff]
    %v5738 = vld [vmem:[#allocation3 + $0x10] sm:$0xff]
    %v5739 = vld [vmem:[#allocation3 + $0x18] sm:$0xff]
    %v5740 = vld [vmem:[#allocation3 + $0x20] sm:$0xff]
    %v5741 = vld [vmem:[#allocation3 + $0x28] sm:$0xff]
    %v5742 = vld [vmem:[#allocation3 + $0x30] sm:$0xff]
    %v5743 = vld [vmem:[#allocation3 + $0x38] sm:$0xf]
    %v5744 = vld [vmem:[#allocation7] sm:$0xf]
    %v5745 = vld [vmem:[#allocation7 + $0x4] sm:$0xf]
    %v5746 = vld [vmem:[#allocation7 + $0x8] sm:$0xf]
    %v5747 = vld [vmem:[#allocation7 + $0xc] sm:$0xf]
    %v5748 = vld [vmem:[#allocation7 + $0x10] sm:$0xf]
    %v5749 = vld [vmem:[#allocation7 + $0x14] sm:$0xf]
    %v5750 = vld [vmem:[#allocation7 + $0x18] sm:$0xf]
    %v5751 = vld [vmem:[#allocation7 + $0x1c] sm:$0xf]
    %v5752 = vld [vmem:[#allocation7 + $0x20] sm:$0xf]
    %v5753 = vld [vmem:[#allocation7 + $0x24] sm:$0xf]
    %v5754 = vld [vmem:[#allocation7 + $0x28] sm:$0xf]
    %v5755 = vld [vmem:[#allocation7 + $0x2c] sm:$0xf]
    %v5756 = vld [vmem:[#allocation7 + $0x30] sm:$0xf]
    %v5757 = vld [vmem:[#allocation7 + $0x34] sm:$0xf]
    %v5758 = vld [vmem:[#allocation7 + $0x38] sm:$0xf]
    %v5759 = vld [vmem:[#allocation7 + $0x3c] sm:$0xf]
    %v5760 = vld [vmem:[#allocation3 + $0x38] sm:$0x1f]
    %s5761 = scalar_lea.vmem [#allocation7], 64
    %v5762 = vld [vmem:[%s5761] sm:$0xf]
    %v5763 = vld [vmem:[%s5761 + $0x4] sm:$0xf]
    %v5764 = vld [vmem:[%s5761 + $0x8] sm:$0xf]
    %v5765 = vld [vmem:[%s5761 + $0xc] sm:$0xf]
    %v5766 = vld [vmem:[%s5761 + $0x10] sm:$0xf]
    %v5767 = vld [vmem:[%s5761 + $0x14] sm:$0xf]
    %v5768 = vld [vmem:[%s5761 + $0x18] sm:$0xf]
    %v5769 = vld [vmem:[%s5761 + $0x1c] sm:$0xf]
    %v5770 = vld [vmem:[%s5761 + $0x20] sm:$0xf]
    %v5771 = vld [vmem:[%s5761 + $0x24] sm:$0xf]
    %v5772 = vld [vmem:[%s5761 + $0x28] sm:$0xf]
    %v5773 = vld [vmem:[%s5761 + $0x2c] sm:$0xf]
    %v5774 = vld [vmem:[%s5761 + $0x30] sm:$0xf]
    %v5775 = vld [vmem:[%s5761 + $0x34] sm:$0xf]
    %v5776 = vld [vmem:[%s5761 + $0x38] sm:$0xf]
    %v5777 = vld [vmem:[%s5761 + $0x3c] sm:$0xf]
    %v5779 = vshrl.u32 %v5736, 16
    %v5781 = vshll.u32 %v5736, 16
    %v5783 = vrot.slane %v5781, 1
    %v5784 = vor.u32 %v5779, %v5783
    %v5786 = vshll.u32 %v5737, 16
    %v5788 = vrot.slane %v5786, 1
    %v5789 = vsel %vm754, %v5784, %v5788
    %v5790 = vshrl.u32 %v5737, 16
    %v5792 = vor.u32 %v5790, %v5788
    %v5794 = vshll.u32 %v5738, 16
    %v5796 = vrot.slane %v5794, 1
    %v5797 = vsel %vm754, %v5792, %v5796
    %v5798 = vshrl.u32 %v5738, 16
    %v5800 = vor.u32 %v5798, %v5796
    %v5802 = vshll.u32 %v5739, 16
    %v5804 = vrot.slane %v5802, 1
    %v5805 = vsel %vm754, %v5800, %v5804
    %v5806 = vshrl.u32 %v5739, 16
    %v5808 = vor.u32 %v5806, %v5804
    %v5810 = vshll.u32 %v5740, 16
    %v5812 = vrot.slane %v5810, 1
    %v5813 = vsel %vm754, %v5808, %v5812
    %v5814 = vshrl.u32 %v5740, 16
    %v5816 = vor.u32 %v5814, %v5812
    %v5818 = vshll.u32 %v5741, 16
    %v5820 = vrot.slane %v5818, 1
    %v5821 = vsel %vm754, %v5816, %v5820
    %v5822 = vshrl.u32 %v5741, 16
    %v5824 = vor.u32 %v5822, %v5820
    %v5826 = vshll.u32 %v5742, 16
    %v5828 = vrot.slane %v5826, 1
    %v5829 = vsel %vm754, %v5824, %v5828
    %v5830 = vshrl.u32 %v5742, 16
    %v5832 = vor.u32 %v5830, %v5828
    %v5834 = vshll.u32 %v5760, 16
    %v5836 = vrot.slane %v5834, 1
    %v5837 = vsel %vm754, %v5832, %v5836
    %v5838 = vshrl.u32 %v5760, 16
    %v5840 = vor.u32 %v5838, %v5836
    %v5865 = vunpack.c.l.b16 %v5762
    %v5866 = vunpack.c.l.b16 %v5763
    %v5867 = vunpack.c.l.b16 %v5764
    %v5868 = vunpack.c.l.b16 %v5765
    %v5869 = vunpack.c.l.b16 %v5766
    %v5870 = vunpack.c.l.b16 %v5767
    %v5871 = vunpack.c.l.b16 %v5768
    %v5872 = vunpack.c.l.b16 %v5769
    %v5873 = vunpack.c.l.b16 %v5770
    %v5874 = vunpack.c.l.b16 %v5771
    %v5875 = vunpack.c.l.b16 %v5772
    %v5876 = vunpack.c.l.b16 %v5773
    %v5877 = vunpack.c.l.b16 %v5774
    %v5878 = vunpack.c.l.b16 %v5775
    %v5879 = vunpack.c.l.b16 %v5776
    %v5880 = vunpack.c.l.b16 %v5777
    %v5881 = vpack.c.b16 %v5866, %v5865
    %v5882 = vpack.c.b16 %v5868, %v5867
    %v5883 = vpack.c.b16 %v5870, %v5869
    %v5884 = vpack.c.b16 %v5872, %v5871
    %v5885 = vpack.c.b16 %v5874, %v5873
    %v5886 = vpack.c.b16 %v5876, %v5875
    %v5887 = vpack.c.b16 %v5878, %v5877
    %v5888 = vpack.c.b16 %v5880, %v5879
    %5897 = vmatprep.subr.bf16.mxu0 0
    %5898 = vmatpush1.bf16.msra.mxu0 %v5881
    %5899 = vmatprep.subr.bf16.mxu0 0
    %5900 = vmatpush1.bf16.msra.mxu0 %v5882
    %5901 = vmatprep.subr.bf16.mxu0 0
    %5902 = vmatpush1.bf16.msra.mxu0 %v5883
    %5903 = vmatprep.subr.bf16.mxu0 0
    %5904 = vmatpush1.bf16.msra.mxu0 %v5884
    %5905 = vmatprep.subr.bf16.mxu0 0
    %5906 = vmatpush1.bf16.msra.mxu0 %v5885
    %5907 = vmatprep.subr.bf16.mxu0 0
    %5908 = vmatpush1.bf16.msra.mxu0 %v5886
    %5909 = vmatprep.subr.bf16.mxu0 0
    %5910 = vmatpush1.bf16.msra.mxu0 %v5887
    %5911 = vmatprep.subr.bf16.mxu0 0
    %5912 = vmatpush1.bf16.msra.mxu0 %v5888
    %5913 = vmatprep.subr.bf16.mxu0 0
    %5914 = vmatpush1.bf16.msra.mxu0 0
    %5915 = vmatprep.subr.bf16.mxu0 0
    %5916 = vmatpush1.bf16.msra.mxu0 0
    %5917 = vmatprep.subr.bf16.mxu0 0
    %5918 = vmatpush1.bf16.msra.mxu0 0
    %5919 = vmatprep.subr.bf16.mxu0 0
    %5920 = vmatpush1.bf16.msra.mxu0 0
    %5921 = vmatprep.subr.bf16.mxu0 0
    %5922 = vmatpush1.bf16.msra.mxu0 0
    %5923 = vmatprep.subr.bf16.mxu0 0
    %5924 = vmatpush1.bf16.msra.mxu0 0
    %5925 = vmatprep.subr.bf16.mxu0 0
    %5926 = vmatpush1.bf16.msra.mxu0 0
    %5927 = vmatprep.subr.bf16.mxu0 0
    %5928 = vmatpush1.bf16.msra.mxu0 0
    %5929 = vmatprep.mubr.bf16.mxu0 0
    %5930 = vmatmul.mubr.bf16.gmra.mrb[0].mxu0 %v5789
    %v5931 = vpop.f32.mrb[0].mxu0
    %v5932 = vadd.f32 0.0, %v5931
    %v5933 = vpop.f32.mrb[0].mxu0
    %v5934 = vpop.f32.mrb[0].mxu0
    %v5935 = vadd.f32 0.0, %v5934
    %v5936 = vpop.f32.mrb[0].mxu0
    %5937 = vmatprep.mubr.bf16.mxu0 0
    %5938 = vmatmul.mubr.bf16.gmra.mrb[0].mxu0 %v5797
    %v5939 = vpop.f32.mrb[0].mxu0
    %v5940 = vadd.f32 0.0, %v5939
    %v5941 = vpop.f32.mrb[0].mxu0
    %v5942 = vpop.f32.mrb[0].mxu0
    %v5943 = vadd.f32 0.0, %v5942
    %v5944 = vpop.f32.mrb[0].mxu0
    %5945 = vmatprep.mubr.bf16.mxu0 0
    %5946 = vmatmul.mubr.bf16.gmra.mrb[0].mxu0 %v5805
    %v5947 = vpop.f32.mrb[0].mxu0
    %v5948 = vadd.f32 0.0, %v5947
    %v5949 = vpop.f32.mrb[0].mxu0
    %v5950 = vpop.f32.mrb[0].mxu0
    %v5951 = vadd.f32 0.0, %v5950
    %v5952 = vpop.f32.mrb[0].mxu0
    %5953 = vmatprep.mubr.bf16.mxu0 0
    %5954 = vmatmul.mubr.bf16.gmra.mrb[0].mxu0 %v5813
    %v5955 = vpop.f32.mrb[0].mxu0
    %v5956 = vadd.f32 0.0, %v5955
    %v5957 = vpop.f32.mrb[0].mxu0
    %v5958 = vpop.f32.mrb[0].mxu0
    %v5959 = vadd.f32 0.0, %v5958
    %v5960 = vpop.f32.mrb[0].mxu0
    %5961 = vmatprep.mubr.bf16.mxu0 0
    %5962 = vmatmul.mubr.bf16.gmra.mrb[0].mxu0 %v5821
    %v5963 = vpop.f32.mrb[0].mxu0
    %v5964 = vadd.f32 0.0, %v5963
    %v5965 = vpop.f32.mrb[0].mxu0
    %v5966 = vpop.f32.mrb[0].mxu0
    %v5967 = vadd.f32 0.0, %v5966
    %v5968 = vpop.f32.mrb[0].mxu0
    %5969 = vmatprep.mubr.bf16.mxu0 0
    %5970 = vmatmul.mubr.bf16.gmra.mrb[0].mxu0 %v5829
    %v5971 = vpop.f32.mrb[0].mxu0
    %v5972 = vadd.f32 0.0, %v5971
    %v5973 = vpop.f32.mrb[0].mxu0
    %v5974 = vpop.f32.mrb[0].mxu0
    %v5975 = vadd.f32 0.0, %v5974
    %v5976 = vpop.f32.mrb[0].mxu0
    %5977 = vmatprep.mubr.bf16.mxu0 0
    %5978 = vmatmul.mubr.bf16.gmra.mrb[0].mxu0 %v5837
    %v5979 = vpop.f32.mrb[0].mxu0
    %v5980 = vadd.f32 0.0, %v5979
    %v5981 = vpop.f32.mrb[0].mxu0
    %v5982 = vpop.f32.mrb[0].mxu0
    %v5983 = vadd.f32 0.0, %v5982
    %v5984 = vpop.f32.mrb[0].mxu0
    %5985 = vmatprep.mubr.bf16.mxu0 0
    %5986 = vmatmul.mubr.bf16.gmra.mrb[0].mxu0 %v5840
    %v5987 = vpop.f32.mrb[0].mxu0
    %v5988 = vadd.f32 0.0, %v5987
    %v5989 = vpop.f32.mrb[0].mxu0
    %v5990 = vpop.f32.mrb[0].mxu0
    %v5991 = vpop.f32.mrb[0].mxu0
    %5992 = vdwg.mxu0
    %v6009 = vunpack.c.l.b16 %v5744
    %v6010 = vunpack.c.l.b16 %v5745
    %v6011 = vunpack.c.l.b16 %v5746
    %v6012 = vunpack.c.l.b16 %v5747
    %v6013 = vunpack.c.l.b16 %v5748
    %v6014 = vunpack.c.l.b16 %v5749
    %v6015 = vunpack.c.l.b16 %v5750
    %v6016 = vunpack.c.l.b16 %v5751
    %v6017 = vunpack.c.l.b16 %v5752
    %v6018 = vunpack.c.l.b16 %v5753
    %v6019 = vunpack.c.l.b16 %v5754
    %v6020 = vunpack.c.l.b16 %v5755
    %v6021 = vunpack.c.l.b16 %v5756
    %v6022 = vunpack.c.l.b16 %v5757
    %v6023 = vunpack.c.l.b16 %v5758
    %v6024 = vunpack.c.l.b16 %v5759
    %v6025 = vpack.c.b16 %v6010, %v6009
    %v6026 = vpack.c.b16 %v6012, %v6011
    %v6027 = vpack.c.b16 %v6014, %v6013
    %v6028 = vpack.c.b16 %v6016, %v6015
    %v6029 = vpack.c.b16 %v6018, %v6017
    %v6030 = vpack.c.b16 %v6020, %v6019
    %v6031 = vpack.c.b16 %v6022, %v6021
    %v6032 = vpack.c.b16 %v6024, %v6023
    %6041 = vmatprep.subr.bf16.mxu0 0
    %6042 = vmatpush1.bf16.msra.mxu0 %v6025
    %6043 = vmatprep.subr.bf16.mxu0 0
    %6044 = vmatpush1.bf16.msra.mxu0 %v6026
    %6045 = vmatprep.subr.bf16.mxu0 0
    %6046 = vmatpush1.bf16.msra.mxu0 %v6027
    %6047 = vmatprep.subr.bf16.mxu0 0
    %6048 = vmatpush1.bf16.msra.mxu0 %v6028
    %6049 = vmatprep.subr.bf16.mxu0 0
    %6050 = vmatpush1.bf16.msra.mxu0 %v6029
    %6051 = vmatprep.subr.bf16.mxu0 0
    %6052 = vmatpush1.bf16.msra.mxu0 %v6030
    %6053 = vmatprep.subr.bf16.mxu0 0
    %6054 = vmatpush1.bf16.msra.mxu0 %v6031
    %6055 = vmatprep.subr.bf16.mxu0 0
    %6056 = vmatpush1.bf16.msra.mxu0 %v6032
    %6057 = vmatprep.subr.bf16.mxu0 0
    %6058 = vmatpush1.bf16.msra.mxu0 0
    %6059 = vmatprep.subr.bf16.mxu0 0
    %6060 = vmatpush1.bf16.msra.mxu0 0
    %6061 = vmatprep.subr.bf16.mxu0 0
    %6062 = vmatpush1.bf16.msra.mxu0 0
    %6063 = vmatprep.subr.bf16.mxu0 0
    %6064 = vmatpush1.bf16.msra.mxu0 0
    %6065 = vmatprep.subr.bf16.mxu0 0
    %6066 = vmatpush1.bf16.msra.mxu0 0
    %6067 = vmatprep.subr.bf16.mxu0 0
    %6068 = vmatpush1.bf16.msra.mxu0 0
    %6069 = vmatprep.subr.bf16.mxu0 0
    %6070 = vmatpush1.bf16.msra.mxu0 0
    %6071 = vmatprep.subr.bf16.mxu0 0
    %6072 = vmatpush1.bf16.msra.mxu0 0
    %6073 = vmatprep.mubr.bf16.mxu0 0
    %6074 = vmatmul.mubr.bf16.gmra.mrb[0].mxu0 %v5736
    %v6075 = vpop.f32.mrb[0].mxu0
    %v6076 = vadd.f32 %v5932, %v6075
    %v6077 = vpop.f32.mrb[0].mxu0
    %v6078 = vpop.f32.mrb[0].mxu0
    %v6079 = vadd.f32 %v5935, %v6078
    %v6080 = vpop.f32.mrb[0].mxu0
    %6081 = vmatprep.mubr.bf16.mxu0 0
    %6082 = vmatmul.mubr.bf16.gmra.mrb[0].mxu0 %v5737
    %v6083 = vpop.f32.mrb[0].mxu0
    %v6084 = vadd.f32 %v5940, %v6083
    %v6085 = vpop.f32.mrb[0].mxu0
    %v6086 = vpop.f32.mrb[0].mxu0
    %v6087 = vadd.f32 %v5943, %v6086
    %v6088 = vpop.f32.mrb[0].mxu0
    %6089 = vmatprep.mubr.bf16.mxu0 0
    %6090 = vmatmul.mubr.bf16.gmra.mrb[0].mxu0 %v5738
    %v6091 = vpop.f32.mrb[0].mxu0
    %v6092 = vadd.f32 %v5948, %v6091
    %v6093 = vpop.f32.mrb[0].mxu0
    %v6094 = vpop.f32.mrb[0].mxu0
    %v6095 = vadd.f32 %v5951, %v6094
    %v6096 = vpop.f32.mrb[0].mxu0
    %6097 = vmatprep.mubr.bf16.mxu0 0
    %6098 = vmatmul.mubr.bf16.gmra.mrb[0].mxu0 %v5739
    %v6099 = vpop.f32.mrb[0].mxu0
    %v6100 = vadd.f32 %v5956, %v6099
    %v6101 = vpop.f32.mrb[0].mxu0
    %v6102 = vpop.f32.mrb[0].mxu0
    %v6103 = vadd.f32 %v5959, %v6102
    %v6104 = vpop.f32.mrb[0].mxu0
    %6105 = vmatprep.mubr.bf16.mxu0 0
    %6106 = vmatmul.mubr.bf16.gmra.mrb[0].mxu0 %v5740
    %v6107 = vpop.f32.mrb[0].mxu0
    %v6108 = vadd.f32 %v5964, %v6107
    %v6109 = vpop.f32.mrb[0].mxu0
    %v6110 = vpop.f32.mrb[0].mxu0
    %v6111 = vadd.f32 %v5967, %v6110
    %v6112 = vpop.f32.mrb[0].mxu0
    %6113 = vmatprep.mubr.bf16.mxu0 0
    %6114 = vmatmul.mubr.bf16.gmra.mrb[0].mxu0 %v5741
    %v6115 = vpop.f32.mrb[0].mxu0
    %v6116 = vadd.f32 %v5972, %v6115
    %v6117 = vpop.f32.mrb[0].mxu0
    %v6118 = vpop.f32.mrb[0].mxu0
    %v6119 = vadd.f32 %v5975, %v6118
    %v6120 = vpop.f32.mrb[0].mxu0
    %6121 = vmatprep.mubr.bf16.mxu0 0
    %6122 = vmatmul.mubr.bf16.gmra.mrb[0].mxu0 %v5742
    %v6123 = vpop.f32.mrb[0].mxu0
    %v6124 = vadd.f32 %v5980, %v6123
    %v6125 = vpop.f32.mrb[0].mxu0
    %v6126 = vpop.f32.mrb[0].mxu0
    %v6127 = vadd.f32 %v5983, %v6126
    %v6128 = vpop.f32.mrb[0].mxu0
    %6129 = vmatprep.mubr.bf16.mxu0 0
    %6130 = vmatmul.mubr.bf16.gmra.mrb[0].mxu0 %v5743
    %v6131 = vpop.f32.mrb[0].mxu0
    %v6132 = vadd.f32 %v5988, %v6131
    %v6133 = vpop.f32.mrb[0].mxu0
    %v6134 = vpop.f32.mrb[0].mxu0
    %v6135 = vpop.f32.mrb[0].mxu0
    %6136 = vdwg.mxu0
    %v6137 = vld [vmem:[#allocation3] sm:$0xfe]
    %s6138 = scalar_lea.vmem [#allocation7], 128
    %v6139 = vld [vmem:[%s6138] sm:$0xf]
    %v6140 = vld [vmem:[%s6138 + $0x4] sm:$0xf]
    %v6141 = vld [vmem:[%s6138 + $0x8] sm:$0xf]
    %v6142 = vld [vmem:[%s6138 + $0xc] sm:$0xf]
    %v6143 = vld [vmem:[%s6138 + $0x10] sm:$0xf]
    %v6144 = vld [vmem:[%s6138 + $0x14] sm:$0xf]
    %v6145 = vld [vmem:[%s6138 + $0x18] sm:$0xf]
    %v6146 = vld [vmem:[%s6138 + $0x1c] sm:$0xf]
    %v6147 = vld [vmem:[%s6138 + $0x20] sm:$0xf]
    %v6148 = vld [vmem:[%s6138 + $0x24] sm:$0xf]
    %v6149 = vld [vmem:[%s6138 + $0x28] sm:$0xf]
    %v6150 = vld [vmem:[%s6138 + $0x2c] sm:$0xf]
    %v6151 = vld [vmem:[%s6138 + $0x30] sm:$0xf]
    %v6152 = vld [vmem:[%s6138 + $0x34] sm:$0xf]
    %v6153 = vld [vmem:[%s6138 + $0x38] sm:$0xf]
    %v6154 = vld [vmem:[%s6138 + $0x3c] sm:$0xf]
    %v6163 = vrot.slane %v6137, 1
    %v6164 = vrot.slane %v5737, 1
    %v6165 = vsel %vm1716, %v6163, %v6164
    %v6166 = vrot.slane %v5738, 1
    %v6167 = vsel %vm1716, %v6164, %v6166
    %v6168 = vrot.slane %v5739, 1
    %v6169 = vsel %vm1716, %v6166, %v6168
    %v6170 = vrot.slane %v5740, 1
    %v6171 = vsel %vm1716, %v6168, %v6170
    %v6172 = vrot.slane %v5741, 1
    %v6173 = vsel %vm1716, %v6170, %v6172
    %v6174 = vrot.slane %v5742, 1
    %v6175 = vsel %vm1716, %v6172, %v6174
    %v6176 = vrot.slane %v5760, 1
    %v6177 = vsel %vm1716, %v6174, %v6176
    %v6202 = vunpack.c.l.b16 %v6139
    %v6203 = vunpack.c.l.b16 %v6140
    %v6204 = vunpack.c.l.b16 %v6141
    %v6205 = vunpack.c.l.b16 %v6142
    %v6206 = vunpack.c.l.b16 %v6143
    %v6207 = vunpack.c.l.b16 %v6144
    %v6208 = vunpack.c.l.b16 %v6145
    %v6209 = vunpack.c.l.b16 %v6146
    %v6210 = vunpack.c.l.b16 %v6147
    %v6211 = vunpack.c.l.b16 %v6148
    %v6212 = vunpack.c.l.b16 %v6149
    %v6213 = vunpack.c.l.b16 %v6150
    %v6214 = vunpack.c.l.b16 %v6151
    %v6215 = vunpack.c.l.b16 %v6152
    %v6216 = vunpack.c.l.b16 %v6153
    %v6217 = vunpack.c.l.b16 %v6154
    %v6218 = vpack.c.b16 %v6203, %v6202
    %v6219 = vpack.c.b16 %v6205, %v6204
    %v6220 = vpack.c.b16 %v6207, %v6206
    %v6221 = vpack.c.b16 %v6209, %v6208
    %v6222 = vpack.c.b16 %v6211, %v6210
    %v6223 = vpack.c.b16 %v6213, %v6212
    %v6224 = vpack.c.b16 %v6215, %v6214
    %v6225 = vpack.c.b16 %v6217, %v6216
    %6234 = vmatprep.subr.bf16.mxu0 0
    %6235 = vmatpush1.bf16.msra.mxu0 %v6218
    %6236 = vmatprep.subr.bf16.mxu0 0
    %6237 = vmatpush1.bf16.msra.mxu0 %v6219
    %6238 = vmatprep.subr.bf16.mxu0 0
    %6239 = vmatpush1.bf16.msra.mxu0 %v6220
    %6240 = vmatprep.subr.bf16.mxu0 0
    %6241 = vmatpush1.bf16.msra.mxu0 %v6221
    %6242 = vmatprep.subr.bf16.mxu0 0
    %6243 = vmatpush1.bf16.msra.mxu0 %v6222
    %6244 = vmatprep.subr.bf16.mxu0 0
    %6245 = vmatpush1.bf16.msra.mxu0 %v6223
    %6246 = vmatprep.subr.bf16.mxu0 0
    %6247 = vmatpush1.bf16.msra.mxu0 %v6224
    %6248 = vmatprep.subr.bf16.mxu0 0
    %6249 = vmatpush1.bf16.msra.mxu0 %v6225
    %6250 = vmatprep.subr.bf16.mxu0 0
    %6251 = vmatpush1.bf16.msra.mxu0 0
    %6252 = vmatprep.subr.bf16.mxu0 0
    %6253 = vmatpush1.bf16.msra.mxu0 0
    %6254 = vmatprep.subr.bf16.mxu0 0
    %6255 = vmatpush1.bf16.msra.mxu0 0
    %6256 = vmatprep.subr.bf16.mxu0 0
    %6257 = vmatpush1.bf16.msra.mxu0 0
    %6258 = vmatprep.subr.bf16.mxu0 0
    %6259 = vmatpush1.bf16.msra.mxu0 0
    %6260 = vmatprep.subr.bf16.mxu0 0
    %6261 = vmatpush1.bf16.msra.mxu0 0
    %6262 = vmatprep.subr.bf16.mxu0 0
    %6263 = vmatpush1.bf16.msra.mxu0 0
    %6264 = vmatprep.subr.bf16.mxu0 0
    %6265 = vmatpush1.bf16.msra.mxu0 0
    %6266 = vmatprep.mubr.bf16.mxu0 0
    %6267 = vmatmul.mubr.bf16.gmra.mrb[0].mxu0 %v6165
    %v6268 = vpop.f32.mrb[0].mxu0
    %v6269 = vadd.f32 0.0, %v6268
    %v6270 = vpop.f32.mrb[0].mxu0
    %v6271 = vpop.f32.mrb[0].mxu0
    %v6272 = vadd.f32 0.0, %v6271
    %v6273 = vpop.f32.mrb[0].mxu0
    %6274 = vmatprep.mubr.bf16.mxu0 0
    %6275 = vmatmul.mubr.bf16.gmra.mrb[0].mxu0 %v6167
    %v6276 = vpop.f32.mrb[0].mxu0
    %v6277 = vadd.f32 0.0, %v6276
    %v6278 = vpop.f32.mrb[0].mxu0
    %v6279 = vpop.f32.mrb[0].mxu0
    %v6280 = vadd.f32 0.0, %v6279
    %v6281 = vpop.f32.mrb[0].mxu0
    %6282 = vmatprep.mubr.bf16.mxu0 0
    %6283 = vmatmul.mubr.bf16.gmra.mrb[0].mxu0 %v6169
    %v6284 = vpop.f32.mrb[0].mxu0
    %v6285 = vadd.f32 0.0, %v6284
    %v6286 = vpop.f32.mrb[0].mxu0
    %v6287 = vpop.f32.mrb[0].mxu0
    %v6288 = vadd.f32 0.0, %v6287
    %v6289 = vpop.f32.mrb[0].mxu0
    %6290 = vmatprep.mubr.bf16.mxu0 0
    %6291 = vmatmul.mubr.bf16.gmra.mrb[0].mxu0 %v6171
    %v6292 = vpop.f32.mrb[0].mxu0
    %v6293 = vadd.f32 0.0, %v6292
    %v6294 = vpop.f32.mrb[0].mxu0
    %v6295 = vpop.f32.mrb[0].mxu0
    %v6296 = vadd.f32 0.0, %v6295
    %v6297 = vpop.f32.mrb[0].mxu0
    %6298 = vmatprep.mubr.bf16.mxu0 0
    %6299 = vmatmul.mubr.bf16.gmra.mrb[0].mxu0 %v6173
    %v6300 = vpop.f32.mrb[0].mxu0
    %v6301 = vadd.f32 0.0, %v6300
    %v6302 = vpop.f32.mrb[0].mxu0
    %v6303 = vpop.f32.mrb[0].mxu0
    %v6304 = vadd.f32 0.0, %v6303
    %v6305 = vpop.f32.mrb[0].mxu0
    %6306 = vmatprep.mubr.bf16.mxu0 0
    %6307 = vmatmul.mubr.bf16.gmra.mrb[0].mxu0 %v6175
    %v6308 = vpop.f32.mrb[0].mxu0
    %v6309 = vadd.f32 0.0, %v6308
    %v6310 = vpop.f32.mrb[0].mxu0
    %v6311 = vpop.f32.mrb[0].mxu0
    %v6312 = vadd.f32 0.0, %v6311
    %v6313 = vpop.f32.mrb[0].mxu0
    %6314 = vmatprep.mubr.bf16.mxu0 0
    %6315 = vmatmul.mubr.bf16.gmra.mrb[0].mxu0 %v6177
    %v6316 = vpop.f32.mrb[0].mxu0
    %v6317 = vadd.f32 0.0, %v6316
    %v6318 = vpop.f32.mrb[0].mxu0
    %v6319 = vpop.f32.mrb[0].mxu0
    %v6320 = vadd.f32 0.0, %v6319
    %v6321 = vpop.f32.mrb[0].mxu0
    %6322 = vmatprep.mubr.bf16.mxu0 0
    %6323 = vmatmul.mubr.bf16.gmra.mrb[0].mxu0 %v6176
    %v6324 = vpop.f32.mrb[0].mxu0
    %v6325 = vadd.f32 0.0, %v6324
    %v6326 = vpop.f32.mrb[0].mxu0
    %v6327 = vpop.f32.mrb[0].mxu0
    %v6328 = vpop.f32.mrb[0].mxu0
    %6329 = vdwg.mxu0
    %v6330 = vadd.f32 %v6076, %v6269
    %v6331 = vadd.f32 %v6079, %v6272
    %v6332 = vadd.f32 %v6084, %v6277
    %v6333 = vadd.f32 %v6087, %v6280
    %v6334 = vadd.f32 %v6092, %v6285
    %v6335 = vadd.f32 %v6095, %v6288
    %v6336 = vadd.f32 %v6100, %v6293
    %v6337 = vadd.f32 %v6103, %v6296
    %v6338 = vadd.f32 %v6108, %v6301
    %v6339 = vadd.f32 %v6111, %v6304
    %v6340 = vadd.f32 %v6116, %v6309
    %v6341 = vadd.f32 %v6119, %v6312
    %v6342 = vadd.f32 %v6124, %v6317
    %v6343 = vadd.f32 %v6127, %v6320
    %v6344 = vadd.f32 %v6132, %v6325
    %v6345 = vld [vmem:[#allocation3] sm:$0xe0]
    %v6346 = vld [vmem:[#allocation3 + $0x8] sm:$0xff]
    %v6347 = vld [vmem:[#allocation3 + $0x10] sm:$0xff]
    %v6348 = vld [vmem:[#allocation3 + $0x18] sm:$0xff]
    %v6349 = vld [vmem:[#allocation3 + $0x20] sm:$0xff]
    %v6350 = vld [vmem:[#allocation3 + $0x28] sm:$0xff]
    %v6351 = vld [vmem:[#allocation3 + $0x30] sm:$0xff]
    %v6352 = vld [vmem:[#allocation3 + $0x38] sm:$0xff]
    %v6353 = vld [vmem:[#allocation3 + $0x40] sm:$0x1]
    %s6354 = scalar_lea.vmem [#allocation7], 192
    %v6355 = vld [vmem:[%s6354] sm:$0xf]
    %v6356 = vld [vmem:[%s6354 + $0x4] sm:$0xf]
    %v6357 = vld [vmem:[%s6354 + $0x8] sm:$0xf]
    %v6358 = vld [vmem:[%s6354 + $0xc] sm:$0xf]
    %v6359 = vld [vmem:[%s6354 + $0x10] sm:$0xf]
    %v6360 = vld [vmem:[%s6354 + $0x14] sm:$0xf]
    %v6361 = vld [vmem:[%s6354 + $0x18] sm:$0xf]
    %v6362 = vld [vmem:[%s6354 + $0x1c] sm:$0xf]
    %v6363 = vld [vmem:[%s6354 + $0x20] sm:$0xf]
    %v6364 = vld [vmem:[%s6354 + $0x24] sm:$0xf]
    %v6365 = vld [vmem:[%s6354 + $0x28] sm:$0xf]
    %v6366 = vld [vmem:[%s6354 + $0x2c] sm:$0xf]
    %v6367 = vld [vmem:[%s6354 + $0x30] sm:$0xf]
    %v6368 = vld [vmem:[%s6354 + $0x34] sm:$0xf]
    %v6369 = vld [vmem:[%s6354 + $0x38] sm:$0xf]
    %v6370 = vld [vmem:[%s6354 + $0x3c] sm:$0xf]
    %v6380 = vrot.slane %v6345, 5
    %v6381 = vrot.slane %v6346, 5
    %v6382 = vsel %vm2240, %v6380, %v6381
    %v6383 = vrot.slane %v6347, 5
    %v6384 = vsel %vm2240, %v6381, %v6383
    %v6385 = vrot.slane %v6348, 5
    %v6386 = vsel %vm2240, %v6383, %v6385
    %v6387 = vrot.slane %v6349, 5
    %v6388 = vsel %vm2240, %v6385, %v6387
    %v6389 = vrot.slane %v6350, 5
    %v6390 = vsel %vm2240, %v6387, %v6389
    %v6391 = vrot.slane %v6351, 5
    %v6392 = vsel %vm2240, %v6389, %v6391
    %v6393 = vrot.slane %v6352, 5
    %v6394 = vsel %vm2240, %v6391, %v6393
    %v6395 = vrot.slane %v6353, 5
    %v6396 = vsel %vm2240, %v6393, %v6395
    %v6421 = vunpack.c.l.b16 %v6355
    %v6422 = vunpack.c.l.b16 %v6356
    %v6423 = vunpack.c.l.b16 %v6357
    %v6424 = vunpack.c.l.b16 %v6358
    %v6425 = vunpack.c.l.b16 %v6359
    %v6426 = vunpack.c.l.b16 %v6360
    %v6427 = vunpack.c.l.b16 %v6361
    %v6428 = vunpack.c.l.b16 %v6362
    %v6429 = vunpack.c.l.b16 %v6363
    %v6430 = vunpack.c.l.b16 %v6364
    %v6431 = vunpack.c.l.b16 %v6365
    %v6432 = vunpack.c.l.b16 %v6366
    %v6433 = vunpack.c.l.b16 %v6367
    %v6434 = vunpack.c.l.b16 %v6368
    %v6435 = vunpack.c.l.b16 %v6369
    %v6436 = vunpack.c.l.b16 %v6370
    %v6437 = vpack.c.b16 %v6422, %v6421
    %v6438 = vpack.c.b16 %v6424, %v6423
    %v6439 = vpack.c.b16 %v6426, %v6425
    %v6440 = vpack.c.b16 %v6428, %v6427
    %v6441 = vpack.c.b16 %v6430, %v6429
    %v6442 = vpack.c.b16 %v6432, %v6431
    %v6443 = vpack.c.b16 %v6434, %v6433
    %v6444 = vpack.c.b16 %v6436, %v6435
    %6453 = vmatprep.subr.bf16.mxu0 0
    %6454 = vmatpush1.bf16.msra.mxu0 %v6437
    %6455 = vmatprep.subr.bf16.mxu0 0
    %6456 = vmatpush1.bf16.msra.mxu0 %v6438
    %6457 = vmatprep.subr.bf16.mxu0 0
    %6458 = vmatpush1.bf16.msra.mxu0 %v6439
    %6459 = vmatprep.subr.bf16.mxu0 0
    %6460 = vmatpush1.bf16.msra.mxu0 %v6440
    %6461 = vmatprep.subr.bf16.mxu0 0
    %6462 = vmatpush1.bf16.msra.mxu0 %v6441
    %6463 = vmatprep.subr.bf16.mxu0 0
    %6464 = vmatpush1.bf16.msra.mxu0 %v6442
    %6465 = vmatprep.subr.bf16.mxu0 0
    %6466 = vmatpush1.bf16.msra.mxu0 %v6443
    %6467 = vmatprep.subr.bf16.mxu0 0
    %6468 = vmatpush1.bf16.msra.mxu0 %v6444
    %6469 = vmatprep.subr.bf16.mxu0 0
    %6470 = vmatpush1.bf16.msra.mxu0 0
    %6471 = vmatprep.subr.bf16.mxu0 0
    %6472 = vmatpush1.bf16.msra.mxu0 0
    %6473 = vmatprep.subr.bf16.mxu0 0
    %6474 = vmatpush1.bf16.msra.mxu0 0
    %6475 = vmatprep.subr.bf16.mxu0 0
    %6476 = vmatpush1.bf16.msra.mxu0 0
    %6477 = vmatprep.subr.bf16.mxu0 0
    %6478 = vmatpush1.bf16.msra.mxu0 0
    %6479 = vmatprep.subr.bf16.mxu0 0
    %6480 = vmatpush1.bf16.msra.mxu0 0
    %6481 = vmatprep.subr.bf16.mxu0 0
    %6482 = vmatpush1.bf16.msra.mxu0 0
    %6483 = vmatprep.subr.bf16.mxu0 0
    %6484 = vmatpush1.bf16.msra.mxu0 0
    %6485 = vmatprep.mubr.bf16.mxu0 0
    %6486 = vmatmul.mubr.bf16.gmra.mrb[0].mxu0 %v6382
    %v6487 = vpop.f32.mrb[0].mxu0
    %v6488 = vadd.f32 0.0, %v6487
    %v6489 = vpop.f32.mrb[0].mxu0
    %v6490 = vpop.f32.mrb[0].mxu0
    %v6491 = vadd.f32 0.0, %v6490
    %v6492 = vpop.f32.mrb[0].mxu0
    %6493 = vmatprep.mubr.bf16.mxu0 0
    %6494 = vmatmul.mubr.bf16.gmra.mrb[0].mxu0 %v6384
    %v6495 = vpop.f32.mrb[0].mxu0
    %v6496 = vadd.f32 0.0, %v6495
    %v6497 = vpop.f32.mrb[0].mxu0
    %v6498 = vpop.f32.mrb[0].mxu0
    %v6499 = vadd.f32 0.0, %v6498
    %v6500 = vpop.f32.mrb[0].mxu0
    %6501 = vmatprep.mubr.bf16.mxu0 0
    %6502 = vmatmul.mubr.bf16.gmra.mrb[0].mxu0 %v6386
    %v6503 = vpop.f32.mrb[0].mxu0
    %v6504 = vadd.f32 0.0, %v6503
    %v6505 = vpop.f32.mrb[0].mxu0
    %v6506 = vpop.f32.mrb[0].mxu0
    %v6507 = vadd.f32 0.0, %v6506
    %v6508 = vpop.f32.mrb[0].mxu0
    %6509 = vmatprep.mubr.bf16.mxu0 0
    %6510 = vmatmul.mubr.bf16.gmra.mrb[0].mxu0 %v6388
    %v6511 = vpop.f32.mrb[0].mxu0
    %v6512 = vadd.f32 0.0, %v6511
    %v6513 = vpop.f32.mrb[0].mxu0
    %v6514 = vpop.f32.mrb[0].mxu0
    %v6515 = vadd.f32 0.0, %v6514
    %v6516 = vpop.f32.mrb[0].mxu0
    %6517 = vmatprep.mubr.bf16.mxu0 0
    %6518 = vmatmul.mubr.bf16.gmra.mrb[0].mxu0 %v6390
    %v6519 = vpop.f32.mrb[0].mxu0
    %v6520 = vadd.f32 0.0, %v6519
    %v6521 = vpop.f32.mrb[0].mxu0
    %v6522 = vpop.f32.mrb[0].mxu0
    %v6523 = vadd.f32 0.0, %v6522
    %v6524 = vpop.f32.mrb[0].mxu0
    %6525 = vmatprep.mubr.bf16.mxu0 0
    %6526 = vmatmul.mubr.bf16.gmra.mrb[0].mxu0 %v6392
    %v6527 = vpop.f32.mrb[0].mxu0
    %v6528 = vadd.f32 0.0, %v6527
    %v6529 = vpop.f32.mrb[0].mxu0
    %v6530 = vpop.f32.mrb[0].mxu0
    %v6531 = vadd.f32 0.0, %v6530
    %v6532 = vpop.f32.mrb[0].mxu0
    %6533 = vmatprep.mubr.bf16.mxu0 0
    %6534 = vmatmul.mubr.bf16.gmra.mrb[0].mxu0 %v6394
    %v6535 = vpop.f32.mrb[0].mxu0
    %v6536 = vadd.f32 0.0, %v6535
    %v6537 = vpop.f32.mrb[0].mxu0
    %v6538 = vpop.f32.mrb[0].mxu0
    %v6539 = vadd.f32 0.0, %v6538
    %v6540 = vpop.f32.mrb[0].mxu0
    %6541 = vmatprep.mubr.bf16.mxu0 0
    %6542 = vmatmul.mubr.bf16.gmra.mrb[0].mxu0 %v6396
    %v6543 = vpop.f32.mrb[0].mxu0
    %v6544 = vadd.f32 0.0, %v6543
    %v6545 = vpop.f32.mrb[0].mxu0
    %v6546 = vpop.f32.mrb[0].mxu0
    %v6547 = vpop.f32.mrb[0].mxu0
    %6548 = vdwg.mxu0
    %v6549 = vadd.f32 %v6330, %v6488
    %v6550 = vadd.f32 %v6331, %v6491
    %v6551 = vadd.f32 %v6332, %v6496
    %v6552 = vadd.f32 %v6333, %v6499
    %v6553 = vadd.f32 %v6334, %v6504
    %v6554 = vadd.f32 %v6335, %v6507
    %v6555 = vadd.f32 %v6336, %v6512
    %v6556 = vadd.f32 %v6337, %v6515
    %v6557 = vadd.f32 %v6338, %v6520
    %v6558 = vadd.f32 %v6339, %v6523
    %v6559 = vadd.f32 %v6340, %v6528
    %v6560 = vadd.f32 %v6341, %v6531
    %v6561 = vadd.f32 %v6342, %v6536
    %v6562 = vadd.f32 %v6343, %v6539
    %v6563 = vadd.f32 %v6344, %v6544
    %v6564 = vld [vmem:[#allocation3 + $0x40] sm:$0x3]
    %s6565 = scalar_lea.vmem [#allocation7], 256
    %v6566 = vld [vmem:[%s6565] sm:$0xf]
    %v6567 = vld [vmem:[%s6565 + $0x4] sm:$0xf]
    %v6568 = vld [vmem:[%s6565 + $0x8] sm:$0xf]
    %v6569 = vld [vmem:[%s6565 + $0xc] sm:$0xf]
    %v6570 = vld [vmem:[%s6565 + $0x10] sm:$0xf]
    %v6571 = vld [vmem:[%s6565 + $0x14] sm:$0xf]
    %v6572 = vld [vmem:[%s6565 + $0x18] sm:$0xf]
    %v6573 = vld [vmem:[%s6565 + $0x1c] sm:$0xf]
    %v6574 = vld [vmem:[%s6565 + $0x20] sm:$0xf]
    %v6575 = vld [vmem:[%s6565 + $0x24] sm:$0xf]
    %v6576 = vld [vmem:[%s6565 + $0x28] sm:$0xf]
    %v6577 = vld [vmem:[%s6565 + $0x2c] sm:$0xf]
    %v6578 = vld [vmem:[%s6565 + $0x30] sm:$0xf]
    %v6579 = vld [vmem:[%s6565 + $0x34] sm:$0xf]
    %v6580 = vld [vmem:[%s6565 + $0x38] sm:$0xf]
    %v6581 = vld [vmem:[%s6565 + $0x3c] sm:$0xf]
    %v6583 = vshrl.u32 %v6345, 16
    %v6585 = vrot.slane %v6583, 5
    %v6586 = vshll.u32 %v6345, 16
    %v6588 = vrot.slane %v6586, 6
    %v6589 = vor.u32 %v6585, %v6588
    %v6591 = vshrl.u32 %v6346, 16
    %v6593 = vrot.slane %v6591, 5
    %v6594 = vshll.u32 %v6346, 16
    %v6596 = vrot.slane %v6594, 6
    %v6597 = vor.u32 %v6593, %v6596
    %v6598 = vsel %vm2719, %v6589, %v6597
    %v6600 = vshrl.u32 %v6347, 16
    %v6602 = vrot.slane %v6600, 5
    %v6603 = vshll.u32 %v6347, 16
    %v6605 = vrot.slane %v6603, 6
    %v6606 = vor.u32 %v6602, %v6605
    %v6607 = vsel %vm2719, %v6597, %v6606
    %v6609 = vshrl.u32 %v6348, 16
    %v6611 = vrot.slane %v6609, 5
    %v6612 = vshll.u32 %v6348, 16
    %v6614 = vrot.slane %v6612, 6
    %v6615 = vor.u32 %v6611, %v6614
    %v6616 = vsel %vm2719, %v6606, %v6615
    %v6618 = vshrl.u32 %v6349, 16
    %v6620 = vrot.slane %v6618, 5
    %v6621 = vshll.u32 %v6349, 16
    %v6623 = vrot.slane %v6621, 6
    %v6624 = vor.u32 %v6620, %v6623
    %v6625 = vsel %vm2719, %v6615, %v6624
    %v6627 = vshrl.u32 %v6350, 16
    %v6629 = vrot.slane %v6627, 5
    %v6630 = vshll.u32 %v6350, 16
    %v6632 = vrot.slane %v6630, 6
    %v6633 = vor.u32 %v6629, %v6632
    %v6634 = vsel %vm2719, %v6624, %v6633
    %v6636 = vshrl.u32 %v6351, 16
    %v6638 = vrot.slane %v6636, 5
    %v6639 = vshll.u32 %v6351, 16
    %v6641 = vrot.slane %v6639, 6
    %v6642 = vor.u32 %v6638, %v6641
    %v6643 = vsel %vm2719, %v6633, %v6642
    %v6645 = vshrl.u32 %v6352, 16
    %v6647 = vrot.slane %v6645, 5
    %v6648 = vshll.u32 %v6352, 16
    %v6650 = vrot.slane %v6648, 6
    %v6651 = vor.u32 %v6647, %v6650
    %v6652 = vsel %vm2719, %v6642, %v6651
    %v6654 = vshrl.u32 %v6564, 16
    %v6656 = vrot.slane %v6654, 5
    %v6657 = vshll.u32 %v6564, 16
    %v6659 = vrot.slane %v6657, 6
    %v6660 = vor.u32 %v6656, %v6659
    %v6661 = vsel %vm2719, %v6651, %v6660
    %v6686 = vunpack.c.l.b16 %v6566
    %v6687 = vunpack.c.l.b16 %v6567
    %v6688 = vunpack.c.l.b16 %v6568
    %v6689 = vunpack.c.l.b16 %v6569
    %v6690 = vunpack.c.l.b16 %v6570
    %v6691 = vunpack.c.l.b16 %v6571
    %v6692 = vunpack.c.l.b16 %v6572
    %v6693 = vunpack.c.l.b16 %v6573
    %v6694 = vunpack.c.l.b16 %v6574
    %v6695 = vunpack.c.l.b16 %v6575
    %v6696 = vunpack.c.l.b16 %v6576
    %v6697 = vunpack.c.l.b16 %v6577
    %v6698 = vunpack.c.l.b16 %v6578
    %v6699 = vunpack.c.l.b16 %v6579
    %v6700 = vunpack.c.l.b16 %v6580
    %v6701 = vunpack.c.l.b16 %v6581
    %v6702 = vpack.c.b16 %v6687, %v6686
    %v6703 = vpack.c.b16 %v6689, %v6688
    %v6704 = vpack.c.b16 %v6691, %v6690
    %v6705 = vpack.c.b16 %v6693, %v6692
    %v6706 = vpack.c.b16 %v6695, %v6694
    %v6707 = vpack.c.b16 %v6697, %v6696
    %v6708 = vpack.c.b16 %v6699, %v6698
    %v6709 = vpack.c.b16 %v6701, %v6700
    %6718 = vmatprep.subr.bf16.mxu0 0
    %6719 = vmatpush1.bf16.msra.mxu0 %v6702
    %6720 = vmatprep.subr.bf16.mxu0 0
    %6721 = vmatpush1.bf16.msra.mxu0 %v6703
    %6722 = vmatprep.subr.bf16.mxu0 0
    %6723 = vmatpush1.bf16.msra.mxu0 %v6704
    %6724 = vmatprep.subr.bf16.mxu0 0
    %6725 = vmatpush1.bf16.msra.mxu0 %v6705
    %6726 = vmatprep.subr.bf16.mxu0 0
    %6727 = vmatpush1.bf16.msra.mxu0 %v6706
    %6728 = vmatprep.subr.bf16.mxu0 0
    %6729 = vmatpush1.bf16.msra.mxu0 %v6707
    %6730 = vmatprep.subr.bf16.mxu0 0
    %6731 = vmatpush1.bf16.msra.mxu0 %v6708
    %6732 = vmatprep.subr.bf16.mxu0 0
    %6733 = vmatpush1.bf16.msra.mxu0 %v6709
    %6734 = vmatprep.subr.bf16.mxu0 0
    %6735 = vmatpush1.bf16.msra.mxu0 0
    %6736 = vmatprep.subr.bf16.mxu0 0
    %6737 = vmatpush1.bf16.msra.mxu0 0
    %6738 = vmatprep.subr.bf16.mxu0 0
    %6739 = vmatpush1.bf16.msra.mxu0 0
    %6740 = vmatprep.subr.bf16.mxu0 0
    %6741 = vmatpush1.bf16.msra.mxu0 0
    %6742 = vmatprep.subr.bf16.mxu0 0
    %6743 = vmatpush1.bf16.msra.mxu0 0
    %6744 = vmatprep.subr.bf16.mxu0 0
    %6745 = vmatpush1.bf16.msra.mxu0 0
    %6746 = vmatprep.subr.bf16.mxu0 0
    %6747 = vmatpush1.bf16.msra.mxu0 0
    %6748 = vmatprep.subr.bf16.mxu0 0
    %6749 = vmatpush1.bf16.msra.mxu0 0
    %6750 = vmatprep.mubr.bf16.mxu0 0
    %6751 = vmatmul.mubr.bf16.gmra.mrb[0].mxu0 %v6598
    %v6752 = vpop.f32.mrb[0].mxu0
    %v6753 = vadd.f32 0.0, %v6752
    %v6754 = vpop.f32.mrb[0].mxu0
    %v6755 = vpop.f32.mrb[0].mxu0
    %v6756 = vadd.f32 0.0, %v6755
    %v6757 = vpop.f32.mrb[0].mxu0
    %6758 = vmatprep.mubr.bf16.mxu0 0
    %6759 = vmatmul.mubr.bf16.gmra.mrb[0].mxu0 %v6607
    %v6760 = vpop.f32.mrb[0].mxu0
    %v6761 = vadd.f32 0.0, %v6760
    %v6762 = vpop.f32.mrb[0].mxu0
    %v6763 = vpop.f32.mrb[0].mxu0
    %v6764 = vadd.f32 0.0, %v6763
    %v6765 = vpop.f32.mrb[0].mxu0
    %6766 = vmatprep.mubr.bf16.mxu0 0
    %6767 = vmatmul.mubr.bf16.gmra.mrb[0].mxu0 %v6616
    %v6768 = vpop.f32.mrb[0].mxu0
    %v6769 = vadd.f32 0.0, %v6768
    %v6770 = vpop.f32.mrb[0].mxu0
    %v6771 = vpop.f32.mrb[0].mxu0
    %v6772 = vadd.f32 0.0, %v6771
    %v6773 = vpop.f32.mrb[0].mxu0
    %6774 = vmatprep.mubr.bf16.mxu0 0
    %6775 = vmatmul.mubr.bf16.gmra.mrb[0].mxu0 %v6625
    %v6776 = vpop.f32.mrb[0].mxu0
    %v6777 = vadd.f32 0.0, %v6776
    %v6778 = vpop.f32.mrb[0].mxu0
    %v6779 = vpop.f32.mrb[0].mxu0
    %v6780 = vadd.f32 0.0, %v6779
    %v6781 = vpop.f32.mrb[0].mxu0
    %6782 = vmatprep.mubr.bf16.mxu0 0
    %6783 = vmatmul.mubr.bf16.gmra.mrb[0].mxu0 %v6634
    %v6784 = vpop.f32.mrb[0].mxu0
    %v6785 = vadd.f32 0.0, %v6784
    %v6786 = vpop.f32.mrb[0].mxu0
    %v6787 = vpop.f32.mrb[0].mxu0
    %v6788 = vadd.f32 0.0, %v6787
    %v6789 = vpop.f32.mrb[0].mxu0
    %6790 = vmatprep.mubr.bf16.mxu0 0
    %6791 = vmatmul.mubr.bf16.gmra.mrb[0].mxu0 %v6643
    %v6792 = vpop.f32.mrb[0].mxu0
    %v6793 = vadd.f32 0.0, %v6792
    %v6794 = vpop.f32.mrb[0].mxu0
    %v6795 = vpop.f32.mrb[0].mxu0
    %v6796 = vadd.f32 0.0, %v6795
    %v6797 = vpop.f32.mrb[0].mxu0
    %6798 = vmatprep.mubr.bf16.mxu0 0
    %6799 = vmatmul.mubr.bf16.gmra.mrb[0].mxu0 %v6652
    %v6800 = vpop.f32.mrb[0].mxu0
    %v6801 = vadd.f32 0.0, %v6800
    %v6802 = vpop.f32.mrb[0].mxu0
    %v6803 = vpop.f32.mrb[0].mxu0
    %v6804 = vadd.f32 0.0, %v6803
    %v6805 = vpop.f32.mrb[0].mxu0
    %6806 = vmatprep.mubr.bf16.mxu0 0
    %6807 = vmatmul.mubr.bf16.gmra.mrb[0].mxu0 %v6661
    %v6808 = vpop.f32.mrb[0].mxu0
    %v6809 = vadd.f32 0.0, %v6808
    %v6810 = vpop.f32.mrb[0].mxu0
    %v6811 = vpop.f32.mrb[0].mxu0
    %v6812 = vpop.f32.mrb[0].mxu0
    %6813 = vdwg.mxu0
    %v6814 = vadd.f32 %v6549, %v6753
    %v6815 = vadd.f32 %v6550, %v6756
    %v6816 = vadd.f32 %v6551, %v6761
    %v6817 = vadd.f32 %v6552, %v6764
    %v6818 = vadd.f32 %v6553, %v6769
    %v6819 = vadd.f32 %v6554, %v6772
    %v6820 = vadd.f32 %v6555, %v6777
    %v6821 = vadd.f32 %v6556, %v6780
    %v6822 = vadd.f32 %v6557, %v6785
    %v6823 = vadd.f32 %v6558, %v6788
    %v6824 = vadd.f32 %v6559, %v6793
    %v6825 = vadd.f32 %v6560, %v6796
    %v6826 = vadd.f32 %v6561, %v6801
    %v6827 = vadd.f32 %v6562, %v6804
    %v6828 = vadd.f32 %v6563, %v6809
    %v6829 = vld [vmem:[#allocation3] sm:$0xc0]
    %s6830 = scalar_lea.vmem [#allocation7], 320
    %v6831 = vld [vmem:[%s6830] sm:$0xf]
    %v6832 = vld [vmem:[%s6830 + $0x4] sm:$0xf]
    %v6833 = vld [vmem:[%s6830 + $0x8] sm:$0xf]
    %v6834 = vld [vmem:[%s6830 + $0xc] sm:$0xf]
    %v6835 = vld [vmem:[%s6830 + $0x10] sm:$0xf]
    %v6836 = vld [vmem:[%s6830 + $0x14] sm:$0xf]
    %v6837 = vld [vmem:[%s6830 + $0x18] sm:$0xf]
    %v6838 = vld [vmem:[%s6830 + $0x1c] sm:$0xf]
    %v6839 = vld [vmem:[%s6830 + $0x20] sm:$0xf]
    %v6840 = vld [vmem:[%s6830 + $0x24] sm:$0xf]
    %v6841 = vld [vmem:[%s6830 + $0x28] sm:$0xf]
    %v6842 = vld [vmem:[%s6830 + $0x2c] sm:$0xf]
    %v6843 = vld [vmem:[%s6830 + $0x30] sm:$0xf]
    %v6844 = vld [vmem:[%s6830 + $0x34] sm:$0xf]
    %v6845 = vld [vmem:[%s6830 + $0x38] sm:$0xf]
    %v6846 = vld [vmem:[%s6830 + $0x3c] sm:$0xf]
    %v6849 = vrot.slane %v6829, 6
    %v6850 = vrot.slane %v6346, 6
    %v6851 = vsel %vm135, %v6849, %v6850
    %v6852 = vrot.slane %v6347, 6
    %v6853 = vsel %vm135, %v6850, %v6852
    %v6854 = vrot.slane %v6348, 6
    %v6855 = vsel %vm135, %v6852, %v6854
    %v6856 = vrot.slane %v6349, 6
    %v6857 = vsel %vm135, %v6854, %v6856
    %v6858 = vrot.slane %v6350, 6
    %v6859 = vsel %vm135, %v6856, %v6858
    %v6860 = vrot.slane %v6351, 6
    %v6861 = vsel %vm135, %v6858, %v6860
    %v6862 = vrot.slane %v6352, 6
    %v6863 = vsel %vm135, %v6860, %v6862
    %v6864 = vrot.slane %v6564, 6
    %v6865 = vsel %vm135, %v6862, %v6864
    %v6890 = vunpack.c.l.b16 %v6831
    %v6891 = vunpack.c.l.b16 %v6832
    %v6892 = vunpack.c.l.b16 %v6833
    %v6893 = vunpack.c.l.b16 %v6834
    %v6894 = vunpack.c.l.b16 %v6835
    %v6895 = vunpack.c.l.b16 %v6836
    %v6896 = vunpack.c.l.b16 %v6837
    %v6897 = vunpack.c.l.b16 %v6838
    %v6898 = vunpack.c.l.b16 %v6839
    %v6899 = vunpack.c.l.b16 %v6840
    %v6900 = vunpack.c.l.b16 %v6841
    %v6901 = vunpack.c.l.b16 %v6842
    %v6902 = vunpack.c.l.b16 %v6843
    %v6903 = vunpack.c.l.b16 %v6844
    %v6904 = vunpack.c.l.b16 %v6845
    %v6905 = vunpack.c.l.b16 %v6846
    %v6906 = vpack.c.b16 %v6891, %v6890
    %v6907 = vpack.c.b16 %v6893, %v6892
    %v6908 = vpack.c.b16 %v6895, %v6894
    %v6909 = vpack.c.b16 %v6897, %v6896
    %v6910 = vpack.c.b16 %v6899, %v6898
    %v6911 = vpack.c.b16 %v6901, %v6900
    %v6912 = vpack.c.b16 %v6903, %v6902
    %v6913 = vpack.c.b16 %v6905, %v6904
    %6922 = vmatprep.subr.bf16.mxu0 0
    %6923 = vmatpush1.bf16.msra.mxu0 %v6906
    %6924 = vmatprep.subr.bf16.mxu0 0
    %6925 = vmatpush1.bf16.msra.mxu0 %v6907
    %6926 = vmatprep.subr.bf16.mxu0 0
    %6927 = vmatpush1.bf16.msra.mxu0 %v6908
    %6928 = vmatprep.subr.bf16.mxu0 0
    %6929 = vmatpush1.bf16.msra.mxu0 %v6909
    %6930 = vmatprep.subr.bf16.mxu0 0
    %6931 = vmatpush1.bf16.msra.mxu0 %v6910
    %6932 = vmatprep.subr.bf16.mxu0 0
    %6933 = vmatpush1.bf16.msra.mxu0 %v6911
    %6934 = vmatprep.subr.bf16.mxu0 0
    %6935 = vmatpush1.bf16.msra.mxu0 %v6912
    %6936 = vmatprep.subr.bf16.mxu0 0
    %6937 = vmatpush1.bf16.msra.mxu0 %v6913
    %6938 = vmatprep.subr.bf16.mxu0 0
    %6939 = vmatpush1.bf16.msra.mxu0 0
    %6940 = vmatprep.subr.bf16.mxu0 0
    %6941 = vmatpush1.bf16.msra.mxu0 0
    %6942 = vmatprep.subr.bf16.mxu0 0
    %6943 = vmatpush1.bf16.msra.mxu0 0
    %6944 = vmatprep.subr.bf16.mxu0 0
    %6945 = vmatpush1.bf16.msra.mxu0 0
    %6946 = vmatprep.subr.bf16.mxu0 0
    %6947 = vmatpush1.bf16.msra.mxu0 0
    %6948 = vmatprep.subr.bf16.mxu0 0
    %6949 = vmatpush1.bf16.msra.mxu0 0
    %6950 = vmatprep.subr.bf16.mxu0 0
    %6951 = vmatpush1.bf16.msra.mxu0 0
    %6952 = vmatprep.subr.bf16.mxu0 0
    %6953 = vmatpush1.bf16.msra.mxu0 0
    %6954 = vmatprep.mubr.bf16.mxu0 0
    %6955 = vmatmul.mubr.bf16.gmra.mrb[0].mxu0 %v6851
    %v6956 = vpop.f32.mrb[0].mxu0
    %v6957 = vadd.f32 0.0, %v6956
    %v6958 = vpop.f32.mrb[0].mxu0
    %v6959 = vpop.f32.mrb[0].mxu0
    %v6960 = vadd.f32 0.0, %v6959
    %v6961 = vpop.f32.mrb[0].mxu0
    %6962 = vmatprep.mubr.bf16.mxu0 0
    %6963 = vmatmul.mubr.bf16.gmra.mrb[0].mxu0 %v6853
    %v6964 = vpop.f32.mrb[0].mxu0
    %v6965 = vadd.f32 0.0, %v6964
    %v6966 = vpop.f32.mrb[0].mxu0
    %v6967 = vpop.f32.mrb[0].mxu0
    %v6968 = vadd.f32 0.0, %v6967
    %v6969 = vpop.f32.mrb[0].mxu0
    %6970 = vmatprep.mubr.bf16.mxu0 0
    %6971 = vmatmul.mubr.bf16.gmra.mrb[0].mxu0 %v6855
    %v6972 = vpop.f32.mrb[0].mxu0
    %v6973 = vadd.f32 0.0, %v6972
    %v6974 = vpop.f32.mrb[0].mxu0
    %v6975 = vpop.f32.mrb[0].mxu0
    %v6976 = vadd.f32 0.0, %v6975
    %v6977 = vpop.f32.mrb[0].mxu0
    %6978 = vmatprep.mubr.bf16.mxu0 0
    %6979 = vmatmul.mubr.bf16.gmra.mrb[0].mxu0 %v6857
    %v6980 = vpop.f32.mrb[0].mxu0
    %v6981 = vadd.f32 0.0, %v6980
    %v6982 = vpop.f32.mrb[0].mxu0
    %v6983 = vpop.f32.mrb[0].mxu0
    %v6984 = vadd.f32 0.0, %v6983
    %v6985 = vpop.f32.mrb[0].mxu0
    %6986 = vmatprep.mubr.bf16.mxu0 0
    %6987 = vmatmul.mubr.bf16.gmra.mrb[0].mxu0 %v6859
    %v6988 = vpop.f32.mrb[0].mxu0
    %v6989 = vadd.f32 0.0, %v6988
    %v6990 = vpop.f32.mrb[0].mxu0
    %v6991 = vpop.f32.mrb[0].mxu0
    %v6992 = vadd.f32 0.0, %v6991
    %v6993 = vpop.f32.mrb[0].mxu0
    %6994 = vmatprep.mubr.bf16.mxu0 0
    %6995 = vmatmul.mubr.bf16.gmra.mrb[0].mxu0 %v6861
    %v6996 = vpop.f32.mrb[0].mxu0
    %v6997 = vadd.f32 0.0, %v6996
    %v6998 = vpop.f32.mrb[0].mxu0
    %v6999 = vpop.f32.mrb[0].mxu0
    %v7000 = vadd.f32 0.0, %v6999
    %v7001 = vpop.f32.mrb[0].mxu0
    %7002 = vmatprep.mubr.bf16.mxu0 0
    %7003 = vmatmul.mubr.bf16.gmra.mrb[0].mxu0 %v6863
    %v7004 = vpop.f32.mrb[0].mxu0
    %v7005 = vadd.f32 0.0, %v7004
    %v7006 = vpop.f32.mrb[0].mxu0
    %v7007 = vpop.f32.mrb[0].mxu0
    %v7008 = vadd.f32 0.0, %v7007
    %v7009 = vpop.f32.mrb[0].mxu0
    %7010 = vmatprep.mubr.bf16.mxu0 0
    %7011 = vmatmul.mubr.bf16.gmra.mrb[0].mxu0 %v6865
    %v7012 = vpop.f32.mrb[0].mxu0
    %v7013 = vadd.f32 0.0, %v7012
    %v7014 = vpop.f32.mrb[0].mxu0
    %v7015 = vpop.f32.mrb[0].mxu0
    %v7016 = vpop.f32.mrb[0].mxu0
    %7017 = vdwg.mxu0
    %v7018 = vadd.f32 %v6814, %v6957
    %v7019 = vadd.f32 %v6815, %v6960
    %v7020 = vadd.f32 %v6816, %v6965
    %v7021 = vadd.f32 %v6817, %v6968
    %v7022 = vadd.f32 %v6818, %v6973
    %v7023 = vadd.f32 %v6819, %v6976
    %v7024 = vadd.f32 %v6820, %v6981
    %v7025 = vadd.f32 %v6821, %v6984
    %v7026 = vadd.f32 %v6822, %v6989
    %v7027 = vadd.f32 %v6823, %v6992
    %v7028 = vadd.f32 %v6824, %v6997
    %v7029 = vadd.f32 %v6825, %v7000
    %v7030 = vadd.f32 %v6826, %v7005
    %v7031 = vadd.f32 %v6827, %v7008
    %v7032 = vadd.f32 %v6828, %v7013
    %v7033 = vld [vmem:[#allocation3 + $0x8] sm:$0xfc]
    %v7034 = vld [vmem:[#allocation3 + $0x40] sm:$0x3f]
    %s7035 = scalar_lea.vmem [#allocation7], 384
    %v7036 = vld [vmem:[%s7035] sm:$0xf]
    %v7037 = vld [vmem:[%s7035 + $0x4] sm:$0xf]
    %v7038 = vld [vmem:[%s7035 + $0x8] sm:$0xf]
    %v7039 = vld [vmem:[%s7035 + $0xc] sm:$0xf]
    %v7040 = vld [vmem:[%s7035 + $0x10] sm:$0xf]
    %v7041 = vld [vmem:[%s7035 + $0x14] sm:$0xf]
    %v7042 = vld [vmem:[%s7035 + $0x18] sm:$0xf]
    %v7043 = vld [vmem:[%s7035 + $0x1c] sm:$0xf]
    %v7044 = vld [vmem:[%s7035 + $0x20] sm:$0xf]
    %v7045 = vld [vmem:[%s7035 + $0x24] sm:$0xf]
    %v7046 = vld [vmem:[%s7035 + $0x28] sm:$0xf]
    %v7047 = vld [vmem:[%s7035 + $0x2c] sm:$0xf]
    %v7048 = vld [vmem:[%s7035 + $0x30] sm:$0xf]
    %v7049 = vld [vmem:[%s7035 + $0x34] sm:$0xf]
    %v7050 = vld [vmem:[%s7035 + $0x38] sm:$0xf]
    %v7051 = vld [vmem:[%s7035 + $0x3c] sm:$0xf]
    %v7054 = vrot.slane %v7033, 2
    %v7055 = vrot.slane %v6347, 2
    %v7056 = vsel %vm74, %v7054, %v7055
    %v7057 = vrot.slane %v6348, 2
    %v7058 = vsel %vm74, %v7055, %v7057
    %v7059 = vrot.slane %v6349, 2
    %v7060 = vsel %vm74, %v7057, %v7059
    %v7061 = vrot.slane %v6350, 2
    %v7062 = vsel %vm74, %v7059, %v7061
    %v7063 = vrot.slane %v6351, 2
    %v7064 = vsel %vm74, %v7061, %v7063
    %v7065 = vrot.slane %v6352, 2
    %v7066 = vsel %vm74, %v7063, %v7065
    %v7067 = vrot.slane %v7034, 2
    %v7068 = vsel %vm74, %v7065, %v7067
    %v7093 = vunpack.c.l.b16 %v7036
    %v7094 = vunpack.c.l.b16 %v7037
    %v7095 = vunpack.c.l.b16 %v7038
    %v7096 = vunpack.c.l.b16 %v7039
    %v7097 = vunpack.c.l.b16 %v7040
    %v7098 = vunpack.c.l.b16 %v7041
    %v7099 = vunpack.c.l.b16 %v7042
    %v7100 = vunpack.c.l.b16 %v7043
    %v7101 = vunpack.c.l.b16 %v7044
    %v7102 = vunpack.c.l.b16 %v7045
    %v7103 = vunpack.c.l.b16 %v7046
    %v7104 = vunpack.c.l.b16 %v7047
    %v7105 = vunpack.c.l.b16 %v7048
    %v7106 = vunpack.c.l.b16 %v7049
    %v7107 = vunpack.c.l.b16 %v7050
    %v7108 = vunpack.c.l.b16 %v7051
    %v7109 = vpack.c.b16 %v7094, %v7093
    %v7110 = vpack.c.b16 %v7096, %v7095
    %v7111 = vpack.c.b16 %v7098, %v7097
    %v7112 = vpack.c.b16 %v7100, %v7099
    %v7113 = vpack.c.b16 %v7102, %v7101
    %v7114 = vpack.c.b16 %v7104, %v7103
    %v7115 = vpack.c.b16 %v7106, %v7105
    %v7116 = vpack.c.b16 %v7108, %v7107
    %7125 = vmatprep.subr.bf16.mxu0 0
    %7126 = vmatpush1.bf16.msra.mxu0 %v7109
    %7127 = vmatprep.subr.bf16.mxu0 0
    %7128 = vmatpush1.bf16.msra.mxu0 %v7110
    %7129 = vmatprep.subr.bf16.mxu0 0
    %7130 = vmatpush1.bf16.msra.mxu0 %v7111
    %7131 = vmatprep.subr.bf16.mxu0 0
    %7132 = vmatpush1.bf16.msra.mxu0 %v7112
    %7133 = vmatprep.subr.bf16.mxu0 0
    %7134 = vmatpush1.bf16.msra.mxu0 %v7113
    %7135 = vmatprep.subr.bf16.mxu0 0
    %7136 = vmatpush1.bf16.msra.mxu0 %v7114
    %7137 = vmatprep.subr.bf16.mxu0 0
    %7138 = vmatpush1.bf16.msra.mxu0 %v7115
    %7139 = vmatprep.subr.bf16.mxu0 0
    %7140 = vmatpush1.bf16.msra.mxu0 %v7116
    %7141 = vmatprep.subr.bf16.mxu0 0
    %7142 = vmatpush1.bf16.msra.mxu0 0
    %7143 = vmatprep.subr.bf16.mxu0 0
    %7144 = vmatpush1.bf16.msra.mxu0 0
    %7145 = vmatprep.subr.bf16.mxu0 0
    %7146 = vmatpush1.bf16.msra.mxu0 0
    %7147 = vmatprep.subr.bf16.mxu0 0
    %7148 = vmatpush1.bf16.msra.mxu0 0
    %7149 = vmatprep.subr.bf16.mxu0 0
    %7150 = vmatpush1.bf16.msra.mxu0 0
    %7151 = vmatprep.subr.bf16.mxu0 0
    %7152 = vmatpush1.bf16.msra.mxu0 0
    %7153 = vmatprep.subr.bf16.mxu0 0
    %7154 = vmatpush1.bf16.msra.mxu0 0
    %7155 = vmatprep.subr.bf16.mxu0 0
    %7156 = vmatpush1.bf16.msra.mxu0 0
    %7157 = vmatprep.mubr.bf16.mxu0 0
    %7158 = vmatmul.mubr.bf16.gmra.mrb[0].mxu0 %v7056
    %v7159 = vpop.f32.mrb[0].mxu0
    %v7160 = vadd.f32 0.0, %v7159
    %v7161 = vpop.f32.mrb[0].mxu0
    %v7162 = vpop.f32.mrb[0].mxu0
    %v7163 = vadd.f32 0.0, %v7162
    %v7164 = vpop.f32.mrb[0].mxu0
    %7165 = vmatprep.mubr.bf16.mxu0 0
    %7166 = vmatmul.mubr.bf16.gmra.mrb[0].mxu0 %v7058
    %v7167 = vpop.f32.mrb[0].mxu0
    %v7168 = vadd.f32 0.0, %v7167
    %v7169 = vpop.f32.mrb[0].mxu0
    %v7170 = vpop.f32.mrb[0].mxu0
    %v7171 = vadd.f32 0.0, %v7170
    %v7172 = vpop.f32.mrb[0].mxu0
    %7173 = vmatprep.mubr.bf16.mxu0 0
    %7174 = vmatmul.mubr.bf16.gmra.mrb[0].mxu0 %v7060
    %v7175 = vpop.f32.mrb[0].mxu0
    %v7176 = vadd.f32 0.0, %v7175
    %v7177 = vpop.f32.mrb[0].mxu0
    %v7178 = vpop.f32.mrb[0].mxu0
    %v7179 = vadd.f32 0.0, %v7178
    %v7180 = vpop.f32.mrb[0].mxu0
    %7181 = vmatprep.mubr.bf16.mxu0 0
    %7182 = vmatmul.mubr.bf16.gmra.mrb[0].mxu0 %v7062
    %v7183 = vpop.f32.mrb[0].mxu0
    %v7184 = vadd.f32 0.0, %v7183
    %v7185 = vpop.f32.mrb[0].mxu0
    %v7186 = vpop.f32.mrb[0].mxu0
    %v7187 = vadd.f32 0.0, %v7186
    %v7188 = vpop.f32.mrb[0].mxu0
    %7189 = vmatprep.mubr.bf16.mxu0 0
    %7190 = vmatmul.mubr.bf16.gmra.mrb[0].mxu0 %v7064
    %v7191 = vpop.f32.mrb[0].mxu0
    %v7192 = vadd.f32 0.0, %v7191
    %v7193 = vpop.f32.mrb[0].mxu0
    %v7194 = vpop.f32.mrb[0].mxu0
    %v7195 = vadd.f32 0.0, %v7194
    %v7196 = vpop.f32.mrb[0].mxu0
    %7197 = vmatprep.mubr.bf16.mxu0 0
    %7198 = vmatmul.mubr.bf16.gmra.mrb[0].mxu0 %v7066
    %v7199 = vpop.f32.mrb[0].mxu0
    %v7200 = vadd.f32 0.0, %v7199
    %v7201 = vpop.f32.mrb[0].mxu0
    %v7202 = vpop.f32.mrb[0].mxu0
    %v7203 = vadd.f32 0.0, %v7202
    %v7204 = vpop.f32.mrb[0].mxu0
    %7205 = vmatprep.mubr.bf16.mxu0 0
    %7206 = vmatmul.mubr.bf16.gmra.mrb[0].mxu0 %v7068
    %v7207 = vpop.f32.mrb[0].mxu0
    %v7208 = vadd.f32 0.0, %v7207
    %v7209 = vpop.f32.mrb[0].mxu0
    %v7210 = vpop.f32.mrb[0].mxu0
    %v7211 = vadd.f32 0.0, %v7210
    %v7212 = vpop.f32.mrb[0].mxu0
    %7213 = vmatprep.mubr.bf16.mxu0 0
    %7214 = vmatmul.mubr.bf16.gmra.mrb[0].mxu0 %v7067
    %v7215 = vpop.f32.mrb[0].mxu0
    %v7216 = vadd.f32 0.0, %v7215
    %v7217 = vpop.f32.mrb[0].mxu0
    %v7218 = vpop.f32.mrb[0].mxu0
    %v7219 = vpop.f32.mrb[0].mxu0
    %7220 = vdwg.mxu0
    %v7221 = vadd.f32 %v7018, %v7160
    %v7222 = vadd.f32 %v7019, %v7163
    %v7223 = vadd.f32 %v7020, %v7168
    %v7224 = vadd.f32 %v7021, %v7171
    %v7225 = vadd.f32 %v7022, %v7176
    %v7226 = vadd.f32 %v7023, %v7179
    %v7227 = vadd.f32 %v7024, %v7184
    %v7228 = vadd.f32 %v7025, %v7187
    %v7229 = vadd.f32 %v7026, %v7192
    %v7230 = vadd.f32 %v7027, %v7195
    %v7231 = vadd.f32 %v7028, %v7200
    %v7232 = vadd.f32 %v7029, %v7203
    %v7233 = vadd.f32 %v7030, %v7208
    %v7234 = vadd.f32 %v7031, %v7211
    %v7235 = vadd.f32 %v7032, %v7216
    %v7236 = vld [vmem:[#allocation3 + $0x40] sm:$0x7f]
    %s7237 = scalar_lea.vmem [#allocation7], 448
    %v7238 = vld [vmem:[%s7237] sm:$0xf]
    %v7239 = vld [vmem:[%s7237 + $0x4] sm:$0xf]
    %v7240 = vld [vmem:[%s7237 + $0x8] sm:$0xf]
    %v7241 = vld [vmem:[%s7237 + $0xc] sm:$0xf]
    %v7242 = vld [vmem:[%s7237 + $0x10] sm:$0xf]
    %v7243 = vld [vmem:[%s7237 + $0x14] sm:$0xf]
    %v7244 = vld [vmem:[%s7237 + $0x18] sm:$0xf]
    %v7245 = vld [vmem:[%s7237 + $0x1c] sm:$0xf]
    %v7246 = vld [vmem:[%s7237 + $0x20] sm:$0xf]
    %v7247 = vld [vmem:[%s7237 + $0x24] sm:$0xf]
    %v7248 = vld [vmem:[%s7237 + $0x28] sm:$0xf]
    %v7249 = vld [vmem:[%s7237 + $0x2c] sm:$0xf]
    %v7250 = vld [vmem:[%s7237 + $0x30] sm:$0xf]
    %v7251 = vld [vmem:[%s7237 + $0x34] sm:$0xf]
    %v7252 = vld [vmem:[%s7237 + $0x38] sm:$0xf]
    %v7253 = vld [vmem:[%s7237 + $0x3c] sm:$0xf]
    %v7255 = vshrl.u32 %v7033, 16
    %v7257 = vrot.slane %v7255, 2
    %v7258 = vshll.u32 %v7033, 16
    %v7260 = vrot.slane %v7258, 3
    %v7261 = vor.u32 %v7257, %v7260
    %v7262 = vrot.slane %v6600, 2
    %v7263 = vrot.slane %v6603, 3
    %v7264 = vor.u32 %v7262, %v7263
    %v7265 = vsel %vm75, %v7261, %v7264
    %v7266 = vrot.slane %v6609, 2
    %v7267 = vrot.slane %v6612, 3
    %v7268 = vor.u32 %v7266, %v7267
    %v7269 = vsel %vm75, %v7264, %v7268
    %v7270 = vrot.slane %v6618, 2
    %v7271 = vrot.slane %v6621, 3
    %v7272 = vor.u32 %v7270, %v7271
    %v7273 = vsel %vm75, %v7268, %v7272
    %v7274 = vrot.slane %v6627, 2
    %v7275 = vrot.slane %v6630, 3
    %v7276 = vor.u32 %v7274, %v7275
    %v7277 = vsel %vm75, %v7272, %v7276
    %v7278 = vrot.slane %v6636, 2
    %v7279 = vrot.slane %v6639, 3
    %v7280 = vor.u32 %v7278, %v7279
    %v7281 = vsel %vm75, %v7276, %v7280
    %v7282 = vrot.slane %v6645, 2
    %v7283 = vrot.slane %v6648, 3
    %v7284 = vor.u32 %v7282, %v7283
    %v7285 = vsel %vm75, %v7280, %v7284
    %v7287 = vshrl.u32 %v7236, 16
    %v7289 = vrot.slane %v7287, 2
    %v7290 = vshll.u32 %v7236, 16
    %v7292 = vrot.slane %v7290, 3
    %v7293 = vor.u32 %v7289, %v7292
    %v7294 = vsel %vm75, %v7284, %v7293
    %v7319 = vunpack.c.l.b16 %v7238
    %v7320 = vunpack.c.l.b16 %v7239
    %v7321 = vunpack.c.l.b16 %v7240
    %v7322 = vunpack.c.l.b16 %v7241
    %v7323 = vunpack.c.l.b16 %v7242
    %v7324 = vunpack.c.l.b16 %v7243
    %v7325 = vunpack.c.l.b16 %v7244
    %v7326 = vunpack.c.l.b16 %v7245
    %v7327 = vunpack.c.l.b16 %v7246
    %v7328 = vunpack.c.l.b16 %v7247
    %v7329 = vunpack.c.l.b16 %v7248
    %v7330 = vunpack.c.l.b16 %v7249
    %v7331 = vunpack.c.l.b16 %v7250
    %v7332 = vunpack.c.l.b16 %v7251
    %v7333 = vunpack.c.l.b16 %v7252
    %v7334 = vunpack.c.l.b16 %v7253
    %v7335 = vpack.c.b16 %v7320, %v7319
    %v7336 = vpack.c.b16 %v7322, %v7321
    %v7337 = vpack.c.b16 %v7324, %v7323
    %v7338 = vpack.c.b16 %v7326, %v7325
    %v7339 = vpack.c.b16 %v7328, %v7327
    %v7340 = vpack.c.b16 %v7330, %v7329
    %v7341 = vpack.c.b16 %v7332, %v7331
    %v7342 = vpack.c.b16 %v7334, %v7333
    %7351 = vmatprep.subr.bf16.mxu0 0
    %7352 = vmatpush1.bf16.msra.mxu0 %v7335
    %7353 = vmatprep.subr.bf16.mxu0 0
    %7354 = vmatpush1.bf16.msra.mxu0 %v7336
    %7355 = vmatprep.subr.bf16.mxu0 0
    %7356 = vmatpush1.bf16.msra.mxu0 %v7337
    %7357 = vmatprep.subr.bf16.mxu0 0
    %7358 = vmatpush1.bf16.msra.mxu0 %v7338
    %7359 = vmatprep.subr.bf16.mxu0 0
    %7360 = vmatpush1.bf16.msra.mxu0 %v7339
    %7361 = vmatprep.subr.bf16.mxu0 0
    %7362 = vmatpush1.bf16.msra.mxu0 %v7340
    %7363 = vmatprep.subr.bf16.mxu0 0
    %7364 = vmatpush1.bf16.msra.mxu0 %v7341
    %7365 = vmatprep.subr.bf16.mxu0 0
    %7366 = vmatpush1.bf16.msra.mxu0 %v7342
    %7367 = vmatprep.subr.bf16.mxu0 0
    %7368 = vmatpush1.bf16.msra.mxu0 0
    %7369 = vmatprep.subr.bf16.mxu0 0
    %7370 = vmatpush1.bf16.msra.mxu0 0
    %7371 = vmatprep.subr.bf16.mxu0 0
    %7372 = vmatpush1.bf16.msra.mxu0 0
    %7373 = vmatprep.subr.bf16.mxu0 0
    %7374 = vmatpush1.bf16.msra.mxu0 0
    %7375 = vmatprep.subr.bf16.mxu0 0
    %7376 = vmatpush1.bf16.msra.mxu0 0
    %7377 = vmatprep.subr.bf16.mxu0 0
    %7378 = vmatpush1.bf16.msra.mxu0 0
    %7379 = vmatprep.subr.bf16.mxu0 0
    %7380 = vmatpush1.bf16.msra.mxu0 0
    %7381 = vmatprep.subr.bf16.mxu0 0
    %7382 = vmatpush1.bf16.msra.mxu0 0
    %7383 = vmatprep.mubr.bf16.mxu0 0
    %7384 = vmatmul.mubr.bf16.gmra.mrb[0].mxu0 %v7265
    %v7385 = vpop.f32.mrb[0].mxu0
    %v7386 = vadd.f32 0.0, %v7385
    %v7387 = vpop.f32.mrb[0].mxu0
    %v7388 = vpop.f32.mrb[0].mxu0
    %v7389 = vadd.f32 0.0, %v7388
    %v7390 = vpop.f32.mrb[0].mxu0
    %7391 = vmatprep.mubr.bf16.mxu0 0
    %7392 = vmatmul.mubr.bf16.gmra.mrb[0].mxu0 %v7269
    %v7393 = vpop.f32.mrb[0].mxu0
    %v7394 = vadd.f32 0.0, %v7393
    %v7395 = vpop.f32.mrb[0].mxu0
    %v7396 = vpop.f32.mrb[0].mxu0
    %v7397 = vadd.f32 0.0, %v7396
    %v7398 = vpop.f32.mrb[0].mxu0
    %7399 = vmatprep.mubr.bf16.mxu0 0
    %7400 = vmatmul.mubr.bf16.gmra.mrb[0].mxu0 %v7273
    %v7401 = vpop.f32.mrb[0].mxu0
    %v7402 = vadd.f32 0.0, %v7401
    %v7403 = vpop.f32.mrb[0].mxu0
    %v7404 = vpop.f32.mrb[0].mxu0
    %v7405 = vadd.f32 0.0, %v7404
    %v7406 = vpop.f32.mrb[0].mxu0
    %7407 = vmatprep.mubr.bf16.mxu0 0
    %7408 = vmatmul.mubr.bf16.gmra.mrb[0].mxu0 %v7277
    %v7409 = vpop.f32.mrb[0].mxu0
    %v7410 = vadd.f32 0.0, %v7409
    %v7411 = vpop.f32.mrb[0].mxu0
    %v7412 = vpop.f32.mrb[0].mxu0
    %v7413 = vadd.f32 0.0, %v7412
    %v7414 = vpop.f32.mrb[0].mxu0
    %7415 = vmatprep.mubr.bf16.mxu0 0
    %7416 = vmatmul.mubr.bf16.gmra.mrb[0].mxu0 %v7281
    %v7417 = vpop.f32.mrb[0].mxu0
    %v7418 = vadd.f32 0.0, %v7417
    %v7419 = vpop.f32.mrb[0].mxu0
    %v7420 = vpop.f32.mrb[0].mxu0
    %v7421 = vadd.f32 0.0, %v7420
    %v7422 = vpop.f32.mrb[0].mxu0
    %7423 = vmatprep.mubr.bf16.mxu0 0
    %7424 = vmatmul.mubr.bf16.gmra.mrb[0].mxu0 %v7285
    %v7425 = vpop.f32.mrb[0].mxu0
    %v7426 = vadd.f32 0.0, %v7425
    %v7427 = vpop.f32.mrb[0].mxu0
    %v7428 = vpop.f32.mrb[0].mxu0
    %v7429 = vadd.f32 0.0, %v7428
    %v7430 = vpop.f32.mrb[0].mxu0
    %7431 = vmatprep.mubr.bf16.mxu0 0
    %7432 = vmatmul.mubr.bf16.gmra.mrb[0].mxu0 %v7294
    %v7433 = vpop.f32.mrb[0].mxu0
    %v7434 = vadd.f32 0.0, %v7433
    %v7435 = vpop.f32.mrb[0].mxu0
    %v7436 = vpop.f32.mrb[0].mxu0
    %v7437 = vadd.f32 0.0, %v7436
    %v7438 = vpop.f32.mrb[0].mxu0
    %7439 = vmatprep.mubr.bf16.mxu0 0
    %7440 = vmatmul.mubr.bf16.gmra.mrb[0].mxu0 %v7293
    %v7441 = vpop.f32.mrb[0].mxu0
    %v7442 = vadd.f32 0.0, %v7441
    %v7443 = vpop.f32.mrb[0].mxu0
    %v7444 = vpop.f32.mrb[0].mxu0
    %v7445 = vpop.f32.mrb[0].mxu0
    %7446 = vdwg.mxu0
    %v7447 = vadd.f32 %v7221, %v7386
    %v7448 = vadd.f32 %v7222, %v7389
    %v7449 = vadd.f32 %v7223, %v7394
    %v7450 = vadd.f32 %v7224, %v7397
    %v7451 = vadd.f32 %v7225, %v7402
    %v7452 = vadd.f32 %v7226, %v7405
    %v7453 = vadd.f32 %v7227, %v7410
    %v7454 = vadd.f32 %v7228, %v7413
    %v7455 = vadd.f32 %v7229, %v7418
    %v7456 = vadd.f32 %v7230, %v7421
    %v7457 = vadd.f32 %v7231, %v7426
    %v7458 = vadd.f32 %v7232, %v7429
    %v7459 = vadd.f32 %v7233, %v7434
    %v7460 = vadd.f32 %v7234, %v7437
    %v7461 = vadd.f32 %v7235, %v7442
    %v7462 = vld [vmem:[#allocation3 + $0x8] sm:$0xf8]
    %s7463 = scalar_lea.vmem [#allocation7], 512
    %v7464 = vld [vmem:[%s7463] sm:$0xf]
    %v7465 = vld [vmem:[%s7463 + $0x4] sm:$0xf]
    %v7466 = vld [vmem:[%s7463 + $0x8] sm:$0xf]
    %v7467 = vld [vmem:[%s7463 + $0xc] sm:$0xf]
    %v7468 = vld [vmem:[%s7463 + $0x10] sm:$0xf]
    %v7469 = vld [vmem:[%s7463 + $0x14] sm:$0xf]
    %v7470 = vld [vmem:[%s7463 + $0x18] sm:$0xf]
    %v7471 = vld [vmem:[%s7463 + $0x1c] sm:$0xf]
    %v7472 = vld [vmem:[%s7463 + $0x20] sm:$0xf]
    %v7473 = vld [vmem:[%s7463 + $0x24] sm:$0xf]
    %v7474 = vld [vmem:[%s7463 + $0x28] sm:$0xf]
    %v7475 = vld [vmem:[%s7463 + $0x2c] sm:$0xf]
    %v7476 = vld [vmem:[%s7463 + $0x30] sm:$0xf]
    %v7477 = vld [vmem:[%s7463 + $0x34] sm:$0xf]
    %v7478 = vld [vmem:[%s7463 + $0x38] sm:$0xf]
    %v7479 = vld [vmem:[%s7463 + $0x3c] sm:$0xf]
    %v7482 = vrot.slane %v7462, 3
    %v7483 = vrot.slane %v6347, 3
    %v7484 = vsel %vm479, %v7482, %v7483
    %v7485 = vrot.slane %v6348, 3
    %v7486 = vsel %vm479, %v7483, %v7485
    %v7487 = vrot.slane %v6349, 3
    %v7488 = vsel %vm479, %v7485, %v7487
    %v7489 = vrot.slane %v6350, 3
    %v7490 = vsel %vm479, %v7487, %v7489
    %v7491 = vrot.slane %v6351, 3
    %v7492 = vsel %vm479, %v7489, %v7491
    %v7493 = vrot.slane %v6352, 3
    %v7494 = vsel %vm479, %v7491, %v7493
    %v7495 = vrot.slane %v7236, 3
    %v7496 = vsel %vm479, %v7493, %v7495
    %v7521 = vunpack.c.l.b16 %v7464
    %v7522 = vunpack.c.l.b16 %v7465
    %v7523 = vunpack.c.l.b16 %v7466
    %v7524 = vunpack.c.l.b16 %v7467
    %v7525 = vunpack.c.l.b16 %v7468
    %v7526 = vunpack.c.l.b16 %v7469
    %v7527 = vunpack.c.l.b16 %v7470
    %v7528 = vunpack.c.l.b16 %v7471
    %v7529 = vunpack.c.l.b16 %v7472
    %v7530 = vunpack.c.l.b16 %v7473
    %v7531 = vunpack.c.l.b16 %v7474
    %v7532 = vunpack.c.l.b16 %v7475
    %v7533 = vunpack.c.l.b16 %v7476
    %v7534 = vunpack.c.l.b16 %v7477
    %v7535 = vunpack.c.l.b16 %v7478
    %v7536 = vunpack.c.l.b16 %v7479
    %v7537 = vpack.c.b16 %v7522, %v7521
    %v7538 = vpack.c.b16 %v7524, %v7523
    %v7539 = vpack.c.b16 %v7526, %v7525
    %v7540 = vpack.c.b16 %v7528, %v7527
    %v7541 = vpack.c.b16 %v7530, %v7529
    %v7542 = vpack.c.b16 %v7532, %v7531
    %v7543 = vpack.c.b16 %v7534, %v7533
    %v7544 = vpack.c.b16 %v7536, %v7535
    %7553 = vmatprep.subr.bf16.mxu0 0
    %7554 = vmatpush1.bf16.msra.mxu0 %v7537
    %7555 = vmatprep.subr.bf16.mxu0 0
    %7556 = vmatpush1.bf16.msra.mxu0 %v7538
    %7557 = vmatprep.subr.bf16.mxu0 0
    %7558 = vmatpush1.bf16.msra.mxu0 %v7539
    %7559 = vmatprep.subr.bf16.mxu0 0
    %7560 = vmatpush1.bf16.msra.mxu0 %v7540
    %7561 = vmatprep.subr.bf16.mxu0 0
    %7562 = vmatpush1.bf16.msra.mxu0 %v7541
    %7563 = vmatprep.subr.bf16.mxu0 0
    %7564 = vmatpush1.bf16.msra.mxu0 %v7542
    %7565 = vmatprep.subr.bf16.mxu0 0
    %7566 = vmatpush1.bf16.msra.mxu0 %v7543
    %7567 = vmatprep.subr.bf16.mxu0 0
    %7568 = vmatpush1.bf16.msra.mxu0 %v7544
    %7569 = vmatprep.subr.bf16.mxu0 0
    %7570 = vmatpush1.bf16.msra.mxu0 0
    %7571 = vmatprep.subr.bf16.mxu0 0
    %7572 = vmatpush1.bf16.msra.mxu0 0
    %7573 = vmatprep.subr.bf16.mxu0 0
    %7574 = vmatpush1.bf16.msra.mxu0 0
    %7575 = vmatprep.subr.bf16.mxu0 0
    %7576 = vmatpush1.bf16.msra.mxu0 0
    %7577 = vmatprep.subr.bf16.mxu0 0
    %7578 = vmatpush1.bf16.msra.mxu0 0
    %7579 = vmatprep.subr.bf16.mxu0 0
    %7580 = vmatpush1.bf16.msra.mxu0 0
    %7581 = vmatprep.subr.bf16.mxu0 0
    %7582 = vmatpush1.bf16.msra.mxu0 0
    %7583 = vmatprep.subr.bf16.mxu0 0
    %7584 = vmatpush1.bf16.msra.mxu0 0
    %7585 = vmatprep.mubr.bf16.mxu0 0
    %7586 = vmatmul.mubr.bf16.gmra.mrb[0].mxu0 %v7484
    %v7587 = vpop.f32.mrb[0].mxu0
    %v7588 = vadd.f32 0.0, %v7587
    %v7589 = vpop.f32.mrb[0].mxu0
    %v7590 = vpop.f32.mrb[0].mxu0
    %v7591 = vadd.f32 0.0, %v7590
    %v7592 = vpop.f32.mrb[0].mxu0
    %7593 = vmatprep.mubr.bf16.mxu0 0
    %7594 = vmatmul.mubr.bf16.gmra.mrb[0].mxu0 %v7486
    %v7595 = vpop.f32.mrb[0].mxu0
    %v7596 = vadd.f32 0.0, %v7595
    %v7597 = vpop.f32.mrb[0].mxu0
    %v7598 = vpop.f32.mrb[0].mxu0
    %v7599 = vadd.f32 0.0, %v7598
    %v7600 = vpop.f32.mrb[0].mxu0
    %7601 = vmatprep.mubr.bf16.mxu0 0
    %7602 = vmatmul.mubr.bf16.gmra.mrb[0].mxu0 %v7488
    %v7603 = vpop.f32.mrb[0].mxu0
    %v7604 = vadd.f32 0.0, %v7603
    %v7605 = vpop.f32.mrb[0].mxu0
    %v7606 = vpop.f32.mrb[0].mxu0
    %v7607 = vadd.f32 0.0, %v7606
    %v7608 = vpop.f32.mrb[0].mxu0
    %7609 = vmatprep.mubr.bf16.mxu0 0
    %7610 = vmatmul.mubr.bf16.gmra.mrb[0].mxu0 %v7490
    %v7611 = vpop.f32.mrb[0].mxu0
    %v7612 = vadd.f32 0.0, %v7611
    %v7613 = vpop.f32.mrb[0].mxu0
    %v7614 = vpop.f32.mrb[0].mxu0
    %v7615 = vadd.f32 0.0, %v7614
    %v7616 = vpop.f32.mrb[0].mxu0
    %7617 = vmatprep.mubr.bf16.mxu0 0
    %7618 = vmatmul.mubr.bf16.gmra.mrb[0].mxu0 %v7492
    %v7619 = vpop.f32.mrb[0].mxu0
    %v7620 = vadd.f32 0.0, %v7619
    %v7621 = vpop.f32.mrb[0].mxu0
    %v7622 = vpop.f32.mrb[0].mxu0
    %v7623 = vadd.f32 0.0, %v7622
    %v7624 = vpop.f32.mrb[0].mxu0
    %7625 = vmatprep.mubr.bf16.mxu0 0
    %7626 = vmatmul.mubr.bf16.gmra.mrb[0].mxu0 %v7494
    %v7627 = vpop.f32.mrb[0].mxu0
    %v7628 = vadd.f32 0.0, %v7627
    %v7629 = vpop.f32.mrb[0].mxu0
    %v7630 = vpop.f32.mrb[0].mxu0
    %v7631 = vadd.f32 0.0, %v7630
    %v7632 = vpop.f32.mrb[0].mxu0
    %7633 = vmatprep.mubr.bf16.mxu0 0
    %7634 = vmatmul.mubr.bf16.gmra.mrb[0].mxu0 %v7496
    %v7635 = vpop.f32.mrb[0].mxu0
    %v7636 = vadd.f32 0.0, %v7635
    %v7637 = vpop.f32.mrb[0].mxu0
    %v7638 = vpop.f32.mrb[0].mxu0
    %v7639 = vadd.f32 0.0, %v7638
    %v7640 = vpop.f32.mrb[0].mxu0
    %7641 = vmatprep.mubr.bf16.mxu0 0
    %7642 = vmatmul.mubr.bf16.gmra.mrb[0].mxu0 %v7495
    %v7643 = vpop.f32.mrb[0].mxu0
    %v7644 = vadd.f32 0.0, %v7643
    %v7645 = vpop.f32.mrb[0].mxu0
    %v7646 = vpop.f32.mrb[0].mxu0
    %v7647 = vpop.f32.mrb[0].mxu0
    %7648 = vdwg.mxu0
    %v7649 = vadd.f32 %v7447, %v7588
    %v7650 = vadd.f32 %v7448, %v7591
    %v7651 = vadd.f32 %v7449, %v7596
    %v7652 = vadd.f32 %v7450, %v7599
    %v7653 = vadd.f32 %v7451, %v7604
    %v7654 = vadd.f32 %v7452, %v7607
    %v7655 = vadd.f32 %v7453, %v7612
    %v7656 = vadd.f32 %v7454, %v7615
    %v7657 = vadd.f32 %v7455, %v7620
    %v7658 = vadd.f32 %v7456, %v7623
    %v7659 = vadd.f32 %v7457, %v7628
    %v7660 = vadd.f32 %v7458, %v7631
    %v7661 = vadd.f32 %v7459, %v7636
    %v7662 = vadd.f32 %v7460, %v7639
    %v7663 = vadd.f32 %v7461, %v7644
    %v7664 = vld [vmem:[%s5] sm:$0x1]
    %v7665 = vld [vmem:[%s6] sm:$0x1]
    %v7666 = vmul.f32 %v7649, %v5333
    %v7667 = vmul.f32 %v7650, %v5338
    %v7668 = vmul.f32 %v7651, %v5343
    %v7669 = vmul.f32 %v7652, %v5348
    %v7670 = vmul.f32 %v7653, %v5353
    %v7671 = vmul.f32 %v7654, %v5358
    %v7672 = vmul.f32 %v7655, %v5363
    %v7673 = vmul.f32 %v7656, %v5368
    %v7674 = vmul.f32 %v7657, %v5373
    %v7675 = vmul.f32 %v7658, %v5378
    %v7676 = vmul.f32 %v7659, %v5383
    %v7677 = vmul.f32 %v7660, %v5388
    %v7678 = vmul.f32 %v7661, %v5393
    %v7679 = vmul.f32 %v7662, %v5398
    %v7680 = vmul.f32 %v7663, %v5403
    %v7681 = vadd.f32 %v7666, %v7667
    %v7682 = vadd.f32 %v7681, %v7668
    %v7683 = vadd.f32 %v7682, %v7669
    %v7684 = vadd.f32 %v7683, %v7670
    %v7685 = vadd.f32 %v7684, %v7671
    %v7686 = vadd.f32 %v7685, %v7672
    %v7687 = vadd.f32 %v7686, %v7673
    %v7688 = vadd.f32 %v7687, %v7674
    %v7689 = vadd.f32 %v7688, %v7675
    %v7690 = vadd.f32 %v7689, %v7676
    %v7691 = vadd.f32 %v7690, %v7677
    %v7692 = vadd.f32 %v7691, %v7678
    %v7693 = vadd.f32 %v7692, %v7679
    %v7694 = vadd.f32 %v7693, %v7680
    %v7695 = vrot.slane %v7694, 4
    %v7696 = vadd.f32 %v7694, %v7695
    %v7697 = vrot.slane %v7696, 2
    %v7698 = vadd.f32 %v7696, %v7697
    %v7699 = vrot.slane %v7698, 1
    %v7700 = vadd.f32 %v7698, %v7699
    %7701 = vrot.lane.b32.xlu0 %v7700, 64
    %v7702 = vpop.permute.xlu0 %7701
    %v7703 = vadd.f32 %v7700, %v7702
    %7704 = vrot.lane.b32.xlu0 %v7703, 32
    %v7705 = vpop.permute.xlu0 %7704
    %v7706 = vadd.f32 %v7703, %v7705
    %7707 = vrot.lane.b32.xlu0 %v7706, 16
    %v7708 = vpop.permute.xlu0 %7707
    %v7709 = vadd.f32 %v7706, %v7708
    %7710 = vrot.lane.b32.xlu0 %v7709, 8
    %v7711 = vpop.permute.xlu0 %7710
    %v7712 = vadd.f32 %v7709, %v7711
    %v7713 = vmul.f32 %v7712, 0.0009765625
    %v7714 = vlaneseq
    %v7715 = vshrl.u32 %v7714, 7
    %v7716 = vsub.s32 0, %v7715
    %v7717 = vrot.slane %v7713, %v7716
    %v7718 = vsub.f32 %v7649, %v7717
    %v7719 = vsub.f32 %v7650, %v7717
    %v7720 = vsub.f32 %v7651, %v7717
    %v7721 = vsub.f32 %v7652, %v7717
    %v7722 = vsub.f32 %v7653, %v7717
    %v7723 = vsub.f32 %v7654, %v7717
    %v7724 = vsub.f32 %v7655, %v7717
    %v7725 = vsub.f32 %v7656, %v7717
    %v7726 = vsub.f32 %v7657, %v7717
    %v7727 = vsub.f32 %v7658, %v7717
    %v7728 = vsub.f32 %v7659, %v7717
    %v7729 = vsub.f32 %v7660, %v7717
    %v7730 = vsub.f32 %v7661, %v7717
    %v7731 = vsub.f32 %v7662, %v7717
    %v7732 = vsub.f32 %v7663, %v7717
    %v7733 = vmul.f32 %v7718, %v7718
    %v7734 = vmul.f32 %v7719, %v7719
    %v7735 = vmul.f32 %v7720, %v7720
    %v7736 = vmul.f32 %v7721, %v7721
    %v7737 = vmul.f32 %v7722, %v7722
    %v7738 = vmul.f32 %v7723, %v7723
    %v7739 = vmul.f32 %v7724, %v7724
    %v7740 = vmul.f32 %v7725, %v7725
    %v7741 = vmul.f32 %v7726, %v7726
    %v7742 = vmul.f32 %v7727, %v7727
    %v7743 = vmul.f32 %v7728, %v7728
    %v7744 = vmul.f32 %v7729, %v7729
    %v7745 = vmul.f32 %v7730, %v7730
    %v7746 = vmul.f32 %v7731, %v7731
    %v7747 = vmul.f32 %v7732, %v7732
    %v7748 = vmul.f32 %v7733, %v5333
    %v7749 = vmul.f32 %v7734, %v5338
    %v7750 = vmul.f32 %v7735, %v5343
    %v7751 = vmul.f32 %v7736, %v5348
    %v7752 = vmul.f32 %v7737, %v5353
    %v7753 = vmul.f32 %v7738, %v5358
    %v7754 = vmul.f32 %v7739, %v5363
    %v7755 = vmul.f32 %v7740, %v5368
    %v7756 = vmul.f32 %v7741, %v5373
    %v7757 = vmul.f32 %v7742, %v5378
    %v7758 = vmul.f32 %v7743, %v5383
    %v7759 = vmul.f32 %v7744, %v5388
    %v7760 = vmul.f32 %v7745, %v5393
    %v7761 = vmul.f32 %v7746, %v5398
    %v7762 = vmul.f32 %v7747, %v5403
    %v7763 = vadd.f32 %v7748, %v7749
    %v7764 = vadd.f32 %v7763, %v7750
    %v7765 = vadd.f32 %v7764, %v7751
    %v7766 = vadd.f32 %v7765, %v7752
    %v7767 = vadd.f32 %v7766, %v7753
    %v7768 = vadd.f32 %v7767, %v7754
    %v7769 = vadd.f32 %v7768, %v7755
    %v7770 = vadd.f32 %v7769, %v7756
    %v7771 = vadd.f32 %v7770, %v7757
    %v7772 = vadd.f32 %v7771, %v7758
    %v7773 = vadd.f32 %v7772, %v7759
    %v7774 = vadd.f32 %v7773, %v7760
    %v7775 = vadd.f32 %v7774, %v7761
    %v7776 = vadd.f32 %v7775, %v7762
    %v7777 = vrot.slane %v7776, 4
    %v7778 = vadd.f32 %v7776, %v7777
    %v7779 = vrot.slane %v7778, 2
    %v7780 = vadd.f32 %v7778, %v7779
    %v7781 = vrot.slane %v7780, 1
    %v7782 = vadd.f32 %v7780, %v7781
    %7783 = vrot.lane.b32.xlu0 %v7782, 64
    %v7784 = vpop.permute.xlu0 %7783
    %v7785 = vadd.f32 %v7782, %v7784
    %7786 = vrot.lane.b32.xlu0 %v7785, 32
    %v7787 = vpop.permute.xlu0 %7786
    %v7788 = vadd.f32 %v7785, %v7787
    %7789 = vrot.lane.b32.xlu0 %v7788, 16
    %v7790 = vpop.permute.xlu0 %7789
    %v7791 = vadd.f32 %v7788, %v7790
    %7792 = vrot.lane.b32.xlu0 %v7791, 8
    %v7793 = vpop.permute.xlu0 %7792
    %v7794 = vadd.f32 %v7791, %v7793
    %v7795 = vmul.f32 %v7794, 0.0009765625
    %v7796 = vadd.f32 %v7795, 1e-05
    %v7797 = vrsqrt.pop %v7796
    %v7798 = vmul.f32 %v7664, %v7797
    %v7800 = vlaneseq
    %v7801 = vshrl.u32 %v7800, 7
    %v7802 = vsub.s32 0, %v7801
    %v7803 = vrot.slane %v7798, %v7802
    %v7805 = vmul.f32 %v7718, %v7803
    %v7806 = vmul.f32 %v7719, %v7803
    %v7807 = vmul.f32 %v7720, %v7803
    %v7808 = vmul.f32 %v7721, %v7803
    %v7809 = vmul.f32 %v7722, %v7803
    %v7810 = vmul.f32 %v7725, %v7803
    %v7811 = vmul.f32 %v7726, %v7803
    %v7812 = vmul.f32 %v7727, %v7803
    %v7813 = vmul.f32 %v7728, %v7803
    %v7814 = vmul.f32 %v7729, %v7803
    %v7815 = vmul.f32 %v7730, %v7803
    %v7817 = vlaneseq
    %v7818 = vshrl.u32 %v7817, 7
    %v7819 = vsub.s32 0, %v7818
    %v7820 = vrot.slane %v7665, %v7819
    %v7822 = vadd.f32 %v7805, %v7820
    %v7823 = vadd.f32 %v7806, %v7820
    %v7824 = vadd.f32 %v7807, %v7820
    %v7825 = vadd.f32 %v7808, %v7820
    %v7826 = vadd.f32 %v7809, %v7820
    %v7827 = vadd.f32 %v7810, %v7820
    %v7828 = vadd.f32 %v7811, %v7820
    %v7829 = vadd.f32 %v7812, %v7820
    %v7830 = vadd.f32 %v7813, %v7820
    %v7831 = vadd.f32 %v7814, %v7820
    %v7832 = vadd.f32 %v7815, %v7820
    %v7833 = vmax.f32 %v7822, 0.0
    %v7834 = vmax.f32 %v7823, 0.0
    %v7835 = vmax.f32 %v7824, 0.0
    %v7836 = vmax.f32 %v7825, 0.0
    %v7837 = vmax.f32 %v7826, 0.0
    %v7838 = vmax.f32 %v7827, 0.0
    %v7839 = vmax.f32 %v7828, 0.0
    %v7840 = vmax.f32 %v7829, 0.0
    %v7841 = vmax.f32 %v7830, 0.0
    %v7842 = vmax.f32 %v7831, 0.0
    %v7843 = vmax.f32 %v7832, 0.0
    %7844 = vst [vmem:[#allocation9] sm:$0xff] %v7833
    %7845 = vst [vmem:[#allocation9 + $0x6] sm:$0xfc] %v7834
    %7846 = vst [vmem:[#allocation9 + $0xe] sm:$0x3] %v7835
    %7847 = vst [vmem:[#allocation9 + $0xc] sm:$0xf0] %v7835
    %7848 = vst [vmem:[#allocation9 + $0x14] sm:$0xf] %v7836
    %7849 = vst [vmem:[#allocation9 + $0x12] sm:$0xc0] %v7836
    %7850 = vst [vmem:[#allocation9 + $0x1a] sm:$0x3f] %v7837
    %7851 = vst [vmem:[#allocation9 + $0x1c] sm:$0xf0] %v7838
    %7852 = vst [vmem:[#allocation9 + $0x24] sm:$0xf] %v7839
    %7853 = vst [vmem:[#allocation9 + $0x22] sm:$0xc0] %v7839
    %7854 = vst [vmem:[#allocation9 + $0x2a] sm:$0x3f] %v7840
    %7855 = vst [vmem:[#allocation9 + $0x30] sm:$0xff] %v7841
    %7856 = vst [vmem:[#allocation9 + $0x36] sm:$0xfc] %v7842
    %7857 = vst [vmem:[#allocation9 + $0x3e] sm:$0x3] %v7843
    // Predicated region
    $region42: #{tpu_custom_call.1} parent=1 // pred_check
      _
    $region43: #{tpu_custom_call.1} parent=1 // pred_check_branch
      %7859 = sbr.rel (0) target = $region45
    $region44: #{tpu_custom_call.1} parent=1 // pred_region
      %s7861 = ssub.s32 1024, 1024
      %7862 = vsyncadd [#allocation6], %s7861
      %s7863 = sshll.u32 [#allocation9], 4
      %s7864 = int_to_ptr.vmem [resolvable:$true] %s7863
      %7869 = dma.vmem_to_hbm [thread:$0]  %s7864, 1024, %s8, [#allocation6], 128, 128, 8
    $region45: #{tpu_custom_call.1} parent=1 // pred_fallthru
      _
    // Predicated region
    $region46: #{tpu_custom_call.1} parent=1 // pred_check
      _
    $region47: #{tpu_custom_call.1} parent=1 // pred_check_branch
      %7871 = sbr.rel (0) target = $region49
    $region48: #{tpu_custom_call.1} parent=1 // pred_region
      %7872 = dma.done [#allocation6], 1024
    $region49: #{tpu_custom_call.1} parent=1 // pred_fallthru
      _
    %7873 = vsyncpa [#allocation5], 1
    %7874 = vsyncpa [#allocation8], 1
    %7875 = vsyncpa [#allocation6], 1

</llo_original>
